<compile_context>
chip_gen: v6e
topology: v6e:2x2x1
jax: 0.10.0
libtpu: 0.0.40
codegen_flags: <defaults>
</compile_context>

<pallas_src>
import jax
import jax.numpy as jnp
from jax.experimental import pallas as pl
from jax.experimental.pallas import tpu as pltpu

IMAGE_SIZE = 3 * 32 * 32   # 3072
HIDDEN_DIM = 400
LATENT_DIM = 20
LATENT_PAD = 128           # lane-dense padded latent width
HEADS_PAD = 2 * LATENT_PAD  # fused [mu | logvar] head width (256 lanes)


def _round_up(x, m):
    return (x + m - 1) // m * m


def vae_kernel(x_ref, eps_ref,
               w1_ref, b1_ref,
               w2_ref, b2_ref,
               w3_ref, b3_ref,
               w4_ref, b4_ref,
               recon_ref, mu_ref, logvar_ref):
    """Fused VAE forward on one batch tile: encode -> reparameterize -> decode.

    Latent path is 128-lane dense end to end: the fused mu|logvar head is
    padded to 2*128 output lanes (extra lanes exactly 0), eps is zero-padded,
    and fc3 has zero rows 20..127, so no masked vregs/stores are needed.
    """
    x = x_ref[...]                                              # (TM, 3072) bf16

    # --- encode: fc1 (bf16 x and W, f32 accumulate) + relu ---
    h = jnp.dot(x, w1_ref[...],
                preferred_element_type=jnp.float32) + b1_ref[...]
    h = jnp.maximum(h, 0.0)                                     # (TM, 400) f32

    # --- fused latent heads: one 256-lane dot; lanes [0:128]=mu, [128:256]=logvar ---
    heads = jnp.dot(h, w2_ref[...],
                    preferred_element_type=jnp.float32) + b2_ref[...]   # (TM, 256)
    mu_pad = heads[:, :LATENT_PAD]                              # (TM, 128)
    lv_pad = heads[:, LATENT_PAD:]                              # (TM, 128)
    mu_ref[...] = mu_pad
    logvar_ref[...] = lv_pad

    # --- reparameterize: z = mu + eps * exp(logvar / 2), kept 128-wide ---
    # eps lanes >= 20 and mu lanes >= 20 are zero, so z_pad lanes >= 20 are
    # zero; they also hit the zero rows of the padded fc3 weight.
    z_pad = mu_pad + eps_ref[...] * jnp.exp(lv_pad * 0.5)       # (TM, 128)

    # --- decode: fc3 (K padded to 128) + relu, fc4 (bf16) + sigmoid ---
    h2 = jnp.dot(z_pad, w3_ref[...],
                 preferred_element_type=jnp.float32) + b3_ref[...]
    h2 = jnp.maximum(h2, 0.0)                                   # (TM, 400)

    logits = jnp.dot(h2.astype(jnp.bfloat16), w4_ref[...],
                     preferred_element_type=jnp.float32) + b4_ref[...]
    # sigmoid via EUP: exp + approx reciprocal (no VALU divide), store bf16.
    recon = pl.reciprocal(1.0 + jnp.exp(-logits), approx=True)
    recon_ref[...] = recon.astype(recon_ref.dtype)              # (TM, 3072) bf16


def prepare_params(w1, b1, w2m, b2m, w2l, b2l, w3, b3, w4, b4):
    """Pack params into the kernel layout.

    Large weights (fc1/fc4) -> bf16. Latent heads (fc2_mean / fc2_logvar)
    fused into one (400, 256) f32 weight with zero padding in lanes
    [20:128] and [148:256]; fc3 padded to 128 contraction rows (zeros).
    Biases stay f32.
    """
    w1 = w1.astype(jnp.bfloat16)                                # (3072, 400) bf16
    w4 = w4.astype(jnp.bfloat16)                                # (400, 3072) bf16

    w2_p = jnp.zeros((HIDDEN_DIM, HEADS_PAD), jnp.float32)
    w2_p = w2_p.at[:, :LATENT_DIM].set(w2m)
    w2_p = w2_p.at[:, LATENT_PAD:LATENT_PAD + LATENT_DIM].set(w2l)
    b2_p = jnp.zeros((1, HEADS_PAD), jnp.float32)
    b2_p = b2_p.at[:, :LATENT_DIM].set(b2m)
    b2_p = b2_p.at[:, LATENT_PAD:LATENT_PAD + LATENT_DIM].set(b2l)

    w3_p = jnp.zeros((LATENT_PAD, HIDDEN_DIM), jnp.float32).at[:LATENT_DIM, :].set(w3)

    return (w1, b1.astype(jnp.float32),
            w2_p, b2_p,
            w3_p, b3.astype(jnp.float32),
            w4, b4.astype(jnp.float32))


@jax.jit
def vae_forward(x_nchw, eps, params):
    """x_nchw: (B, 3, 32, 32) f32; eps: (B, LATENT_DIM) f32 (reparam noise).

    Returns (recon bf16 (B, 3072), mu f32 (B, 20), logvar f32 (B, 20)).
    """
    B = x_nchw.shape[0]

    # Batch tiling: x/recon are tiled (and double-buffered by the pipeline);
    # weights use a constant index_map + Buffered(1) so they are fetched once
    # and stay VMEM-resident across grid steps.
    if B >= 256:
        # keep at least 2 grid blocks so both v7x TensorCores get work
        TM = min(256, max(128, (B // 2) // 128 * 128))
    else:
        TM = _round_up(max(B, 1), 16)        # bf16 sublane-packing friendly
    B_pad = _round_up(B, TM)
    num_blocks = B_pad // TM

    # Flatten + cast x to bf16 in one pass; skip the pad copy when not needed.
    x_bf16 = x_nchw.reshape(B, IMAGE_SIZE).astype(jnp.bfloat16)
    if B_pad == B:
        x_in = x_bf16
    else:
        x_in = jnp.zeros((B_pad, IMAGE_SIZE), jnp.bfloat16).at[:B].set(x_bf16)
    eps_pad = jnp.zeros((B_pad, LATENT_PAD), jnp.float32).at[:B, :LATENT_DIM].set(eps)

    w1, b1, w2, b2, w3, b3, w4, b4 = params

    def tile_spec(shape):
        return pl.BlockSpec(shape, lambda i: (i, 0))

    def resident_spec(arr):
        # Constant block across the grid; single-buffered (no wasted VMEM).
        return pl.BlockSpec(arr.shape, lambda i: (0, 0),
                            pipeline_mode=pl.Buffered(buffer_count=1))

    # Only shard across TensorCores (megacore) when there are several batch
    # tiles; for small B a split just duplicates the weight-load cost.
    dim_sem = ("parallel",) if num_blocks > 1 else ("arbitrary",)

    recon_pad, mu_pad, lv_pad = pl.pallas_call(
        vae_kernel,
        out_shape=(
            jax.ShapeDtypeStruct((B_pad, IMAGE_SIZE), jnp.bfloat16),
            jax.ShapeDtypeStruct((B_pad, LATENT_PAD), jnp.float32),
            jax.ShapeDtypeStruct((B_pad, LATENT_PAD), jnp.float32),
        ),
        grid_spec=pltpu.PrefetchScalarGridSpec(
            num_scalar_prefetch=0,
            grid=(num_blocks,),
            in_specs=[
                tile_spec((TM, IMAGE_SIZE)),      # x (bf16)
                tile_spec((TM, LATENT_PAD)),      # eps (zero-padded)
                resident_spec(w1), resident_spec(b1),
                resident_spec(w2), resident_spec(b2),
                resident_spec(w3), resident_spec(b3),
                resident_spec(w4), resident_spec(b4),
            ],
            out_specs=(
                tile_spec((TM, IMAGE_SIZE)),      # recon (bf16)
                tile_spec((TM, LATENT_PAD)),      # mu (lane-dense)
                tile_spec((TM, LATENT_PAD)),      # logvar (lane-dense)
            ),
        ),
        compiler_params=pltpu.CompilerParams(
            dimension_semantics=dim_sem,
            vmem_limit_bytes=32 << 20,            # fits v7x 64 MiB/TC w/ headroom
        ),
    )(x_in, eps_pad, w1, b1, w2, b2, w3, b3, w4, b4)

    recon = recon_pad[:B]                          # bf16 (B, 3072)
    mu = mu_pad[:B, :LATENT_DIM]
    logvar = lv_pad[:B, :LATENT_DIM]
    return recon, mu, logvar


def init_linear(key, in_features, out_features):
    """PyTorch nn.Linear default init: U(-1/sqrt(in), 1/sqrt(in)).

    Weight returned pre-transposed to (in_features, out_features)."""
    kw, kb = jax.random.split(key)
    bound = 1.0 / (in_features ** 0.5)
    w = jax.random.uniform(kw, (in_features, out_features),
                           minval=-bound, maxval=bound, dtype=jnp.float32)
    b = jax.random.uniform(kb, (1, out_features),
                           minval=-bound, maxval=bound, dtype=jnp.float32)
    return w, b


if __name__ == "__main__":
    key = jax.random.PRNGKey(0)
    k_x, k_eps, k1, k2, k3, k4, k5 = jax.random.split(key, 7)

    B = 4
    x = jax.random.uniform(k_x, (B, 3, 32, 32), dtype=jnp.float32)   # NCHW like torch
    eps = jax.random.normal(k_eps, (B, LATENT_DIM), dtype=jnp.float32)

    w1, b1 = init_linear(k1, IMAGE_SIZE, HIDDEN_DIM)      # fc1
    w2m, b2m = init_linear(k2, HIDDEN_DIM, LATENT_DIM)    # fc2_mean
    w2l, b2l = init_linear(k3, HIDDEN_DIM, LATENT_DIM)    # fc2_logvar
    w3, b3 = init_linear(k4, LATENT_DIM, HIDDEN_DIM)      # fc3
    w4, b4 = init_linear(k5, HIDDEN_DIM, IMAGE_SIZE)      # fc4

    params = prepare_params(w1, b1, w2m, b2m, w2l, b2l, w3, b3, w4, b4)

    recon, mu, logvar = vae_forward(x, eps, params)
    jax.block_until_ready((recon, mu, logvar))

    # sanity: shapes + (approx) sigmoid range
    assert recon.shape == (B, IMAGE_SIZE)
    assert mu.shape == (B, LATENT_DIM)
    assert logvar.shape == (B, LATENT_DIM)
    recon_f32 = recon.astype(jnp.float32)
    assert bool(jnp.all((recon_f32 >= 0.0) & (recon_f32 <= 1.0 + 1e-2)))

    # pure-JAX reference with matching numerics (bf16 x/fc1/fc4, f32 accumulation)
    x_flat_bf = x.reshape(B, IMAGE_SIZE).astype(jnp.bfloat16)
    h_ref = jnp.maximum(
        jnp.dot(x_flat_bf, w1.astype(jnp.bfloat16),
                preferred_element_type=jnp.float32) + b1, 0.0)
    mu_ref = h_ref @ w2m + b2m
    lv_ref = h_ref @ w2l + b2l
    z_ref = mu_ref + eps * jnp.exp(lv_ref * 0.5)
    h2_ref = jnp.maximum(z_ref @ w3 + b3, 0.0)
    recon_ref = jax.nn.sigmoid(
        jnp.dot(h2_ref.astype(jnp.bfloat16), w4.astype(jnp.bfloat16),
                preferred_element_type=jnp.float32) + b4)

    assert bool(jnp.allclose(mu, mu_ref, atol=2e-2, rtol=2e-2))
    assert bool(jnp.allclose(logvar, lv_ref, atol=2e-2, rtol=2e-2))
    assert bool(jnp.allclose(recon_f32, recon_ref, atol=2e-2, rtol=2e-2))

    print("KERNEL_OK")
</pallas_src>

<mosaic_0001>
module attributes {stable_mosaic.version = 11 : i64} {
  func.func @vae_kernel(%arg0: i32, %arg1: memref<16x3072xbf16, #tpu.memory_space<vmem>>, %arg2: memref<16x128xf32, #tpu.memory_space<vmem>>, %arg3: memref<3072x400xbf16, #tpu.memory_space<vmem>>, %arg4: memref<1x400xf32, #tpu.memory_space<vmem>>, %arg5: memref<400x256xf32, #tpu.memory_space<vmem>>, %arg6: memref<1x256xf32, #tpu.memory_space<vmem>>, %arg7: memref<128x400xf32, #tpu.memory_space<vmem>>, %arg8: memref<1x400xf32, #tpu.memory_space<vmem>>, %arg9: memref<400x3072xbf16, #tpu.memory_space<vmem>>, %arg10: memref<1x3072xf32, #tpu.memory_space<vmem>>, %arg11: memref<16x3072xbf16, #tpu.memory_space<vmem>>, %arg12: memref<16x128xf32, #tpu.memory_space<vmem>>, %arg13: memref<16x128xf32, #tpu.memory_space<vmem>>) attributes {dimension_semantics = [#tpu.dimension_semantics<arbitrary>], iteration_bounds = array<i64: 1>, scalar_prefetch = 0 : i64, scratch_operands = 0 : i64, tpu.core_type = #tpu.core_type<tc>, window_params = [{transform_indices = @transform_0, window_bounds = array<i64: 16, 3072>}, {transform_indices = @transform_1, window_bounds = array<i64: 16, 128>}, {pipeline_mode = #tpu.pipeline_mode<synchronous>, transform_indices = @transform_2, window_bounds = array<i64: 3072, 400>}, {pipeline_mode = #tpu.pipeline_mode<synchronous>, transform_indices = @transform_3, window_bounds = array<i64: 1, 400>}, {pipeline_mode = #tpu.pipeline_mode<synchronous>, transform_indices = @transform_4, window_bounds = array<i64: 400, 256>}, {pipeline_mode = #tpu.pipeline_mode<synchronous>, transform_indices = @transform_5, window_bounds = array<i64: 1, 256>}, {pipeline_mode = #tpu.pipeline_mode<synchronous>, transform_indices = @transform_6, window_bounds = array<i64: 128, 400>}, {pipeline_mode = #tpu.pipeline_mode<synchronous>, transform_indices = @transform_7, window_bounds = array<i64: 1, 400>}, {pipeline_mode = #tpu.pipeline_mode<synchronous>, transform_indices = @transform_8, window_bounds = array<i64: 400, 3072>}, {pipeline_mode = #tpu.pipeline_mode<synchronous>, transform_indices = @transform_9, window_bounds = array<i64: 1, 3072>}, {transform_indices = @transform_10, window_bounds = array<i64: 16, 3072>}, {transform_indices = @transform_11, window_bounds = array<i64: 16, 128>}, {transform_indices = @transform_12, window_bounds = array<i64: 16, 128>}]} {
    %c0 = arith.constant 0 : index
    %c0_0 = arith.constant 0 : index
    %0 = vector.load %arg1[%c0, %c0_0] : memref<16x3072xbf16, #tpu.memory_space<vmem>>, vector<16x3072xbf16>
    %c0_1 = arith.constant 0 : index
    %c0_2 = arith.constant 0 : index
    %1 = vector.load %arg3[%c0_1, %c0_2] : memref<3072x400xbf16, #tpu.memory_space<vmem>>, vector<3072x400xbf16>
    %cst = arith.constant dense<0.000000e+00> : vector<16x400xf32>
    %2 = tpu.matmul %0, %1, %cst {dimension_numbers = #tpu.dot_dimension_numbers<[1], [0], [0], [1], [0, 0, 1, 1], [], []>} : vector<16x3072xbf16>, vector<3072x400xbf16>, vector<16x400xf32> -> vector<16x400xf32>
    %c0_3 = arith.constant 0 : index
    %c0_4 = arith.constant 0 : index
    %3 = vector.load %arg4[%c0_3, %c0_4] : memref<1x400xf32, #tpu.memory_space<vmem>>, vector<1x400xf32>
    %4 = vector.broadcast %3 : vector<1x400xf32> to vector<16x400xf32>
    %5 = arith.addf %2, %4 : vector<16x400xf32>
    %cst_5 = arith.constant 0.000000e+00 : f32
    %6 = vector.broadcast %cst_5 : f32 to vector<16x400xf32>
    %7 = arith.maximumf %5, %6 : vector<16x400xf32>
    %c0_6 = arith.constant 0 : index
    %c0_7 = arith.constant 0 : index
    %8 = vector.load %arg5[%c0_6, %c0_7] : memref<400x256xf32, #tpu.memory_space<vmem>>, vector<400x256xf32>
    %cst_8 = arith.constant dense<0.000000e+00> : vector<16x256xf32>
    %9 = tpu.matmul %7, %8, %cst_8 {dimension_numbers = #tpu.dot_dimension_numbers<[1], [0], [0], [1], [0, 0, 1, 1], [], []>} : vector<16x400xf32>, vector<400x256xf32>, vector<16x256xf32> -> vector<16x256xf32>
    %c0_9 = arith.constant 0 : index
    %c0_10 = arith.constant 0 : index
    %10 = vector.load %arg6[%c0_9, %c0_10] : memref<1x256xf32, #tpu.memory_space<vmem>>, vector<1x256xf32>
    %11 = vector.broadcast %10 : vector<1x256xf32> to vector<16x256xf32>
    %12 = arith.addf %9, %11 : vector<16x256xf32>
    %13 = vector.extract_strided_slice %12 {offsets = [0, 0], sizes = [16, 128], strides = [1, 1]} : vector<16x256xf32> to vector<16x128xf32>
    %14 = vector.extract_strided_slice %12 {offsets = [0, 128], sizes = [16, 128], strides = [1, 1]} : vector<16x256xf32> to vector<16x128xf32>
    %c0_11 = arith.constant 0 : index
    %c0_12 = arith.constant 0 : index
    %15 = vector.load %arg12[%c0_11, %c0_12] : memref<16x128xf32, #tpu.memory_space<vmem>>, vector<16x128xf32>
    tpu.vector_store %arg12[%c0_11, %c0_12], %13 {strides = array<i32>} : memref<16x128xf32, #tpu.memory_space<vmem>>, vector<16x128xf32>,
    %c0_13 = arith.constant 0 : index
    %c0_14 = arith.constant 0 : index
    %16 = vector.load %arg13[%c0_13, %c0_14] : memref<16x128xf32, #tpu.memory_space<vmem>>, vector<16x128xf32>
    tpu.vector_store %arg13[%c0_13, %c0_14], %14 {strides = array<i32>} : memref<16x128xf32, #tpu.memory_space<vmem>>, vector<16x128xf32>,
    %c0_15 = arith.constant 0 : index
    %c0_16 = arith.constant 0 : index
    %17 = vector.load %arg2[%c0_15, %c0_16] : memref<16x128xf32, #tpu.memory_space<vmem>>, vector<16x128xf32>
    %cst_17 = arith.constant 5.000000e-01 : f32
    %18 = vector.broadcast %cst_17 : f32 to vector<16x128xf32>
    %19 = arith.mulf %14, %18 : vector<16x128xf32>
    %20 = math.exp %19 : vector<16x128xf32>
    %21 = arith.mulf %17, %20 : vector<16x128xf32>
    %22 = arith.addf %13, %21 : vector<16x128xf32>
    %c0_18 = arith.constant 0 : index
    %c0_19 = arith.constant 0 : index
    %23 = vector.load %arg7[%c0_18, %c0_19] : memref<128x400xf32, #tpu.memory_space<vmem>>, vector<128x400xf32>
    %cst_20 = arith.constant dense<0.000000e+00> : vector<16x400xf32>
    %24 = tpu.matmul %22, %23, %cst_20 {dimension_numbers = #tpu.dot_dimension_numbers<[1], [0], [0], [1], [0, 0, 1, 1], [], []>} : vector<16x128xf32>, vector<128x400xf32>, vector<16x400xf32> -> vector<16x400xf32>
    %c0_21 = arith.constant 0 : index
    %c0_22 = arith.constant 0 : index
    %25 = vector.load %arg8[%c0_21, %c0_22] : memref<1x400xf32, #tpu.memory_space<vmem>>, vector<1x400xf32>
    %26 = vector.broadcast %25 : vector<1x400xf32> to vector<16x400xf32>
    %27 = arith.addf %24, %26 : vector<16x400xf32>
    %cst_23 = arith.constant 0.000000e+00 : f32
    %28 = vector.broadcast %cst_23 : f32 to vector<16x400xf32>
    %29 = arith.maximumf %27, %28 : vector<16x400xf32>
    %30 = arith.truncf %29 : vector<16x400xf32> to vector<16x400xbf16>
    %c0_24 = arith.constant 0 : index
    %c0_25 = arith.constant 0 : index
    %31 = vector.load %arg9[%c0_24, %c0_25] : memref<400x3072xbf16, #tpu.memory_space<vmem>>, vector<400x3072xbf16>
    %cst_26 = arith.constant dense<0.000000e+00> : vector<16x3072xf32>
    %32 = tpu.matmul %30, %31, %cst_26 {dimension_numbers = #tpu.dot_dimension_numbers<[1], [0], [0], [1], [0, 0, 1, 1], [], []>} : vector<16x400xbf16>, vector<400x3072xbf16>, vector<16x3072xf32> -> vector<16x3072xf32>
    %c0_27 = arith.constant 0 : index
    %c0_28 = arith.constant 0 : index
    %33 = vector.load %arg10[%c0_27, %c0_28] : memref<1x3072xf32, #tpu.memory_space<vmem>>, vector<1x3072xf32>
    %34 = vector.broadcast %33 : vector<1x3072xf32> to vector<16x3072xf32>
    %35 = arith.addf %32, %34 : vector<16x3072xf32>
    %cst_29 = arith.constant 0.000000e+00 : f32
    %36 = vector.broadcast %cst_29 : f32 to vector<16x3072xf32>
    %37 = arith.subf %36, %35 : vector<16x3072xf32>
    %38 = math.exp %37 : vector<16x3072xf32>
    %cst_30 = arith.constant 1.000000e+00 : f32
    %39 = vector.broadcast %cst_30 : f32 to vector<16x3072xf32>
    %40 = arith.addf %39, %38 : vector<16x3072xf32>
    %41 = tpu.reciprocal %40 {approx = true} : vector<16x3072xf32> -> vector<16x3072xf32>
    %42 = arith.truncf %41 : vector<16x3072xf32> to vector<16x3072xbf16>
    %c0_31 = arith.constant 0 : index
    %c0_32 = arith.constant 0 : index
    %43 = vector.load %arg11[%c0_31, %c0_32] : memref<16x3072xbf16, #tpu.memory_space<vmem>>, vector<16x3072xbf16>
    tpu.vector_store %arg11[%c0_31, %c0_32], %42 {strides = array<i32>} : memref<16x3072xbf16, #tpu.memory_space<vmem>>, vector<16x3072xbf16>,
    return
  }
  func.func @transform_0(%arg0: i32) -> (i32, i32) {
    %c0_i32 = arith.constant 0 : i32
    %c0_i32_0 = arith.constant 0 : i32
    return %arg0, %c0_i32 : i32, i32
  }
  func.func @transform_1(%arg0: i32) -> (i32, i32) {
    %c0_i32 = arith.constant 0 : i32
    %c0_i32_0 = arith.constant 0 : i32
    return %arg0, %c0_i32 : i32, i32
  }
  func.func @transform_2(%arg0: i32) -> (i32, i32) {
    %c0_i32 = arith.constant 0 : i32
    %c0_i32_0 = arith.constant 0 : i32
    %c0_i32_1 = arith.constant 0 : i32
    return %c0_i32, %c0_i32_0 : i32, i32
  }
  func.func @transform_3(%arg0: i32) -> (i32, i32) {
    %c0_i32 = arith.constant 0 : i32
    %c0_i32_0 = arith.constant 0 : i32
    %c0_i32_1 = arith.constant 0 : i32
    return %c0_i32, %c0_i32_0 : i32, i32
  }
  func.func @transform_4(%arg0: i32) -> (i32, i32) {
    %c0_i32 = arith.constant 0 : i32
    %c0_i32_0 = arith.constant 0 : i32
    %c0_i32_1 = arith.constant 0 : i32
    return %c0_i32, %c0_i32_0 : i32, i32
  }
  func.func @transform_5(%arg0: i32) -> (i32, i32) {
    %c0_i32 = arith.constant 0 : i32
    %c0_i32_0 = arith.constant 0 : i32
    %c0_i32_1 = arith.constant 0 : i32
    return %c0_i32, %c0_i32_0 : i32, i32
  }
  func.func @transform_6(%arg0: i32) -> (i32, i32) {
    %c0_i32 = arith.constant 0 : i32
    %c0_i32_0 = arith.constant 0 : i32
    %c0_i32_1 = arith.constant 0 : i32
    return %c0_i32, %c0_i32_0 : i32, i32
  }
  func.func @transform_7(%arg0: i32) -> (i32, i32) {
    %c0_i32 = arith.constant 0 : i32
    %c0_i32_0 = arith.constant 0 : i32
    %c0_i32_1 = arith.constant 0 : i32
    return %c0_i32, %c0_i32_0 : i32, i32
  }
  func.func @transform_8(%arg0: i32) -> (i32, i32) {
    %c0_i32 = arith.constant 0 : i32
    %c0_i32_0 = arith.constant 0 : i32
    %c0_i32_1 = arith.constant 0 : i32
    return %c0_i32, %c0_i32_0 : i32, i32
  }
  func.func @transform_9(%arg0: i32) -> (i32, i32) {
    %c0_i32 = arith.constant 0 : i32
    %c0_i32_0 = arith.constant 0 : i32
    %c0_i32_1 = arith.constant 0 : i32
    return %c0_i32, %c0_i32_0 : i32, i32
  }
  func.func @transform_10(%arg0: i32) -> (i32, i32) {
    %c0_i32 = arith.constant 0 : i32
    %c0_i32_0 = arith.constant 0 : i32
    return %arg0, %c0_i32 : i32, i32
  }
  func.func @transform_11(%arg0: i32) -> (i32, i32) {
    %c0_i32 = arith.constant 0 : i32
    %c0_i32_0 = arith.constant 0 : i32
    return %arg0, %c0_i32 : i32, i32
  }
  func.func @transform_12(%arg0: i32) -> (i32, i32) {
    %c0_i32 = arith.constant 0 : i32
    %c0_i32_0 = arith.constant 0 : i32
    return %arg0, %c0_i32 : i32, i32
  }
}

</mosaic_0001>

<llo_original>
// kernel: vae_forward.1
$region0: #{vae_forward.1}
  #allocation0 [shape = 'u32[]', space=smem, size = 0x4, offset = 0x4, fixed_abs, tag = 'smem constant byte address 0x4 - core index']
  #allocation1 [shape = 'u32[144,128]{1,0:T(1,128)}', space=vmem, size = 0x12000, scoped, tag = 'internal scratch']
  %s0 = inlined_call_operand.vmem [shape: bf16[16,3072], index: 0, kind: input, shape index: {}]
  %s1 = inlined_call_operand.vmem [shape: f32[16,128], index: 1, kind: input, shape index: {}]
  %s2 = inlined_call_operand.vmem [shape: bf16[3072,400], index: 2, kind: input, shape index: {}]
  %s3 = inlined_call_operand.vmem [shape: f32[1,400], index: 3, kind: input, shape index: {}]
  %s4 = inlined_call_operand.vmem [shape: f32[400,256], index: 4, kind: input, shape index: {}]
  %s5 = inlined_call_operand.vmem [shape: f32[1,256], index: 5, kind: input, shape index: {}]
  %s6 = inlined_call_operand.vmem [shape: f32[128,400], index: 6, kind: input, shape index: {}]
  %s7 = inlined_call_operand.vmem [shape: f32[1,400], index: 7, kind: input, shape index: {}]
  %s8 = inlined_call_operand.vmem [shape: bf16[400,3072], index: 8, kind: input, shape index: {}]
  %s9 = inlined_call_operand.vmem [shape: f32[1,3072], index: 9, kind: input, shape index: {}]
  %s10 = inlined_call_operand.vmem [shape: bf16[16,3072], index: 10, kind: output, shape index: {0}]
  %s11 = inlined_call_operand.vmem [shape: f32[16,128], index: 11, kind: output, shape index: {1}]
  %s12 = inlined_call_operand.vmem [shape: f32[16,128], index: 12, kind: output, shape index: {2}]
  %13 = xla_tuple %s10, %s11, %s12
  %s14 = sld [smem:[#allocation0]]
  $region66: #{vae_forward.1} parent=0
    _
  %s16 = ssub.s32 1, %s14
  %s17 = scalar_select 0, %s16, %s14
  // Predicated region
  $region2: #{vae_forward.1} parent=0 // pred_check
    _
  $region3: #{vae_forward.1} parent=0 // pred_check_branch
    %19 = sbr.rel (0) target = $region5
  $region4: #{vae_forward.1} parent=0 // pred_region
    _
  $region5: #{vae_forward.1} parent=0 // pred_fallthru
    _
  // Predicated region
  $region6: #{vae_forward.1} parent=0 // pred_check
    _
  $region7: #{vae_forward.1} parent=0 // pred_check_branch
    %21 = sbr.rel (0) target = $region9
  $region8: #{vae_forward.1} parent=0 // pred_region
    _
  $region9: #{vae_forward.1} parent=0 // pred_fallthru
    _
  // Predicated region
  $region10: #{vae_forward.1} parent=0 // pred_check
    _
  $region11: #{vae_forward.1} parent=0 // pred_check_branch
    %23 = sbr.rel (0) target = $region13
  $region12: #{vae_forward.1} parent=0 // pred_region
    _
  $region13: #{vae_forward.1} parent=0 // pred_fallthru
    _
  // Predicated region
  $region14: #{vae_forward.1} parent=0 // pred_check
    _
  $region15: #{vae_forward.1} parent=0 // pred_check_branch
    %25 = sbr.rel (0) target = $region17
  $region16: #{vae_forward.1} parent=0 // pred_region
    _
  $region17: #{vae_forward.1} parent=0 // pred_fallthru
    _
  // Predicated region
  $region18: #{vae_forward.1} parent=0 // pred_check
    _
  $region19: #{vae_forward.1} parent=0 // pred_check_branch
    %27 = sbr.rel (0) target = $region21
  $region20: #{vae_forward.1} parent=0 // pred_region
    _
  $region21: #{vae_forward.1} parent=0 // pred_fallthru
    _
  // Predicated region
  $region22: #{vae_forward.1} parent=0 // pred_check
    _
  $region23: #{vae_forward.1} parent=0 // pred_check_branch
    %29 = sbr.rel (0) target = $region25
  $region24: #{vae_forward.1} parent=0 // pred_region
    _
  $region25: #{vae_forward.1} parent=0 // pred_fallthru
    _
  // Predicated region
  $region26: #{vae_forward.1} parent=0 // pred_check
    _
  $region27: #{vae_forward.1} parent=0 // pred_check_branch
    %31 = sbr.rel (0) target = $region29
  $region28: #{vae_forward.1} parent=0 // pred_region
    _
  $region29: #{vae_forward.1} parent=0 // pred_fallthru
    _
  // Predicated region
  $region30: #{vae_forward.1} parent=0 // pred_check
    _
  $region31: #{vae_forward.1} parent=0 // pred_check_branch
    %33 = sbr.rel (0) target = $region33
  $region32: #{vae_forward.1} parent=0 // pred_region
    _
  $region33: #{vae_forward.1} parent=0 // pred_fallthru
    _
  // Predicated region
  $region34: #{vae_forward.1} parent=0 // pred_check
    _
  $region35: #{vae_forward.1} parent=0 // pred_check_branch
    %35 = sbr.rel (0) target = $region37
  $region36: #{vae_forward.1} parent=0 // pred_region
    _
  $region37: #{vae_forward.1} parent=0 // pred_fallthru
    _
  // Predicated region
  $region38: #{vae_forward.1} parent=0 // pred_check
    _
  $region39: #{vae_forward.1} parent=0 // pred_check_branch
    %37 = sbr.rel (0) target = $region41
  $region40: #{vae_forward.1} parent=0 // pred_region
    _
  $region41: #{vae_forward.1} parent=0 // pred_fallthru
    _
  %v39 = vld [vmem:[%s0] sm:$0xff]
  %v40 = vld [vmem:[%s0 + $0x8] sm:$0xff]
  %v41 = vld [vmem:[%s0 + $0x10] sm:$0xff]
  %v42 = vld [vmem:[%s0 + $0x18] sm:$0xff]
  %v43 = vld [vmem:[%s0 + $0x20] sm:$0xff]
  %v44 = vld [vmem:[%s0 + $0x28] sm:$0xff]
  %v45 = vld [vmem:[%s0 + $0x30] sm:$0xff]
  %v46 = vld [vmem:[%s0 + $0x38] sm:$0xff]
  %v47 = vld [vmem:[%s0 + $0x40] sm:$0xff]
  %v48 = vld [vmem:[%s0 + $0x48] sm:$0xff]
  %v49 = vld [vmem:[%s0 + $0x50] sm:$0xff]
  %v50 = vld [vmem:[%s0 + $0x58] sm:$0xff]
  %v51 = vld [vmem:[%s0 + $0x60] sm:$0xff]
  %v52 = vld [vmem:[%s0 + $0x68] sm:$0xff]
  %v53 = vld [vmem:[%s0 + $0x70] sm:$0xff]
  %v54 = vld [vmem:[%s0 + $0x78] sm:$0xff]
  %v55 = vld [vmem:[%s0 + $0x80] sm:$0xff]
  %v56 = vld [vmem:[%s0 + $0x88] sm:$0xff]
  %v57 = vld [vmem:[%s0 + $0x90] sm:$0xff]
  %v58 = vld [vmem:[%s0 + $0x98] sm:$0xff]
  %v59 = vld [vmem:[%s0 + $0xa0] sm:$0xff]
  %v60 = vld [vmem:[%s0 + $0xa8] sm:$0xff]
  %v61 = vld [vmem:[%s0 + $0xb0] sm:$0xff]
  %v62 = vld [vmem:[%s0 + $0xb8] sm:$0xff]
  %v63 = vld [vmem:[%s2] sm:$0xff]
  %v64 = vld [vmem:[%s2 + $0x8] sm:$0xff]
  %v65 = vld [vmem:[%s2 + $0x10] sm:$0xff]
  %v66 = vld [vmem:[%s2 + $0x18] sm:$0xff]
  %v67 = vld [vmem:[%s2 + $0x20] sm:$0xff]
  %v68 = vld [vmem:[%s2 + $0x28] sm:$0xff]
  %v69 = vld [vmem:[%s2 + $0x30] sm:$0xff]
  %v70 = vld [vmem:[%s2 + $0x38] sm:$0xff]
  %v71 = vld [vmem:[%s2 + $0x40] sm:$0xff]
  %v72 = vld [vmem:[%s2 + $0x48] sm:$0xff]
  %v73 = vld [vmem:[%s2 + $0x50] sm:$0xff]
  %v74 = vld [vmem:[%s2 + $0x58] sm:$0xff]
  %v75 = vld [vmem:[%s2 + $0x60] sm:$0xff]
  %v76 = vld [vmem:[%s2 + $0x68] sm:$0xff]
  %v77 = vld [vmem:[%s2 + $0x70] sm:$0xff]
  %v78 = vld [vmem:[%s2 + $0x78] sm:$0xff]
  %v79 = vld [vmem:[%s2 + $0x80] sm:$0xff]
  %v80 = vld [vmem:[%s2 + $0x88] sm:$0xff]
  %v81 = vld [vmem:[%s2 + $0x90] sm:$0xff]
  %v82 = vld [vmem:[%s2 + $0x98] sm:$0xff]
  %v83 = vld [vmem:[%s2 + $0xa0] sm:$0xff]
  %v84 = vld [vmem:[%s2 + $0xa8] sm:$0xff]
  %v85 = vld [vmem:[%s2 + $0xb0] sm:$0xff]
  %v86 = vld [vmem:[%s2 + $0xb8] sm:$0xff]
  %v87 = vld [vmem:[%s2 + $0xc0] sm:$0xff]
  %v88 = vld [vmem:[%s2 + $0xc8] sm:$0xff]
  %v89 = vld [vmem:[%s2 + $0xd0] sm:$0xff]
  %v90 = vld [vmem:[%s2 + $0xd8] sm:$0xff]
  %v91 = vld [vmem:[%s2 + $0xe0] sm:$0xff]
  %v92 = vld [vmem:[%s2 + $0xe8] sm:$0xff]
  %v93 = vld [vmem:[%s2 + $0xf0] sm:$0xff]
  %v94 = vld [vmem:[%s2 + $0xf8] sm:$0xff]
  %v95 = vld [vmem:[%s2 + $0x100] sm:$0xff]
  %v96 = vld [vmem:[%s2 + $0x108] sm:$0xff]
  %v97 = vld [vmem:[%s2 + $0x110] sm:$0xff]
  %v98 = vld [vmem:[%s2 + $0x118] sm:$0xff]
  %v99 = vld [vmem:[%s2 + $0x120] sm:$0xff]
  %v100 = vld [vmem:[%s2 + $0x128] sm:$0xff]
  %v101 = vld [vmem:[%s2 + $0x130] sm:$0xff]
  %v102 = vld [vmem:[%s2 + $0x138] sm:$0xff]
  %v103 = vld [vmem:[%s2 + $0x140] sm:$0xff]
  %v104 = vld [vmem:[%s2 + $0x148] sm:$0xff]
  %v105 = vld [vmem:[%s2 + $0x150] sm:$0xff]
  %v106 = vld [vmem:[%s2 + $0x158] sm:$0xff]
  %v107 = vld [vmem:[%s2 + $0x160] sm:$0xff]
  %v108 = vld [vmem:[%s2 + $0x168] sm:$0xff]
  %v109 = vld [vmem:[%s2 + $0x170] sm:$0xff]
  %v110 = vld [vmem:[%s2 + $0x178] sm:$0xff]
  %v111 = vld [vmem:[%s2 + $0x180] sm:$0xff]
  %v112 = vld [vmem:[%s2 + $0x188] sm:$0xff]
  %v113 = vld [vmem:[%s2 + $0x190] sm:$0xff]
  %v114 = vld [vmem:[%s2 + $0x198] sm:$0xff]
  %v115 = vld [vmem:[%s2 + $0x1a0] sm:$0xff]
  %v116 = vld [vmem:[%s2 + $0x1a8] sm:$0xff]
  %v117 = vld [vmem:[%s2 + $0x1b0] sm:$0xff]
  %v118 = vld [vmem:[%s2 + $0x1b8] sm:$0xff]
  %v119 = vld [vmem:[%s2 + $0x1c0] sm:$0xff]
  %v120 = vld [vmem:[%s2 + $0x1c8] sm:$0xff]
  %v121 = vld [vmem:[%s2 + $0x1d0] sm:$0xff]
  %v122 = vld [vmem:[%s2 + $0x1d8] sm:$0xff]
  %v123 = vld [vmem:[%s2 + $0x1e0] sm:$0xff]
  %v124 = vld [vmem:[%s2 + $0x1e8] sm:$0xff]
  %v125 = vld [vmem:[%s2 + $0x1f0] sm:$0xff]
  %v126 = vld [vmem:[%s2 + $0x1f8] sm:$0xff]
  %v127 = vld [vmem:[%s2 + $0x200] sm:$0xff]
  %v128 = vld [vmem:[%s2 + $0x208] sm:$0xff]
  %v129 = vld [vmem:[%s2 + $0x210] sm:$0xff]
  %v130 = vld [vmem:[%s2 + $0x218] sm:$0xff]
  %v131 = vld [vmem:[%s2 + $0x220] sm:$0xff]
  %v132 = vld [vmem:[%s2 + $0x228] sm:$0xff]
  %v133 = vld [vmem:[%s2 + $0x230] sm:$0xff]
  %v134 = vld [vmem:[%s2 + $0x238] sm:$0xff]
  %v135 = vld [vmem:[%s2 + $0x240] sm:$0xff]
  %v136 = vld [vmem:[%s2 + $0x248] sm:$0xff]
  %v137 = vld [vmem:[%s2 + $0x250] sm:$0xff]
  %v138 = vld [vmem:[%s2 + $0x258] sm:$0xff]
  %v139 = vld [vmem:[%s2 + $0x260] sm:$0xff]
  %v140 = vld [vmem:[%s2 + $0x268] sm:$0xff]
  %v141 = vld [vmem:[%s2 + $0x270] sm:$0xff]
  %v142 = vld [vmem:[%s2 + $0x278] sm:$0xff]
  %v143 = vld [vmem:[%s2 + $0x280] sm:$0xff]
  %v144 = vld [vmem:[%s2 + $0x288] sm:$0xff]
  %v145 = vld [vmem:[%s2 + $0x290] sm:$0xff]
  %v146 = vld [vmem:[%s2 + $0x298] sm:$0xff]
  %v147 = vld [vmem:[%s2 + $0x2a0] sm:$0xff]
  %v148 = vld [vmem:[%s2 + $0x2a8] sm:$0xff]
  %v149 = vld [vmem:[%s2 + $0x2b0] sm:$0xff]
  %v150 = vld [vmem:[%s2 + $0x2b8] sm:$0xff]
  %v151 = vld [vmem:[%s2 + $0x2c0] sm:$0xff]
  %v152 = vld [vmem:[%s2 + $0x2c8] sm:$0xff]
  %v153 = vld [vmem:[%s2 + $0x2d0] sm:$0xff]
  %v154 = vld [vmem:[%s2 + $0x2d8] sm:$0xff]
  %v155 = vld [vmem:[%s2 + $0x2e0] sm:$0xff]
  %v156 = vld [vmem:[%s2 + $0x2e8] sm:$0xff]
  %v157 = vld [vmem:[%s2 + $0x2f0] sm:$0xff]
  %v158 = vld [vmem:[%s2 + $0x2f8] sm:$0xff]
  %v159 = vld [vmem:[%s2 + $0x300] sm:$0xff]
  %v160 = vld [vmem:[%s2 + $0x308] sm:$0xff]
  %v161 = vld [vmem:[%s2 + $0x310] sm:$0xff]
  %v162 = vld [vmem:[%s2 + $0x318] sm:$0xff]
  %v163 = vld [vmem:[%s2 + $0x320] sm:$0xff]
  %v164 = vld [vmem:[%s2 + $0x328] sm:$0xff]
  %v165 = vld [vmem:[%s2 + $0x330] sm:$0xff]
  %v166 = vld [vmem:[%s2 + $0x338] sm:$0xff]
  %v167 = vld [vmem:[%s2 + $0x340] sm:$0xff]
  %v168 = vld [vmem:[%s2 + $0x348] sm:$0xff]
  %v169 = vld [vmem:[%s2 + $0x350] sm:$0xff]
  %v170 = vld [vmem:[%s2 + $0x358] sm:$0xff]
  %v171 = vld [vmem:[%s2 + $0x360] sm:$0xff]
  %v172 = vld [vmem:[%s2 + $0x368] sm:$0xff]
  %v173 = vld [vmem:[%s2 + $0x370] sm:$0xff]
  %v174 = vld [vmem:[%s2 + $0x378] sm:$0xff]
  %v175 = vld [vmem:[%s2 + $0x380] sm:$0xff]
  %v176 = vld [vmem:[%s2 + $0x388] sm:$0xff]
  %v177 = vld [vmem:[%s2 + $0x390] sm:$0xff]
  %v178 = vld [vmem:[%s2 + $0x398] sm:$0xff]
  %v179 = vld [vmem:[%s2 + $0x3a0] sm:$0xff]
  %v180 = vld [vmem:[%s2 + $0x3a8] sm:$0xff]
  %v181 = vld [vmem:[%s2 + $0x3b0] sm:$0xff]
  %v182 = vld [vmem:[%s2 + $0x3b8] sm:$0xff]
  %v183 = vld [vmem:[%s2 + $0x3c0] sm:$0xff]
  %v184 = vld [vmem:[%s2 + $0x3c8] sm:$0xff]
  %v185 = vld [vmem:[%s2 + $0x3d0] sm:$0xff]
  %v186 = vld [vmem:[%s2 + $0x3d8] sm:$0xff]
  %v187 = vld [vmem:[%s2 + $0x3e0] sm:$0xff]
  %v188 = vld [vmem:[%s2 + $0x3e8] sm:$0xff]
  %v189 = vld [vmem:[%s2 + $0x3f0] sm:$0xff]
  %v190 = vld [vmem:[%s2 + $0x3f8] sm:$0xff]
  %v191 = vld [vmem:[%s2 + $0x400] sm:$0xff]
  %v192 = vld [vmem:[%s2 + $0x408] sm:$0xff]
  %v193 = vld [vmem:[%s2 + $0x410] sm:$0xff]
  %v194 = vld [vmem:[%s2 + $0x418] sm:$0xff]
  %v195 = vld [vmem:[%s2 + $0x420] sm:$0xff]
  %v196 = vld [vmem:[%s2 + $0x428] sm:$0xff]
  %v197 = vld [vmem:[%s2 + $0x430] sm:$0xff]
  %v198 = vld [vmem:[%s2 + $0x438] sm:$0xff]
  %v199 = vld [vmem:[%s2 + $0x440] sm:$0xff]
  %v200 = vld [vmem:[%s2 + $0x448] sm:$0xff]
  %v201 = vld [vmem:[%s2 + $0x450] sm:$0xff]
  %v202 = vld [vmem:[%s2 + $0x458] sm:$0xff]
  %v203 = vld [vmem:[%s2 + $0x460] sm:$0xff]
  %v204 = vld [vmem:[%s2 + $0x468] sm:$0xff]
  %v205 = vld [vmem:[%s2 + $0x470] sm:$0xff]
  %v206 = vld [vmem:[%s2 + $0x478] sm:$0xff]
  %v207 = vld [vmem:[%s2 + $0x480] sm:$0xff]
  %v208 = vld [vmem:[%s2 + $0x488] sm:$0xff]
  %v209 = vld [vmem:[%s2 + $0x490] sm:$0xff]
  %v210 = vld [vmem:[%s2 + $0x498] sm:$0xff]
  %v211 = vld [vmem:[%s2 + $0x4a0] sm:$0xff]
  %v212 = vld [vmem:[%s2 + $0x4a8] sm:$0xff]
  %v213 = vld [vmem:[%s2 + $0x4b0] sm:$0xff]
  %v214 = vld [vmem:[%s2 + $0x4b8] sm:$0xff]
  %v215 = vld [vmem:[%s2 + $0x4c0] sm:$0xff]
  %v216 = vld [vmem:[%s2 + $0x4c8] sm:$0xff]
  %v217 = vld [vmem:[%s2 + $0x4d0] sm:$0xff]
  %v218 = vld [vmem:[%s2 + $0x4d8] sm:$0xff]
  %v219 = vld [vmem:[%s2 + $0x4e0] sm:$0xff]
  %v220 = vld [vmem:[%s2 + $0x4e8] sm:$0xff]
  %v221 = vld [vmem:[%s2 + $0x4f0] sm:$0xff]
  %v222 = vld [vmem:[%s2 + $0x4f8] sm:$0xff]
  %v223 = vld [vmem:[%s2 + $0x500] sm:$0xff]
  %v224 = vld [vmem:[%s2 + $0x508] sm:$0xff]
  %v225 = vld [vmem:[%s2 + $0x510] sm:$0xff]
  %v226 = vld [vmem:[%s2 + $0x518] sm:$0xff]
  %v227 = vld [vmem:[%s2 + $0x520] sm:$0xff]
  %v228 = vld [vmem:[%s2 + $0x528] sm:$0xff]
  %v229 = vld [vmem:[%s2 + $0x530] sm:$0xff]
  %v230 = vld [vmem:[%s2 + $0x538] sm:$0xff]
  %v231 = vld [vmem:[%s2 + $0x540] sm:$0xff]
  %v232 = vld [vmem:[%s2 + $0x548] sm:$0xff]
  %v233 = vld [vmem:[%s2 + $0x550] sm:$0xff]
  %v234 = vld [vmem:[%s2 + $0x558] sm:$0xff]
  %v235 = vld [vmem:[%s2 + $0x560] sm:$0xff]
  %v236 = vld [vmem:[%s2 + $0x568] sm:$0xff]
  %v237 = vld [vmem:[%s2 + $0x570] sm:$0xff]
  %v238 = vld [vmem:[%s2 + $0x578] sm:$0xff]
  %v239 = vld [vmem:[%s2 + $0x580] sm:$0xff]
  %v240 = vld [vmem:[%s2 + $0x588] sm:$0xff]
  %v241 = vld [vmem:[%s2 + $0x590] sm:$0xff]
  %v242 = vld [vmem:[%s2 + $0x598] sm:$0xff]
  %v243 = vld [vmem:[%s2 + $0x5a0] sm:$0xff]
  %v244 = vld [vmem:[%s2 + $0x5a8] sm:$0xff]
  %v245 = vld [vmem:[%s2 + $0x5b0] sm:$0xff]
  %v246 = vld [vmem:[%s2 + $0x5b8] sm:$0xff]
  %v247 = vld [vmem:[%s2 + $0x5c0] sm:$0xff]
  %v248 = vld [vmem:[%s2 + $0x5c8] sm:$0xff]
  %v249 = vld [vmem:[%s2 + $0x5d0] sm:$0xff]
  %v250 = vld [vmem:[%s2 + $0x5d8] sm:$0xff]
  %v251 = vld [vmem:[%s2 + $0x5e0] sm:$0xff]
  %v252 = vld [vmem:[%s2 + $0x5e8] sm:$0xff]
  %v253 = vld [vmem:[%s2 + $0x5f0] sm:$0xff]
  %v254 = vld [vmem:[%s2 + $0x5f8] sm:$0xff]
  %v255 = vld [vmem:[%s2 + $0x600] sm:$0xff]
  %v256 = vld [vmem:[%s2 + $0x608] sm:$0xff]
  %v257 = vld [vmem:[%s2 + $0x610] sm:$0xff]
  %v258 = vld [vmem:[%s2 + $0x618] sm:$0xff]
  %v259 = vld [vmem:[%s2 + $0x620] sm:$0xff]
  %v260 = vld [vmem:[%s2 + $0x628] sm:$0xff]
  %v261 = vld [vmem:[%s2 + $0x630] sm:$0xff]
  %v262 = vld [vmem:[%s2 + $0x638] sm:$0xff]
  %v263 = vld [vmem:[%s2 + $0x640] sm:$0xff]
  %v264 = vld [vmem:[%s2 + $0x648] sm:$0xff]
  %v265 = vld [vmem:[%s2 + $0x650] sm:$0xff]
  %v266 = vld [vmem:[%s2 + $0x658] sm:$0xff]
  %v267 = vld [vmem:[%s2 + $0x660] sm:$0xff]
  %v268 = vld [vmem:[%s2 + $0x668] sm:$0xff]
  %v269 = vld [vmem:[%s2 + $0x670] sm:$0xff]
  %v270 = vld [vmem:[%s2 + $0x678] sm:$0xff]
  %v271 = vld [vmem:[%s2 + $0x680] sm:$0xff]
  %v272 = vld [vmem:[%s2 + $0x688] sm:$0xff]
  %v273 = vld [vmem:[%s2 + $0x690] sm:$0xff]
  %v274 = vld [vmem:[%s2 + $0x698] sm:$0xff]
  %v275 = vld [vmem:[%s2 + $0x6a0] sm:$0xff]
  %v276 = vld [vmem:[%s2 + $0x6a8] sm:$0xff]
  %v277 = vld [vmem:[%s2 + $0x6b0] sm:$0xff]
  %v278 = vld [vmem:[%s2 + $0x6b8] sm:$0xff]
  %v279 = vld [vmem:[%s2 + $0x6c0] sm:$0xff]
  %v280 = vld [vmem:[%s2 + $0x6c8] sm:$0xff]
  %v281 = vld [vmem:[%s2 + $0x6d0] sm:$0xff]
  %v282 = vld [vmem:[%s2 + $0x6d8] sm:$0xff]
  %v283 = vld [vmem:[%s2 + $0x6e0] sm:$0xff]
  %v284 = vld [vmem:[%s2 + $0x6e8] sm:$0xff]
  %v285 = vld [vmem:[%s2 + $0x6f0] sm:$0xff]
  %v286 = vld [vmem:[%s2 + $0x6f8] sm:$0xff]
  %v287 = vld [vmem:[%s2 + $0x700] sm:$0xff]
  %v288 = vld [vmem:[%s2 + $0x708] sm:$0xff]
  %v289 = vld [vmem:[%s2 + $0x710] sm:$0xff]
  %v290 = vld [vmem:[%s2 + $0x718] sm:$0xff]
  %v291 = vld [vmem:[%s2 + $0x720] sm:$0xff]
  %v292 = vld [vmem:[%s2 + $0x728] sm:$0xff]
  %v293 = vld [vmem:[%s2 + $0x730] sm:$0xff]
  %v294 = vld [vmem:[%s2 + $0x738] sm:$0xff]
  %v295 = vld [vmem:[%s2 + $0x740] sm:$0xff]
  %v296 = vld [vmem:[%s2 + $0x748] sm:$0xff]
  %v297 = vld [vmem:[%s2 + $0x750] sm:$0xff]
  %v298 = vld [vmem:[%s2 + $0x758] sm:$0xff]
  %v299 = vld [vmem:[%s2 + $0x760] sm:$0xff]
  %v300 = vld [vmem:[%s2 + $0x768] sm:$0xff]
  %v301 = vld [vmem:[%s2 + $0x770] sm:$0xff]
  %v302 = vld [vmem:[%s2 + $0x778] sm:$0xff]
  %v303 = vld [vmem:[%s2 + $0x780] sm:$0xff]
  %v304 = vld [vmem:[%s2 + $0x788] sm:$0xff]
  %v305 = vld [vmem:[%s2 + $0x790] sm:$0xff]
  %v306 = vld [vmem:[%s2 + $0x798] sm:$0xff]
  %v307 = vld [vmem:[%s2 + $0x7a0] sm:$0xff]
  %v308 = vld [vmem:[%s2 + $0x7a8] sm:$0xff]
  %v309 = vld [vmem:[%s2 + $0x7b0] sm:$0xff]
  %v310 = vld [vmem:[%s2 + $0x7b8] sm:$0xff]
  %v311 = vld [vmem:[%s2 + $0x7c0] sm:$0xff]
  %v312 = vld [vmem:[%s2 + $0x7c8] sm:$0xff]
  %v313 = vld [vmem:[%s2 + $0x7d0] sm:$0xff]
  %v314 = vld [vmem:[%s2 + $0x7d8] sm:$0xff]
  %v315 = vld [vmem:[%s2 + $0x7e0] sm:$0xff]
  %v316 = vld [vmem:[%s2 + $0x7e8] sm:$0xff]
  %v317 = vld [vmem:[%s2 + $0x7f0] sm:$0xff]
  %v318 = vld [vmem:[%s2 + $0x7f8] sm:$0xff]
  %v319 = vld [vmem:[%s2 + $0x800] sm:$0xff]
  %v320 = vld [vmem:[%s2 + $0x808] sm:$0xff]
  %v321 = vld [vmem:[%s2 + $0x810] sm:$0xff]
  %v322 = vld [vmem:[%s2 + $0x818] sm:$0xff]
  %v323 = vld [vmem:[%s2 + $0x820] sm:$0xff]
  %v324 = vld [vmem:[%s2 + $0x828] sm:$0xff]
  %v325 = vld [vmem:[%s2 + $0x830] sm:$0xff]
  %v326 = vld [vmem:[%s2 + $0x838] sm:$0xff]
  %v327 = vld [vmem:[%s2 + $0x840] sm:$0xff]
  %v328 = vld [vmem:[%s2 + $0x848] sm:$0xff]
  %v329 = vld [vmem:[%s2 + $0x850] sm:$0xff]
  %v330 = vld [vmem:[%s2 + $0x858] sm:$0xff]
  %v331 = vld [vmem:[%s2 + $0x860] sm:$0xff]
  %v332 = vld [vmem:[%s2 + $0x868] sm:$0xff]
  %v333 = vld [vmem:[%s2 + $0x870] sm:$0xff]
  %v334 = vld [vmem:[%s2 + $0x878] sm:$0xff]
  %v335 = vld [vmem:[%s2 + $0x880] sm:$0xff]
  %v336 = vld [vmem:[%s2 + $0x888] sm:$0xff]
  %v337 = vld [vmem:[%s2 + $0x890] sm:$0xff]
  %v338 = vld [vmem:[%s2 + $0x898] sm:$0xff]
  %v339 = vld [vmem:[%s2 + $0x8a0] sm:$0xff]
  %v340 = vld [vmem:[%s2 + $0x8a8] sm:$0xff]
  %v341 = vld [vmem:[%s2 + $0x8b0] sm:$0xff]
  %v342 = vld [vmem:[%s2 + $0x8b8] sm:$0xff]
  %v343 = vld [vmem:[%s2 + $0x8c0] sm:$0xff]
  %v344 = vld [vmem:[%s2 + $0x8c8] sm:$0xff]
  %v345 = vld [vmem:[%s2 + $0x8d0] sm:$0xff]
  %v346 = vld [vmem:[%s2 + $0x8d8] sm:$0xff]
  %v347 = vld [vmem:[%s2 + $0x8e0] sm:$0xff]
  %v348 = vld [vmem:[%s2 + $0x8e8] sm:$0xff]
  %v349 = vld [vmem:[%s2 + $0x8f0] sm:$0xff]
  %v350 = vld [vmem:[%s2 + $0x8f8] sm:$0xff]
  %v351 = vld [vmem:[%s2 + $0x900] sm:$0xff]
  %v352 = vld [vmem:[%s2 + $0x908] sm:$0xff]
  %v353 = vld [vmem:[%s2 + $0x910] sm:$0xff]
  %v354 = vld [vmem:[%s2 + $0x918] sm:$0xff]
  %v355 = vld [vmem:[%s2 + $0x920] sm:$0xff]
  %v356 = vld [vmem:[%s2 + $0x928] sm:$0xff]
  %v357 = vld [vmem:[%s2 + $0x930] sm:$0xff]
  %v358 = vld [vmem:[%s2 + $0x938] sm:$0xff]
  %v359 = vld [vmem:[%s2 + $0x940] sm:$0xff]
  %v360 = vld [vmem:[%s2 + $0x948] sm:$0xff]
  %v361 = vld [vmem:[%s2 + $0x950] sm:$0xff]
  %v362 = vld [vmem:[%s2 + $0x958] sm:$0xff]
  %v363 = vld [vmem:[%s2 + $0x960] sm:$0xff]
  %v364 = vld [vmem:[%s2 + $0x968] sm:$0xff]
  %v365 = vld [vmem:[%s2 + $0x970] sm:$0xff]
  %v366 = vld [vmem:[%s2 + $0x978] sm:$0xff]
  %v367 = vld [vmem:[%s2 + $0x980] sm:$0xff]
  %v368 = vld [vmem:[%s2 + $0x988] sm:$0xff]
  %v369 = vld [vmem:[%s2 + $0x990] sm:$0xff]
  %v370 = vld [vmem:[%s2 + $0x998] sm:$0xff]
  %v371 = vld [vmem:[%s2 + $0x9a0] sm:$0xff]
  %v372 = vld [vmem:[%s2 + $0x9a8] sm:$0xff]
  %v373 = vld [vmem:[%s2 + $0x9b0] sm:$0xff]
  %v374 = vld [vmem:[%s2 + $0x9b8] sm:$0xff]
  %v375 = vld [vmem:[%s2 + $0x9c0] sm:$0xff]
  %v376 = vld [vmem:[%s2 + $0x9c8] sm:$0xff]
  %v377 = vld [vmem:[%s2 + $0x9d0] sm:$0xff]
  %v378 = vld [vmem:[%s2 + $0x9d8] sm:$0xff]
  %v379 = vld [vmem:[%s2 + $0x9e0] sm:$0xff]
  %v380 = vld [vmem:[%s2 + $0x9e8] sm:$0xff]
  %v381 = vld [vmem:[%s2 + $0x9f0] sm:$0xff]
  %v382 = vld [vmem:[%s2 + $0x9f8] sm:$0xff]
  %v383 = vld [vmem:[%s2 + $0xa00] sm:$0xff]
  %v384 = vld [vmem:[%s2 + $0xa08] sm:$0xff]
  %v385 = vld [vmem:[%s2 + $0xa10] sm:$0xff]
  %v386 = vld [vmem:[%s2 + $0xa18] sm:$0xff]
  %v387 = vld [vmem:[%s2 + $0xa20] sm:$0xff]
  %v388 = vld [vmem:[%s2 + $0xa28] sm:$0xff]
  %v389 = vld [vmem:[%s2 + $0xa30] sm:$0xff]
  %v390 = vld [vmem:[%s2 + $0xa38] sm:$0xff]
  %v391 = vld [vmem:[%s2 + $0xa40] sm:$0xff]
  %v392 = vld [vmem:[%s2 + $0xa48] sm:$0xff]
  %v393 = vld [vmem:[%s2 + $0xa50] sm:$0xff]
  %v394 = vld [vmem:[%s2 + $0xa58] sm:$0xff]
  %v395 = vld [vmem:[%s2 + $0xa60] sm:$0xff]
  %v396 = vld [vmem:[%s2 + $0xa68] sm:$0xff]
  %v397 = vld [vmem:[%s2 + $0xa70] sm:$0xff]
  %v398 = vld [vmem:[%s2 + $0xa78] sm:$0xff]
  %v399 = vld [vmem:[%s2 + $0xa80] sm:$0xff]
  %v400 = vld [vmem:[%s2 + $0xa88] sm:$0xff]
  %v401 = vld [vmem:[%s2 + $0xa90] sm:$0xff]
  %v402 = vld [vmem:[%s2 + $0xa98] sm:$0xff]
  %v403 = vld [vmem:[%s2 + $0xaa0] sm:$0xff]
  %v404 = vld [vmem:[%s2 + $0xaa8] sm:$0xff]
  %v405 = vld [vmem:[%s2 + $0xab0] sm:$0xff]
  %v406 = vld [vmem:[%s2 + $0xab8] sm:$0xff]
  %v407 = vld [vmem:[%s2 + $0xac0] sm:$0xff]
  %v408 = vld [vmem:[%s2 + $0xac8] sm:$0xff]
  %v409 = vld [vmem:[%s2 + $0xad0] sm:$0xff]
  %v410 = vld [vmem:[%s2 + $0xad8] sm:$0xff]
  %v411 = vld [vmem:[%s2 + $0xae0] sm:$0xff]
  %v412 = vld [vmem:[%s2 + $0xae8] sm:$0xff]
  %v413 = vld [vmem:[%s2 + $0xaf0] sm:$0xff]
  %v414 = vld [vmem:[%s2 + $0xaf8] sm:$0xff]
  %v415 = vld [vmem:[%s2 + $0xb00] sm:$0xff]
  %v416 = vld [vmem:[%s2 + $0xb08] sm:$0xff]
  %v417 = vld [vmem:[%s2 + $0xb10] sm:$0xff]
  %v418 = vld [vmem:[%s2 + $0xb18] sm:$0xff]
  %v419 = vld [vmem:[%s2 + $0xb20] sm:$0xff]
  %v420 = vld [vmem:[%s2 + $0xb28] sm:$0xff]
  %v421 = vld [vmem:[%s2 + $0xb30] sm:$0xff]
  %v422 = vld [vmem:[%s2 + $0xb38] sm:$0xff]
  %v423 = vld [vmem:[%s2 + $0xb40] sm:$0xff]
  %v424 = vld [vmem:[%s2 + $0xb48] sm:$0xff]
  %v425 = vld [vmem:[%s2 + $0xb50] sm:$0xff]
  %v426 = vld [vmem:[%s2 + $0xb58] sm:$0xff]
  %v427 = vld [vmem:[%s2 + $0xb60] sm:$0xff]
  %v428 = vld [vmem:[%s2 + $0xb68] sm:$0xff]
  %v429 = vld [vmem:[%s2 + $0xb70] sm:$0xff]
  %v430 = vld [vmem:[%s2 + $0xb78] sm:$0xff]
  %v431 = vld [vmem:[%s2 + $0xb80] sm:$0xff]
  %v432 = vld [vmem:[%s2 + $0xb88] sm:$0xff]
  %v433 = vld [vmem:[%s2 + $0xb90] sm:$0xff]
  %v434 = vld [vmem:[%s2 + $0xb98] sm:$0xff]
  %v435 = vld [vmem:[%s2 + $0xba0] sm:$0xff]
  %v436 = vld [vmem:[%s2 + $0xba8] sm:$0xff]
  %v437 = vld [vmem:[%s2 + $0xbb0] sm:$0xff]
  %v438 = vld [vmem:[%s2 + $0xbb8] sm:$0xff]
  %v439 = vld [vmem:[%s2 + $0xbc0] sm:$0xff]
  %v440 = vld [vmem:[%s2 + $0xbc8] sm:$0xff]
  %v441 = vld [vmem:[%s2 + $0xbd0] sm:$0xff]
  %v442 = vld [vmem:[%s2 + $0xbd8] sm:$0xff]
  %v443 = vld [vmem:[%s2 + $0xbe0] sm:$0xff]
  %v444 = vld [vmem:[%s2 + $0xbe8] sm:$0xff]
  %v445 = vld [vmem:[%s2 + $0xbf0] sm:$0xff]
  %v446 = vld [vmem:[%s2 + $0xbf8] sm:$0xff]
  %v447 = vld [vmem:[%s2 + $0xc00] sm:$0xff]
  %v448 = vld [vmem:[%s2 + $0xc08] sm:$0xff]
  %v449 = vld [vmem:[%s2 + $0xc10] sm:$0xff]
  %v450 = vld [vmem:[%s2 + $0xc18] sm:$0xff]
  %v451 = vld [vmem:[%s2 + $0xc20] sm:$0xff]
  %v452 = vld [vmem:[%s2 + $0xc28] sm:$0xff]
  %v453 = vld [vmem:[%s2 + $0xc30] sm:$0xff]
  %v454 = vld [vmem:[%s2 + $0xc38] sm:$0xff]
  %v455 = vld [vmem:[%s2 + $0xc40] sm:$0xff]
  %v456 = vld [vmem:[%s2 + $0xc48] sm:$0xff]
  %v457 = vld [vmem:[%s2 + $0xc50] sm:$0xff]
  %v458 = vld [vmem:[%s2 + $0xc58] sm:$0xff]
  %v459 = vld [vmem:[%s2 + $0xc60] sm:$0xff]
  %v460 = vld [vmem:[%s2 + $0xc68] sm:$0xff]
  %v461 = vld [vmem:[%s2 + $0xc70] sm:$0xff]
  %v462 = vld [vmem:[%s2 + $0xc78] sm:$0xff]
  %v463 = vld [vmem:[%s2 + $0xc80] sm:$0xff]
  %v464 = vld [vmem:[%s2 + $0xc88] sm:$0xff]
  %v465 = vld [vmem:[%s2 + $0xc90] sm:$0xff]
  %v466 = vld [vmem:[%s2 + $0xc98] sm:$0xff]
  %v467 = vld [vmem:[%s2 + $0xca0] sm:$0xff]
  %v468 = vld [vmem:[%s2 + $0xca8] sm:$0xff]
  %v469 = vld [vmem:[%s2 + $0xcb0] sm:$0xff]
  %v470 = vld [vmem:[%s2 + $0xcb8] sm:$0xff]
  %v471 = vld [vmem:[%s2 + $0xcc0] sm:$0xff]
  %v472 = vld [vmem:[%s2 + $0xcc8] sm:$0xff]
  %v473 = vld [vmem:[%s2 + $0xcd0] sm:$0xff]
  %v474 = vld [vmem:[%s2 + $0xcd8] sm:$0xff]
  %v475 = vld [vmem:[%s2 + $0xce0] sm:$0xff]
  %v476 = vld [vmem:[%s2 + $0xce8] sm:$0xff]
  %v477 = vld [vmem:[%s2 + $0xcf0] sm:$0xff]
  %v478 = vld [vmem:[%s2 + $0xcf8] sm:$0xff]
  %v479 = vld [vmem:[%s2 + $0xd00] sm:$0xff]
  %v480 = vld [vmem:[%s2 + $0xd08] sm:$0xff]
  %v481 = vld [vmem:[%s2 + $0xd10] sm:$0xff]
  %v482 = vld [vmem:[%s2 + $0xd18] sm:$0xff]
  %v483 = vld [vmem:[%s2 + $0xd20] sm:$0xff]
  %v484 = vld [vmem:[%s2 + $0xd28] sm:$0xff]
  %v485 = vld [vmem:[%s2 + $0xd30] sm:$0xff]
  %v486 = vld [vmem:[%s2 + $0xd38] sm:$0xff]
  %v487 = vld [vmem:[%s2 + $0xd40] sm:$0xff]
  %v488 = vld [vmem:[%s2 + $0xd48] sm:$0xff]
  %v489 = vld [vmem:[%s2 + $0xd50] sm:$0xff]
  %v490 = vld [vmem:[%s2 + $0xd58] sm:$0xff]
  %v491 = vld [vmem:[%s2 + $0xd60] sm:$0xff]
  %v492 = vld [vmem:[%s2 + $0xd68] sm:$0xff]
  %v493 = vld [vmem:[%s2 + $0xd70] sm:$0xff]
  %v494 = vld [vmem:[%s2 + $0xd78] sm:$0xff]
  %v495 = vld [vmem:[%s2 + $0xd80] sm:$0xff]
  %v496 = vld [vmem:[%s2 + $0xd88] sm:$0xff]
  %v497 = vld [vmem:[%s2 + $0xd90] sm:$0xff]
  %v498 = vld [vmem:[%s2 + $0xd98] sm:$0xff]
  %v499 = vld [vmem:[%s2 + $0xda0] sm:$0xff]
  %v500 = vld [vmem:[%s2 + $0xda8] sm:$0xff]
  %v501 = vld [vmem:[%s2 + $0xdb0] sm:$0xff]
  %v502 = vld [vmem:[%s2 + $0xdb8] sm:$0xff]
  %v503 = vld [vmem:[%s2 + $0xdc0] sm:$0xff]
  %v504 = vld [vmem:[%s2 + $0xdc8] sm:$0xff]
  %v505 = vld [vmem:[%s2 + $0xdd0] sm:$0xff]
  %v506 = vld [vmem:[%s2 + $0xdd8] sm:$0xff]
  %v507 = vld [vmem:[%s2 + $0xde0] sm:$0xff]
  %v508 = vld [vmem:[%s2 + $0xde8] sm:$0xff]
  %v509 = vld [vmem:[%s2 + $0xdf0] sm:$0xff]
  %v510 = vld [vmem:[%s2 + $0xdf8] sm:$0xff]
  %v511 = vld [vmem:[%s2 + $0xe00] sm:$0xff]
  %v512 = vld [vmem:[%s2 + $0xe08] sm:$0xff]
  %v513 = vld [vmem:[%s2 + $0xe10] sm:$0xff]
  %v514 = vld [vmem:[%s2 + $0xe18] sm:$0xff]
  %v515 = vld [vmem:[%s2 + $0xe20] sm:$0xff]
  %v516 = vld [vmem:[%s2 + $0xe28] sm:$0xff]
  %v517 = vld [vmem:[%s2 + $0xe30] sm:$0xff]
  %v518 = vld [vmem:[%s2 + $0xe38] sm:$0xff]
  %v519 = vld [vmem:[%s2 + $0xe40] sm:$0xff]
  %v520 = vld [vmem:[%s2 + $0xe48] sm:$0xff]
  %v521 = vld [vmem:[%s2 + $0xe50] sm:$0xff]
  %v522 = vld [vmem:[%s2 + $0xe58] sm:$0xff]
  %v523 = vld [vmem:[%s2 + $0xe60] sm:$0xff]
  %v524 = vld [vmem:[%s2 + $0xe68] sm:$0xff]
  %v525 = vld [vmem:[%s2 + $0xe70] sm:$0xff]
  %v526 = vld [vmem:[%s2 + $0xe78] sm:$0xff]
  %v527 = vld [vmem:[%s2 + $0xe80] sm:$0xff]
  %v528 = vld [vmem:[%s2 + $0xe88] sm:$0xff]
  %v529 = vld [vmem:[%s2 + $0xe90] sm:$0xff]
  %v530 = vld [vmem:[%s2 + $0xe98] sm:$0xff]
  %v531 = vld [vmem:[%s2 + $0xea0] sm:$0xff]
  %v532 = vld [vmem:[%s2 + $0xea8] sm:$0xff]
  %v533 = vld [vmem:[%s2 + $0xeb0] sm:$0xff]
  %v534 = vld [vmem:[%s2 + $0xeb8] sm:$0xff]
  %v535 = vld [vmem:[%s2 + $0xec0] sm:$0xff]
  %v536 = vld [vmem:[%s2 + $0xec8] sm:$0xff]
  %v537 = vld [vmem:[%s2 + $0xed0] sm:$0xff]
  %v538 = vld [vmem:[%s2 + $0xed8] sm:$0xff]
  %v539 = vld [vmem:[%s2 + $0xee0] sm:$0xff]
  %v540 = vld [vmem:[%s2 + $0xee8] sm:$0xff]
  %v541 = vld [vmem:[%s2 + $0xef0] sm:$0xff]
  %v542 = vld [vmem:[%s2 + $0xef8] sm:$0xff]
  %v543 = vld [vmem:[%s2 + $0xf00] sm:$0xff]
  %v544 = vld [vmem:[%s2 + $0xf08] sm:$0xff]
  %v545 = vld [vmem:[%s2 + $0xf10] sm:$0xff]
  %v546 = vld [vmem:[%s2 + $0xf18] sm:$0xff]
  %v547 = vld [vmem:[%s2 + $0xf20] sm:$0xff]
  %v548 = vld [vmem:[%s2 + $0xf28] sm:$0xff]
  %v549 = vld [vmem:[%s2 + $0xf30] sm:$0xff]
  %v550 = vld [vmem:[%s2 + $0xf38] sm:$0xff]
  %v551 = vld [vmem:[%s2 + $0xf40] sm:$0xff]
  %v552 = vld [vmem:[%s2 + $0xf48] sm:$0xff]
  %v553 = vld [vmem:[%s2 + $0xf50] sm:$0xff]
  %v554 = vld [vmem:[%s2 + $0xf58] sm:$0xff]
  %v555 = vld [vmem:[%s2 + $0xf60] sm:$0xff]
  %v556 = vld [vmem:[%s2 + $0xf68] sm:$0xff]
  %v557 = vld [vmem:[%s2 + $0xf70] sm:$0xff]
  %v558 = vld [vmem:[%s2 + $0xf78] sm:$0xff]
  %v559 = vld [vmem:[%s2 + $0xf80] sm:$0xff]
  %v560 = vld [vmem:[%s2 + $0xf88] sm:$0xff]
  %v561 = vld [vmem:[%s2 + $0xf90] sm:$0xff]
  %v562 = vld [vmem:[%s2 + $0xf98] sm:$0xff]
  %v563 = vld [vmem:[%s2 + $0xfa0] sm:$0xff]
  %v564 = vld [vmem:[%s2 + $0xfa8] sm:$0xff]
  %v565 = vld [vmem:[%s2 + $0xfb0] sm:$0xff]
  %v566 = vld [vmem:[%s2 + $0xfb8] sm:$0xff]
  %v567 = vld [vmem:[%s2 + $0xfc0] sm:$0xff]
  %v568 = vld [vmem:[%s2 + $0xfc8] sm:$0xff]
  %v569 = vld [vmem:[%s2 + $0xfd0] sm:$0xff]
  %v570 = vld [vmem:[%s2 + $0xfd8] sm:$0xff]
  %v571 = vld [vmem:[%s2 + $0xfe0] sm:$0xff]
  %v572 = vld [vmem:[%s2 + $0xfe8] sm:$0xff]
  %v573 = vld [vmem:[%s2 + $0xff0] sm:$0xff]
  %v574 = vld [vmem:[%s2 + $0xff8] sm:$0xff]
  %v575 = vld [vmem:[%s2 + $0x1000] sm:$0xff]
  %v576 = vld [vmem:[%s2 + $0x1008] sm:$0xff]
  %v577 = vld [vmem:[%s2 + $0x1010] sm:$0xff]
  %v578 = vld [vmem:[%s2 + $0x1018] sm:$0xff]
  %v579 = vld [vmem:[%s2 + $0x1020] sm:$0xff]
  %v580 = vld [vmem:[%s2 + $0x1028] sm:$0xff]
  %v581 = vld [vmem:[%s2 + $0x1030] sm:$0xff]
  %v582 = vld [vmem:[%s2 + $0x1038] sm:$0xff]
  %v583 = vld [vmem:[%s2 + $0x1040] sm:$0xff]
  %v584 = vld [vmem:[%s2 + $0x1048] sm:$0xff]
  %v585 = vld [vmem:[%s2 + $0x1050] sm:$0xff]
  %v586 = vld [vmem:[%s2 + $0x1058] sm:$0xff]
  %v587 = vld [vmem:[%s2 + $0x1060] sm:$0xff]
  %v588 = vld [vmem:[%s2 + $0x1068] sm:$0xff]
  %v589 = vld [vmem:[%s2 + $0x1070] sm:$0xff]
  %v590 = vld [vmem:[%s2 + $0x1078] sm:$0xff]
  %v591 = vld [vmem:[%s2 + $0x1080] sm:$0xff]
  %v592 = vld [vmem:[%s2 + $0x1088] sm:$0xff]
  %v593 = vld [vmem:[%s2 + $0x1090] sm:$0xff]
  %v594 = vld [vmem:[%s2 + $0x1098] sm:$0xff]
  %v595 = vld [vmem:[%s2 + $0x10a0] sm:$0xff]
  %v596 = vld [vmem:[%s2 + $0x10a8] sm:$0xff]
  %v597 = vld [vmem:[%s2 + $0x10b0] sm:$0xff]
  %v598 = vld [vmem:[%s2 + $0x10b8] sm:$0xff]
  %v599 = vld [vmem:[%s2 + $0x10c0] sm:$0xff]
  %v600 = vld [vmem:[%s2 + $0x10c8] sm:$0xff]
  %v601 = vld [vmem:[%s2 + $0x10d0] sm:$0xff]
  %v602 = vld [vmem:[%s2 + $0x10d8] sm:$0xff]
  %v603 = vld [vmem:[%s2 + $0x10e0] sm:$0xff]
  %v604 = vld [vmem:[%s2 + $0x10e8] sm:$0xff]
  %v605 = vld [vmem:[%s2 + $0x10f0] sm:$0xff]
  %v606 = vld [vmem:[%s2 + $0x10f8] sm:$0xff]
  %v607 = vld [vmem:[%s2 + $0x1100] sm:$0xff]
  %v608 = vld [vmem:[%s2 + $0x1108] sm:$0xff]
  %v609 = vld [vmem:[%s2 + $0x1110] sm:$0xff]
  %v610 = vld [vmem:[%s2 + $0x1118] sm:$0xff]
  %v611 = vld [vmem:[%s2 + $0x1120] sm:$0xff]
  %v612 = vld [vmem:[%s2 + $0x1128] sm:$0xff]
  %v613 = vld [vmem:[%s2 + $0x1130] sm:$0xff]
  %v614 = vld [vmem:[%s2 + $0x1138] sm:$0xff]
  %v615 = vld [vmem:[%s2 + $0x1140] sm:$0xff]
  %v616 = vld [vmem:[%s2 + $0x1148] sm:$0xff]
  %v617 = vld [vmem:[%s2 + $0x1150] sm:$0xff]
  %v618 = vld [vmem:[%s2 + $0x1158] sm:$0xff]
  %v619 = vld [vmem:[%s2 + $0x1160] sm:$0xff]
  %v620 = vld [vmem:[%s2 + $0x1168] sm:$0xff]
  %v621 = vld [vmem:[%s2 + $0x1170] sm:$0xff]
  %v622 = vld [vmem:[%s2 + $0x1178] sm:$0xff]
  %v623 = vld [vmem:[%s2 + $0x1180] sm:$0xff]
  %v624 = vld [vmem:[%s2 + $0x1188] sm:$0xff]
  %v625 = vld [vmem:[%s2 + $0x1190] sm:$0xff]
  %v626 = vld [vmem:[%s2 + $0x1198] sm:$0xff]
  %v627 = vld [vmem:[%s2 + $0x11a0] sm:$0xff]
  %v628 = vld [vmem:[%s2 + $0x11a8] sm:$0xff]
  %v629 = vld [vmem:[%s2 + $0x11b0] sm:$0xff]
  %v630 = vld [vmem:[%s2 + $0x11b8] sm:$0xff]
  %v631 = vld [vmem:[%s2 + $0x11c0] sm:$0xff]
  %v632 = vld [vmem:[%s2 + $0x11c8] sm:$0xff]
  %v633 = vld [vmem:[%s2 + $0x11d0] sm:$0xff]
  %v634 = vld [vmem:[%s2 + $0x11d8] sm:$0xff]
  %v635 = vld [vmem:[%s2 + $0x11e0] sm:$0xff]
  %v636 = vld [vmem:[%s2 + $0x11e8] sm:$0xff]
  %v637 = vld [vmem:[%s2 + $0x11f0] sm:$0xff]
  %v638 = vld [vmem:[%s2 + $0x11f8] sm:$0xff]
  %v639 = vld [vmem:[%s2 + $0x1200] sm:$0xff]
  %v640 = vld [vmem:[%s2 + $0x1208] sm:$0xff]
  %v641 = vld [vmem:[%s2 + $0x1210] sm:$0xff]
  %v642 = vld [vmem:[%s2 + $0x1218] sm:$0xff]
  %v643 = vld [vmem:[%s2 + $0x1220] sm:$0xff]
  %v644 = vld [vmem:[%s2 + $0x1228] sm:$0xff]
  %v645 = vld [vmem:[%s2 + $0x1230] sm:$0xff]
  %v646 = vld [vmem:[%s2 + $0x1238] sm:$0xff]
  %v647 = vld [vmem:[%s2 + $0x1240] sm:$0xff]
  %v648 = vld [vmem:[%s2 + $0x1248] sm:$0xff]
  %v649 = vld [vmem:[%s2 + $0x1250] sm:$0xff]
  %v650 = vld [vmem:[%s2 + $0x1258] sm:$0xff]
  %v651 = vld [vmem:[%s2 + $0x1260] sm:$0xff]
  %v652 = vld [vmem:[%s2 + $0x1268] sm:$0xff]
  %v653 = vld [vmem:[%s2 + $0x1270] sm:$0xff]
  %v654 = vld [vmem:[%s2 + $0x1278] sm:$0xff]
  %v655 = vld [vmem:[%s2 + $0x1280] sm:$0xff]
  %v656 = vld [vmem:[%s2 + $0x1288] sm:$0xff]
  %v657 = vld [vmem:[%s2 + $0x1290] sm:$0xff]
  %v658 = vld [vmem:[%s2 + $0x1298] sm:$0xff]
  %v659 = vld [vmem:[%s2 + $0x12a0] sm:$0xff]
  %v660 = vld [vmem:[%s2 + $0x12a8] sm:$0xff]
  %v661 = vld [vmem:[%s2 + $0x12b0] sm:$0xff]
  %v662 = vld [vmem:[%s2 + $0x12b8] sm:$0xff]
  %v663 = vld [vmem:[%s2 + $0x12c0] sm:$0xff]
  %v664 = vld [vmem:[%s2 + $0x12c8] sm:$0xff]
  %v665 = vld [vmem:[%s2 + $0x12d0] sm:$0xff]
  %v666 = vld [vmem:[%s2 + $0x12d8] sm:$0xff]
  %v667 = vld [vmem:[%s2 + $0x12e0] sm:$0xff]
  %v668 = vld [vmem:[%s2 + $0x12e8] sm:$0xff]
  %v669 = vld [vmem:[%s2 + $0x12f0] sm:$0xff]
  %v670 = vld [vmem:[%s2 + $0x12f8] sm:$0xff]
  %v671 = vld [vmem:[%s2 + $0x1300] sm:$0xff]
  %v672 = vld [vmem:[%s2 + $0x1308] sm:$0xff]
  %v673 = vld [vmem:[%s2 + $0x1310] sm:$0xff]
  %v674 = vld [vmem:[%s2 + $0x1318] sm:$0xff]
  %v675 = vld [vmem:[%s2 + $0x1320] sm:$0xff]
  %v676 = vld [vmem:[%s2 + $0x1328] sm:$0xff]
  %v677 = vld [vmem:[%s2 + $0x1330] sm:$0xff]
  %v678 = vld [vmem:[%s2 + $0x1338] sm:$0xff]
  %v679 = vld [vmem:[%s2 + $0x1340] sm:$0xff]
  %v680 = vld [vmem:[%s2 + $0x1348] sm:$0xff]
  %v681 = vld [vmem:[%s2 + $0x1350] sm:$0xff]
  %v682 = vld [vmem:[%s2 + $0x1358] sm:$0xff]
  %v683 = vld [vmem:[%s2 + $0x1360] sm:$0xff]
  %v684 = vld [vmem:[%s2 + $0x1368] sm:$0xff]
  %v685 = vld [vmem:[%s2 + $0x1370] sm:$0xff]
  %v686 = vld [vmem:[%s2 + $0x1378] sm:$0xff]
  %v687 = vld [vmem:[%s2 + $0x1380] sm:$0xff]
  %v688 = vld [vmem:[%s2 + $0x1388] sm:$0xff]
  %v689 = vld [vmem:[%s2 + $0x1390] sm:$0xff]
  %v690 = vld [vmem:[%s2 + $0x1398] sm:$0xff]
  %v691 = vld [vmem:[%s2 + $0x13a0] sm:$0xff]
  %v692 = vld [vmem:[%s2 + $0x13a8] sm:$0xff]
  %v693 = vld [vmem:[%s2 + $0x13b0] sm:$0xff]
  %v694 = vld [vmem:[%s2 + $0x13b8] sm:$0xff]
  %v695 = vld [vmem:[%s2 + $0x13c0] sm:$0xff]
  %v696 = vld [vmem:[%s2 + $0x13c8] sm:$0xff]
  %v697 = vld [vmem:[%s2 + $0x13d0] sm:$0xff]
  %v698 = vld [vmem:[%s2 + $0x13d8] sm:$0xff]
  %v699 = vld [vmem:[%s2 + $0x13e0] sm:$0xff]
  %v700 = vld [vmem:[%s2 + $0x13e8] sm:$0xff]
  %v701 = vld [vmem:[%s2 + $0x13f0] sm:$0xff]
  %v702 = vld [vmem:[%s2 + $0x13f8] sm:$0xff]
  %v703 = vld [vmem:[%s2 + $0x1400] sm:$0xff]
  %v704 = vld [vmem:[%s2 + $0x1408] sm:$0xff]
  %v705 = vld [vmem:[%s2 + $0x1410] sm:$0xff]
  %v706 = vld [vmem:[%s2 + $0x1418] sm:$0xff]
  %v707 = vld [vmem:[%s2 + $0x1420] sm:$0xff]
  %v708 = vld [vmem:[%s2 + $0x1428] sm:$0xff]
  %v709 = vld [vmem:[%s2 + $0x1430] sm:$0xff]
  %v710 = vld [vmem:[%s2 + $0x1438] sm:$0xff]
  %v711 = vld [vmem:[%s2 + $0x1440] sm:$0xff]
  %v712 = vld [vmem:[%s2 + $0x1448] sm:$0xff]
  %v713 = vld [vmem:[%s2 + $0x1450] sm:$0xff]
  %v714 = vld [vmem:[%s2 + $0x1458] sm:$0xff]
  %v715 = vld [vmem:[%s2 + $0x1460] sm:$0xff]
  %v716 = vld [vmem:[%s2 + $0x1468] sm:$0xff]
  %v717 = vld [vmem:[%s2 + $0x1470] sm:$0xff]
  %v718 = vld [vmem:[%s2 + $0x1478] sm:$0xff]
  %v719 = vld [vmem:[%s2 + $0x1480] sm:$0xff]
  %v720 = vld [vmem:[%s2 + $0x1488] sm:$0xff]
  %v721 = vld [vmem:[%s2 + $0x1490] sm:$0xff]
  %v722 = vld [vmem:[%s2 + $0x1498] sm:$0xff]
  %v723 = vld [vmem:[%s2 + $0x14a0] sm:$0xff]
  %v724 = vld [vmem:[%s2 + $0x14a8] sm:$0xff]
  %v725 = vld [vmem:[%s2 + $0x14b0] sm:$0xff]
  %v726 = vld [vmem:[%s2 + $0x14b8] sm:$0xff]
  %v727 = vld [vmem:[%s2 + $0x14c0] sm:$0xff]
  %v728 = vld [vmem:[%s2 + $0x14c8] sm:$0xff]
  %v729 = vld [vmem:[%s2 + $0x14d0] sm:$0xff]
  %v730 = vld [vmem:[%s2 + $0x14d8] sm:$0xff]
  %v731 = vld [vmem:[%s2 + $0x14e0] sm:$0xff]
  %v732 = vld [vmem:[%s2 + $0x14e8] sm:$0xff]
  %v733 = vld [vmem:[%s2 + $0x14f0] sm:$0xff]
  %v734 = vld [vmem:[%s2 + $0x14f8] sm:$0xff]
  %v735 = vld [vmem:[%s2 + $0x1500] sm:$0xff]
  %v736 = vld [vmem:[%s2 + $0x1508] sm:$0xff]
  %v737 = vld [vmem:[%s2 + $0x1510] sm:$0xff]
  %v738 = vld [vmem:[%s2 + $0x1518] sm:$0xff]
  %v739 = vld [vmem:[%s2 + $0x1520] sm:$0xff]
  %v740 = vld [vmem:[%s2 + $0x1528] sm:$0xff]
  %v741 = vld [vmem:[%s2 + $0x1530] sm:$0xff]
  %v742 = vld [vmem:[%s2 + $0x1538] sm:$0xff]
  %v743 = vld [vmem:[%s2 + $0x1540] sm:$0xff]
  %v744 = vld [vmem:[%s2 + $0x1548] sm:$0xff]
  %v745 = vld [vmem:[%s2 + $0x1550] sm:$0xff]
  %v746 = vld [vmem:[%s2 + $0x1558] sm:$0xff]
  %v747 = vld [vmem:[%s2 + $0x1560] sm:$0xff]
  %v748 = vld [vmem:[%s2 + $0x1568] sm:$0xff]
  %v749 = vld [vmem:[%s2 + $0x1570] sm:$0xff]
  %v750 = vld [vmem:[%s2 + $0x1578] sm:$0xff]
  %v751 = vld [vmem:[%s2 + $0x1580] sm:$0xff]
  %v752 = vld [vmem:[%s2 + $0x1588] sm:$0xff]
  %v753 = vld [vmem:[%s2 + $0x1590] sm:$0xff]
  %v754 = vld [vmem:[%s2 + $0x1598] sm:$0xff]
  %v755 = vld [vmem:[%s2 + $0x15a0] sm:$0xff]
  %v756 = vld [vmem:[%s2 + $0x15a8] sm:$0xff]
  %v757 = vld [vmem:[%s2 + $0x15b0] sm:$0xff]
  %v758 = vld [vmem:[%s2 + $0x15b8] sm:$0xff]
  %v759 = vld [vmem:[%s2 + $0x15c0] sm:$0xff]
  %v760 = vld [vmem:[%s2 + $0x15c8] sm:$0xff]
  %v761 = vld [vmem:[%s2 + $0x15d0] sm:$0xff]
  %v762 = vld [vmem:[%s2 + $0x15d8] sm:$0xff]
  %v763 = vld [vmem:[%s2 + $0x15e0] sm:$0xff]
  %v764 = vld [vmem:[%s2 + $0x15e8] sm:$0xff]
  %v765 = vld [vmem:[%s2 + $0x15f0] sm:$0xff]
  %v766 = vld [vmem:[%s2 + $0x15f8] sm:$0xff]
  %v767 = vld [vmem:[%s2 + $0x1600] sm:$0xff]
  %v768 = vld [vmem:[%s2 + $0x1608] sm:$0xff]
  %v769 = vld [vmem:[%s2 + $0x1610] sm:$0xff]
  %v770 = vld [vmem:[%s2 + $0x1618] sm:$0xff]
  %v771 = vld [vmem:[%s2 + $0x1620] sm:$0xff]
  %v772 = vld [vmem:[%s2 + $0x1628] sm:$0xff]
  %v773 = vld [vmem:[%s2 + $0x1630] sm:$0xff]
  %v774 = vld [vmem:[%s2 + $0x1638] sm:$0xff]
  %v775 = vld [vmem:[%s2 + $0x1640] sm:$0xff]
  %v776 = vld [vmem:[%s2 + $0x1648] sm:$0xff]
  %v777 = vld [vmem:[%s2 + $0x1650] sm:$0xff]
  %v778 = vld [vmem:[%s2 + $0x1658] sm:$0xff]
  %v779 = vld [vmem:[%s2 + $0x1660] sm:$0xff]
  %v780 = vld [vmem:[%s2 + $0x1668] sm:$0xff]
  %v781 = vld [vmem:[%s2 + $0x1670] sm:$0xff]
  %v782 = vld [vmem:[%s2 + $0x1678] sm:$0xff]
  %v783 = vld [vmem:[%s2 + $0x1680] sm:$0xff]
  %v784 = vld [vmem:[%s2 + $0x1688] sm:$0xff]
  %v785 = vld [vmem:[%s2 + $0x1690] sm:$0xff]
  %v786 = vld [vmem:[%s2 + $0x1698] sm:$0xff]
  %v787 = vld [vmem:[%s2 + $0x16a0] sm:$0xff]
  %v788 = vld [vmem:[%s2 + $0x16a8] sm:$0xff]
  %v789 = vld [vmem:[%s2 + $0x16b0] sm:$0xff]
  %v790 = vld [vmem:[%s2 + $0x16b8] sm:$0xff]
  %v791 = vld [vmem:[%s2 + $0x16c0] sm:$0xff]
  %v792 = vld [vmem:[%s2 + $0x16c8] sm:$0xff]
  %v793 = vld [vmem:[%s2 + $0x16d0] sm:$0xff]
  %v794 = vld [vmem:[%s2 + $0x16d8] sm:$0xff]
  %v795 = vld [vmem:[%s2 + $0x16e0] sm:$0xff]
  %v796 = vld [vmem:[%s2 + $0x16e8] sm:$0xff]
  %v797 = vld [vmem:[%s2 + $0x16f0] sm:$0xff]
  %v798 = vld [vmem:[%s2 + $0x16f8] sm:$0xff]
  %v799 = vld [vmem:[%s2 + $0x1700] sm:$0xff]
  %v800 = vld [vmem:[%s2 + $0x1708] sm:$0xff]
  %v801 = vld [vmem:[%s2 + $0x1710] sm:$0xff]
  %v802 = vld [vmem:[%s2 + $0x1718] sm:$0xff]
  %v803 = vld [vmem:[%s2 + $0x1720] sm:$0xff]
  %v804 = vld [vmem:[%s2 + $0x1728] sm:$0xff]
  %v805 = vld [vmem:[%s2 + $0x1730] sm:$0xff]
  %v806 = vld [vmem:[%s2 + $0x1738] sm:$0xff]
  %v807 = vld [vmem:[%s2 + $0x1740] sm:$0xff]
  %v808 = vld [vmem:[%s2 + $0x1748] sm:$0xff]
  %v809 = vld [vmem:[%s2 + $0x1750] sm:$0xff]
  %v810 = vld [vmem:[%s2 + $0x1758] sm:$0xff]
  %v811 = vld [vmem:[%s2 + $0x1760] sm:$0xff]
  %v812 = vld [vmem:[%s2 + $0x1768] sm:$0xff]
  %v813 = vld [vmem:[%s2 + $0x1770] sm:$0xff]
  %v814 = vld [vmem:[%s2 + $0x1778] sm:$0xff]
  %v815 = vld [vmem:[%s2 + $0x1780] sm:$0xff]
  %v816 = vld [vmem:[%s2 + $0x1788] sm:$0xff]
  %v817 = vld [vmem:[%s2 + $0x1790] sm:$0xff]
  %v818 = vld [vmem:[%s2 + $0x1798] sm:$0xff]
  %v819 = vld [vmem:[%s2 + $0x17a0] sm:$0xff]
  %v820 = vld [vmem:[%s2 + $0x17a8] sm:$0xff]
  %v821 = vld [vmem:[%s2 + $0x17b0] sm:$0xff]
  %v822 = vld [vmem:[%s2 + $0x17b8] sm:$0xff]
  %v823 = vld [vmem:[%s2 + $0x17c0] sm:$0xff]
  %v824 = vld [vmem:[%s2 + $0x17c8] sm:$0xff]
  %v825 = vld [vmem:[%s2 + $0x17d0] sm:$0xff]
  %v826 = vld [vmem:[%s2 + $0x17d8] sm:$0xff]
  %v827 = vld [vmem:[%s2 + $0x17e0] sm:$0xff]
  %v828 = vld [vmem:[%s2 + $0x17e8] sm:$0xff]
  %v829 = vld [vmem:[%s2 + $0x17f0] sm:$0xff]
  %v830 = vld [vmem:[%s2 + $0x17f8] sm:$0xff]
  %v831 = vld [vmem:[%s3] sm:$0xf]
  %v833 = vlaneseq
  %v834 = vshrl.u32 %v833, 7
  %v835 = vsub.s32 0, %v834
  %v836 = vrot.slane %v831, %v835
  %v837 = vlaneseq
  %v838 = vshrl.u32 %v837, 7
  %v839 = vsub.s32 1, %v838
  %v840 = vrot.slane %v831, %v839
  %v841 = vlaneseq
  %v842 = vshrl.u32 %v841, 7
  %v843 = vsub.s32 2, %v842
  %v844 = vrot.slane %v831, %v843
  %v845 = vlaneseq
  %v846 = vshrl.u32 %v845, 7
  %v847 = vsub.s32 3, %v846
  %v848 = vrot.slane %v831, %v847
  %v877 = vunpack.c.l.b16 %v39
  %v878 = vunpack.c.h.b16 %v39
  %v879 = vunpack.c.l.b16 %v40
  %v880 = vunpack.c.h.b16 %v40
  %v881 = vunpack.c.l.b16 %v41
  %v882 = vunpack.c.h.b16 %v41
  %v883 = vunpack.c.l.b16 %v42
  %v884 = vunpack.c.h.b16 %v42
  %v885 = vunpack.c.l.b16 %v43
  %v886 = vunpack.c.h.b16 %v43
  %v887 = vunpack.c.l.b16 %v44
  %v888 = vunpack.c.h.b16 %v44
  %v889 = vunpack.c.l.b16 %v45
  %v890 = vunpack.c.h.b16 %v45
  %v891 = vunpack.c.l.b16 %v46
  %v892 = vunpack.c.h.b16 %v46
  %v893 = vunpack.c.l.b16 %v47
  %v894 = vunpack.c.h.b16 %v47
  %v895 = vunpack.c.l.b16 %v48
  %v896 = vunpack.c.h.b16 %v48
  %v897 = vunpack.c.l.b16 %v49
  %v898 = vunpack.c.h.b16 %v49
  %v899 = vunpack.c.l.b16 %v50
  %v900 = vunpack.c.h.b16 %v50
  %v901 = vunpack.c.l.b16 %v51
  %v902 = vunpack.c.h.b16 %v51
  %v903 = vunpack.c.l.b16 %v52
  %v904 = vunpack.c.h.b16 %v52
  %v905 = vunpack.c.l.b16 %v53
  %v906 = vunpack.c.h.b16 %v53
  %v907 = vunpack.c.l.b16 %v54
  %v908 = vunpack.c.h.b16 %v54
  %v909 = vunpack.c.l.b16 %v55
  %v910 = vunpack.c.h.b16 %v55
  %v911 = vunpack.c.l.b16 %v56
  %v912 = vunpack.c.h.b16 %v56
  %v913 = vunpack.c.l.b16 %v57
  %v914 = vunpack.c.h.b16 %v57
  %v915 = vunpack.c.l.b16 %v58
  %v916 = vunpack.c.h.b16 %v58
  %v917 = vunpack.c.l.b16 %v59
  %v918 = vunpack.c.h.b16 %v59
  %v919 = vunpack.c.l.b16 %v60
  %v920 = vunpack.c.h.b16 %v60
  %v921 = vunpack.c.l.b16 %v61
  %v922 = vunpack.c.h.b16 %v61
  %v923 = vunpack.c.l.b16 %v62
  %v924 = vunpack.c.h.b16 %v62
  %v925 = vpack.c.b16 %v901, %v877
  %v926 = vpack.c.b16 %v902, %v878
  %v927 = vpack.c.b16 %v903, %v879
  %v928 = vpack.c.b16 %v904, %v880
  %v929 = vpack.c.b16 %v905, %v881
  %v930 = vpack.c.b16 %v906, %v882
  %v931 = vpack.c.b16 %v907, %v883
  %v932 = vpack.c.b16 %v908, %v884
  %v933 = vpack.c.b16 %v909, %v885
  %v934 = vpack.c.b16 %v910, %v886
  %v935 = vpack.c.b16 %v911, %v887
  %v936 = vpack.c.b16 %v912, %v888
  %v937 = vpack.c.b16 %v913, %v889
  %v938 = vpack.c.b16 %v914, %v890
  %v939 = vpack.c.b16 %v915, %v891
  %v940 = vpack.c.b16 %v916, %v892
  %v941 = vpack.c.b16 %v917, %v893
  %v942 = vpack.c.b16 %v918, %v894
  %v943 = vpack.c.b16 %v919, %v895
  %v944 = vpack.c.b16 %v920, %v896
  %v945 = vpack.c.b16 %v921, %v897
  %v946 = vpack.c.b16 %v922, %v898
  %v947 = vpack.c.b16 %v923, %v899
  %v948 = vpack.c.b16 %v924, %v900
  %v1741 = vunpack.c.l.b16 %v63
  %v1742 = vunpack.c.h.b16 %v63
  %v1743 = vunpack.c.l.b16 %v64
  %v1744 = vunpack.c.h.b16 %v64
  %v1745 = vunpack.c.l.b16 %v65
  %v1746 = vunpack.c.h.b16 %v65
  %v1747 = vunpack.c.l.b16 %v66
  %v1748 = vunpack.c.h.b16 %v66
  %v1749 = vunpack.c.l.b16 %v67
  %v1750 = vunpack.c.h.b16 %v67
  %v1751 = vunpack.c.l.b16 %v68
  %v1752 = vunpack.c.h.b16 %v68
  %v1753 = vunpack.c.l.b16 %v69
  %v1754 = vunpack.c.h.b16 %v69
  %v1755 = vunpack.c.l.b16 %v70
  %v1756 = vunpack.c.h.b16 %v70
  %v1757 = vunpack.c.l.b16 %v71
  %v1758 = vunpack.c.h.b16 %v71
  %v1759 = vunpack.c.l.b16 %v72
  %v1760 = vunpack.c.h.b16 %v72
  %v1761 = vunpack.c.l.b16 %v73
  %v1762 = vunpack.c.h.b16 %v73
  %v1763 = vunpack.c.l.b16 %v74
  %v1764 = vunpack.c.h.b16 %v74
  %v1765 = vunpack.c.l.b16 %v75
  %v1766 = vunpack.c.h.b16 %v75
  %v1767 = vunpack.c.l.b16 %v76
  %v1768 = vunpack.c.h.b16 %v76
  %v1769 = vunpack.c.l.b16 %v77
  %v1770 = vunpack.c.h.b16 %v77
  %v1771 = vunpack.c.l.b16 %v78
  %v1772 = vunpack.c.h.b16 %v78
  %v1773 = vunpack.c.l.b16 %v79
  %v1774 = vunpack.c.h.b16 %v79
  %v1775 = vunpack.c.l.b16 %v80
  %v1776 = vunpack.c.h.b16 %v80
  %v1777 = vunpack.c.l.b16 %v81
  %v1778 = vunpack.c.h.b16 %v81
  %v1779 = vunpack.c.l.b16 %v82
  %v1780 = vunpack.c.h.b16 %v82
  %v1781 = vunpack.c.l.b16 %v83
  %v1782 = vunpack.c.h.b16 %v83
  %v1783 = vunpack.c.l.b16 %v84
  %v1784 = vunpack.c.h.b16 %v84
  %v1785 = vunpack.c.l.b16 %v85
  %v1786 = vunpack.c.h.b16 %v85
  %v1787 = vunpack.c.l.b16 %v86
  %v1788 = vunpack.c.h.b16 %v86
  %v1789 = vunpack.c.l.b16 %v87
  %v1790 = vunpack.c.h.b16 %v87
  %v1791 = vunpack.c.l.b16 %v88
  %v1792 = vunpack.c.h.b16 %v88
  %v1793 = vunpack.c.l.b16 %v89
  %v1794 = vunpack.c.h.b16 %v89
  %v1795 = vunpack.c.l.b16 %v90
  %v1796 = vunpack.c.h.b16 %v90
  %v1797 = vunpack.c.l.b16 %v91
  %v1798 = vunpack.c.h.b16 %v91
  %v1799 = vunpack.c.l.b16 %v92
  %v1800 = vunpack.c.h.b16 %v92
  %v1801 = vunpack.c.l.b16 %v93
  %v1802 = vunpack.c.h.b16 %v93
  %v1803 = vunpack.c.l.b16 %v94
  %v1804 = vunpack.c.h.b16 %v94
  %v1805 = vunpack.c.l.b16 %v95
  %v1806 = vunpack.c.h.b16 %v95
  %v1807 = vunpack.c.l.b16 %v96
  %v1808 = vunpack.c.h.b16 %v96
  %v1809 = vunpack.c.l.b16 %v97
  %v1810 = vunpack.c.h.b16 %v97
  %v1811 = vunpack.c.l.b16 %v98
  %v1812 = vunpack.c.h.b16 %v98
  %v1813 = vunpack.c.l.b16 %v99
  %v1814 = vunpack.c.h.b16 %v99
  %v1815 = vunpack.c.l.b16 %v100
  %v1816 = vunpack.c.h.b16 %v100
  %v1817 = vunpack.c.l.b16 %v101
  %v1818 = vunpack.c.h.b16 %v101
  %v1819 = vunpack.c.l.b16 %v102
  %v1820 = vunpack.c.h.b16 %v102
  %v1821 = vunpack.c.l.b16 %v103
  %v1822 = vunpack.c.h.b16 %v103
  %v1823 = vunpack.c.l.b16 %v104
  %v1824 = vunpack.c.h.b16 %v104
  %v1825 = vunpack.c.l.b16 %v105
  %v1826 = vunpack.c.h.b16 %v105
  %v1827 = vunpack.c.l.b16 %v106
  %v1828 = vunpack.c.h.b16 %v106
  %v1829 = vunpack.c.l.b16 %v107
  %v1830 = vunpack.c.h.b16 %v107
  %v1831 = vunpack.c.l.b16 %v108
  %v1832 = vunpack.c.h.b16 %v108
  %v1833 = vunpack.c.l.b16 %v109
  %v1834 = vunpack.c.h.b16 %v109
  %v1835 = vunpack.c.l.b16 %v110
  %v1836 = vunpack.c.h.b16 %v110
  %v1837 = vunpack.c.l.b16 %v111
  %v1838 = vunpack.c.h.b16 %v111
  %v1839 = vunpack.c.l.b16 %v112
  %v1840 = vunpack.c.h.b16 %v112
  %v1841 = vunpack.c.l.b16 %v113
  %v1842 = vunpack.c.h.b16 %v113
  %v1843 = vunpack.c.l.b16 %v114
  %v1844 = vunpack.c.h.b16 %v114
  %v1845 = vunpack.c.l.b16 %v115
  %v1846 = vunpack.c.h.b16 %v115
  %v1847 = vunpack.c.l.b16 %v116
  %v1848 = vunpack.c.h.b16 %v116
  %v1849 = vunpack.c.l.b16 %v117
  %v1850 = vunpack.c.h.b16 %v117
  %v1851 = vunpack.c.l.b16 %v118
  %v1852 = vunpack.c.h.b16 %v118
  %v1853 = vunpack.c.l.b16 %v119
  %v1854 = vunpack.c.h.b16 %v119
  %v1855 = vunpack.c.l.b16 %v120
  %v1856 = vunpack.c.h.b16 %v120
  %v1857 = vunpack.c.l.b16 %v121
  %v1858 = vunpack.c.h.b16 %v121
  %v1859 = vunpack.c.l.b16 %v122
  %v1860 = vunpack.c.h.b16 %v122
  %v1861 = vunpack.c.l.b16 %v123
  %v1862 = vunpack.c.h.b16 %v123
  %v1863 = vunpack.c.l.b16 %v124
  %v1864 = vunpack.c.h.b16 %v124
  %v1865 = vunpack.c.l.b16 %v125
  %v1866 = vunpack.c.h.b16 %v125
  %v1867 = vunpack.c.l.b16 %v126
  %v1868 = vunpack.c.h.b16 %v126
  %v1869 = vunpack.c.l.b16 %v127
  %v1870 = vunpack.c.h.b16 %v127
  %v1871 = vunpack.c.l.b16 %v128
  %v1872 = vunpack.c.h.b16 %v128
  %v1873 = vunpack.c.l.b16 %v129
  %v1874 = vunpack.c.h.b16 %v129
  %v1875 = vunpack.c.l.b16 %v130
  %v1876 = vunpack.c.h.b16 %v130
  %v1877 = vunpack.c.l.b16 %v131
  %v1878 = vunpack.c.h.b16 %v131
  %v1879 = vunpack.c.l.b16 %v132
  %v1880 = vunpack.c.h.b16 %v132
  %v1881 = vunpack.c.l.b16 %v133
  %v1882 = vunpack.c.h.b16 %v133
  %v1883 = vunpack.c.l.b16 %v134
  %v1884 = vunpack.c.h.b16 %v134
  %v1885 = vunpack.c.l.b16 %v135
  %v1886 = vunpack.c.h.b16 %v135
  %v1887 = vunpack.c.l.b16 %v136
  %v1888 = vunpack.c.h.b16 %v136
  %v1889 = vunpack.c.l.b16 %v137
  %v1890 = vunpack.c.h.b16 %v137
  %v1891 = vunpack.c.l.b16 %v138
  %v1892 = vunpack.c.h.b16 %v138
  %v1893 = vunpack.c.l.b16 %v139
  %v1894 = vunpack.c.h.b16 %v139
  %v1895 = vunpack.c.l.b16 %v140
  %v1896 = vunpack.c.h.b16 %v140
  %v1897 = vunpack.c.l.b16 %v141
  %v1898 = vunpack.c.h.b16 %v141
  %v1899 = vunpack.c.l.b16 %v142
  %v1900 = vunpack.c.h.b16 %v142
  %v1901 = vunpack.c.l.b16 %v143
  %v1902 = vunpack.c.h.b16 %v143
  %v1903 = vunpack.c.l.b16 %v144
  %v1904 = vunpack.c.h.b16 %v144
  %v1905 = vunpack.c.l.b16 %v145
  %v1906 = vunpack.c.h.b16 %v145
  %v1907 = vunpack.c.l.b16 %v146
  %v1908 = vunpack.c.h.b16 %v146
  %v1909 = vunpack.c.l.b16 %v147
  %v1910 = vunpack.c.h.b16 %v147
  %v1911 = vunpack.c.l.b16 %v148
  %v1912 = vunpack.c.h.b16 %v148
  %v1913 = vunpack.c.l.b16 %v149
  %v1914 = vunpack.c.h.b16 %v149
  %v1915 = vunpack.c.l.b16 %v150
  %v1916 = vunpack.c.h.b16 %v150
  %v1917 = vunpack.c.l.b16 %v151
  %v1918 = vunpack.c.h.b16 %v151
  %v1919 = vunpack.c.l.b16 %v152
  %v1920 = vunpack.c.h.b16 %v152
  %v1921 = vunpack.c.l.b16 %v153
  %v1922 = vunpack.c.h.b16 %v153
  %v1923 = vunpack.c.l.b16 %v154
  %v1924 = vunpack.c.h.b16 %v154
  %v1925 = vunpack.c.l.b16 %v155
  %v1926 = vunpack.c.h.b16 %v155
  %v1927 = vunpack.c.l.b16 %v156
  %v1928 = vunpack.c.h.b16 %v156
  %v1929 = vunpack.c.l.b16 %v157
  %v1930 = vunpack.c.h.b16 %v157
  %v1931 = vunpack.c.l.b16 %v158
  %v1932 = vunpack.c.h.b16 %v158
  %v1933 = vunpack.c.l.b16 %v159
  %v1934 = vunpack.c.h.b16 %v159
  %v1935 = vunpack.c.l.b16 %v160
  %v1936 = vunpack.c.h.b16 %v160
  %v1937 = vunpack.c.l.b16 %v161
  %v1938 = vunpack.c.h.b16 %v161
  %v1939 = vunpack.c.l.b16 %v162
  %v1940 = vunpack.c.h.b16 %v162
  %v1941 = vunpack.c.l.b16 %v163
  %v1942 = vunpack.c.h.b16 %v163
  %v1943 = vunpack.c.l.b16 %v164
  %v1944 = vunpack.c.h.b16 %v164
  %v1945 = vunpack.c.l.b16 %v165
  %v1946 = vunpack.c.h.b16 %v165
  %v1947 = vunpack.c.l.b16 %v166
  %v1948 = vunpack.c.h.b16 %v166
  %v1949 = vunpack.c.l.b16 %v167
  %v1950 = vunpack.c.h.b16 %v167
  %v1951 = vunpack.c.l.b16 %v168
  %v1952 = vunpack.c.h.b16 %v168
  %v1953 = vunpack.c.l.b16 %v169
  %v1954 = vunpack.c.h.b16 %v169
  %v1955 = vunpack.c.l.b16 %v170
  %v1956 = vunpack.c.h.b16 %v170
  %v1957 = vunpack.c.l.b16 %v171
  %v1958 = vunpack.c.h.b16 %v171
  %v1959 = vunpack.c.l.b16 %v172
  %v1960 = vunpack.c.h.b16 %v172
  %v1961 = vunpack.c.l.b16 %v173
  %v1962 = vunpack.c.h.b16 %v173
  %v1963 = vunpack.c.l.b16 %v174
  %v1964 = vunpack.c.h.b16 %v174
  %v1965 = vunpack.c.l.b16 %v175
  %v1966 = vunpack.c.h.b16 %v175
  %v1967 = vunpack.c.l.b16 %v176
  %v1968 = vunpack.c.h.b16 %v176
  %v1969 = vunpack.c.l.b16 %v177
  %v1970 = vunpack.c.h.b16 %v177
  %v1971 = vunpack.c.l.b16 %v178
  %v1972 = vunpack.c.h.b16 %v178
  %v1973 = vunpack.c.l.b16 %v179
  %v1974 = vunpack.c.h.b16 %v179
  %v1975 = vunpack.c.l.b16 %v180
  %v1976 = vunpack.c.h.b16 %v180
  %v1977 = vunpack.c.l.b16 %v181
  %v1978 = vunpack.c.h.b16 %v181
  %v1979 = vunpack.c.l.b16 %v182
  %v1980 = vunpack.c.h.b16 %v182
  %v1981 = vunpack.c.l.b16 %v183
  %v1982 = vunpack.c.h.b16 %v183
  %v1983 = vunpack.c.l.b16 %v184
  %v1984 = vunpack.c.h.b16 %v184
  %v1985 = vunpack.c.l.b16 %v185
  %v1986 = vunpack.c.h.b16 %v185
  %v1987 = vunpack.c.l.b16 %v186
  %v1988 = vunpack.c.h.b16 %v186
  %v1989 = vunpack.c.l.b16 %v187
  %v1990 = vunpack.c.h.b16 %v187
  %v1991 = vunpack.c.l.b16 %v188
  %v1992 = vunpack.c.h.b16 %v188
  %v1993 = vunpack.c.l.b16 %v189
  %v1994 = vunpack.c.h.b16 %v189
  %v1995 = vunpack.c.l.b16 %v190
  %v1996 = vunpack.c.h.b16 %v190
  %v1997 = vunpack.c.l.b16 %v191
  %v1998 = vunpack.c.h.b16 %v191
  %v1999 = vunpack.c.l.b16 %v192
  %v2000 = vunpack.c.h.b16 %v192
  %v2001 = vunpack.c.l.b16 %v193
  %v2002 = vunpack.c.h.b16 %v193
  %v2003 = vunpack.c.l.b16 %v194
  %v2004 = vunpack.c.h.b16 %v194
  %v2005 = vunpack.c.l.b16 %v195
  %v2006 = vunpack.c.h.b16 %v195
  %v2007 = vunpack.c.l.b16 %v196
  %v2008 = vunpack.c.h.b16 %v196
  %v2009 = vunpack.c.l.b16 %v197
  %v2010 = vunpack.c.h.b16 %v197
  %v2011 = vunpack.c.l.b16 %v198
  %v2012 = vunpack.c.h.b16 %v198
  %v2013 = vunpack.c.l.b16 %v199
  %v2014 = vunpack.c.h.b16 %v199
  %v2015 = vunpack.c.l.b16 %v200
  %v2016 = vunpack.c.h.b16 %v200
  %v2017 = vunpack.c.l.b16 %v201
  %v2018 = vunpack.c.h.b16 %v201
  %v2019 = vunpack.c.l.b16 %v202
  %v2020 = vunpack.c.h.b16 %v202
  %v2021 = vunpack.c.l.b16 %v203
  %v2022 = vunpack.c.h.b16 %v203
  %v2023 = vunpack.c.l.b16 %v204
  %v2024 = vunpack.c.h.b16 %v204
  %v2025 = vunpack.c.l.b16 %v205
  %v2026 = vunpack.c.h.b16 %v205
  %v2027 = vunpack.c.l.b16 %v206
  %v2028 = vunpack.c.h.b16 %v206
  %v2029 = vunpack.c.l.b16 %v207
  %v2030 = vunpack.c.h.b16 %v207
  %v2031 = vunpack.c.l.b16 %v208
  %v2032 = vunpack.c.h.b16 %v208
  %v2033 = vunpack.c.l.b16 %v209
  %v2034 = vunpack.c.h.b16 %v209
  %v2035 = vunpack.c.l.b16 %v210
  %v2036 = vunpack.c.h.b16 %v210
  %v2037 = vunpack.c.l.b16 %v211
  %v2038 = vunpack.c.h.b16 %v211
  %v2039 = vunpack.c.l.b16 %v212
  %v2040 = vunpack.c.h.b16 %v212
  %v2041 = vunpack.c.l.b16 %v213
  %v2042 = vunpack.c.h.b16 %v213
  %v2043 = vunpack.c.l.b16 %v214
  %v2044 = vunpack.c.h.b16 %v214
  %v2045 = vunpack.c.l.b16 %v215
  %v2046 = vunpack.c.h.b16 %v215
  %v2047 = vunpack.c.l.b16 %v216
  %v2048 = vunpack.c.h.b16 %v216
  %v2049 = vunpack.c.l.b16 %v217
  %v2050 = vunpack.c.h.b16 %v217
  %v2051 = vunpack.c.l.b16 %v218
  %v2052 = vunpack.c.h.b16 %v218
  %v2053 = vunpack.c.l.b16 %v219
  %v2054 = vunpack.c.h.b16 %v219
  %v2055 = vunpack.c.l.b16 %v220
  %v2056 = vunpack.c.h.b16 %v220
  %v2057 = vunpack.c.l.b16 %v221
  %v2058 = vunpack.c.h.b16 %v221
  %v2059 = vunpack.c.l.b16 %v222
  %v2060 = vunpack.c.h.b16 %v222
  %v2061 = vunpack.c.l.b16 %v223
  %v2062 = vunpack.c.h.b16 %v223
  %v2063 = vunpack.c.l.b16 %v224
  %v2064 = vunpack.c.h.b16 %v224
  %v2065 = vunpack.c.l.b16 %v225
  %v2066 = vunpack.c.h.b16 %v225
  %v2067 = vunpack.c.l.b16 %v226
  %v2068 = vunpack.c.h.b16 %v226
  %v2069 = vunpack.c.l.b16 %v227
  %v2070 = vunpack.c.h.b16 %v227
  %v2071 = vunpack.c.l.b16 %v228
  %v2072 = vunpack.c.h.b16 %v228
  %v2073 = vunpack.c.l.b16 %v229
  %v2074 = vunpack.c.h.b16 %v229
  %v2075 = vunpack.c.l.b16 %v230
  %v2076 = vunpack.c.h.b16 %v230
  %v2077 = vunpack.c.l.b16 %v231
  %v2078 = vunpack.c.h.b16 %v231
  %v2079 = vunpack.c.l.b16 %v232
  %v2080 = vunpack.c.h.b16 %v232
  %v2081 = vunpack.c.l.b16 %v233
  %v2082 = vunpack.c.h.b16 %v233
  %v2083 = vunpack.c.l.b16 %v234
  %v2084 = vunpack.c.h.b16 %v234
  %v2085 = vunpack.c.l.b16 %v235
  %v2086 = vunpack.c.h.b16 %v235
  %v2087 = vunpack.c.l.b16 %v236
  %v2088 = vunpack.c.h.b16 %v236
  %v2089 = vunpack.c.l.b16 %v237
  %v2090 = vunpack.c.h.b16 %v237
  %v2091 = vunpack.c.l.b16 %v238
  %v2092 = vunpack.c.h.b16 %v238
  %v2093 = vunpack.c.l.b16 %v239
  %v2094 = vunpack.c.h.b16 %v239
  %v2095 = vunpack.c.l.b16 %v240
  %v2096 = vunpack.c.h.b16 %v240
  %v2097 = vunpack.c.l.b16 %v241
  %v2098 = vunpack.c.h.b16 %v241
  %v2099 = vunpack.c.l.b16 %v242
  %v2100 = vunpack.c.h.b16 %v242
  %v2101 = vunpack.c.l.b16 %v243
  %v2102 = vunpack.c.h.b16 %v243
  %v2103 = vunpack.c.l.b16 %v244
  %v2104 = vunpack.c.h.b16 %v244
  %v2105 = vunpack.c.l.b16 %v245
  %v2106 = vunpack.c.h.b16 %v245
  %v2107 = vunpack.c.l.b16 %v246
  %v2108 = vunpack.c.h.b16 %v246
  %v2109 = vunpack.c.l.b16 %v247
  %v2110 = vunpack.c.h.b16 %v247
  %v2111 = vunpack.c.l.b16 %v248
  %v2112 = vunpack.c.h.b16 %v248
  %v2113 = vunpack.c.l.b16 %v249
  %v2114 = vunpack.c.h.b16 %v249
  %v2115 = vunpack.c.l.b16 %v250
  %v2116 = vunpack.c.h.b16 %v250
  %v2117 = vunpack.c.l.b16 %v251
  %v2118 = vunpack.c.h.b16 %v251
  %v2119 = vunpack.c.l.b16 %v252
  %v2120 = vunpack.c.h.b16 %v252
  %v2121 = vunpack.c.l.b16 %v253
  %v2122 = vunpack.c.h.b16 %v253
  %v2123 = vunpack.c.l.b16 %v254
  %v2124 = vunpack.c.h.b16 %v254
  %v2125 = vunpack.c.l.b16 %v255
  %v2126 = vunpack.c.h.b16 %v255
  %v2127 = vunpack.c.l.b16 %v256
  %v2128 = vunpack.c.h.b16 %v256
  %v2129 = vunpack.c.l.b16 %v257
  %v2130 = vunpack.c.h.b16 %v257
  %v2131 = vunpack.c.l.b16 %v258
  %v2132 = vunpack.c.h.b16 %v258
  %v2133 = vunpack.c.l.b16 %v259
  %v2134 = vunpack.c.h.b16 %v259
  %v2135 = vunpack.c.l.b16 %v260
  %v2136 = vunpack.c.h.b16 %v260
  %v2137 = vunpack.c.l.b16 %v261
  %v2138 = vunpack.c.h.b16 %v261
  %v2139 = vunpack.c.l.b16 %v262
  %v2140 = vunpack.c.h.b16 %v262
  %v2141 = vunpack.c.l.b16 %v263
  %v2142 = vunpack.c.h.b16 %v263
  %v2143 = vunpack.c.l.b16 %v264
  %v2144 = vunpack.c.h.b16 %v264
  %v2145 = vunpack.c.l.b16 %v265
  %v2146 = vunpack.c.h.b16 %v265
  %v2147 = vunpack.c.l.b16 %v266
  %v2148 = vunpack.c.h.b16 %v266
  %v2149 = vunpack.c.l.b16 %v267
  %v2150 = vunpack.c.h.b16 %v267
  %v2151 = vunpack.c.l.b16 %v268
  %v2152 = vunpack.c.h.b16 %v268
  %v2153 = vunpack.c.l.b16 %v269
  %v2154 = vunpack.c.h.b16 %v269
  %v2155 = vunpack.c.l.b16 %v270
  %v2156 = vunpack.c.h.b16 %v270
  %v2157 = vunpack.c.l.b16 %v271
  %v2158 = vunpack.c.h.b16 %v271
  %v2159 = vunpack.c.l.b16 %v272
  %v2160 = vunpack.c.h.b16 %v272
  %v2161 = vunpack.c.l.b16 %v273
  %v2162 = vunpack.c.h.b16 %v273
  %v2163 = vunpack.c.l.b16 %v274
  %v2164 = vunpack.c.h.b16 %v274
  %v2165 = vunpack.c.l.b16 %v275
  %v2166 = vunpack.c.h.b16 %v275
  %v2167 = vunpack.c.l.b16 %v276
  %v2168 = vunpack.c.h.b16 %v276
  %v2169 = vunpack.c.l.b16 %v277
  %v2170 = vunpack.c.h.b16 %v277
  %v2171 = vunpack.c.l.b16 %v278
  %v2172 = vunpack.c.h.b16 %v278
  %v2173 = vunpack.c.l.b16 %v279
  %v2174 = vunpack.c.h.b16 %v279
  %v2175 = vunpack.c.l.b16 %v280
  %v2176 = vunpack.c.h.b16 %v280
  %v2177 = vunpack.c.l.b16 %v281
  %v2178 = vunpack.c.h.b16 %v281
  %v2179 = vunpack.c.l.b16 %v282
  %v2180 = vunpack.c.h.b16 %v282
  %v2181 = vunpack.c.l.b16 %v283
  %v2182 = vunpack.c.h.b16 %v283
  %v2183 = vunpack.c.l.b16 %v284
  %v2184 = vunpack.c.h.b16 %v284
  %v2185 = vunpack.c.l.b16 %v285
  %v2186 = vunpack.c.h.b16 %v285
  %v2187 = vunpack.c.l.b16 %v286
  %v2188 = vunpack.c.h.b16 %v286
  %v2189 = vunpack.c.l.b16 %v287
  %v2190 = vunpack.c.h.b16 %v287
  %v2191 = vunpack.c.l.b16 %v288
  %v2192 = vunpack.c.h.b16 %v288
  %v2193 = vunpack.c.l.b16 %v289
  %v2194 = vunpack.c.h.b16 %v289
  %v2195 = vunpack.c.l.b16 %v290
  %v2196 = vunpack.c.h.b16 %v290
  %v2197 = vunpack.c.l.b16 %v291
  %v2198 = vunpack.c.h.b16 %v291
  %v2199 = vunpack.c.l.b16 %v292
  %v2200 = vunpack.c.h.b16 %v292
  %v2201 = vunpack.c.l.b16 %v293
  %v2202 = vunpack.c.h.b16 %v293
  %v2203 = vunpack.c.l.b16 %v294
  %v2204 = vunpack.c.h.b16 %v294
  %v2205 = vunpack.c.l.b16 %v295
  %v2206 = vunpack.c.h.b16 %v295
  %v2207 = vunpack.c.l.b16 %v296
  %v2208 = vunpack.c.h.b16 %v296
  %v2209 = vunpack.c.l.b16 %v297
  %v2210 = vunpack.c.h.b16 %v297
  %v2211 = vunpack.c.l.b16 %v298
  %v2212 = vunpack.c.h.b16 %v298
  %v2213 = vunpack.c.l.b16 %v299
  %v2214 = vunpack.c.h.b16 %v299
  %v2215 = vunpack.c.l.b16 %v300
  %v2216 = vunpack.c.h.b16 %v300
  %v2217 = vunpack.c.l.b16 %v301
  %v2218 = vunpack.c.h.b16 %v301
  %v2219 = vunpack.c.l.b16 %v302
  %v2220 = vunpack.c.h.b16 %v302
  %v2221 = vunpack.c.l.b16 %v303
  %v2222 = vunpack.c.h.b16 %v303
  %v2223 = vunpack.c.l.b16 %v304
  %v2224 = vunpack.c.h.b16 %v304
  %v2225 = vunpack.c.l.b16 %v305
  %v2226 = vunpack.c.h.b16 %v305
  %v2227 = vunpack.c.l.b16 %v306
  %v2228 = vunpack.c.h.b16 %v306
  %v2229 = vunpack.c.l.b16 %v307
  %v2230 = vunpack.c.h.b16 %v307
  %v2231 = vunpack.c.l.b16 %v308
  %v2232 = vunpack.c.h.b16 %v308
  %v2233 = vunpack.c.l.b16 %v309
  %v2234 = vunpack.c.h.b16 %v309
  %v2235 = vunpack.c.l.b16 %v310
  %v2236 = vunpack.c.h.b16 %v310
  %v2237 = vunpack.c.l.b16 %v311
  %v2238 = vunpack.c.h.b16 %v311
  %v2239 = vunpack.c.l.b16 %v312
  %v2240 = vunpack.c.h.b16 %v312
  %v2241 = vunpack.c.l.b16 %v313
  %v2242 = vunpack.c.h.b16 %v313
  %v2243 = vunpack.c.l.b16 %v314
  %v2244 = vunpack.c.h.b16 %v314
  %v2245 = vunpack.c.l.b16 %v315
  %v2246 = vunpack.c.h.b16 %v315
  %v2247 = vunpack.c.l.b16 %v316
  %v2248 = vunpack.c.h.b16 %v316
  %v2249 = vunpack.c.l.b16 %v317
  %v2250 = vunpack.c.h.b16 %v317
  %v2251 = vunpack.c.l.b16 %v318
  %v2252 = vunpack.c.h.b16 %v318
  %v2253 = vunpack.c.l.b16 %v319
  %v2254 = vunpack.c.h.b16 %v319
  %v2255 = vunpack.c.l.b16 %v320
  %v2256 = vunpack.c.h.b16 %v320
  %v2257 = vunpack.c.l.b16 %v321
  %v2258 = vunpack.c.h.b16 %v321
  %v2259 = vunpack.c.l.b16 %v322
  %v2260 = vunpack.c.h.b16 %v322
  %v2261 = vunpack.c.l.b16 %v323
  %v2262 = vunpack.c.h.b16 %v323
  %v2263 = vunpack.c.l.b16 %v324
  %v2264 = vunpack.c.h.b16 %v324
  %v2265 = vunpack.c.l.b16 %v325
  %v2266 = vunpack.c.h.b16 %v325
  %v2267 = vunpack.c.l.b16 %v326
  %v2268 = vunpack.c.h.b16 %v326
  %v2269 = vunpack.c.l.b16 %v327
  %v2270 = vunpack.c.h.b16 %v327
  %v2271 = vunpack.c.l.b16 %v328
  %v2272 = vunpack.c.h.b16 %v328
  %v2273 = vunpack.c.l.b16 %v329
  %v2274 = vunpack.c.h.b16 %v329
  %v2275 = vunpack.c.l.b16 %v330
  %v2276 = vunpack.c.h.b16 %v330
  %v2277 = vunpack.c.l.b16 %v331
  %v2278 = vunpack.c.h.b16 %v331
  %v2279 = vunpack.c.l.b16 %v332
  %v2280 = vunpack.c.h.b16 %v332
  %v2281 = vunpack.c.l.b16 %v333
  %v2282 = vunpack.c.h.b16 %v333
  %v2283 = vunpack.c.l.b16 %v334
  %v2284 = vunpack.c.h.b16 %v334
  %v2285 = vunpack.c.l.b16 %v335
  %v2286 = vunpack.c.h.b16 %v335
  %v2287 = vunpack.c.l.b16 %v336
  %v2288 = vunpack.c.h.b16 %v336
  %v2289 = vunpack.c.l.b16 %v337
  %v2290 = vunpack.c.h.b16 %v337
  %v2291 = vunpack.c.l.b16 %v338
  %v2292 = vunpack.c.h.b16 %v338
  %v2293 = vunpack.c.l.b16 %v339
  %v2294 = vunpack.c.h.b16 %v339
  %v2295 = vunpack.c.l.b16 %v340
  %v2296 = vunpack.c.h.b16 %v340
  %v2297 = vunpack.c.l.b16 %v341
  %v2298 = vunpack.c.h.b16 %v341
  %v2299 = vunpack.c.l.b16 %v342
  %v2300 = vunpack.c.h.b16 %v342
  %v2301 = vunpack.c.l.b16 %v343
  %v2302 = vunpack.c.h.b16 %v343
  %v2303 = vunpack.c.l.b16 %v344
  %v2304 = vunpack.c.h.b16 %v344
  %v2305 = vunpack.c.l.b16 %v345
  %v2306 = vunpack.c.h.b16 %v345
  %v2307 = vunpack.c.l.b16 %v346
  %v2308 = vunpack.c.h.b16 %v346
  %v2309 = vunpack.c.l.b16 %v347
  %v2310 = vunpack.c.h.b16 %v347
  %v2311 = vunpack.c.l.b16 %v348
  %v2312 = vunpack.c.h.b16 %v348
  %v2313 = vunpack.c.l.b16 %v349
  %v2314 = vunpack.c.h.b16 %v349
  %v2315 = vunpack.c.l.b16 %v350
  %v2316 = vunpack.c.h.b16 %v350
  %v2317 = vunpack.c.l.b16 %v351
  %v2318 = vunpack.c.h.b16 %v351
  %v2319 = vunpack.c.l.b16 %v352
  %v2320 = vunpack.c.h.b16 %v352
  %v2321 = vunpack.c.l.b16 %v353
  %v2322 = vunpack.c.h.b16 %v353
  %v2323 = vunpack.c.l.b16 %v354
  %v2324 = vunpack.c.h.b16 %v354
  %v2325 = vunpack.c.l.b16 %v355
  %v2326 = vunpack.c.h.b16 %v355
  %v2327 = vunpack.c.l.b16 %v356
  %v2328 = vunpack.c.h.b16 %v356
  %v2329 = vunpack.c.l.b16 %v357
  %v2330 = vunpack.c.h.b16 %v357
  %v2331 = vunpack.c.l.b16 %v358
  %v2332 = vunpack.c.h.b16 %v358
  %v2333 = vunpack.c.l.b16 %v359
  %v2334 = vunpack.c.h.b16 %v359
  %v2335 = vunpack.c.l.b16 %v360
  %v2336 = vunpack.c.h.b16 %v360
  %v2337 = vunpack.c.l.b16 %v361
  %v2338 = vunpack.c.h.b16 %v361
  %v2339 = vunpack.c.l.b16 %v362
  %v2340 = vunpack.c.h.b16 %v362
  %v2341 = vunpack.c.l.b16 %v363
  %v2342 = vunpack.c.h.b16 %v363
  %v2343 = vunpack.c.l.b16 %v364
  %v2344 = vunpack.c.h.b16 %v364
  %v2345 = vunpack.c.l.b16 %v365
  %v2346 = vunpack.c.h.b16 %v365
  %v2347 = vunpack.c.l.b16 %v366
  %v2348 = vunpack.c.h.b16 %v366
  %v2349 = vunpack.c.l.b16 %v367
  %v2350 = vunpack.c.h.b16 %v367
  %v2351 = vunpack.c.l.b16 %v368
  %v2352 = vunpack.c.h.b16 %v368
  %v2353 = vunpack.c.l.b16 %v369
  %v2354 = vunpack.c.h.b16 %v369
  %v2355 = vunpack.c.l.b16 %v370
  %v2356 = vunpack.c.h.b16 %v370
  %v2357 = vunpack.c.l.b16 %v371
  %v2358 = vunpack.c.h.b16 %v371
  %v2359 = vunpack.c.l.b16 %v372
  %v2360 = vunpack.c.h.b16 %v372
  %v2361 = vunpack.c.l.b16 %v373
  %v2362 = vunpack.c.h.b16 %v373
  %v2363 = vunpack.c.l.b16 %v374
  %v2364 = vunpack.c.h.b16 %v374
  %v2365 = vunpack.c.l.b16 %v375
  %v2366 = vunpack.c.h.b16 %v375
  %v2367 = vunpack.c.l.b16 %v376
  %v2368 = vunpack.c.h.b16 %v376
  %v2369 = vunpack.c.l.b16 %v377
  %v2370 = vunpack.c.h.b16 %v377
  %v2371 = vunpack.c.l.b16 %v378
  %v2372 = vunpack.c.h.b16 %v378
  %v2373 = vunpack.c.l.b16 %v379
  %v2374 = vunpack.c.h.b16 %v379
  %v2375 = vunpack.c.l.b16 %v380
  %v2376 = vunpack.c.h.b16 %v380
  %v2377 = vunpack.c.l.b16 %v381
  %v2378 = vunpack.c.h.b16 %v381
  %v2379 = vunpack.c.l.b16 %v382
  %v2380 = vunpack.c.h.b16 %v382
  %v2381 = vunpack.c.l.b16 %v383
  %v2382 = vunpack.c.h.b16 %v383
  %v2383 = vunpack.c.l.b16 %v384
  %v2384 = vunpack.c.h.b16 %v384
  %v2385 = vunpack.c.l.b16 %v385
  %v2386 = vunpack.c.h.b16 %v385
  %v2387 = vunpack.c.l.b16 %v386
  %v2388 = vunpack.c.h.b16 %v386
  %v2389 = vunpack.c.l.b16 %v387
  %v2390 = vunpack.c.h.b16 %v387
  %v2391 = vunpack.c.l.b16 %v388
  %v2392 = vunpack.c.h.b16 %v388
  %v2393 = vunpack.c.l.b16 %v389
  %v2394 = vunpack.c.h.b16 %v389
  %v2395 = vunpack.c.l.b16 %v390
  %v2396 = vunpack.c.h.b16 %v390
  %v2397 = vunpack.c.l.b16 %v391
  %v2398 = vunpack.c.h.b16 %v391
  %v2399 = vunpack.c.l.b16 %v392
  %v2400 = vunpack.c.h.b16 %v392
  %v2401 = vunpack.c.l.b16 %v393
  %v2402 = vunpack.c.h.b16 %v393
  %v2403 = vunpack.c.l.b16 %v394
  %v2404 = vunpack.c.h.b16 %v394
  %v2405 = vunpack.c.l.b16 %v395
  %v2406 = vunpack.c.h.b16 %v395
  %v2407 = vunpack.c.l.b16 %v396
  %v2408 = vunpack.c.h.b16 %v396
  %v2409 = vunpack.c.l.b16 %v397
  %v2410 = vunpack.c.h.b16 %v397
  %v2411 = vunpack.c.l.b16 %v398
  %v2412 = vunpack.c.h.b16 %v398
  %v2413 = vunpack.c.l.b16 %v399
  %v2414 = vunpack.c.h.b16 %v399
  %v2415 = vunpack.c.l.b16 %v400
  %v2416 = vunpack.c.h.b16 %v400
  %v2417 = vunpack.c.l.b16 %v401
  %v2418 = vunpack.c.h.b16 %v401
  %v2419 = vunpack.c.l.b16 %v402
  %v2420 = vunpack.c.h.b16 %v402
  %v2421 = vunpack.c.l.b16 %v403
  %v2422 = vunpack.c.h.b16 %v403
  %v2423 = vunpack.c.l.b16 %v404
  %v2424 = vunpack.c.h.b16 %v404
  %v2425 = vunpack.c.l.b16 %v405
  %v2426 = vunpack.c.h.b16 %v405
  %v2427 = vunpack.c.l.b16 %v406
  %v2428 = vunpack.c.h.b16 %v406
  %v2429 = vunpack.c.l.b16 %v407
  %v2430 = vunpack.c.h.b16 %v407
  %v2431 = vunpack.c.l.b16 %v408
  %v2432 = vunpack.c.h.b16 %v408
  %v2433 = vunpack.c.l.b16 %v409
  %v2434 = vunpack.c.h.b16 %v409
  %v2435 = vunpack.c.l.b16 %v410
  %v2436 = vunpack.c.h.b16 %v410
  %v2437 = vunpack.c.l.b16 %v411
  %v2438 = vunpack.c.h.b16 %v411
  %v2439 = vunpack.c.l.b16 %v412
  %v2440 = vunpack.c.h.b16 %v412
  %v2441 = vunpack.c.l.b16 %v413
  %v2442 = vunpack.c.h.b16 %v413
  %v2443 = vunpack.c.l.b16 %v414
  %v2444 = vunpack.c.h.b16 %v414
  %v2445 = vunpack.c.l.b16 %v415
  %v2446 = vunpack.c.h.b16 %v415
  %v2447 = vunpack.c.l.b16 %v416
  %v2448 = vunpack.c.h.b16 %v416
  %v2449 = vunpack.c.l.b16 %v417
  %v2450 = vunpack.c.h.b16 %v417
  %v2451 = vunpack.c.l.b16 %v418
  %v2452 = vunpack.c.h.b16 %v418
  %v2453 = vunpack.c.l.b16 %v419
  %v2454 = vunpack.c.h.b16 %v419
  %v2455 = vunpack.c.l.b16 %v420
  %v2456 = vunpack.c.h.b16 %v420
  %v2457 = vunpack.c.l.b16 %v421
  %v2458 = vunpack.c.h.b16 %v421
  %v2459 = vunpack.c.l.b16 %v422
  %v2460 = vunpack.c.h.b16 %v422
  %v2461 = vunpack.c.l.b16 %v423
  %v2462 = vunpack.c.h.b16 %v423
  %v2463 = vunpack.c.l.b16 %v424
  %v2464 = vunpack.c.h.b16 %v424
  %v2465 = vunpack.c.l.b16 %v425
  %v2466 = vunpack.c.h.b16 %v425
  %v2467 = vunpack.c.l.b16 %v426
  %v2468 = vunpack.c.h.b16 %v426
  %v2469 = vunpack.c.l.b16 %v427
  %v2470 = vunpack.c.h.b16 %v427
  %v2471 = vunpack.c.l.b16 %v428
  %v2472 = vunpack.c.h.b16 %v428
  %v2473 = vunpack.c.l.b16 %v429
  %v2474 = vunpack.c.h.b16 %v429
  %v2475 = vunpack.c.l.b16 %v430
  %v2476 = vunpack.c.h.b16 %v430
  %v2477 = vunpack.c.l.b16 %v431
  %v2478 = vunpack.c.h.b16 %v431
  %v2479 = vunpack.c.l.b16 %v432
  %v2480 = vunpack.c.h.b16 %v432
  %v2481 = vunpack.c.l.b16 %v433
  %v2482 = vunpack.c.h.b16 %v433
  %v2483 = vunpack.c.l.b16 %v434
  %v2484 = vunpack.c.h.b16 %v434
  %v2485 = vunpack.c.l.b16 %v435
  %v2486 = vunpack.c.h.b16 %v435
  %v2487 = vunpack.c.l.b16 %v436
  %v2488 = vunpack.c.h.b16 %v436
  %v2489 = vunpack.c.l.b16 %v437
  %v2490 = vunpack.c.h.b16 %v437
  %v2491 = vunpack.c.l.b16 %v438
  %v2492 = vunpack.c.h.b16 %v438
  %v2493 = vunpack.c.l.b16 %v439
  %v2494 = vunpack.c.h.b16 %v439
  %v2495 = vunpack.c.l.b16 %v440
  %v2496 = vunpack.c.h.b16 %v440
  %v2497 = vunpack.c.l.b16 %v441
  %v2498 = vunpack.c.h.b16 %v441
  %v2499 = vunpack.c.l.b16 %v442
  %v2500 = vunpack.c.h.b16 %v442
  %v2501 = vunpack.c.l.b16 %v443
  %v2502 = vunpack.c.h.b16 %v443
  %v2503 = vunpack.c.l.b16 %v444
  %v2504 = vunpack.c.h.b16 %v444
  %v2505 = vunpack.c.l.b16 %v445
  %v2506 = vunpack.c.h.b16 %v445
  %v2507 = vunpack.c.l.b16 %v446
  %v2508 = vunpack.c.h.b16 %v446
  %v2509 = vunpack.c.l.b16 %v447
  %v2510 = vunpack.c.h.b16 %v447
  %v2511 = vunpack.c.l.b16 %v448
  %v2512 = vunpack.c.h.b16 %v448
  %v2513 = vunpack.c.l.b16 %v449
  %v2514 = vunpack.c.h.b16 %v449
  %v2515 = vunpack.c.l.b16 %v450
  %v2516 = vunpack.c.h.b16 %v450
  %v2517 = vunpack.c.l.b16 %v451
  %v2518 = vunpack.c.h.b16 %v451
  %v2519 = vunpack.c.l.b16 %v452
  %v2520 = vunpack.c.h.b16 %v452
  %v2521 = vunpack.c.l.b16 %v453
  %v2522 = vunpack.c.h.b16 %v453
  %v2523 = vunpack.c.l.b16 %v454
  %v2524 = vunpack.c.h.b16 %v454
  %v2525 = vunpack.c.l.b16 %v455
  %v2526 = vunpack.c.h.b16 %v455
  %v2527 = vunpack.c.l.b16 %v456
  %v2528 = vunpack.c.h.b16 %v456
  %v2529 = vunpack.c.l.b16 %v457
  %v2530 = vunpack.c.h.b16 %v457
  %v2531 = vunpack.c.l.b16 %v458
  %v2532 = vunpack.c.h.b16 %v458
  %v2533 = vunpack.c.l.b16 %v459
  %v2534 = vunpack.c.h.b16 %v459
  %v2535 = vunpack.c.l.b16 %v460
  %v2536 = vunpack.c.h.b16 %v460
  %v2537 = vunpack.c.l.b16 %v461
  %v2538 = vunpack.c.h.b16 %v461
  %v2539 = vunpack.c.l.b16 %v462
  %v2540 = vunpack.c.h.b16 %v462
  %v2541 = vunpack.c.l.b16 %v463
  %v2542 = vunpack.c.h.b16 %v463
  %v2543 = vunpack.c.l.b16 %v464
  %v2544 = vunpack.c.h.b16 %v464
  %v2545 = vunpack.c.l.b16 %v465
  %v2546 = vunpack.c.h.b16 %v465
  %v2547 = vunpack.c.l.b16 %v466
  %v2548 = vunpack.c.h.b16 %v466
  %v2549 = vunpack.c.l.b16 %v467
  %v2550 = vunpack.c.h.b16 %v467
  %v2551 = vunpack.c.l.b16 %v468
  %v2552 = vunpack.c.h.b16 %v468
  %v2553 = vunpack.c.l.b16 %v469
  %v2554 = vunpack.c.h.b16 %v469
  %v2555 = vunpack.c.l.b16 %v470
  %v2556 = vunpack.c.h.b16 %v470
  %v2557 = vunpack.c.l.b16 %v471
  %v2558 = vunpack.c.h.b16 %v471
  %v2559 = vunpack.c.l.b16 %v472
  %v2560 = vunpack.c.h.b16 %v472
  %v2561 = vunpack.c.l.b16 %v473
  %v2562 = vunpack.c.h.b16 %v473
  %v2563 = vunpack.c.l.b16 %v474
  %v2564 = vunpack.c.h.b16 %v474
  %v2565 = vunpack.c.l.b16 %v475
  %v2566 = vunpack.c.h.b16 %v475
  %v2567 = vunpack.c.l.b16 %v476
  %v2568 = vunpack.c.h.b16 %v476
  %v2569 = vunpack.c.l.b16 %v477
  %v2570 = vunpack.c.h.b16 %v477
  %v2571 = vunpack.c.l.b16 %v478
  %v2572 = vunpack.c.h.b16 %v478
  %v2573 = vunpack.c.l.b16 %v479
  %v2574 = vunpack.c.h.b16 %v479
  %v2575 = vunpack.c.l.b16 %v480
  %v2576 = vunpack.c.h.b16 %v480
  %v2577 = vunpack.c.l.b16 %v481
  %v2578 = vunpack.c.h.b16 %v481
  %v2579 = vunpack.c.l.b16 %v482
  %v2580 = vunpack.c.h.b16 %v482
  %v2581 = vunpack.c.l.b16 %v483
  %v2582 = vunpack.c.h.b16 %v483
  %v2583 = vunpack.c.l.b16 %v484
  %v2584 = vunpack.c.h.b16 %v484
  %v2585 = vunpack.c.l.b16 %v485
  %v2586 = vunpack.c.h.b16 %v485
  %v2587 = vunpack.c.l.b16 %v486
  %v2588 = vunpack.c.h.b16 %v486
  %v2589 = vunpack.c.l.b16 %v487
  %v2590 = vunpack.c.h.b16 %v487
  %v2591 = vunpack.c.l.b16 %v488
  %v2592 = vunpack.c.h.b16 %v488
  %v2593 = vunpack.c.l.b16 %v489
  %v2594 = vunpack.c.h.b16 %v489
  %v2595 = vunpack.c.l.b16 %v490
  %v2596 = vunpack.c.h.b16 %v490
  %v2597 = vunpack.c.l.b16 %v491
  %v2598 = vunpack.c.h.b16 %v491
  %v2599 = vunpack.c.l.b16 %v492
  %v2600 = vunpack.c.h.b16 %v492
  %v2601 = vunpack.c.l.b16 %v493
  %v2602 = vunpack.c.h.b16 %v493
  %v2603 = vunpack.c.l.b16 %v494
  %v2604 = vunpack.c.h.b16 %v494
  %v2605 = vunpack.c.l.b16 %v495
  %v2606 = vunpack.c.h.b16 %v495
  %v2607 = vunpack.c.l.b16 %v496
  %v2608 = vunpack.c.h.b16 %v496
  %v2609 = vunpack.c.l.b16 %v497
  %v2610 = vunpack.c.h.b16 %v497
  %v2611 = vunpack.c.l.b16 %v498
  %v2612 = vunpack.c.h.b16 %v498
  %v2613 = vunpack.c.l.b16 %v499
  %v2614 = vunpack.c.h.b16 %v499
  %v2615 = vunpack.c.l.b16 %v500
  %v2616 = vunpack.c.h.b16 %v500
  %v2617 = vunpack.c.l.b16 %v501
  %v2618 = vunpack.c.h.b16 %v501
  %v2619 = vunpack.c.l.b16 %v502
  %v2620 = vunpack.c.h.b16 %v502
  %v2621 = vunpack.c.l.b16 %v503
  %v2622 = vunpack.c.h.b16 %v503
  %v2623 = vunpack.c.l.b16 %v504
  %v2624 = vunpack.c.h.b16 %v504
  %v2625 = vunpack.c.l.b16 %v505
  %v2626 = vunpack.c.h.b16 %v505
  %v2627 = vunpack.c.l.b16 %v506
  %v2628 = vunpack.c.h.b16 %v506
  %v2629 = vunpack.c.l.b16 %v507
  %v2630 = vunpack.c.h.b16 %v507
  %v2631 = vunpack.c.l.b16 %v508
  %v2632 = vunpack.c.h.b16 %v508
  %v2633 = vunpack.c.l.b16 %v509
  %v2634 = vunpack.c.h.b16 %v509
  %v2635 = vunpack.c.l.b16 %v510
  %v2636 = vunpack.c.h.b16 %v510
  %v2637 = vunpack.c.l.b16 %v511
  %v2638 = vunpack.c.h.b16 %v511
  %v2639 = vunpack.c.l.b16 %v512
  %v2640 = vunpack.c.h.b16 %v512
  %v2641 = vunpack.c.l.b16 %v513
  %v2642 = vunpack.c.h.b16 %v513
  %v2643 = vunpack.c.l.b16 %v514
  %v2644 = vunpack.c.h.b16 %v514
  %v2645 = vunpack.c.l.b16 %v515
  %v2646 = vunpack.c.h.b16 %v515
  %v2647 = vunpack.c.l.b16 %v516
  %v2648 = vunpack.c.h.b16 %v516
  %v2649 = vunpack.c.l.b16 %v517
  %v2650 = vunpack.c.h.b16 %v517
  %v2651 = vunpack.c.l.b16 %v518
  %v2652 = vunpack.c.h.b16 %v518
  %v2653 = vunpack.c.l.b16 %v519
  %v2654 = vunpack.c.h.b16 %v519
  %v2655 = vunpack.c.l.b16 %v520
  %v2656 = vunpack.c.h.b16 %v520
  %v2657 = vunpack.c.l.b16 %v521
  %v2658 = vunpack.c.h.b16 %v521
  %v2659 = vunpack.c.l.b16 %v522
  %v2660 = vunpack.c.h.b16 %v522
  %v2661 = vunpack.c.l.b16 %v523
  %v2662 = vunpack.c.h.b16 %v523
  %v2663 = vunpack.c.l.b16 %v524
  %v2664 = vunpack.c.h.b16 %v524
  %v2665 = vunpack.c.l.b16 %v525
  %v2666 = vunpack.c.h.b16 %v525
  %v2667 = vunpack.c.l.b16 %v526
  %v2668 = vunpack.c.h.b16 %v526
  %v2669 = vunpack.c.l.b16 %v527
  %v2670 = vunpack.c.h.b16 %v527
  %v2671 = vunpack.c.l.b16 %v528
  %v2672 = vunpack.c.h.b16 %v528
  %v2673 = vunpack.c.l.b16 %v529
  %v2674 = vunpack.c.h.b16 %v529
  %v2675 = vunpack.c.l.b16 %v530
  %v2676 = vunpack.c.h.b16 %v530
  %v2677 = vunpack.c.l.b16 %v531
  %v2678 = vunpack.c.h.b16 %v531
  %v2679 = vunpack.c.l.b16 %v532
  %v2680 = vunpack.c.h.b16 %v532
  %v2681 = vunpack.c.l.b16 %v533
  %v2682 = vunpack.c.h.b16 %v533
  %v2683 = vunpack.c.l.b16 %v534
  %v2684 = vunpack.c.h.b16 %v534
  %v2685 = vunpack.c.l.b16 %v535
  %v2686 = vunpack.c.h.b16 %v535
  %v2687 = vunpack.c.l.b16 %v536
  %v2688 = vunpack.c.h.b16 %v536
  %v2689 = vunpack.c.l.b16 %v537
  %v2690 = vunpack.c.h.b16 %v537
  %v2691 = vunpack.c.l.b16 %v538
  %v2692 = vunpack.c.h.b16 %v538
  %v2693 = vunpack.c.l.b16 %v539
  %v2694 = vunpack.c.h.b16 %v539
  %v2695 = vunpack.c.l.b16 %v540
  %v2696 = vunpack.c.h.b16 %v540
  %v2697 = vunpack.c.l.b16 %v541
  %v2698 = vunpack.c.h.b16 %v541
  %v2699 = vunpack.c.l.b16 %v542
  %v2700 = vunpack.c.h.b16 %v542
  %v2701 = vunpack.c.l.b16 %v543
  %v2702 = vunpack.c.h.b16 %v543
  %v2703 = vunpack.c.l.b16 %v544
  %v2704 = vunpack.c.h.b16 %v544
  %v2705 = vunpack.c.l.b16 %v545
  %v2706 = vunpack.c.h.b16 %v545
  %v2707 = vunpack.c.l.b16 %v546
  %v2708 = vunpack.c.h.b16 %v546
  %v2709 = vunpack.c.l.b16 %v547
  %v2710 = vunpack.c.h.b16 %v547
  %v2711 = vunpack.c.l.b16 %v548
  %v2712 = vunpack.c.h.b16 %v548
  %v2713 = vunpack.c.l.b16 %v549
  %v2714 = vunpack.c.h.b16 %v549
  %v2715 = vunpack.c.l.b16 %v550
  %v2716 = vunpack.c.h.b16 %v550
  %v2717 = vunpack.c.l.b16 %v551
  %v2718 = vunpack.c.h.b16 %v551
  %v2719 = vunpack.c.l.b16 %v552
  %v2720 = vunpack.c.h.b16 %v552
  %v2721 = vunpack.c.l.b16 %v553
  %v2722 = vunpack.c.h.b16 %v553
  %v2723 = vunpack.c.l.b16 %v554
  %v2724 = vunpack.c.h.b16 %v554
  %v2725 = vunpack.c.l.b16 %v555
  %v2726 = vunpack.c.h.b16 %v555
  %v2727 = vunpack.c.l.b16 %v556
  %v2728 = vunpack.c.h.b16 %v556
  %v2729 = vunpack.c.l.b16 %v557
  %v2730 = vunpack.c.h.b16 %v557
  %v2731 = vunpack.c.l.b16 %v558
  %v2732 = vunpack.c.h.b16 %v558
  %v2733 = vunpack.c.l.b16 %v559
  %v2734 = vunpack.c.h.b16 %v559
  %v2735 = vunpack.c.l.b16 %v560
  %v2736 = vunpack.c.h.b16 %v560
  %v2737 = vunpack.c.l.b16 %v561
  %v2738 = vunpack.c.h.b16 %v561
  %v2739 = vunpack.c.l.b16 %v562
  %v2740 = vunpack.c.h.b16 %v562
  %v2741 = vunpack.c.l.b16 %v563
  %v2742 = vunpack.c.h.b16 %v563
  %v2743 = vunpack.c.l.b16 %v564
  %v2744 = vunpack.c.h.b16 %v564
  %v2745 = vunpack.c.l.b16 %v565
  %v2746 = vunpack.c.h.b16 %v565
  %v2747 = vunpack.c.l.b16 %v566
  %v2748 = vunpack.c.h.b16 %v566
  %v2749 = vunpack.c.l.b16 %v567
  %v2750 = vunpack.c.h.b16 %v567
  %v2751 = vunpack.c.l.b16 %v568
  %v2752 = vunpack.c.h.b16 %v568
  %v2753 = vunpack.c.l.b16 %v569
  %v2754 = vunpack.c.h.b16 %v569
  %v2755 = vunpack.c.l.b16 %v570
  %v2756 = vunpack.c.h.b16 %v570
  %v2757 = vunpack.c.l.b16 %v571
  %v2758 = vunpack.c.h.b16 %v571
  %v2759 = vunpack.c.l.b16 %v572
  %v2760 = vunpack.c.h.b16 %v572
  %v2761 = vunpack.c.l.b16 %v573
  %v2762 = vunpack.c.h.b16 %v573
  %v2763 = vunpack.c.l.b16 %v574
  %v2764 = vunpack.c.h.b16 %v574
  %v2765 = vunpack.c.l.b16 %v575
  %v2766 = vunpack.c.h.b16 %v575
  %v2767 = vunpack.c.l.b16 %v576
  %v2768 = vunpack.c.h.b16 %v576
  %v2769 = vunpack.c.l.b16 %v577
  %v2770 = vunpack.c.h.b16 %v577
  %v2771 = vunpack.c.l.b16 %v578
  %v2772 = vunpack.c.h.b16 %v578
  %v2773 = vunpack.c.l.b16 %v579
  %v2774 = vunpack.c.h.b16 %v579
  %v2775 = vunpack.c.l.b16 %v580
  %v2776 = vunpack.c.h.b16 %v580
  %v2777 = vunpack.c.l.b16 %v581
  %v2778 = vunpack.c.h.b16 %v581
  %v2779 = vunpack.c.l.b16 %v582
  %v2780 = vunpack.c.h.b16 %v582
  %v2781 = vunpack.c.l.b16 %v583
  %v2782 = vunpack.c.h.b16 %v583
  %v2783 = vunpack.c.l.b16 %v584
  %v2784 = vunpack.c.h.b16 %v584
  %v2785 = vunpack.c.l.b16 %v585
  %v2786 = vunpack.c.h.b16 %v585
  %v2787 = vunpack.c.l.b16 %v586
  %v2788 = vunpack.c.h.b16 %v586
  %v2789 = vunpack.c.l.b16 %v587
  %v2790 = vunpack.c.h.b16 %v587
  %v2791 = vunpack.c.l.b16 %v588
  %v2792 = vunpack.c.h.b16 %v588
  %v2793 = vunpack.c.l.b16 %v589
  %v2794 = vunpack.c.h.b16 %v589
  %v2795 = vunpack.c.l.b16 %v590
  %v2796 = vunpack.c.h.b16 %v590
  %v2797 = vunpack.c.l.b16 %v591
  %v2798 = vunpack.c.h.b16 %v591
  %v2799 = vunpack.c.l.b16 %v592
  %v2800 = vunpack.c.h.b16 %v592
  %v2801 = vunpack.c.l.b16 %v593
  %v2802 = vunpack.c.h.b16 %v593
  %v2803 = vunpack.c.l.b16 %v594
  %v2804 = vunpack.c.h.b16 %v594
  %v2805 = vunpack.c.l.b16 %v595
  %v2806 = vunpack.c.h.b16 %v595
  %v2807 = vunpack.c.l.b16 %v596
  %v2808 = vunpack.c.h.b16 %v596
  %v2809 = vunpack.c.l.b16 %v597
  %v2810 = vunpack.c.h.b16 %v597
  %v2811 = vunpack.c.l.b16 %v598
  %v2812 = vunpack.c.h.b16 %v598
  %v2813 = vunpack.c.l.b16 %v599
  %v2814 = vunpack.c.h.b16 %v599
  %v2815 = vunpack.c.l.b16 %v600
  %v2816 = vunpack.c.h.b16 %v600
  %v2817 = vunpack.c.l.b16 %v601
  %v2818 = vunpack.c.h.b16 %v601
  %v2819 = vunpack.c.l.b16 %v602
  %v2820 = vunpack.c.h.b16 %v602
  %v2821 = vunpack.c.l.b16 %v603
  %v2822 = vunpack.c.h.b16 %v603
  %v2823 = vunpack.c.l.b16 %v604
  %v2824 = vunpack.c.h.b16 %v604
  %v2825 = vunpack.c.l.b16 %v605
  %v2826 = vunpack.c.h.b16 %v605
  %v2827 = vunpack.c.l.b16 %v606
  %v2828 = vunpack.c.h.b16 %v606
  %v2829 = vunpack.c.l.b16 %v607
  %v2830 = vunpack.c.h.b16 %v607
  %v2831 = vunpack.c.l.b16 %v608
  %v2832 = vunpack.c.h.b16 %v608
  %v2833 = vunpack.c.l.b16 %v609
  %v2834 = vunpack.c.h.b16 %v609
  %v2835 = vunpack.c.l.b16 %v610
  %v2836 = vunpack.c.h.b16 %v610
  %v2837 = vunpack.c.l.b16 %v611
  %v2838 = vunpack.c.h.b16 %v611
  %v2839 = vunpack.c.l.b16 %v612
  %v2840 = vunpack.c.h.b16 %v612
  %v2841 = vunpack.c.l.b16 %v613
  %v2842 = vunpack.c.h.b16 %v613
  %v2843 = vunpack.c.l.b16 %v614
  %v2844 = vunpack.c.h.b16 %v614
  %v2845 = vunpack.c.l.b16 %v615
  %v2846 = vunpack.c.h.b16 %v615
  %v2847 = vunpack.c.l.b16 %v616
  %v2848 = vunpack.c.h.b16 %v616
  %v2849 = vunpack.c.l.b16 %v617
  %v2850 = vunpack.c.h.b16 %v617
  %v2851 = vunpack.c.l.b16 %v618
  %v2852 = vunpack.c.h.b16 %v618
  %v2853 = vunpack.c.l.b16 %v619
  %v2854 = vunpack.c.h.b16 %v619
  %v2855 = vunpack.c.l.b16 %v620
  %v2856 = vunpack.c.h.b16 %v620
  %v2857 = vunpack.c.l.b16 %v621
  %v2858 = vunpack.c.h.b16 %v621
  %v2859 = vunpack.c.l.b16 %v622
  %v2860 = vunpack.c.h.b16 %v622
  %v2861 = vunpack.c.l.b16 %v623
  %v2862 = vunpack.c.h.b16 %v623
  %v2863 = vunpack.c.l.b16 %v624
  %v2864 = vunpack.c.h.b16 %v624
  %v2865 = vunpack.c.l.b16 %v625
  %v2866 = vunpack.c.h.b16 %v625
  %v2867 = vunpack.c.l.b16 %v626
  %v2868 = vunpack.c.h.b16 %v626
  %v2869 = vunpack.c.l.b16 %v627
  %v2870 = vunpack.c.h.b16 %v627
  %v2871 = vunpack.c.l.b16 %v628
  %v2872 = vunpack.c.h.b16 %v628
  %v2873 = vunpack.c.l.b16 %v629
  %v2874 = vunpack.c.h.b16 %v629
  %v2875 = vunpack.c.l.b16 %v630
  %v2876 = vunpack.c.h.b16 %v630
  %v2877 = vunpack.c.l.b16 %v631
  %v2878 = vunpack.c.h.b16 %v631
  %v2879 = vunpack.c.l.b16 %v632
  %v2880 = vunpack.c.h.b16 %v632
  %v2881 = vunpack.c.l.b16 %v633
  %v2882 = vunpack.c.h.b16 %v633
  %v2883 = vunpack.c.l.b16 %v634
  %v2884 = vunpack.c.h.b16 %v634
  %v2885 = vunpack.c.l.b16 %v635
  %v2886 = vunpack.c.h.b16 %v635
  %v2887 = vunpack.c.l.b16 %v636
  %v2888 = vunpack.c.h.b16 %v636
  %v2889 = vunpack.c.l.b16 %v637
  %v2890 = vunpack.c.h.b16 %v637
  %v2891 = vunpack.c.l.b16 %v638
  %v2892 = vunpack.c.h.b16 %v638
  %v2893 = vunpack.c.l.b16 %v639
  %v2894 = vunpack.c.h.b16 %v639
  %v2895 = vunpack.c.l.b16 %v640
  %v2896 = vunpack.c.h.b16 %v640
  %v2897 = vunpack.c.l.b16 %v641
  %v2898 = vunpack.c.h.b16 %v641
  %v2899 = vunpack.c.l.b16 %v642
  %v2900 = vunpack.c.h.b16 %v642
  %v2901 = vunpack.c.l.b16 %v643
  %v2902 = vunpack.c.h.b16 %v643
  %v2903 = vunpack.c.l.b16 %v644
  %v2904 = vunpack.c.h.b16 %v644
  %v2905 = vunpack.c.l.b16 %v645
  %v2906 = vunpack.c.h.b16 %v645
  %v2907 = vunpack.c.l.b16 %v646
  %v2908 = vunpack.c.h.b16 %v646
  %v2909 = vunpack.c.l.b16 %v647
  %v2910 = vunpack.c.h.b16 %v647
  %v2911 = vunpack.c.l.b16 %v648
  %v2912 = vunpack.c.h.b16 %v648
  %v2913 = vunpack.c.l.b16 %v649
  %v2914 = vunpack.c.h.b16 %v649
  %v2915 = vunpack.c.l.b16 %v650
  %v2916 = vunpack.c.h.b16 %v650
  %v2917 = vunpack.c.l.b16 %v651
  %v2918 = vunpack.c.h.b16 %v651
  %v2919 = vunpack.c.l.b16 %v652
  %v2920 = vunpack.c.h.b16 %v652
  %v2921 = vunpack.c.l.b16 %v653
  %v2922 = vunpack.c.h.b16 %v653
  %v2923 = vunpack.c.l.b16 %v654
  %v2924 = vunpack.c.h.b16 %v654
  %v2925 = vunpack.c.l.b16 %v655
  %v2926 = vunpack.c.h.b16 %v655
  %v2927 = vunpack.c.l.b16 %v656
  %v2928 = vunpack.c.h.b16 %v656
  %v2929 = vunpack.c.l.b16 %v657
  %v2930 = vunpack.c.h.b16 %v657
  %v2931 = vunpack.c.l.b16 %v658
  %v2932 = vunpack.c.h.b16 %v658
  %v2933 = vunpack.c.l.b16 %v659
  %v2934 = vunpack.c.h.b16 %v659
  %v2935 = vunpack.c.l.b16 %v660
  %v2936 = vunpack.c.h.b16 %v660
  %v2937 = vunpack.c.l.b16 %v661
  %v2938 = vunpack.c.h.b16 %v661
  %v2939 = vunpack.c.l.b16 %v662
  %v2940 = vunpack.c.h.b16 %v662
  %v2941 = vunpack.c.l.b16 %v663
  %v2942 = vunpack.c.h.b16 %v663
  %v2943 = vunpack.c.l.b16 %v664
  %v2944 = vunpack.c.h.b16 %v664
  %v2945 = vunpack.c.l.b16 %v665
  %v2946 = vunpack.c.h.b16 %v665
  %v2947 = vunpack.c.l.b16 %v666
  %v2948 = vunpack.c.h.b16 %v666
  %v2949 = vunpack.c.l.b16 %v667
  %v2950 = vunpack.c.h.b16 %v667
  %v2951 = vunpack.c.l.b16 %v668
  %v2952 = vunpack.c.h.b16 %v668
  %v2953 = vunpack.c.l.b16 %v669
  %v2954 = vunpack.c.h.b16 %v669
  %v2955 = vunpack.c.l.b16 %v670
  %v2956 = vunpack.c.h.b16 %v670
  %v2957 = vunpack.c.l.b16 %v671
  %v2958 = vunpack.c.h.b16 %v671
  %v2959 = vunpack.c.l.b16 %v672
  %v2960 = vunpack.c.h.b16 %v672
  %v2961 = vunpack.c.l.b16 %v673
  %v2962 = vunpack.c.h.b16 %v673
  %v2963 = vunpack.c.l.b16 %v674
  %v2964 = vunpack.c.h.b16 %v674
  %v2965 = vunpack.c.l.b16 %v675
  %v2966 = vunpack.c.h.b16 %v675
  %v2967 = vunpack.c.l.b16 %v676
  %v2968 = vunpack.c.h.b16 %v676
  %v2969 = vunpack.c.l.b16 %v677
  %v2970 = vunpack.c.h.b16 %v677
  %v2971 = vunpack.c.l.b16 %v678
  %v2972 = vunpack.c.h.b16 %v678
  %v2973 = vunpack.c.l.b16 %v679
  %v2974 = vunpack.c.h.b16 %v679
  %v2975 = vunpack.c.l.b16 %v680
  %v2976 = vunpack.c.h.b16 %v680
  %v2977 = vunpack.c.l.b16 %v681
  %v2978 = vunpack.c.h.b16 %v681
  %v2979 = vunpack.c.l.b16 %v682
  %v2980 = vunpack.c.h.b16 %v682
  %v2981 = vunpack.c.l.b16 %v683
  %v2982 = vunpack.c.h.b16 %v683
  %v2983 = vunpack.c.l.b16 %v684
  %v2984 = vunpack.c.h.b16 %v684
  %v2985 = vunpack.c.l.b16 %v685
  %v2986 = vunpack.c.h.b16 %v685
  %v2987 = vunpack.c.l.b16 %v686
  %v2988 = vunpack.c.h.b16 %v686
  %v2989 = vunpack.c.l.b16 %v687
  %v2990 = vunpack.c.h.b16 %v687
  %v2991 = vunpack.c.l.b16 %v688
  %v2992 = vunpack.c.h.b16 %v688
  %v2993 = vunpack.c.l.b16 %v689
  %v2994 = vunpack.c.h.b16 %v689
  %v2995 = vunpack.c.l.b16 %v690
  %v2996 = vunpack.c.h.b16 %v690
  %v2997 = vunpack.c.l.b16 %v691
  %v2998 = vunpack.c.h.b16 %v691
  %v2999 = vunpack.c.l.b16 %v692
  %v3000 = vunpack.c.h.b16 %v692
  %v3001 = vunpack.c.l.b16 %v693
  %v3002 = vunpack.c.h.b16 %v693
  %v3003 = vunpack.c.l.b16 %v694
  %v3004 = vunpack.c.h.b16 %v694
  %v3005 = vunpack.c.l.b16 %v695
  %v3006 = vunpack.c.h.b16 %v695
  %v3007 = vunpack.c.l.b16 %v696
  %v3008 = vunpack.c.h.b16 %v696
  %v3009 = vunpack.c.l.b16 %v697
  %v3010 = vunpack.c.h.b16 %v697
  %v3011 = vunpack.c.l.b16 %v698
  %v3012 = vunpack.c.h.b16 %v698
  %v3013 = vunpack.c.l.b16 %v699
  %v3014 = vunpack.c.h.b16 %v699
  %v3015 = vunpack.c.l.b16 %v700
  %v3016 = vunpack.c.h.b16 %v700
  %v3017 = vunpack.c.l.b16 %v701
  %v3018 = vunpack.c.h.b16 %v701
  %v3019 = vunpack.c.l.b16 %v702
  %v3020 = vunpack.c.h.b16 %v702
  %v3021 = vunpack.c.l.b16 %v703
  %v3022 = vunpack.c.h.b16 %v703
  %v3023 = vunpack.c.l.b16 %v704
  %v3024 = vunpack.c.h.b16 %v704
  %v3025 = vunpack.c.l.b16 %v705
  %v3026 = vunpack.c.h.b16 %v705
  %v3027 = vunpack.c.l.b16 %v706
  %v3028 = vunpack.c.h.b16 %v706
  %v3029 = vunpack.c.l.b16 %v707
  %v3030 = vunpack.c.h.b16 %v707
  %v3031 = vunpack.c.l.b16 %v708
  %v3032 = vunpack.c.h.b16 %v708
  %v3033 = vunpack.c.l.b16 %v709
  %v3034 = vunpack.c.h.b16 %v709
  %v3035 = vunpack.c.l.b16 %v710
  %v3036 = vunpack.c.h.b16 %v710
  %v3037 = vunpack.c.l.b16 %v711
  %v3038 = vunpack.c.h.b16 %v711
  %v3039 = vunpack.c.l.b16 %v712
  %v3040 = vunpack.c.h.b16 %v712
  %v3041 = vunpack.c.l.b16 %v713
  %v3042 = vunpack.c.h.b16 %v713
  %v3043 = vunpack.c.l.b16 %v714
  %v3044 = vunpack.c.h.b16 %v714
  %v3045 = vunpack.c.l.b16 %v715
  %v3046 = vunpack.c.h.b16 %v715
  %v3047 = vunpack.c.l.b16 %v716
  %v3048 = vunpack.c.h.b16 %v716
  %v3049 = vunpack.c.l.b16 %v717
  %v3050 = vunpack.c.h.b16 %v717
  %v3051 = vunpack.c.l.b16 %v718
  %v3052 = vunpack.c.h.b16 %v718
  %v3053 = vunpack.c.l.b16 %v719
  %v3054 = vunpack.c.h.b16 %v719
  %v3055 = vunpack.c.l.b16 %v720
  %v3056 = vunpack.c.h.b16 %v720
  %v3057 = vunpack.c.l.b16 %v721
  %v3058 = vunpack.c.h.b16 %v721
  %v3059 = vunpack.c.l.b16 %v722
  %v3060 = vunpack.c.h.b16 %v722
  %v3061 = vunpack.c.l.b16 %v723
  %v3062 = vunpack.c.h.b16 %v723
  %v3063 = vunpack.c.l.b16 %v724
  %v3064 = vunpack.c.h.b16 %v724
  %v3065 = vunpack.c.l.b16 %v725
  %v3066 = vunpack.c.h.b16 %v725
  %v3067 = vunpack.c.l.b16 %v726
  %v3068 = vunpack.c.h.b16 %v726
  %v3069 = vunpack.c.l.b16 %v727
  %v3070 = vunpack.c.h.b16 %v727
  %v3071 = vunpack.c.l.b16 %v728
  %v3072 = vunpack.c.h.b16 %v728
  %v3073 = vunpack.c.l.b16 %v729
  %v3074 = vunpack.c.h.b16 %v729
  %v3075 = vunpack.c.l.b16 %v730
  %v3076 = vunpack.c.h.b16 %v730
  %v3077 = vunpack.c.l.b16 %v731
  %v3078 = vunpack.c.h.b16 %v731
  %v3079 = vunpack.c.l.b16 %v732
  %v3080 = vunpack.c.h.b16 %v732
  %v3081 = vunpack.c.l.b16 %v733
  %v3082 = vunpack.c.h.b16 %v733
  %v3083 = vunpack.c.l.b16 %v734
  %v3084 = vunpack.c.h.b16 %v734
  %v3085 = vunpack.c.l.b16 %v735
  %v3086 = vunpack.c.h.b16 %v735
  %v3087 = vunpack.c.l.b16 %v736
  %v3088 = vunpack.c.h.b16 %v736
  %v3089 = vunpack.c.l.b16 %v737
  %v3090 = vunpack.c.h.b16 %v737
  %v3091 = vunpack.c.l.b16 %v738
  %v3092 = vunpack.c.h.b16 %v738
  %v3093 = vunpack.c.l.b16 %v739
  %v3094 = vunpack.c.h.b16 %v739
  %v3095 = vunpack.c.l.b16 %v740
  %v3096 = vunpack.c.h.b16 %v740
  %v3097 = vunpack.c.l.b16 %v741
  %v3098 = vunpack.c.h.b16 %v741
  %v3099 = vunpack.c.l.b16 %v742
  %v3100 = vunpack.c.h.b16 %v742
  %v3101 = vunpack.c.l.b16 %v743
  %v3102 = vunpack.c.h.b16 %v743
  %v3103 = vunpack.c.l.b16 %v744
  %v3104 = vunpack.c.h.b16 %v744
  %v3105 = vunpack.c.l.b16 %v745
  %v3106 = vunpack.c.h.b16 %v745
  %v3107 = vunpack.c.l.b16 %v746
  %v3108 = vunpack.c.h.b16 %v746
  %v3109 = vunpack.c.l.b16 %v747
  %v3110 = vunpack.c.h.b16 %v747
  %v3111 = vunpack.c.l.b16 %v748
  %v3112 = vunpack.c.h.b16 %v748
  %v3113 = vunpack.c.l.b16 %v749
  %v3114 = vunpack.c.h.b16 %v749
  %v3115 = vunpack.c.l.b16 %v750
  %v3116 = vunpack.c.h.b16 %v750
  %v3117 = vunpack.c.l.b16 %v751
  %v3118 = vunpack.c.h.b16 %v751
  %v3119 = vunpack.c.l.b16 %v752
  %v3120 = vunpack.c.h.b16 %v752
  %v3121 = vunpack.c.l.b16 %v753
  %v3122 = vunpack.c.h.b16 %v753
  %v3123 = vunpack.c.l.b16 %v754
  %v3124 = vunpack.c.h.b16 %v754
  %v3125 = vunpack.c.l.b16 %v755
  %v3126 = vunpack.c.h.b16 %v755
  %v3127 = vunpack.c.l.b16 %v756
  %v3128 = vunpack.c.h.b16 %v756
  %v3129 = vunpack.c.l.b16 %v757
  %v3130 = vunpack.c.h.b16 %v757
  %v3131 = vunpack.c.l.b16 %v758
  %v3132 = vunpack.c.h.b16 %v758
  %v3133 = vunpack.c.l.b16 %v759
  %v3134 = vunpack.c.h.b16 %v759
  %v3135 = vunpack.c.l.b16 %v760
  %v3136 = vunpack.c.h.b16 %v760
  %v3137 = vunpack.c.l.b16 %v761
  %v3138 = vunpack.c.h.b16 %v761
  %v3139 = vunpack.c.l.b16 %v762
  %v3140 = vunpack.c.h.b16 %v762
  %v3141 = vunpack.c.l.b16 %v763
  %v3142 = vunpack.c.h.b16 %v763
  %v3143 = vunpack.c.l.b16 %v764
  %v3144 = vunpack.c.h.b16 %v764
  %v3145 = vunpack.c.l.b16 %v765
  %v3146 = vunpack.c.h.b16 %v765
  %v3147 = vunpack.c.l.b16 %v766
  %v3148 = vunpack.c.h.b16 %v766
  %v3149 = vunpack.c.l.b16 %v767
  %v3150 = vunpack.c.h.b16 %v767
  %v3151 = vunpack.c.l.b16 %v768
  %v3152 = vunpack.c.h.b16 %v768
  %v3153 = vunpack.c.l.b16 %v769
  %v3154 = vunpack.c.h.b16 %v769
  %v3155 = vunpack.c.l.b16 %v770
  %v3156 = vunpack.c.h.b16 %v770
  %v3157 = vunpack.c.l.b16 %v771
  %v3158 = vunpack.c.h.b16 %v771
  %v3159 = vunpack.c.l.b16 %v772
  %v3160 = vunpack.c.h.b16 %v772
  %v3161 = vunpack.c.l.b16 %v773
  %v3162 = vunpack.c.h.b16 %v773
  %v3163 = vunpack.c.l.b16 %v774
  %v3164 = vunpack.c.h.b16 %v774
  %v3165 = vunpack.c.l.b16 %v775
  %v3166 = vunpack.c.h.b16 %v775
  %v3167 = vunpack.c.l.b16 %v776
  %v3168 = vunpack.c.h.b16 %v776
  %v3169 = vunpack.c.l.b16 %v777
  %v3170 = vunpack.c.h.b16 %v777
  %v3171 = vunpack.c.l.b16 %v778
  %v3172 = vunpack.c.h.b16 %v778
  %v3173 = vunpack.c.l.b16 %v779
  %v3174 = vunpack.c.h.b16 %v779
  %v3175 = vunpack.c.l.b16 %v780
  %v3176 = vunpack.c.h.b16 %v780
  %v3177 = vunpack.c.l.b16 %v781
  %v3178 = vunpack.c.h.b16 %v781
  %v3179 = vunpack.c.l.b16 %v782
  %v3180 = vunpack.c.h.b16 %v782
  %v3181 = vunpack.c.l.b16 %v783
  %v3182 = vunpack.c.h.b16 %v783
  %v3183 = vunpack.c.l.b16 %v784
  %v3184 = vunpack.c.h.b16 %v784
  %v3185 = vunpack.c.l.b16 %v785
  %v3186 = vunpack.c.h.b16 %v785
  %v3187 = vunpack.c.l.b16 %v786
  %v3188 = vunpack.c.h.b16 %v786
  %v3189 = vunpack.c.l.b16 %v787
  %v3190 = vunpack.c.h.b16 %v787
  %v3191 = vunpack.c.l.b16 %v788
  %v3192 = vunpack.c.h.b16 %v788
  %v3193 = vunpack.c.l.b16 %v789
  %v3194 = vunpack.c.h.b16 %v789
  %v3195 = vunpack.c.l.b16 %v790
  %v3196 = vunpack.c.h.b16 %v790
  %v3197 = vunpack.c.l.b16 %v791
  %v3198 = vunpack.c.h.b16 %v791
  %v3199 = vunpack.c.l.b16 %v792
  %v3200 = vunpack.c.h.b16 %v792
  %v3201 = vunpack.c.l.b16 %v793
  %v3202 = vunpack.c.h.b16 %v793
  %v3203 = vunpack.c.l.b16 %v794
  %v3204 = vunpack.c.h.b16 %v794
  %v3205 = vunpack.c.l.b16 %v795
  %v3206 = vunpack.c.h.b16 %v795
  %v3207 = vunpack.c.l.b16 %v796
  %v3208 = vunpack.c.h.b16 %v796
  %v3209 = vunpack.c.l.b16 %v797
  %v3210 = vunpack.c.h.b16 %v797
  %v3211 = vunpack.c.l.b16 %v798
  %v3212 = vunpack.c.h.b16 %v798
  %v3213 = vunpack.c.l.b16 %v799
  %v3214 = vunpack.c.h.b16 %v799
  %v3215 = vunpack.c.l.b16 %v800
  %v3216 = vunpack.c.h.b16 %v800
  %v3217 = vunpack.c.l.b16 %v801
  %v3218 = vunpack.c.h.b16 %v801
  %v3219 = vunpack.c.l.b16 %v802
  %v3220 = vunpack.c.h.b16 %v802
  %v3221 = vunpack.c.l.b16 %v803
  %v3222 = vunpack.c.h.b16 %v803
  %v3223 = vunpack.c.l.b16 %v804
  %v3224 = vunpack.c.h.b16 %v804
  %v3225 = vunpack.c.l.b16 %v805
  %v3226 = vunpack.c.h.b16 %v805
  %v3227 = vunpack.c.l.b16 %v806
  %v3228 = vunpack.c.h.b16 %v806
  %v3229 = vunpack.c.l.b16 %v807
  %v3230 = vunpack.c.h.b16 %v807
  %v3231 = vunpack.c.l.b16 %v808
  %v3232 = vunpack.c.h.b16 %v808
  %v3233 = vunpack.c.l.b16 %v809
  %v3234 = vunpack.c.h.b16 %v809
  %v3235 = vunpack.c.l.b16 %v810
  %v3236 = vunpack.c.h.b16 %v810
  %v3237 = vunpack.c.l.b16 %v811
  %v3238 = vunpack.c.h.b16 %v811
  %v3239 = vunpack.c.l.b16 %v812
  %v3240 = vunpack.c.h.b16 %v812
  %v3241 = vunpack.c.l.b16 %v813
  %v3242 = vunpack.c.h.b16 %v813
  %v3243 = vunpack.c.l.b16 %v814
  %v3244 = vunpack.c.h.b16 %v814
  %v3245 = vunpack.c.l.b16 %v815
  %v3246 = vunpack.c.h.b16 %v815
  %v3247 = vunpack.c.l.b16 %v816
  %v3248 = vunpack.c.h.b16 %v816
  %v3249 = vunpack.c.l.b16 %v817
  %v3250 = vunpack.c.h.b16 %v817
  %v3251 = vunpack.c.l.b16 %v818
  %v3252 = vunpack.c.h.b16 %v818
  %v3253 = vunpack.c.l.b16 %v819
  %v3254 = vunpack.c.h.b16 %v819
  %v3255 = vunpack.c.l.b16 %v820
  %v3256 = vunpack.c.h.b16 %v820
  %v3257 = vunpack.c.l.b16 %v821
  %v3258 = vunpack.c.h.b16 %v821
  %v3259 = vunpack.c.l.b16 %v822
  %v3260 = vunpack.c.h.b16 %v822
  %v3261 = vunpack.c.l.b16 %v823
  %v3262 = vunpack.c.h.b16 %v823
  %v3263 = vunpack.c.l.b16 %v824
  %v3264 = vunpack.c.h.b16 %v824
  %v3265 = vunpack.c.l.b16 %v825
  %v3266 = vunpack.c.h.b16 %v825
  %v3267 = vunpack.c.l.b16 %v826
  %v3268 = vunpack.c.h.b16 %v826
  %v3269 = vunpack.c.l.b16 %v827
  %v3270 = vunpack.c.h.b16 %v827
  %v3271 = vunpack.c.l.b16 %v828
  %v3272 = vunpack.c.h.b16 %v828
  %v3273 = vunpack.c.l.b16 %v829
  %v3274 = vunpack.c.h.b16 %v829
  %v3275 = vunpack.c.l.b16 %v830
  %v3276 = vunpack.c.h.b16 %v830
  %v3277 = vpack.c.b16 %v1745, %v1741
  %v3278 = vpack.c.b16 %v1746, %v1742
  %v3279 = vpack.c.b16 %v1747, %v1743
  %v3280 = vpack.c.b16 %v1748, %v1744
  %v3281 = vpack.c.b16 %v1753, %v1749
  %v3282 = vpack.c.b16 %v1754, %v1750
  %v3283 = vpack.c.b16 %v1755, %v1751
  %v3284 = vpack.c.b16 %v1756, %v1752
  %v3285 = vpack.c.b16 %v1761, %v1757
  %v3286 = vpack.c.b16 %v1762, %v1758
  %v3287 = vpack.c.b16 %v1763, %v1759
  %v3288 = vpack.c.b16 %v1764, %v1760
  %v3289 = vpack.c.b16 %v1769, %v1765
  %v3290 = vpack.c.b16 %v1770, %v1766
  %v3291 = vpack.c.b16 %v1771, %v1767
  %v3292 = vpack.c.b16 %v1772, %v1768
  %v3293 = vpack.c.b16 %v1777, %v1773
  %v3294 = vpack.c.b16 %v1778, %v1774
  %v3295 = vpack.c.b16 %v1779, %v1775
  %v3296 = vpack.c.b16 %v1780, %v1776
  %v3297 = vpack.c.b16 %v1785, %v1781
  %v3298 = vpack.c.b16 %v1786, %v1782
  %v3299 = vpack.c.b16 %v1787, %v1783
  %v3300 = vpack.c.b16 %v1788, %v1784
  %v3301 = vpack.c.b16 %v1793, %v1789
  %v3302 = vpack.c.b16 %v1794, %v1790
  %v3303 = vpack.c.b16 %v1795, %v1791
  %v3304 = vpack.c.b16 %v1796, %v1792
  %v3305 = vpack.c.b16 %v1801, %v1797
  %v3306 = vpack.c.b16 %v1802, %v1798
  %v3307 = vpack.c.b16 %v1803, %v1799
  %v3308 = vpack.c.b16 %v1804, %v1800
  %v3309 = vpack.c.b16 %v1809, %v1805
  %v3310 = vpack.c.b16 %v1810, %v1806
  %v3311 = vpack.c.b16 %v1811, %v1807
  %v3312 = vpack.c.b16 %v1812, %v1808
  %v3313 = vpack.c.b16 %v1817, %v1813
  %v3314 = vpack.c.b16 %v1818, %v1814
  %v3315 = vpack.c.b16 %v1819, %v1815
  %v3316 = vpack.c.b16 %v1820, %v1816
  %v3317 = vpack.c.b16 %v1825, %v1821
  %v3318 = vpack.c.b16 %v1826, %v1822
  %v3319 = vpack.c.b16 %v1827, %v1823
  %v3320 = vpack.c.b16 %v1828, %v1824
  %v3321 = vpack.c.b16 %v1833, %v1829
  %v3322 = vpack.c.b16 %v1834, %v1830
  %v3323 = vpack.c.b16 %v1835, %v1831
  %v3324 = vpack.c.b16 %v1836, %v1832
  %v3325 = vpack.c.b16 %v1841, %v1837
  %v3326 = vpack.c.b16 %v1842, %v1838
  %v3327 = vpack.c.b16 %v1843, %v1839
  %v3328 = vpack.c.b16 %v1844, %v1840
  %v3329 = vpack.c.b16 %v1849, %v1845
  %v3330 = vpack.c.b16 %v1850, %v1846
  %v3331 = vpack.c.b16 %v1851, %v1847
  %v3332 = vpack.c.b16 %v1852, %v1848
  %v3333 = vpack.c.b16 %v1857, %v1853
  %v3334 = vpack.c.b16 %v1858, %v1854
  %v3335 = vpack.c.b16 %v1859, %v1855
  %v3336 = vpack.c.b16 %v1860, %v1856
  %v3337 = vpack.c.b16 %v1865, %v1861
  %v3338 = vpack.c.b16 %v1866, %v1862
  %v3339 = vpack.c.b16 %v1867, %v1863
  %v3340 = vpack.c.b16 %v1868, %v1864
  %v3341 = vpack.c.b16 %v1873, %v1869
  %v3342 = vpack.c.b16 %v1874, %v1870
  %v3343 = vpack.c.b16 %v1875, %v1871
  %v3344 = vpack.c.b16 %v1876, %v1872
  %v3345 = vpack.c.b16 %v1881, %v1877
  %v3346 = vpack.c.b16 %v1882, %v1878
  %v3347 = vpack.c.b16 %v1883, %v1879
  %v3348 = vpack.c.b16 %v1884, %v1880
  %v3349 = vpack.c.b16 %v1889, %v1885
  %v3350 = vpack.c.b16 %v1890, %v1886
  %v3351 = vpack.c.b16 %v1891, %v1887
  %v3352 = vpack.c.b16 %v1892, %v1888
  %v3353 = vpack.c.b16 %v1897, %v1893
  %v3354 = vpack.c.b16 %v1898, %v1894
  %v3355 = vpack.c.b16 %v1899, %v1895
  %v3356 = vpack.c.b16 %v1900, %v1896
  %v3357 = vpack.c.b16 %v1905, %v1901
  %v3358 = vpack.c.b16 %v1906, %v1902
  %v3359 = vpack.c.b16 %v1907, %v1903
  %v3360 = vpack.c.b16 %v1908, %v1904
  %v3361 = vpack.c.b16 %v1913, %v1909
  %v3362 = vpack.c.b16 %v1914, %v1910
  %v3363 = vpack.c.b16 %v1915, %v1911
  %v3364 = vpack.c.b16 %v1916, %v1912
  %v3365 = vpack.c.b16 %v1921, %v1917
  %v3366 = vpack.c.b16 %v1922, %v1918
  %v3367 = vpack.c.b16 %v1923, %v1919
  %v3368 = vpack.c.b16 %v1924, %v1920
  %v3369 = vpack.c.b16 %v1929, %v1925
  %v3370 = vpack.c.b16 %v1930, %v1926
  %v3371 = vpack.c.b16 %v1931, %v1927
  %v3372 = vpack.c.b16 %v1932, %v1928
  %v3373 = vpack.c.b16 %v1937, %v1933
  %v3374 = vpack.c.b16 %v1938, %v1934
  %v3375 = vpack.c.b16 %v1939, %v1935
  %v3376 = vpack.c.b16 %v1940, %v1936
  %v3377 = vpack.c.b16 %v1945, %v1941
  %v3378 = vpack.c.b16 %v1946, %v1942
  %v3379 = vpack.c.b16 %v1947, %v1943
  %v3380 = vpack.c.b16 %v1948, %v1944
  %v3381 = vpack.c.b16 %v1953, %v1949
  %v3382 = vpack.c.b16 %v1954, %v1950
  %v3383 = vpack.c.b16 %v1955, %v1951
  %v3384 = vpack.c.b16 %v1956, %v1952
  %v3385 = vpack.c.b16 %v1961, %v1957
  %v3386 = vpack.c.b16 %v1962, %v1958
  %v3387 = vpack.c.b16 %v1963, %v1959
  %v3388 = vpack.c.b16 %v1964, %v1960
  %v3389 = vpack.c.b16 %v1969, %v1965
  %v3390 = vpack.c.b16 %v1970, %v1966
  %v3391 = vpack.c.b16 %v1971, %v1967
  %v3392 = vpack.c.b16 %v1972, %v1968
  %v3393 = vpack.c.b16 %v1977, %v1973
  %v3394 = vpack.c.b16 %v1978, %v1974
  %v3395 = vpack.c.b16 %v1979, %v1975
  %v3396 = vpack.c.b16 %v1980, %v1976
  %v3397 = vpack.c.b16 %v1985, %v1981
  %v3398 = vpack.c.b16 %v1986, %v1982
  %v3399 = vpack.c.b16 %v1987, %v1983
  %v3400 = vpack.c.b16 %v1988, %v1984
  %v3401 = vpack.c.b16 %v1993, %v1989
  %v3402 = vpack.c.b16 %v1994, %v1990
  %v3403 = vpack.c.b16 %v1995, %v1991
  %v3404 = vpack.c.b16 %v1996, %v1992
  %v3405 = vpack.c.b16 %v2001, %v1997
  %v3406 = vpack.c.b16 %v2002, %v1998
  %v3407 = vpack.c.b16 %v2003, %v1999
  %v3408 = vpack.c.b16 %v2004, %v2000
  %v3409 = vpack.c.b16 %v2009, %v2005
  %v3410 = vpack.c.b16 %v2010, %v2006
  %v3411 = vpack.c.b16 %v2011, %v2007
  %v3412 = vpack.c.b16 %v2012, %v2008
  %v3413 = vpack.c.b16 %v2017, %v2013
  %v3414 = vpack.c.b16 %v2018, %v2014
  %v3415 = vpack.c.b16 %v2019, %v2015
  %v3416 = vpack.c.b16 %v2020, %v2016
  %v3417 = vpack.c.b16 %v2025, %v2021
  %v3418 = vpack.c.b16 %v2026, %v2022
  %v3419 = vpack.c.b16 %v2027, %v2023
  %v3420 = vpack.c.b16 %v2028, %v2024
  %v3421 = vpack.c.b16 %v2033, %v2029
  %v3422 = vpack.c.b16 %v2034, %v2030
  %v3423 = vpack.c.b16 %v2035, %v2031
  %v3424 = vpack.c.b16 %v2036, %v2032
  %v3425 = vpack.c.b16 %v2041, %v2037
  %v3426 = vpack.c.b16 %v2042, %v2038
  %v3427 = vpack.c.b16 %v2043, %v2039
  %v3428 = vpack.c.b16 %v2044, %v2040
  %v3429 = vpack.c.b16 %v2049, %v2045
  %v3430 = vpack.c.b16 %v2050, %v2046
  %v3431 = vpack.c.b16 %v2051, %v2047
  %v3432 = vpack.c.b16 %v2052, %v2048
  %v3433 = vpack.c.b16 %v2057, %v2053
  %v3434 = vpack.c.b16 %v2058, %v2054
  %v3435 = vpack.c.b16 %v2059, %v2055
  %v3436 = vpack.c.b16 %v2060, %v2056
  %v3437 = vpack.c.b16 %v2065, %v2061
  %v3438 = vpack.c.b16 %v2066, %v2062
  %v3439 = vpack.c.b16 %v2067, %v2063
  %v3440 = vpack.c.b16 %v2068, %v2064
  %v3441 = vpack.c.b16 %v2073, %v2069
  %v3442 = vpack.c.b16 %v2074, %v2070
  %v3443 = vpack.c.b16 %v2075, %v2071
  %v3444 = vpack.c.b16 %v2076, %v2072
  %v3445 = vpack.c.b16 %v2081, %v2077
  %v3446 = vpack.c.b16 %v2082, %v2078
  %v3447 = vpack.c.b16 %v2083, %v2079
  %v3448 = vpack.c.b16 %v2084, %v2080
  %v3449 = vpack.c.b16 %v2089, %v2085
  %v3450 = vpack.c.b16 %v2090, %v2086
  %v3451 = vpack.c.b16 %v2091, %v2087
  %v3452 = vpack.c.b16 %v2092, %v2088
  %v3453 = vpack.c.b16 %v2097, %v2093
  %v3454 = vpack.c.b16 %v2098, %v2094
  %v3455 = vpack.c.b16 %v2099, %v2095
  %v3456 = vpack.c.b16 %v2100, %v2096
  %v3457 = vpack.c.b16 %v2105, %v2101
  %v3458 = vpack.c.b16 %v2106, %v2102
  %v3459 = vpack.c.b16 %v2107, %v2103
  %v3460 = vpack.c.b16 %v2108, %v2104
  %v3461 = vpack.c.b16 %v2113, %v2109
  %v3462 = vpack.c.b16 %v2114, %v2110
  %v3463 = vpack.c.b16 %v2115, %v2111
  %v3464 = vpack.c.b16 %v2116, %v2112
  %v3465 = vpack.c.b16 %v2121, %v2117
  %v3466 = vpack.c.b16 %v2122, %v2118
  %v3467 = vpack.c.b16 %v2123, %v2119
  %v3468 = vpack.c.b16 %v2124, %v2120
  %v3469 = vpack.c.b16 %v2129, %v2125
  %v3470 = vpack.c.b16 %v2130, %v2126
  %v3471 = vpack.c.b16 %v2131, %v2127
  %v3472 = vpack.c.b16 %v2132, %v2128
  %v3473 = vpack.c.b16 %v2137, %v2133
  %v3474 = vpack.c.b16 %v2138, %v2134
  %v3475 = vpack.c.b16 %v2139, %v2135
  %v3476 = vpack.c.b16 %v2140, %v2136
  %v3477 = vpack.c.b16 %v2145, %v2141
  %v3478 = vpack.c.b16 %v2146, %v2142
  %v3479 = vpack.c.b16 %v2147, %v2143
  %v3480 = vpack.c.b16 %v2148, %v2144
  %v3481 = vpack.c.b16 %v2153, %v2149
  %v3482 = vpack.c.b16 %v2154, %v2150
  %v3483 = vpack.c.b16 %v2155, %v2151
  %v3484 = vpack.c.b16 %v2156, %v2152
  %v3485 = vpack.c.b16 %v2161, %v2157
  %v3486 = vpack.c.b16 %v2162, %v2158
  %v3487 = vpack.c.b16 %v2163, %v2159
  %v3488 = vpack.c.b16 %v2164, %v2160
  %v3489 = vpack.c.b16 %v2169, %v2165
  %v3490 = vpack.c.b16 %v2170, %v2166
  %v3491 = vpack.c.b16 %v2171, %v2167
  %v3492 = vpack.c.b16 %v2172, %v2168
  %v3493 = vpack.c.b16 %v2177, %v2173
  %v3494 = vpack.c.b16 %v2178, %v2174
  %v3495 = vpack.c.b16 %v2179, %v2175
  %v3496 = vpack.c.b16 %v2180, %v2176
  %v3497 = vpack.c.b16 %v2185, %v2181
  %v3498 = vpack.c.b16 %v2186, %v2182
  %v3499 = vpack.c.b16 %v2187, %v2183
  %v3500 = vpack.c.b16 %v2188, %v2184
  %v3501 = vpack.c.b16 %v2193, %v2189
  %v3502 = vpack.c.b16 %v2194, %v2190
  %v3503 = vpack.c.b16 %v2195, %v2191
  %v3504 = vpack.c.b16 %v2196, %v2192
  %v3505 = vpack.c.b16 %v2201, %v2197
  %v3506 = vpack.c.b16 %v2202, %v2198
  %v3507 = vpack.c.b16 %v2203, %v2199
  %v3508 = vpack.c.b16 %v2204, %v2200
  %v3509 = vpack.c.b16 %v2209, %v2205
  %v3510 = vpack.c.b16 %v2210, %v2206
  %v3511 = vpack.c.b16 %v2211, %v2207
  %v3512 = vpack.c.b16 %v2212, %v2208
  %v3513 = vpack.c.b16 %v2217, %v2213
  %v3514 = vpack.c.b16 %v2218, %v2214
  %v3515 = vpack.c.b16 %v2219, %v2215
  %v3516 = vpack.c.b16 %v2220, %v2216
  %v3517 = vpack.c.b16 %v2225, %v2221
  %v3518 = vpack.c.b16 %v2226, %v2222
  %v3519 = vpack.c.b16 %v2227, %v2223
  %v3520 = vpack.c.b16 %v2228, %v2224
  %v3521 = vpack.c.b16 %v2233, %v2229
  %v3522 = vpack.c.b16 %v2234, %v2230
  %v3523 = vpack.c.b16 %v2235, %v2231
  %v3524 = vpack.c.b16 %v2236, %v2232
  %v3525 = vpack.c.b16 %v2241, %v2237
  %v3526 = vpack.c.b16 %v2242, %v2238
  %v3527 = vpack.c.b16 %v2243, %v2239
  %v3528 = vpack.c.b16 %v2244, %v2240
  %v3529 = vpack.c.b16 %v2249, %v2245
  %v3530 = vpack.c.b16 %v2250, %v2246
  %v3531 = vpack.c.b16 %v2251, %v2247
  %v3532 = vpack.c.b16 %v2252, %v2248
  %v3533 = vpack.c.b16 %v2257, %v2253
  %v3534 = vpack.c.b16 %v2258, %v2254
  %v3535 = vpack.c.b16 %v2259, %v2255
  %v3536 = vpack.c.b16 %v2260, %v2256
  %v3537 = vpack.c.b16 %v2265, %v2261
  %v3538 = vpack.c.b16 %v2266, %v2262
  %v3539 = vpack.c.b16 %v2267, %v2263
  %v3540 = vpack.c.b16 %v2268, %v2264
  %v3541 = vpack.c.b16 %v2273, %v2269
  %v3542 = vpack.c.b16 %v2274, %v2270
  %v3543 = vpack.c.b16 %v2275, %v2271
  %v3544 = vpack.c.b16 %v2276, %v2272
  %v3545 = vpack.c.b16 %v2281, %v2277
  %v3546 = vpack.c.b16 %v2282, %v2278
  %v3547 = vpack.c.b16 %v2283, %v2279
  %v3548 = vpack.c.b16 %v2284, %v2280
  %v3549 = vpack.c.b16 %v2289, %v2285
  %v3550 = vpack.c.b16 %v2290, %v2286
  %v3551 = vpack.c.b16 %v2291, %v2287
  %v3552 = vpack.c.b16 %v2292, %v2288
  %v3553 = vpack.c.b16 %v2297, %v2293
  %v3554 = vpack.c.b16 %v2298, %v2294
  %v3555 = vpack.c.b16 %v2299, %v2295
  %v3556 = vpack.c.b16 %v2300, %v2296
  %v3557 = vpack.c.b16 %v2305, %v2301
  %v3558 = vpack.c.b16 %v2306, %v2302
  %v3559 = vpack.c.b16 %v2307, %v2303
  %v3560 = vpack.c.b16 %v2308, %v2304
  %v3561 = vpack.c.b16 %v2313, %v2309
  %v3562 = vpack.c.b16 %v2314, %v2310
  %v3563 = vpack.c.b16 %v2315, %v2311
  %v3564 = vpack.c.b16 %v2316, %v2312
  %v3565 = vpack.c.b16 %v2321, %v2317
  %v3566 = vpack.c.b16 %v2322, %v2318
  %v3567 = vpack.c.b16 %v2323, %v2319
  %v3568 = vpack.c.b16 %v2324, %v2320
  %v3569 = vpack.c.b16 %v2329, %v2325
  %v3570 = vpack.c.b16 %v2330, %v2326
  %v3571 = vpack.c.b16 %v2331, %v2327
  %v3572 = vpack.c.b16 %v2332, %v2328
  %v3573 = vpack.c.b16 %v2337, %v2333
  %v3574 = vpack.c.b16 %v2338, %v2334
  %v3575 = vpack.c.b16 %v2339, %v2335
  %v3576 = vpack.c.b16 %v2340, %v2336
  %v3577 = vpack.c.b16 %v2345, %v2341
  %v3578 = vpack.c.b16 %v2346, %v2342
  %v3579 = vpack.c.b16 %v2347, %v2343
  %v3580 = vpack.c.b16 %v2348, %v2344
  %v3581 = vpack.c.b16 %v2353, %v2349
  %v3582 = vpack.c.b16 %v2354, %v2350
  %v3583 = vpack.c.b16 %v2355, %v2351
  %v3584 = vpack.c.b16 %v2356, %v2352
  %v3585 = vpack.c.b16 %v2361, %v2357
  %v3586 = vpack.c.b16 %v2362, %v2358
  %v3587 = vpack.c.b16 %v2363, %v2359
  %v3588 = vpack.c.b16 %v2364, %v2360
  %v3589 = vpack.c.b16 %v2369, %v2365
  %v3590 = vpack.c.b16 %v2370, %v2366
  %v3591 = vpack.c.b16 %v2371, %v2367
  %v3592 = vpack.c.b16 %v2372, %v2368
  %v3593 = vpack.c.b16 %v2377, %v2373
  %v3594 = vpack.c.b16 %v2378, %v2374
  %v3595 = vpack.c.b16 %v2379, %v2375
  %v3596 = vpack.c.b16 %v2380, %v2376
  %v3597 = vpack.c.b16 %v2385, %v2381
  %v3598 = vpack.c.b16 %v2386, %v2382
  %v3599 = vpack.c.b16 %v2387, %v2383
  %v3600 = vpack.c.b16 %v2388, %v2384
  %v3601 = vpack.c.b16 %v2393, %v2389
  %v3602 = vpack.c.b16 %v2394, %v2390
  %v3603 = vpack.c.b16 %v2395, %v2391
  %v3604 = vpack.c.b16 %v2396, %v2392
  %v3605 = vpack.c.b16 %v2401, %v2397
  %v3606 = vpack.c.b16 %v2402, %v2398
  %v3607 = vpack.c.b16 %v2403, %v2399
  %v3608 = vpack.c.b16 %v2404, %v2400
  %v3609 = vpack.c.b16 %v2409, %v2405
  %v3610 = vpack.c.b16 %v2410, %v2406
  %v3611 = vpack.c.b16 %v2411, %v2407
  %v3612 = vpack.c.b16 %v2412, %v2408
  %v3613 = vpack.c.b16 %v2417, %v2413
  %v3614 = vpack.c.b16 %v2418, %v2414
  %v3615 = vpack.c.b16 %v2419, %v2415
  %v3616 = vpack.c.b16 %v2420, %v2416
  %v3617 = vpack.c.b16 %v2425, %v2421
  %v3618 = vpack.c.b16 %v2426, %v2422
  %v3619 = vpack.c.b16 %v2427, %v2423
  %v3620 = vpack.c.b16 %v2428, %v2424
  %v3621 = vpack.c.b16 %v2433, %v2429
  %v3622 = vpack.c.b16 %v2434, %v2430
  %v3623 = vpack.c.b16 %v2435, %v2431
  %v3624 = vpack.c.b16 %v2436, %v2432
  %v3625 = vpack.c.b16 %v2441, %v2437
  %v3626 = vpack.c.b16 %v2442, %v2438
  %v3627 = vpack.c.b16 %v2443, %v2439
  %v3628 = vpack.c.b16 %v2444, %v2440
  %v3629 = vpack.c.b16 %v2449, %v2445
  %v3630 = vpack.c.b16 %v2450, %v2446
  %v3631 = vpack.c.b16 %v2451, %v2447
  %v3632 = vpack.c.b16 %v2452, %v2448
  %v3633 = vpack.c.b16 %v2457, %v2453
  %v3634 = vpack.c.b16 %v2458, %v2454
  %v3635 = vpack.c.b16 %v2459, %v2455
  %v3636 = vpack.c.b16 %v2460, %v2456
  %v3637 = vpack.c.b16 %v2465, %v2461
  %v3638 = vpack.c.b16 %v2466, %v2462
  %v3639 = vpack.c.b16 %v2467, %v2463
  %v3640 = vpack.c.b16 %v2468, %v2464
  %v3641 = vpack.c.b16 %v2473, %v2469
  %v3642 = vpack.c.b16 %v2474, %v2470
  %v3643 = vpack.c.b16 %v2475, %v2471
  %v3644 = vpack.c.b16 %v2476, %v2472
  %v3645 = vpack.c.b16 %v2481, %v2477
  %v3646 = vpack.c.b16 %v2482, %v2478
  %v3647 = vpack.c.b16 %v2483, %v2479
  %v3648 = vpack.c.b16 %v2484, %v2480
  %v3649 = vpack.c.b16 %v2489, %v2485
  %v3650 = vpack.c.b16 %v2490, %v2486
  %v3651 = vpack.c.b16 %v2491, %v2487
  %v3652 = vpack.c.b16 %v2492, %v2488
  %v3653 = vpack.c.b16 %v2497, %v2493
  %v3654 = vpack.c.b16 %v2498, %v2494
  %v3655 = vpack.c.b16 %v2499, %v2495
  %v3656 = vpack.c.b16 %v2500, %v2496
  %v3657 = vpack.c.b16 %v2505, %v2501
  %v3658 = vpack.c.b16 %v2506, %v2502
  %v3659 = vpack.c.b16 %v2507, %v2503
  %v3660 = vpack.c.b16 %v2508, %v2504
  %v3661 = vpack.c.b16 %v2513, %v2509
  %v3662 = vpack.c.b16 %v2514, %v2510
  %v3663 = vpack.c.b16 %v2515, %v2511
  %v3664 = vpack.c.b16 %v2516, %v2512
  %v3665 = vpack.c.b16 %v2521, %v2517
  %v3666 = vpack.c.b16 %v2522, %v2518
  %v3667 = vpack.c.b16 %v2523, %v2519
  %v3668 = vpack.c.b16 %v2524, %v2520
  %v3669 = vpack.c.b16 %v2529, %v2525
  %v3670 = vpack.c.b16 %v2530, %v2526
  %v3671 = vpack.c.b16 %v2531, %v2527
  %v3672 = vpack.c.b16 %v2532, %v2528
  %v3673 = vpack.c.b16 %v2537, %v2533
  %v3674 = vpack.c.b16 %v2538, %v2534
  %v3675 = vpack.c.b16 %v2539, %v2535
  %v3676 = vpack.c.b16 %v2540, %v2536
  %v3677 = vpack.c.b16 %v2545, %v2541
  %v3678 = vpack.c.b16 %v2546, %v2542
  %v3679 = vpack.c.b16 %v2547, %v2543
  %v3680 = vpack.c.b16 %v2548, %v2544
  %v3681 = vpack.c.b16 %v2553, %v2549
  %v3682 = vpack.c.b16 %v2554, %v2550
  %v3683 = vpack.c.b16 %v2555, %v2551
  %v3684 = vpack.c.b16 %v2556, %v2552
  %v3685 = vpack.c.b16 %v2561, %v2557
  %v3686 = vpack.c.b16 %v2562, %v2558
  %v3687 = vpack.c.b16 %v2563, %v2559
  %v3688 = vpack.c.b16 %v2564, %v2560
  %v3689 = vpack.c.b16 %v2569, %v2565
  %v3690 = vpack.c.b16 %v2570, %v2566
  %v3691 = vpack.c.b16 %v2571, %v2567
  %v3692 = vpack.c.b16 %v2572, %v2568
  %v3693 = vpack.c.b16 %v2577, %v2573
  %v3694 = vpack.c.b16 %v2578, %v2574
  %v3695 = vpack.c.b16 %v2579, %v2575
  %v3696 = vpack.c.b16 %v2580, %v2576
  %v3697 = vpack.c.b16 %v2585, %v2581
  %v3698 = vpack.c.b16 %v2586, %v2582
  %v3699 = vpack.c.b16 %v2587, %v2583
  %v3700 = vpack.c.b16 %v2588, %v2584
  %v3701 = vpack.c.b16 %v2593, %v2589
  %v3702 = vpack.c.b16 %v2594, %v2590
  %v3703 = vpack.c.b16 %v2595, %v2591
  %v3704 = vpack.c.b16 %v2596, %v2592
  %v3705 = vpack.c.b16 %v2601, %v2597
  %v3706 = vpack.c.b16 %v2602, %v2598
  %v3707 = vpack.c.b16 %v2603, %v2599
  %v3708 = vpack.c.b16 %v2604, %v2600
  %v3709 = vpack.c.b16 %v2609, %v2605
  %v3710 = vpack.c.b16 %v2610, %v2606
  %v3711 = vpack.c.b16 %v2611, %v2607
  %v3712 = vpack.c.b16 %v2612, %v2608
  %v3713 = vpack.c.b16 %v2617, %v2613
  %v3714 = vpack.c.b16 %v2618, %v2614
  %v3715 = vpack.c.b16 %v2619, %v2615
  %v3716 = vpack.c.b16 %v2620, %v2616
  %v3717 = vpack.c.b16 %v2625, %v2621
  %v3718 = vpack.c.b16 %v2626, %v2622
  %v3719 = vpack.c.b16 %v2627, %v2623
  %v3720 = vpack.c.b16 %v2628, %v2624
  %v3721 = vpack.c.b16 %v2633, %v2629
  %v3722 = vpack.c.b16 %v2634, %v2630
  %v3723 = vpack.c.b16 %v2635, %v2631
  %v3724 = vpack.c.b16 %v2636, %v2632
  %v3725 = vpack.c.b16 %v2641, %v2637
  %v3726 = vpack.c.b16 %v2642, %v2638
  %v3727 = vpack.c.b16 %v2643, %v2639
  %v3728 = vpack.c.b16 %v2644, %v2640
  %v3729 = vpack.c.b16 %v2649, %v2645
  %v3730 = vpack.c.b16 %v2650, %v2646
  %v3731 = vpack.c.b16 %v2651, %v2647
  %v3732 = vpack.c.b16 %v2652, %v2648
  %v3733 = vpack.c.b16 %v2657, %v2653
  %v3734 = vpack.c.b16 %v2658, %v2654
  %v3735 = vpack.c.b16 %v2659, %v2655
  %v3736 = vpack.c.b16 %v2660, %v2656
  %v3737 = vpack.c.b16 %v2665, %v2661
  %v3738 = vpack.c.b16 %v2666, %v2662
  %v3739 = vpack.c.b16 %v2667, %v2663
  %v3740 = vpack.c.b16 %v2668, %v2664
  %v3741 = vpack.c.b16 %v2673, %v2669
  %v3742 = vpack.c.b16 %v2674, %v2670
  %v3743 = vpack.c.b16 %v2675, %v2671
  %v3744 = vpack.c.b16 %v2676, %v2672
  %v3745 = vpack.c.b16 %v2681, %v2677
  %v3746 = vpack.c.b16 %v2682, %v2678
  %v3747 = vpack.c.b16 %v2683, %v2679
  %v3748 = vpack.c.b16 %v2684, %v2680
  %v3749 = vpack.c.b16 %v2689, %v2685
  %v3750 = vpack.c.b16 %v2690, %v2686
  %v3751 = vpack.c.b16 %v2691, %v2687
  %v3752 = vpack.c.b16 %v2692, %v2688
  %v3753 = vpack.c.b16 %v2697, %v2693
  %v3754 = vpack.c.b16 %v2698, %v2694
  %v3755 = vpack.c.b16 %v2699, %v2695
  %v3756 = vpack.c.b16 %v2700, %v2696
  %v3757 = vpack.c.b16 %v2705, %v2701
  %v3758 = vpack.c.b16 %v2706, %v2702
  %v3759 = vpack.c.b16 %v2707, %v2703
  %v3760 = vpack.c.b16 %v2708, %v2704
  %v3761 = vpack.c.b16 %v2713, %v2709
  %v3762 = vpack.c.b16 %v2714, %v2710
  %v3763 = vpack.c.b16 %v2715, %v2711
  %v3764 = vpack.c.b16 %v2716, %v2712
  %v3765 = vpack.c.b16 %v2721, %v2717
  %v3766 = vpack.c.b16 %v2722, %v2718
  %v3767 = vpack.c.b16 %v2723, %v2719
  %v3768 = vpack.c.b16 %v2724, %v2720
  %v3769 = vpack.c.b16 %v2729, %v2725
  %v3770 = vpack.c.b16 %v2730, %v2726
  %v3771 = vpack.c.b16 %v2731, %v2727
  %v3772 = vpack.c.b16 %v2732, %v2728
  %v3773 = vpack.c.b16 %v2737, %v2733
  %v3774 = vpack.c.b16 %v2738, %v2734
  %v3775 = vpack.c.b16 %v2739, %v2735
  %v3776 = vpack.c.b16 %v2740, %v2736
  %v3777 = vpack.c.b16 %v2745, %v2741
  %v3778 = vpack.c.b16 %v2746, %v2742
  %v3779 = vpack.c.b16 %v2747, %v2743
  %v3780 = vpack.c.b16 %v2748, %v2744
  %v3781 = vpack.c.b16 %v2753, %v2749
  %v3782 = vpack.c.b16 %v2754, %v2750
  %v3783 = vpack.c.b16 %v2755, %v2751
  %v3784 = vpack.c.b16 %v2756, %v2752
  %v3785 = vpack.c.b16 %v2761, %v2757
  %v3786 = vpack.c.b16 %v2762, %v2758
  %v3787 = vpack.c.b16 %v2763, %v2759
  %v3788 = vpack.c.b16 %v2764, %v2760
  %v3789 = vpack.c.b16 %v2769, %v2765
  %v3790 = vpack.c.b16 %v2770, %v2766
  %v3791 = vpack.c.b16 %v2771, %v2767
  %v3792 = vpack.c.b16 %v2772, %v2768
  %v3793 = vpack.c.b16 %v2777, %v2773
  %v3794 = vpack.c.b16 %v2778, %v2774
  %v3795 = vpack.c.b16 %v2779, %v2775
  %v3796 = vpack.c.b16 %v2780, %v2776
  %v3797 = vpack.c.b16 %v2785, %v2781
  %v3798 = vpack.c.b16 %v2786, %v2782
  %v3799 = vpack.c.b16 %v2787, %v2783
  %v3800 = vpack.c.b16 %v2788, %v2784
  %v3801 = vpack.c.b16 %v2793, %v2789
  %v3802 = vpack.c.b16 %v2794, %v2790
  %v3803 = vpack.c.b16 %v2795, %v2791
  %v3804 = vpack.c.b16 %v2796, %v2792
  %v3805 = vpack.c.b16 %v2801, %v2797
  %v3806 = vpack.c.b16 %v2802, %v2798
  %v3807 = vpack.c.b16 %v2803, %v2799
  %v3808 = vpack.c.b16 %v2804, %v2800
  %v3809 = vpack.c.b16 %v2809, %v2805
  %v3810 = vpack.c.b16 %v2810, %v2806
  %v3811 = vpack.c.b16 %v2811, %v2807
  %v3812 = vpack.c.b16 %v2812, %v2808
  %v3813 = vpack.c.b16 %v2817, %v2813
  %v3814 = vpack.c.b16 %v2818, %v2814
  %v3815 = vpack.c.b16 %v2819, %v2815
  %v3816 = vpack.c.b16 %v2820, %v2816
  %v3817 = vpack.c.b16 %v2825, %v2821
  %v3818 = vpack.c.b16 %v2826, %v2822
  %v3819 = vpack.c.b16 %v2827, %v2823
  %v3820 = vpack.c.b16 %v2828, %v2824
  %v3821 = vpack.c.b16 %v2833, %v2829
  %v3822 = vpack.c.b16 %v2834, %v2830
  %v3823 = vpack.c.b16 %v2835, %v2831
  %v3824 = vpack.c.b16 %v2836, %v2832
  %v3825 = vpack.c.b16 %v2841, %v2837
  %v3826 = vpack.c.b16 %v2842, %v2838
  %v3827 = vpack.c.b16 %v2843, %v2839
  %v3828 = vpack.c.b16 %v2844, %v2840
  %v3829 = vpack.c.b16 %v2849, %v2845
  %v3830 = vpack.c.b16 %v2850, %v2846
  %v3831 = vpack.c.b16 %v2851, %v2847
  %v3832 = vpack.c.b16 %v2852, %v2848
  %v3833 = vpack.c.b16 %v2857, %v2853
  %v3834 = vpack.c.b16 %v2858, %v2854
  %v3835 = vpack.c.b16 %v2859, %v2855
  %v3836 = vpack.c.b16 %v2860, %v2856
  %v3837 = vpack.c.b16 %v2865, %v2861
  %v3838 = vpack.c.b16 %v2866, %v2862
  %v3839 = vpack.c.b16 %v2867, %v2863
  %v3840 = vpack.c.b16 %v2868, %v2864
  %v3841 = vpack.c.b16 %v2873, %v2869
  %v3842 = vpack.c.b16 %v2874, %v2870
  %v3843 = vpack.c.b16 %v2875, %v2871
  %v3844 = vpack.c.b16 %v2876, %v2872
  %v3845 = vpack.c.b16 %v2881, %v2877
  %v3846 = vpack.c.b16 %v2882, %v2878
  %v3847 = vpack.c.b16 %v2883, %v2879
  %v3848 = vpack.c.b16 %v2884, %v2880
  %v3849 = vpack.c.b16 %v2889, %v2885
  %v3850 = vpack.c.b16 %v2890, %v2886
  %v3851 = vpack.c.b16 %v2891, %v2887
  %v3852 = vpack.c.b16 %v2892, %v2888
  %v3853 = vpack.c.b16 %v2897, %v2893
  %v3854 = vpack.c.b16 %v2898, %v2894
  %v3855 = vpack.c.b16 %v2899, %v2895
  %v3856 = vpack.c.b16 %v2900, %v2896
  %v3857 = vpack.c.b16 %v2905, %v2901
  %v3858 = vpack.c.b16 %v2906, %v2902
  %v3859 = vpack.c.b16 %v2907, %v2903
  %v3860 = vpack.c.b16 %v2908, %v2904
  %v3861 = vpack.c.b16 %v2913, %v2909
  %v3862 = vpack.c.b16 %v2914, %v2910
  %v3863 = vpack.c.b16 %v2915, %v2911
  %v3864 = vpack.c.b16 %v2916, %v2912
  %v3865 = vpack.c.b16 %v2921, %v2917
  %v3866 = vpack.c.b16 %v2922, %v2918
  %v3867 = vpack.c.b16 %v2923, %v2919
  %v3868 = vpack.c.b16 %v2924, %v2920
  %v3869 = vpack.c.b16 %v2929, %v2925
  %v3870 = vpack.c.b16 %v2930, %v2926
  %v3871 = vpack.c.b16 %v2931, %v2927
  %v3872 = vpack.c.b16 %v2932, %v2928
  %v3873 = vpack.c.b16 %v2937, %v2933
  %v3874 = vpack.c.b16 %v2938, %v2934
  %v3875 = vpack.c.b16 %v2939, %v2935
  %v3876 = vpack.c.b16 %v2940, %v2936
  %v3877 = vpack.c.b16 %v2945, %v2941
  %v3878 = vpack.c.b16 %v2946, %v2942
  %v3879 = vpack.c.b16 %v2947, %v2943
  %v3880 = vpack.c.b16 %v2948, %v2944
  %v3881 = vpack.c.b16 %v2953, %v2949
  %v3882 = vpack.c.b16 %v2954, %v2950
  %v3883 = vpack.c.b16 %v2955, %v2951
  %v3884 = vpack.c.b16 %v2956, %v2952
  %v3885 = vpack.c.b16 %v2961, %v2957
  %v3886 = vpack.c.b16 %v2962, %v2958
  %v3887 = vpack.c.b16 %v2963, %v2959
  %v3888 = vpack.c.b16 %v2964, %v2960
  %v3889 = vpack.c.b16 %v2969, %v2965
  %v3890 = vpack.c.b16 %v2970, %v2966
  %v3891 = vpack.c.b16 %v2971, %v2967
  %v3892 = vpack.c.b16 %v2972, %v2968
  %v3893 = vpack.c.b16 %v2977, %v2973
  %v3894 = vpack.c.b16 %v2978, %v2974
  %v3895 = vpack.c.b16 %v2979, %v2975
  %v3896 = vpack.c.b16 %v2980, %v2976
  %v3897 = vpack.c.b16 %v2985, %v2981
  %v3898 = vpack.c.b16 %v2986, %v2982
  %v3899 = vpack.c.b16 %v2987, %v2983
  %v3900 = vpack.c.b16 %v2988, %v2984
  %v3901 = vpack.c.b16 %v2993, %v2989
  %v3902 = vpack.c.b16 %v2994, %v2990
  %v3903 = vpack.c.b16 %v2995, %v2991
  %v3904 = vpack.c.b16 %v2996, %v2992
  %v3905 = vpack.c.b16 %v3001, %v2997
  %v3906 = vpack.c.b16 %v3002, %v2998
  %v3907 = vpack.c.b16 %v3003, %v2999
  %v3908 = vpack.c.b16 %v3004, %v3000
  %v3909 = vpack.c.b16 %v3009, %v3005
  %v3910 = vpack.c.b16 %v3010, %v3006
  %v3911 = vpack.c.b16 %v3011, %v3007
  %v3912 = vpack.c.b16 %v3012, %v3008
  %v3913 = vpack.c.b16 %v3017, %v3013
  %v3914 = vpack.c.b16 %v3018, %v3014
  %v3915 = vpack.c.b16 %v3019, %v3015
  %v3916 = vpack.c.b16 %v3020, %v3016
  %v3917 = vpack.c.b16 %v3025, %v3021
  %v3918 = vpack.c.b16 %v3026, %v3022
  %v3919 = vpack.c.b16 %v3027, %v3023
  %v3920 = vpack.c.b16 %v3028, %v3024
  %v3921 = vpack.c.b16 %v3033, %v3029
  %v3922 = vpack.c.b16 %v3034, %v3030
  %v3923 = vpack.c.b16 %v3035, %v3031
  %v3924 = vpack.c.b16 %v3036, %v3032
  %v3925 = vpack.c.b16 %v3041, %v3037
  %v3926 = vpack.c.b16 %v3042, %v3038
  %v3927 = vpack.c.b16 %v3043, %v3039
  %v3928 = vpack.c.b16 %v3044, %v3040
  %v3929 = vpack.c.b16 %v3049, %v3045
  %v3930 = vpack.c.b16 %v3050, %v3046
  %v3931 = vpack.c.b16 %v3051, %v3047
  %v3932 = vpack.c.b16 %v3052, %v3048
  %v3933 = vpack.c.b16 %v3057, %v3053
  %v3934 = vpack.c.b16 %v3058, %v3054
  %v3935 = vpack.c.b16 %v3059, %v3055
  %v3936 = vpack.c.b16 %v3060, %v3056
  %v3937 = vpack.c.b16 %v3065, %v3061
  %v3938 = vpack.c.b16 %v3066, %v3062
  %v3939 = vpack.c.b16 %v3067, %v3063
  %v3940 = vpack.c.b16 %v3068, %v3064
  %v3941 = vpack.c.b16 %v3073, %v3069
  %v3942 = vpack.c.b16 %v3074, %v3070
  %v3943 = vpack.c.b16 %v3075, %v3071
  %v3944 = vpack.c.b16 %v3076, %v3072
  %v3945 = vpack.c.b16 %v3081, %v3077
  %v3946 = vpack.c.b16 %v3082, %v3078
  %v3947 = vpack.c.b16 %v3083, %v3079
  %v3948 = vpack.c.b16 %v3084, %v3080
  %v3949 = vpack.c.b16 %v3089, %v3085
  %v3950 = vpack.c.b16 %v3090, %v3086
  %v3951 = vpack.c.b16 %v3091, %v3087
  %v3952 = vpack.c.b16 %v3092, %v3088
  %v3953 = vpack.c.b16 %v3097, %v3093
  %v3954 = vpack.c.b16 %v3098, %v3094
  %v3955 = vpack.c.b16 %v3099, %v3095
  %v3956 = vpack.c.b16 %v3100, %v3096
  %v3957 = vpack.c.b16 %v3105, %v3101
  %v3958 = vpack.c.b16 %v3106, %v3102
  %v3959 = vpack.c.b16 %v3107, %v3103
  %v3960 = vpack.c.b16 %v3108, %v3104
  %v3961 = vpack.c.b16 %v3113, %v3109
  %v3962 = vpack.c.b16 %v3114, %v3110
  %v3963 = vpack.c.b16 %v3115, %v3111
  %v3964 = vpack.c.b16 %v3116, %v3112
  %v3965 = vpack.c.b16 %v3121, %v3117
  %v3966 = vpack.c.b16 %v3122, %v3118
  %v3967 = vpack.c.b16 %v3123, %v3119
  %v3968 = vpack.c.b16 %v3124, %v3120
  %v3969 = vpack.c.b16 %v3129, %v3125
  %v3970 = vpack.c.b16 %v3130, %v3126
  %v3971 = vpack.c.b16 %v3131, %v3127
  %v3972 = vpack.c.b16 %v3132, %v3128
  %v3973 = vpack.c.b16 %v3137, %v3133
  %v3974 = vpack.c.b16 %v3138, %v3134
  %v3975 = vpack.c.b16 %v3139, %v3135
  %v3976 = vpack.c.b16 %v3140, %v3136
  %v3977 = vpack.c.b16 %v3145, %v3141
  %v3978 = vpack.c.b16 %v3146, %v3142
  %v3979 = vpack.c.b16 %v3147, %v3143
  %v3980 = vpack.c.b16 %v3148, %v3144
  %v3981 = vpack.c.b16 %v3153, %v3149
  %v3982 = vpack.c.b16 %v3154, %v3150
  %v3983 = vpack.c.b16 %v3155, %v3151
  %v3984 = vpack.c.b16 %v3156, %v3152
  %v3985 = vpack.c.b16 %v3161, %v3157
  %v3986 = vpack.c.b16 %v3162, %v3158
  %v3987 = vpack.c.b16 %v3163, %v3159
  %v3988 = vpack.c.b16 %v3164, %v3160
  %v3989 = vpack.c.b16 %v3169, %v3165
  %v3990 = vpack.c.b16 %v3170, %v3166
  %v3991 = vpack.c.b16 %v3171, %v3167
  %v3992 = vpack.c.b16 %v3172, %v3168
  %v3993 = vpack.c.b16 %v3177, %v3173
  %v3994 = vpack.c.b16 %v3178, %v3174
  %v3995 = vpack.c.b16 %v3179, %v3175
  %v3996 = vpack.c.b16 %v3180, %v3176
  %v3997 = vpack.c.b16 %v3185, %v3181
  %v3998 = vpack.c.b16 %v3186, %v3182
  %v3999 = vpack.c.b16 %v3187, %v3183
  %v4000 = vpack.c.b16 %v3188, %v3184
  %v4001 = vpack.c.b16 %v3193, %v3189
  %v4002 = vpack.c.b16 %v3194, %v3190
  %v4003 = vpack.c.b16 %v3195, %v3191
  %v4004 = vpack.c.b16 %v3196, %v3192
  %v4005 = vpack.c.b16 %v3201, %v3197
  %v4006 = vpack.c.b16 %v3202, %v3198
  %v4007 = vpack.c.b16 %v3203, %v3199
  %v4008 = vpack.c.b16 %v3204, %v3200
  %v4009 = vpack.c.b16 %v3209, %v3205
  %v4010 = vpack.c.b16 %v3210, %v3206
  %v4011 = vpack.c.b16 %v3211, %v3207
  %v4012 = vpack.c.b16 %v3212, %v3208
  %v4013 = vpack.c.b16 %v3217, %v3213
  %v4014 = vpack.c.b16 %v3218, %v3214
  %v4015 = vpack.c.b16 %v3219, %v3215
  %v4016 = vpack.c.b16 %v3220, %v3216
  %v4017 = vpack.c.b16 %v3225, %v3221
  %v4018 = vpack.c.b16 %v3226, %v3222
  %v4019 = vpack.c.b16 %v3227, %v3223
  %v4020 = vpack.c.b16 %v3228, %v3224
  %v4021 = vpack.c.b16 %v3233, %v3229
  %v4022 = vpack.c.b16 %v3234, %v3230
  %v4023 = vpack.c.b16 %v3235, %v3231
  %v4024 = vpack.c.b16 %v3236, %v3232
  %v4025 = vpack.c.b16 %v3241, %v3237
  %v4026 = vpack.c.b16 %v3242, %v3238
  %v4027 = vpack.c.b16 %v3243, %v3239
  %v4028 = vpack.c.b16 %v3244, %v3240
  %v4029 = vpack.c.b16 %v3249, %v3245
  %v4030 = vpack.c.b16 %v3250, %v3246
  %v4031 = vpack.c.b16 %v3251, %v3247
  %v4032 = vpack.c.b16 %v3252, %v3248
  %v4033 = vpack.c.b16 %v3257, %v3253
  %v4034 = vpack.c.b16 %v3258, %v3254
  %v4035 = vpack.c.b16 %v3259, %v3255
  %v4036 = vpack.c.b16 %v3260, %v3256
  %v4037 = vpack.c.b16 %v3265, %v3261
  %v4038 = vpack.c.b16 %v3266, %v3262
  %v4039 = vpack.c.b16 %v3267, %v3263
  %v4040 = vpack.c.b16 %v3268, %v3264
  %v4041 = vpack.c.b16 %v3273, %v3269
  %v4042 = vpack.c.b16 %v3274, %v3270
  %v4043 = vpack.c.b16 %v3275, %v3271
  %v4044 = vpack.c.b16 %v3276, %v3272
  %4813 = vmatprep.subr.bf16.mxu0 %v3306
  %4814 = vmatpush1.bf16.msra.mxu0 %v3305
  %4815 = vmatprep.subr.bf16.mxu0 %v3302
  %4816 = vmatpush1.bf16.msra.mxu0 %v3301
  %4817 = vmatprep.subr.bf16.mxu0 %v3298
  %4818 = vmatpush1.bf16.msra.mxu0 %v3297
  %4819 = vmatprep.subr.bf16.mxu0 %v3294
  %4820 = vmatpush1.bf16.msra.mxu0 %v3293
  %4821 = vmatprep.subr.bf16.mxu0 %v3290
  %4822 = vmatpush1.bf16.msra.mxu0 %v3289
  %4823 = vmatprep.subr.bf16.mxu0 %v3286
  %4824 = vmatpush1.bf16.msra.mxu0 %v3285
  %4825 = vmatprep.subr.bf16.mxu0 %v3282
  %4826 = vmatpush1.bf16.msra.mxu0 %v3281
  %4827 = vmatprep.subr.bf16.mxu0 %v3278
  %4828 = vmatpush1.bf16.msra.mxu0 %v3277
  %4829 = vmatprep.subr.bf16.mxu0 %v3338
  %4830 = vmatpush2.bf16.msra.mxu0 %v3337
  %4831 = vmatprep.subr.bf16.mxu0 %v3334
  %4832 = vmatpush2.bf16.msra.mxu0 %v3333
  %4833 = vmatprep.subr.bf16.mxu0 %v3330
  %4834 = vmatpush2.bf16.msra.mxu0 %v3329
  %4835 = vmatprep.subr.bf16.mxu0 %v3326
  %4836 = vmatpush2.bf16.msra.mxu0 %v3325
  %4837 = vmatprep.subr.bf16.mxu0 %v3322
  %4838 = vmatpush2.bf16.msra.mxu0 %v3321
  %4839 = vmatprep.subr.bf16.mxu0 %v3318
  %4840 = vmatpush2.bf16.msra.mxu0 %v3317
  %4841 = vmatprep.subr.bf16.mxu0 %v3314
  %4842 = vmatpush2.bf16.msra.mxu0 %v3313
  %4843 = vmatprep.subr.bf16.mxu0 %v3310
  %4844 = vmatpush2.bf16.msra.mxu0 %v3309
  %4845 = vmatprep.mubr.bf16.mxu0 %v926
  %4846 = vmatmul.mubr.bf16.gmra.mxu0 %v925
  %v4847 = vpop.f32.mrf.mxu0
  %v4848 = vadd.f32 %v836, %v4847
  %v4849 = vpop.f32.mrf.mxu0
  %v4850 = vadd.f32 %v840, %v4849
  %v4851 = vpop.f32.mrf.mxu0
  %v4852 = vadd.f32 %v836, %v4851
  %v4853 = vpop.f32.mrf.mxu0
  %v4854 = vadd.f32 %v840, %v4853
  %4855 = vdwg.mxu0
  %4856 = vmatprep.subr.bf16.mxu0 %v3370
  %4857 = vmatpush1.bf16.msra.mxu0 %v3369
  %4858 = vmatprep.subr.bf16.mxu0 %v3366
  %4859 = vmatpush1.bf16.msra.mxu0 %v3365
  %4860 = vmatprep.subr.bf16.mxu0 %v3362
  %4861 = vmatpush1.bf16.msra.mxu0 %v3361
  %4862 = vmatprep.subr.bf16.mxu0 %v3358
  %4863 = vmatpush1.bf16.msra.mxu0 %v3357
  %4864 = vmatprep.subr.bf16.mxu0 %v3354
  %4865 = vmatpush1.bf16.msra.mxu0 %v3353
  %4866 = vmatprep.subr.bf16.mxu0 %v3350
  %4867 = vmatpush1.bf16.msra.mxu0 %v3349
  %4868 = vmatprep.subr.bf16.mxu0 %v3346
  %4869 = vmatpush1.bf16.msra.mxu0 %v3345
  %4870 = vmatprep.subr.bf16.mxu0 %v3342
  %4871 = vmatpush1.bf16.msra.mxu0 %v3341
  %4872 = vmatprep.subr.bf16.mxu0 %v3402
  %4873 = vmatpush2.bf16.msra.mxu0 %v3401
  %4874 = vmatprep.subr.bf16.mxu0 %v3398
  %4875 = vmatpush2.bf16.msra.mxu0 %v3397
  %4876 = vmatprep.subr.bf16.mxu0 %v3394
  %4877 = vmatpush2.bf16.msra.mxu0 %v3393
  %4878 = vmatprep.subr.bf16.mxu0 %v3390
  %4879 = vmatpush2.bf16.msra.mxu0 %v3389
  %4880 = vmatprep.subr.bf16.mxu0 %v3386
  %4881 = vmatpush2.bf16.msra.mxu0 %v3385
  %4882 = vmatprep.subr.bf16.mxu0 %v3382
  %4883 = vmatpush2.bf16.msra.mxu0 %v3381
  %4884 = vmatprep.subr.bf16.mxu0 %v3378
  %4885 = vmatpush2.bf16.msra.mxu0 %v3377
  %4886 = vmatprep.subr.bf16.mxu0 %v3374
  %4887 = vmatpush2.bf16.msra.mxu0 %v3373
  %4888 = vmatprep.mubr.bf16.mxu0 %v928
  %4889 = vmatmul.mubr.bf16.gmra.mxu0 %v927
  %v4890 = vpop.f32.mrf.mxu0
  %v4891 = vadd.f32 %v4848, %v4890
  %v4892 = vpop.f32.mrf.mxu0
  %v4893 = vadd.f32 %v4850, %v4892
  %v4894 = vpop.f32.mrf.mxu0
  %v4895 = vadd.f32 %v4852, %v4894
  %v4896 = vpop.f32.mrf.mxu0
  %v4897 = vadd.f32 %v4854, %v4896
  %4898 = vdwg.mxu0
  %4899 = vmatprep.subr.bf16.mxu0 %v3434
  %4900 = vmatpush1.bf16.msra.mxu0 %v3433
  %4901 = vmatprep.subr.bf16.mxu0 %v3430
  %4902 = vmatpush1.bf16.msra.mxu0 %v3429
  %4903 = vmatprep.subr.bf16.mxu0 %v3426
  %4904 = vmatpush1.bf16.msra.mxu0 %v3425
  %4905 = vmatprep.subr.bf16.mxu0 %v3422
  %4906 = vmatpush1.bf16.msra.mxu0 %v3421
  %4907 = vmatprep.subr.bf16.mxu0 %v3418
  %4908 = vmatpush1.bf16.msra.mxu0 %v3417
  %4909 = vmatprep.subr.bf16.mxu0 %v3414
  %4910 = vmatpush1.bf16.msra.mxu0 %v3413
  %4911 = vmatprep.subr.bf16.mxu0 %v3410
  %4912 = vmatpush1.bf16.msra.mxu0 %v3409
  %4913 = vmatprep.subr.bf16.mxu0 %v3406
  %4914 = vmatpush1.bf16.msra.mxu0 %v3405
  %4915 = vmatprep.subr.bf16.mxu0 %v3466
  %4916 = vmatpush2.bf16.msra.mxu0 %v3465
  %4917 = vmatprep.subr.bf16.mxu0 %v3462
  %4918 = vmatpush2.bf16.msra.mxu0 %v3461
  %4919 = vmatprep.subr.bf16.mxu0 %v3458
  %4920 = vmatpush2.bf16.msra.mxu0 %v3457
  %4921 = vmatprep.subr.bf16.mxu0 %v3454
  %4922 = vmatpush2.bf16.msra.mxu0 %v3453
  %4923 = vmatprep.subr.bf16.mxu0 %v3450
  %4924 = vmatpush2.bf16.msra.mxu0 %v3449
  %4925 = vmatprep.subr.bf16.mxu0 %v3446
  %4926 = vmatpush2.bf16.msra.mxu0 %v3445
  %4927 = vmatprep.subr.bf16.mxu0 %v3442
  %4928 = vmatpush2.bf16.msra.mxu0 %v3441
  %4929 = vmatprep.subr.bf16.mxu0 %v3438
  %4930 = vmatpush2.bf16.msra.mxu0 %v3437
  %4931 = vmatprep.mubr.bf16.mxu0 %v930
  %4932 = vmatmul.mubr.bf16.gmra.mxu0 %v929
  %v4933 = vpop.f32.mrf.mxu0
  %v4934 = vadd.f32 %v4891, %v4933
  %v4935 = vpop.f32.mrf.mxu0
  %v4936 = vadd.f32 %v4893, %v4935
  %v4937 = vpop.f32.mrf.mxu0
  %v4938 = vadd.f32 %v4895, %v4937
  %v4939 = vpop.f32.mrf.mxu0
  %v4940 = vadd.f32 %v4897, %v4939
  %4941 = vdwg.mxu0
  %4942 = vmatprep.subr.bf16.mxu0 %v3498
  %4943 = vmatpush1.bf16.msra.mxu0 %v3497
  %4944 = vmatprep.subr.bf16.mxu0 %v3494
  %4945 = vmatpush1.bf16.msra.mxu0 %v3493
  %4946 = vmatprep.subr.bf16.mxu0 %v3490
  %4947 = vmatpush1.bf16.msra.mxu0 %v3489
  %4948 = vmatprep.subr.bf16.mxu0 %v3486
  %4949 = vmatpush1.bf16.msra.mxu0 %v3485
  %4950 = vmatprep.subr.bf16.mxu0 %v3482
  %4951 = vmatpush1.bf16.msra.mxu0 %v3481
  %4952 = vmatprep.subr.bf16.mxu0 %v3478
  %4953 = vmatpush1.bf16.msra.mxu0 %v3477
  %4954 = vmatprep.subr.bf16.mxu0 %v3474
  %4955 = vmatpush1.bf16.msra.mxu0 %v3473
  %4956 = vmatprep.subr.bf16.mxu0 %v3470
  %4957 = vmatpush1.bf16.msra.mxu0 %v3469
  %4958 = vmatprep.subr.bf16.mxu0 %v3530
  %4959 = vmatpush2.bf16.msra.mxu0 %v3529
  %4960 = vmatprep.subr.bf16.mxu0 %v3526
  %4961 = vmatpush2.bf16.msra.mxu0 %v3525
  %4962 = vmatprep.subr.bf16.mxu0 %v3522
  %4963 = vmatpush2.bf16.msra.mxu0 %v3521
  %4964 = vmatprep.subr.bf16.mxu0 %v3518
  %4965 = vmatpush2.bf16.msra.mxu0 %v3517
  %4966 = vmatprep.subr.bf16.mxu0 %v3514
  %4967 = vmatpush2.bf16.msra.mxu0 %v3513
  %4968 = vmatprep.subr.bf16.mxu0 %v3510
  %4969 = vmatpush2.bf16.msra.mxu0 %v3509
  %4970 = vmatprep.subr.bf16.mxu0 %v3506
  %4971 = vmatpush2.bf16.msra.mxu0 %v3505
  %4972 = vmatprep.subr.bf16.mxu0 %v3502
  %4973 = vmatpush2.bf16.msra.mxu0 %v3501
  %4974 = vmatprep.mubr.bf16.mxu0 %v932
  %4975 = vmatmul.mubr.bf16.gmra.mxu0 %v931
  %v4976 = vpop.f32.mrf.mxu0
  %v4977 = vadd.f32 %v4934, %v4976
  %v4978 = vpop.f32.mrf.mxu0
  %v4979 = vadd.f32 %v4936, %v4978
  %v4980 = vpop.f32.mrf.mxu0
  %v4981 = vadd.f32 %v4938, %v4980
  %v4982 = vpop.f32.mrf.mxu0
  %v4983 = vadd.f32 %v4940, %v4982
  %4984 = vdwg.mxu0
  %4985 = vmatprep.subr.bf16.mxu0 %v3562
  %4986 = vmatpush1.bf16.msra.mxu0 %v3561
  %4987 = vmatprep.subr.bf16.mxu0 %v3558
  %4988 = vmatpush1.bf16.msra.mxu0 %v3557
  %4989 = vmatprep.subr.bf16.mxu0 %v3554
  %4990 = vmatpush1.bf16.msra.mxu0 %v3553
  %4991 = vmatprep.subr.bf16.mxu0 %v3550
  %4992 = vmatpush1.bf16.msra.mxu0 %v3549
  %4993 = vmatprep.subr.bf16.mxu0 %v3546
  %4994 = vmatpush1.bf16.msra.mxu0 %v3545
  %4995 = vmatprep.subr.bf16.mxu0 %v3542
  %4996 = vmatpush1.bf16.msra.mxu0 %v3541
  %4997 = vmatprep.subr.bf16.mxu0 %v3538
  %4998 = vmatpush1.bf16.msra.mxu0 %v3537
  %4999 = vmatprep.subr.bf16.mxu0 %v3534
  %5000 = vmatpush1.bf16.msra.mxu0 %v3533
  %5001 = vmatprep.subr.bf16.mxu0 %v3594
  %5002 = vmatpush2.bf16.msra.mxu0 %v3593
  %5003 = vmatprep.subr.bf16.mxu0 %v3590
  %5004 = vmatpush2.bf16.msra.mxu0 %v3589
  %5005 = vmatprep.subr.bf16.mxu0 %v3586
  %5006 = vmatpush2.bf16.msra.mxu0 %v3585
  %5007 = vmatprep.subr.bf16.mxu0 %v3582
  %5008 = vmatpush2.bf16.msra.mxu0 %v3581
  %5009 = vmatprep.subr.bf16.mxu0 %v3578
  %5010 = vmatpush2.bf16.msra.mxu0 %v3577
  %5011 = vmatprep.subr.bf16.mxu0 %v3574
  %5012 = vmatpush2.bf16.msra.mxu0 %v3573
  %5013 = vmatprep.subr.bf16.mxu0 %v3570
  %5014 = vmatpush2.bf16.msra.mxu0 %v3569
  %5015 = vmatprep.subr.bf16.mxu0 %v3566
  %5016 = vmatpush2.bf16.msra.mxu0 %v3565
  %5017 = vmatprep.mubr.bf16.mxu0 %v934
  %5018 = vmatmul.mubr.bf16.gmra.mxu0 %v933
  %v5019 = vpop.f32.mrf.mxu0
  %v5020 = vadd.f32 %v4977, %v5019
  %v5021 = vpop.f32.mrf.mxu0
  %v5022 = vadd.f32 %v4979, %v5021
  %v5023 = vpop.f32.mrf.mxu0
  %v5024 = vadd.f32 %v4981, %v5023
  %v5025 = vpop.f32.mrf.mxu0
  %v5026 = vadd.f32 %v4983, %v5025
  %5027 = vdwg.mxu0
  %5028 = vmatprep.subr.bf16.mxu0 %v3626
  %5029 = vmatpush1.bf16.msra.mxu0 %v3625
  %5030 = vmatprep.subr.bf16.mxu0 %v3622
  %5031 = vmatpush1.bf16.msra.mxu0 %v3621
  %5032 = vmatprep.subr.bf16.mxu0 %v3618
  %5033 = vmatpush1.bf16.msra.mxu0 %v3617
  %5034 = vmatprep.subr.bf16.mxu0 %v3614
  %5035 = vmatpush1.bf16.msra.mxu0 %v3613
  %5036 = vmatprep.subr.bf16.mxu0 %v3610
  %5037 = vmatpush1.bf16.msra.mxu0 %v3609
  %5038 = vmatprep.subr.bf16.mxu0 %v3606
  %5039 = vmatpush1.bf16.msra.mxu0 %v3605
  %5040 = vmatprep.subr.bf16.mxu0 %v3602
  %5041 = vmatpush1.bf16.msra.mxu0 %v3601
  %5042 = vmatprep.subr.bf16.mxu0 %v3598
  %5043 = vmatpush1.bf16.msra.mxu0 %v3597
  %5044 = vmatprep.subr.bf16.mxu0 %v3658
  %5045 = vmatpush2.bf16.msra.mxu0 %v3657
  %5046 = vmatprep.subr.bf16.mxu0 %v3654
  %5047 = vmatpush2.bf16.msra.mxu0 %v3653
  %5048 = vmatprep.subr.bf16.mxu0 %v3650
  %5049 = vmatpush2.bf16.msra.mxu0 %v3649
  %5050 = vmatprep.subr.bf16.mxu0 %v3646
  %5051 = vmatpush2.bf16.msra.mxu0 %v3645
  %5052 = vmatprep.subr.bf16.mxu0 %v3642
  %5053 = vmatpush2.bf16.msra.mxu0 %v3641
  %5054 = vmatprep.subr.bf16.mxu0 %v3638
  %5055 = vmatpush2.bf16.msra.mxu0 %v3637
  %5056 = vmatprep.subr.bf16.mxu0 %v3634
  %5057 = vmatpush2.bf16.msra.mxu0 %v3633
  %5058 = vmatprep.subr.bf16.mxu0 %v3630
  %5059 = vmatpush2.bf16.msra.mxu0 %v3629
  %5060 = vmatprep.mubr.bf16.mxu0 %v936
  %5061 = vmatmul.mubr.bf16.gmra.mxu0 %v935
  %v5062 = vpop.f32.mrf.mxu0
  %v5063 = vadd.f32 %v5020, %v5062
  %v5064 = vpop.f32.mrf.mxu0
  %v5065 = vadd.f32 %v5022, %v5064
  %v5066 = vpop.f32.mrf.mxu0
  %v5067 = vadd.f32 %v5024, %v5066
  %v5068 = vpop.f32.mrf.mxu0
  %v5069 = vadd.f32 %v5026, %v5068
  %5070 = vdwg.mxu0
  %5071 = vmatprep.subr.bf16.mxu0 %v3690
  %5072 = vmatpush1.bf16.msra.mxu0 %v3689
  %5073 = vmatprep.subr.bf16.mxu0 %v3686
  %5074 = vmatpush1.bf16.msra.mxu0 %v3685
  %5075 = vmatprep.subr.bf16.mxu0 %v3682
  %5076 = vmatpush1.bf16.msra.mxu0 %v3681
  %5077 = vmatprep.subr.bf16.mxu0 %v3678
  %5078 = vmatpush1.bf16.msra.mxu0 %v3677
  %5079 = vmatprep.subr.bf16.mxu0 %v3674
  %5080 = vmatpush1.bf16.msra.mxu0 %v3673
  %5081 = vmatprep.subr.bf16.mxu0 %v3670
  %5082 = vmatpush1.bf16.msra.mxu0 %v3669
  %5083 = vmatprep.subr.bf16.mxu0 %v3666
  %5084 = vmatpush1.bf16.msra.mxu0 %v3665
  %5085 = vmatprep.subr.bf16.mxu0 %v3662
  %5086 = vmatpush1.bf16.msra.mxu0 %v3661
  %5087 = vmatprep.subr.bf16.mxu0 %v3722
  %5088 = vmatpush2.bf16.msra.mxu0 %v3721
  %5089 = vmatprep.subr.bf16.mxu0 %v3718
  %5090 = vmatpush2.bf16.msra.mxu0 %v3717
  %5091 = vmatprep.subr.bf16.mxu0 %v3714
  %5092 = vmatpush2.bf16.msra.mxu0 %v3713
  %5093 = vmatprep.subr.bf16.mxu0 %v3710
  %5094 = vmatpush2.bf16.msra.mxu0 %v3709
  %5095 = vmatprep.subr.bf16.mxu0 %v3706
  %5096 = vmatpush2.bf16.msra.mxu0 %v3705
  %5097 = vmatprep.subr.bf16.mxu0 %v3702
  %5098 = vmatpush2.bf16.msra.mxu0 %v3701
  %5099 = vmatprep.subr.bf16.mxu0 %v3698
  %5100 = vmatpush2.bf16.msra.mxu0 %v3697
  %5101 = vmatprep.subr.bf16.mxu0 %v3694
  %5102 = vmatpush2.bf16.msra.mxu0 %v3693
  %5103 = vmatprep.mubr.bf16.mxu0 %v938
  %5104 = vmatmul.mubr.bf16.gmra.mxu0 %v937
  %v5105 = vpop.f32.mrf.mxu0
  %v5106 = vadd.f32 %v5063, %v5105
  %v5107 = vpop.f32.mrf.mxu0
  %v5108 = vadd.f32 %v5065, %v5107
  %v5109 = vpop.f32.mrf.mxu0
  %v5110 = vadd.f32 %v5067, %v5109
  %v5111 = vpop.f32.mrf.mxu0
  %v5112 = vadd.f32 %v5069, %v5111
  %5113 = vdwg.mxu0
  %5114 = vmatprep.subr.bf16.mxu0 %v3754
  %5115 = vmatpush1.bf16.msra.mxu0 %v3753
  %5116 = vmatprep.subr.bf16.mxu0 %v3750
  %5117 = vmatpush1.bf16.msra.mxu0 %v3749
  %5118 = vmatprep.subr.bf16.mxu0 %v3746
  %5119 = vmatpush1.bf16.msra.mxu0 %v3745
  %5120 = vmatprep.subr.bf16.mxu0 %v3742
  %5121 = vmatpush1.bf16.msra.mxu0 %v3741
  %5122 = vmatprep.subr.bf16.mxu0 %v3738
  %5123 = vmatpush1.bf16.msra.mxu0 %v3737
  %5124 = vmatprep.subr.bf16.mxu0 %v3734
  %5125 = vmatpush1.bf16.msra.mxu0 %v3733
  %5126 = vmatprep.subr.bf16.mxu0 %v3730
  %5127 = vmatpush1.bf16.msra.mxu0 %v3729
  %5128 = vmatprep.subr.bf16.mxu0 %v3726
  %5129 = vmatpush1.bf16.msra.mxu0 %v3725
  %5130 = vmatprep.subr.bf16.mxu0 %v3786
  %5131 = vmatpush2.bf16.msra.mxu0 %v3785
  %5132 = vmatprep.subr.bf16.mxu0 %v3782
  %5133 = vmatpush2.bf16.msra.mxu0 %v3781
  %5134 = vmatprep.subr.bf16.mxu0 %v3778
  %5135 = vmatpush2.bf16.msra.mxu0 %v3777
  %5136 = vmatprep.subr.bf16.mxu0 %v3774
  %5137 = vmatpush2.bf16.msra.mxu0 %v3773
  %5138 = vmatprep.subr.bf16.mxu0 %v3770
  %5139 = vmatpush2.bf16.msra.mxu0 %v3769
  %5140 = vmatprep.subr.bf16.mxu0 %v3766
  %5141 = vmatpush2.bf16.msra.mxu0 %v3765
  %5142 = vmatprep.subr.bf16.mxu0 %v3762
  %5143 = vmatpush2.bf16.msra.mxu0 %v3761
  %5144 = vmatprep.subr.bf16.mxu0 %v3758
  %5145 = vmatpush2.bf16.msra.mxu0 %v3757
  %5146 = vmatprep.mubr.bf16.mxu0 %v940
  %5147 = vmatmul.mubr.bf16.gmra.mxu0 %v939
  %v5148 = vpop.f32.mrf.mxu0
  %v5149 = vadd.f32 %v5106, %v5148
  %v5150 = vpop.f32.mrf.mxu0
  %v5151 = vadd.f32 %v5108, %v5150
  %v5152 = vpop.f32.mrf.mxu0
  %v5153 = vadd.f32 %v5110, %v5152
  %v5154 = vpop.f32.mrf.mxu0
  %v5155 = vadd.f32 %v5112, %v5154
  %5156 = vdwg.mxu0
  %5157 = vmatprep.subr.bf16.mxu0 %v3818
  %5158 = vmatpush1.bf16.msra.mxu0 %v3817
  %5159 = vmatprep.subr.bf16.mxu0 %v3814
  %5160 = vmatpush1.bf16.msra.mxu0 %v3813
  %5161 = vmatprep.subr.bf16.mxu0 %v3810
  %5162 = vmatpush1.bf16.msra.mxu0 %v3809
  %5163 = vmatprep.subr.bf16.mxu0 %v3806
  %5164 = vmatpush1.bf16.msra.mxu0 %v3805
  %5165 = vmatprep.subr.bf16.mxu0 %v3802
  %5166 = vmatpush1.bf16.msra.mxu0 %v3801
  %5167 = vmatprep.subr.bf16.mxu0 %v3798
  %5168 = vmatpush1.bf16.msra.mxu0 %v3797
  %5169 = vmatprep.subr.bf16.mxu0 %v3794
  %5170 = vmatpush1.bf16.msra.mxu0 %v3793
  %5171 = vmatprep.subr.bf16.mxu0 %v3790
  %5172 = vmatpush1.bf16.msra.mxu0 %v3789
  %5173 = vmatprep.subr.bf16.mxu0 %v3850
  %5174 = vmatpush2.bf16.msra.mxu0 %v3849
  %5175 = vmatprep.subr.bf16.mxu0 %v3846
  %5176 = vmatpush2.bf16.msra.mxu0 %v3845
  %5177 = vmatprep.subr.bf16.mxu0 %v3842
  %5178 = vmatpush2.bf16.msra.mxu0 %v3841
  %5179 = vmatprep.subr.bf16.mxu0 %v3838
  %5180 = vmatpush2.bf16.msra.mxu0 %v3837
  %5181 = vmatprep.subr.bf16.mxu0 %v3834
  %5182 = vmatpush2.bf16.msra.mxu0 %v3833
  %5183 = vmatprep.subr.bf16.mxu0 %v3830
  %5184 = vmatpush2.bf16.msra.mxu0 %v3829
  %5185 = vmatprep.subr.bf16.mxu0 %v3826
  %5186 = vmatpush2.bf16.msra.mxu0 %v3825
  %5187 = vmatprep.subr.bf16.mxu0 %v3822
  %5188 = vmatpush2.bf16.msra.mxu0 %v3821
  %5189 = vmatprep.mubr.bf16.mxu0 %v942
  %5190 = vmatmul.mubr.bf16.gmra.mxu0 %v941
  %v5191 = vpop.f32.mrf.mxu0
  %v5192 = vadd.f32 %v5149, %v5191
  %v5193 = vpop.f32.mrf.mxu0
  %v5194 = vadd.f32 %v5151, %v5193
  %v5195 = vpop.f32.mrf.mxu0
  %v5196 = vadd.f32 %v5153, %v5195
  %v5197 = vpop.f32.mrf.mxu0
  %v5198 = vadd.f32 %v5155, %v5197
  %5199 = vdwg.mxu0
  %5200 = vmatprep.subr.bf16.mxu0 %v3882
  %5201 = vmatpush1.bf16.msra.mxu0 %v3881
  %5202 = vmatprep.subr.bf16.mxu0 %v3878
  %5203 = vmatpush1.bf16.msra.mxu0 %v3877
  %5204 = vmatprep.subr.bf16.mxu0 %v3874
  %5205 = vmatpush1.bf16.msra.mxu0 %v3873
  %5206 = vmatprep.subr.bf16.mxu0 %v3870
  %5207 = vmatpush1.bf16.msra.mxu0 %v3869
  %5208 = vmatprep.subr.bf16.mxu0 %v3866
  %5209 = vmatpush1.bf16.msra.mxu0 %v3865
  %5210 = vmatprep.subr.bf16.mxu0 %v3862
  %5211 = vmatpush1.bf16.msra.mxu0 %v3861
  %5212 = vmatprep.subr.bf16.mxu0 %v3858
  %5213 = vmatpush1.bf16.msra.mxu0 %v3857
  %5214 = vmatprep.subr.bf16.mxu0 %v3854
  %5215 = vmatpush1.bf16.msra.mxu0 %v3853
  %5216 = vmatprep.subr.bf16.mxu0 %v3914
  %5217 = vmatpush2.bf16.msra.mxu0 %v3913
  %5218 = vmatprep.subr.bf16.mxu0 %v3910
  %5219 = vmatpush2.bf16.msra.mxu0 %v3909
  %5220 = vmatprep.subr.bf16.mxu0 %v3906
  %5221 = vmatpush2.bf16.msra.mxu0 %v3905
  %5222 = vmatprep.subr.bf16.mxu0 %v3902
  %5223 = vmatpush2.bf16.msra.mxu0 %v3901
  %5224 = vmatprep.subr.bf16.mxu0 %v3898
  %5225 = vmatpush2.bf16.msra.mxu0 %v3897
  %5226 = vmatprep.subr.bf16.mxu0 %v3894
  %5227 = vmatpush2.bf16.msra.mxu0 %v3893
  %5228 = vmatprep.subr.bf16.mxu0 %v3890
  %5229 = vmatpush2.bf16.msra.mxu0 %v3889
  %5230 = vmatprep.subr.bf16.mxu0 %v3886
  %5231 = vmatpush2.bf16.msra.mxu0 %v3885
  %5232 = vmatprep.mubr.bf16.mxu0 %v944
  %5233 = vmatmul.mubr.bf16.gmra.mxu0 %v943
  %v5234 = vpop.f32.mrf.mxu0
  %v5235 = vadd.f32 %v5192, %v5234
  %v5236 = vpop.f32.mrf.mxu0
  %v5237 = vadd.f32 %v5194, %v5236
  %v5238 = vpop.f32.mrf.mxu0
  %v5239 = vadd.f32 %v5196, %v5238
  %v5240 = vpop.f32.mrf.mxu0
  %v5241 = vadd.f32 %v5198, %v5240
  %5242 = vdwg.mxu0
  %5243 = vmatprep.subr.bf16.mxu0 %v3946
  %5244 = vmatpush1.bf16.msra.mxu0 %v3945
  %5245 = vmatprep.subr.bf16.mxu0 %v3942
  %5246 = vmatpush1.bf16.msra.mxu0 %v3941
  %5247 = vmatprep.subr.bf16.mxu0 %v3938
  %5248 = vmatpush1.bf16.msra.mxu0 %v3937
  %5249 = vmatprep.subr.bf16.mxu0 %v3934
  %5250 = vmatpush1.bf16.msra.mxu0 %v3933
  %5251 = vmatprep.subr.bf16.mxu0 %v3930
  %5252 = vmatpush1.bf16.msra.mxu0 %v3929
  %5253 = vmatprep.subr.bf16.mxu0 %v3926
  %5254 = vmatpush1.bf16.msra.mxu0 %v3925
  %5255 = vmatprep.subr.bf16.mxu0 %v3922
  %5256 = vmatpush1.bf16.msra.mxu0 %v3921
  %5257 = vmatprep.subr.bf16.mxu0 %v3918
  %5258 = vmatpush1.bf16.msra.mxu0 %v3917
  %5259 = vmatprep.subr.bf16.mxu0 %v3978
  %5260 = vmatpush2.bf16.msra.mxu0 %v3977
  %5261 = vmatprep.subr.bf16.mxu0 %v3974
  %5262 = vmatpush2.bf16.msra.mxu0 %v3973
  %5263 = vmatprep.subr.bf16.mxu0 %v3970
  %5264 = vmatpush2.bf16.msra.mxu0 %v3969
  %5265 = vmatprep.subr.bf16.mxu0 %v3966
  %5266 = vmatpush2.bf16.msra.mxu0 %v3965
  %5267 = vmatprep.subr.bf16.mxu0 %v3962
  %5268 = vmatpush2.bf16.msra.mxu0 %v3961
  %5269 = vmatprep.subr.bf16.mxu0 %v3958
  %5270 = vmatpush2.bf16.msra.mxu0 %v3957
  %5271 = vmatprep.subr.bf16.mxu0 %v3954
  %5272 = vmatpush2.bf16.msra.mxu0 %v3953
  %5273 = vmatprep.subr.bf16.mxu0 %v3950
  %5274 = vmatpush2.bf16.msra.mxu0 %v3949
  %5275 = vmatprep.mubr.bf16.mxu0 %v946
  %5276 = vmatmul.mubr.bf16.gmra.mxu0 %v945
  %v5277 = vpop.f32.mrf.mxu0
  %v5278 = vadd.f32 %v5235, %v5277
  %v5279 = vpop.f32.mrf.mxu0
  %v5280 = vadd.f32 %v5237, %v5279
  %v5281 = vpop.f32.mrf.mxu0
  %v5282 = vadd.f32 %v5239, %v5281
  %v5283 = vpop.f32.mrf.mxu0
  %v5284 = vadd.f32 %v5241, %v5283
  %5285 = vdwg.mxu0
  %5286 = vmatprep.subr.bf16.mxu0 %v4010
  %5287 = vmatpush1.bf16.msra.mxu0 %v4009
  %5288 = vmatprep.subr.bf16.mxu0 %v4006
  %5289 = vmatpush1.bf16.msra.mxu0 %v4005
  %5290 = vmatprep.subr.bf16.mxu0 %v4002
  %5291 = vmatpush1.bf16.msra.mxu0 %v4001
  %5292 = vmatprep.subr.bf16.mxu0 %v3998
  %5293 = vmatpush1.bf16.msra.mxu0 %v3997
  %5294 = vmatprep.subr.bf16.mxu0 %v3994
  %5295 = vmatpush1.bf16.msra.mxu0 %v3993
  %5296 = vmatprep.subr.bf16.mxu0 %v3990
  %5297 = vmatpush1.bf16.msra.mxu0 %v3989
  %5298 = vmatprep.subr.bf16.mxu0 %v3986
  %5299 = vmatpush1.bf16.msra.mxu0 %v3985
  %5300 = vmatprep.subr.bf16.mxu0 %v3982
  %5301 = vmatpush1.bf16.msra.mxu0 %v3981
  %5302 = vmatprep.subr.bf16.mxu0 %v4042
  %5303 = vmatpush2.bf16.msra.mxu0 %v4041
  %5304 = vmatprep.subr.bf16.mxu0 %v4038
  %5305 = vmatpush2.bf16.msra.mxu0 %v4037
  %5306 = vmatprep.subr.bf16.mxu0 %v4034
  %5307 = vmatpush2.bf16.msra.mxu0 %v4033
  %5308 = vmatprep.subr.bf16.mxu0 %v4030
  %5309 = vmatpush2.bf16.msra.mxu0 %v4029
  %5310 = vmatprep.subr.bf16.mxu0 %v4026
  %5311 = vmatpush2.bf16.msra.mxu0 %v4025
  %5312 = vmatprep.subr.bf16.mxu0 %v4022
  %5313 = vmatpush2.bf16.msra.mxu0 %v4021
  %5314 = vmatprep.subr.bf16.mxu0 %v4018
  %5315 = vmatpush2.bf16.msra.mxu0 %v4017
  %5316 = vmatprep.subr.bf16.mxu0 %v4014
  %5317 = vmatpush2.bf16.msra.mxu0 %v4013
  %5318 = vmatprep.mubr.bf16.mxu0 %v948
  %5319 = vmatmul.mubr.bf16.gmra.mxu0 %v947
  %v5320 = vpop.f32.mrf.mxu0
  %v5321 = vadd.f32 %v5278, %v5320
  %v5322 = vpop.f32.mrf.mxu0
  %v5323 = vadd.f32 %v5280, %v5322
  %v5324 = vpop.f32.mrf.mxu0
  %v5325 = vadd.f32 %v5282, %v5324
  %v5326 = vpop.f32.mrf.mxu0
  %v5327 = vadd.f32 %v5284, %v5326
  %5328 = vdwg.mxu0
  %5329 = vmatprep.subr.bf16.mxu0 %v3308
  %5330 = vmatpush1.bf16.msra.mxu0 %v3307
  %5331 = vmatprep.subr.bf16.mxu0 %v3304
  %5332 = vmatpush1.bf16.msra.mxu0 %v3303
  %5333 = vmatprep.subr.bf16.mxu0 %v3300
  %5334 = vmatpush1.bf16.msra.mxu0 %v3299
  %5335 = vmatprep.subr.bf16.mxu0 %v3296
  %5336 = vmatpush1.bf16.msra.mxu0 %v3295
  %5337 = vmatprep.subr.bf16.mxu0 %v3292
  %5338 = vmatpush1.bf16.msra.mxu0 %v3291
  %5339 = vmatprep.subr.bf16.mxu0 %v3288
  %5340 = vmatpush1.bf16.msra.mxu0 %v3287
  %5341 = vmatprep.subr.bf16.mxu0 %v3284
  %5342 = vmatpush1.bf16.msra.mxu0 %v3283
  %5343 = vmatprep.subr.bf16.mxu0 %v3280
  %5344 = vmatpush1.bf16.msra.mxu0 %v3279
  %5345 = vmatprep.subr.bf16.mxu0 %v3340
  %5346 = vmatpush2.bf16.msra.mxu0 %v3339
  %5347 = vmatprep.subr.bf16.mxu0 %v3336
  %5348 = vmatpush2.bf16.msra.mxu0 %v3335
  %5349 = vmatprep.subr.bf16.mxu0 %v3332
  %5350 = vmatpush2.bf16.msra.mxu0 %v3331
  %5351 = vmatprep.subr.bf16.mxu0 %v3328
  %5352 = vmatpush2.bf16.msra.mxu0 %v3327
  %5353 = vmatprep.subr.bf16.mxu0 %v3324
  %5354 = vmatpush2.bf16.msra.mxu0 %v3323
  %5355 = vmatprep.subr.bf16.mxu0 %v3320
  %5356 = vmatpush2.bf16.msra.mxu0 %v3319
  %5357 = vmatprep.subr.bf16.mxu0 %v3316
  %5358 = vmatpush2.bf16.msra.mxu0 %v3315
  %5359 = vmatprep.subr.bf16.mxu0 %v3312
  %5360 = vmatpush2.bf16.msra.mxu0 %v3311
  %5361 = vmatprep.mubr.bf16.mxu0 %v926
  %5362 = vmatmul.mubr.bf16.gmra.mxu0 %v925
  %v5363 = vpop.f32.mrf.mxu0
  %v5364 = vadd.f32 %v844, %v5363
  %v5365 = vpop.f32.mrf.mxu0
  %v5366 = vadd.f32 %v848, %v5365
  %v5367 = vpop.f32.mrf.mxu0
  %v5368 = vadd.f32 %v844, %v5367
  %v5369 = vpop.f32.mrf.mxu0
  %v5370 = vadd.f32 %v848, %v5369
  %5371 = vdwg.mxu0
  %5372 = vmatprep.subr.bf16.mxu0 %v3372
  %5373 = vmatpush1.bf16.msra.mxu0 %v3371
  %5374 = vmatprep.subr.bf16.mxu0 %v3368
  %5375 = vmatpush1.bf16.msra.mxu0 %v3367
  %5376 = vmatprep.subr.bf16.mxu0 %v3364
  %5377 = vmatpush1.bf16.msra.mxu0 %v3363
  %5378 = vmatprep.subr.bf16.mxu0 %v3360
  %5379 = vmatpush1.bf16.msra.mxu0 %v3359
  %5380 = vmatprep.subr.bf16.mxu0 %v3356
  %5381 = vmatpush1.bf16.msra.mxu0 %v3355
  %5382 = vmatprep.subr.bf16.mxu0 %v3352
  %5383 = vmatpush1.bf16.msra.mxu0 %v3351
  %5384 = vmatprep.subr.bf16.mxu0 %v3348
  %5385 = vmatpush1.bf16.msra.mxu0 %v3347
  %5386 = vmatprep.subr.bf16.mxu0 %v3344
  %5387 = vmatpush1.bf16.msra.mxu0 %v3343
  %5388 = vmatprep.subr.bf16.mxu0 %v3404
  %5389 = vmatpush2.bf16.msra.mxu0 %v3403
  %5390 = vmatprep.subr.bf16.mxu0 %v3400
  %5391 = vmatpush2.bf16.msra.mxu0 %v3399
  %5392 = vmatprep.subr.bf16.mxu0 %v3396
  %5393 = vmatpush2.bf16.msra.mxu0 %v3395
  %5394 = vmatprep.subr.bf16.mxu0 %v3392
  %5395 = vmatpush2.bf16.msra.mxu0 %v3391
  %5396 = vmatprep.subr.bf16.mxu0 %v3388
  %5397 = vmatpush2.bf16.msra.mxu0 %v3387
  %5398 = vmatprep.subr.bf16.mxu0 %v3384
  %5399 = vmatpush2.bf16.msra.mxu0 %v3383
  %5400 = vmatprep.subr.bf16.mxu0 %v3380
  %5401 = vmatpush2.bf16.msra.mxu0 %v3379
  %5402 = vmatprep.subr.bf16.mxu0 %v3376
  %5403 = vmatpush2.bf16.msra.mxu0 %v3375
  %5404 = vmatprep.mubr.bf16.mxu0 %v928
  %5405 = vmatmul.mubr.bf16.gmra.mxu0 %v927
  %v5406 = vpop.f32.mrf.mxu0
  %v5407 = vadd.f32 %v5364, %v5406
  %v5408 = vpop.f32.mrf.mxu0
  %v5409 = vadd.f32 %v5366, %v5408
  %v5410 = vpop.f32.mrf.mxu0
  %v5411 = vadd.f32 %v5368, %v5410
  %v5412 = vpop.f32.mrf.mxu0
  %v5413 = vadd.f32 %v5370, %v5412
  %5414 = vdwg.mxu0
  %5415 = vmatprep.subr.bf16.mxu0 %v3436
  %5416 = vmatpush1.bf16.msra.mxu0 %v3435
  %5417 = vmatprep.subr.bf16.mxu0 %v3432
  %5418 = vmatpush1.bf16.msra.mxu0 %v3431
  %5419 = vmatprep.subr.bf16.mxu0 %v3428
  %5420 = vmatpush1.bf16.msra.mxu0 %v3427
  %5421 = vmatprep.subr.bf16.mxu0 %v3424
  %5422 = vmatpush1.bf16.msra.mxu0 %v3423
  %5423 = vmatprep.subr.bf16.mxu0 %v3420
  %5424 = vmatpush1.bf16.msra.mxu0 %v3419
  %5425 = vmatprep.subr.bf16.mxu0 %v3416
  %5426 = vmatpush1.bf16.msra.mxu0 %v3415
  %5427 = vmatprep.subr.bf16.mxu0 %v3412
  %5428 = vmatpush1.bf16.msra.mxu0 %v3411
  %5429 = vmatprep.subr.bf16.mxu0 %v3408
  %5430 = vmatpush1.bf16.msra.mxu0 %v3407
  %5431 = vmatprep.subr.bf16.mxu0 %v3468
  %5432 = vmatpush2.bf16.msra.mxu0 %v3467
  %5433 = vmatprep.subr.bf16.mxu0 %v3464
  %5434 = vmatpush2.bf16.msra.mxu0 %v3463
  %5435 = vmatprep.subr.bf16.mxu0 %v3460
  %5436 = vmatpush2.bf16.msra.mxu0 %v3459
  %5437 = vmatprep.subr.bf16.mxu0 %v3456
  %5438 = vmatpush2.bf16.msra.mxu0 %v3455
  %5439 = vmatprep.subr.bf16.mxu0 %v3452
  %5440 = vmatpush2.bf16.msra.mxu0 %v3451
  %5441 = vmatprep.subr.bf16.mxu0 %v3448
  %5442 = vmatpush2.bf16.msra.mxu0 %v3447
  %5443 = vmatprep.subr.bf16.mxu0 %v3444
  %5444 = vmatpush2.bf16.msra.mxu0 %v3443
  %5445 = vmatprep.subr.bf16.mxu0 %v3440
  %5446 = vmatpush2.bf16.msra.mxu0 %v3439
  %5447 = vmatprep.mubr.bf16.mxu0 %v930
  %5448 = vmatmul.mubr.bf16.gmra.mxu0 %v929
  %v5449 = vpop.f32.mrf.mxu0
  %v5450 = vadd.f32 %v5407, %v5449
  %v5451 = vpop.f32.mrf.mxu0
  %v5452 = vadd.f32 %v5409, %v5451
  %v5453 = vpop.f32.mrf.mxu0
  %v5454 = vadd.f32 %v5411, %v5453
  %v5455 = vpop.f32.mrf.mxu0
  %v5456 = vadd.f32 %v5413, %v5455
  %5457 = vdwg.mxu0
  %5458 = vmatprep.subr.bf16.mxu0 %v3500
  %5459 = vmatpush1.bf16.msra.mxu0 %v3499
  %5460 = vmatprep.subr.bf16.mxu0 %v3496
  %5461 = vmatpush1.bf16.msra.mxu0 %v3495
  %5462 = vmatprep.subr.bf16.mxu0 %v3492
  %5463 = vmatpush1.bf16.msra.mxu0 %v3491
  %5464 = vmatprep.subr.bf16.mxu0 %v3488
  %5465 = vmatpush1.bf16.msra.mxu0 %v3487
  %5466 = vmatprep.subr.bf16.mxu0 %v3484
  %5467 = vmatpush1.bf16.msra.mxu0 %v3483
  %5468 = vmatprep.subr.bf16.mxu0 %v3480
  %5469 = vmatpush1.bf16.msra.mxu0 %v3479
  %5470 = vmatprep.subr.bf16.mxu0 %v3476
  %5471 = vmatpush1.bf16.msra.mxu0 %v3475
  %5472 = vmatprep.subr.bf16.mxu0 %v3472
  %5473 = vmatpush1.bf16.msra.mxu0 %v3471
  %5474 = vmatprep.subr.bf16.mxu0 %v3532
  %5475 = vmatpush2.bf16.msra.mxu0 %v3531
  %5476 = vmatprep.subr.bf16.mxu0 %v3528
  %5477 = vmatpush2.bf16.msra.mxu0 %v3527
  %5478 = vmatprep.subr.bf16.mxu0 %v3524
  %5479 = vmatpush2.bf16.msra.mxu0 %v3523
  %5480 = vmatprep.subr.bf16.mxu0 %v3520
  %5481 = vmatpush2.bf16.msra.mxu0 %v3519
  %5482 = vmatprep.subr.bf16.mxu0 %v3516
  %5483 = vmatpush2.bf16.msra.mxu0 %v3515
  %5484 = vmatprep.subr.bf16.mxu0 %v3512
  %5485 = vmatpush2.bf16.msra.mxu0 %v3511
  %5486 = vmatprep.subr.bf16.mxu0 %v3508
  %5487 = vmatpush2.bf16.msra.mxu0 %v3507
  %5488 = vmatprep.subr.bf16.mxu0 %v3504
  %5489 = vmatpush2.bf16.msra.mxu0 %v3503
  %5490 = vmatprep.mubr.bf16.mxu0 %v932
  %5491 = vmatmul.mubr.bf16.gmra.mxu0 %v931
  %v5492 = vpop.f32.mrf.mxu0
  %v5493 = vadd.f32 %v5450, %v5492
  %v5494 = vpop.f32.mrf.mxu0
  %v5495 = vadd.f32 %v5452, %v5494
  %v5496 = vpop.f32.mrf.mxu0
  %v5497 = vadd.f32 %v5454, %v5496
  %v5498 = vpop.f32.mrf.mxu0
  %v5499 = vadd.f32 %v5456, %v5498
  %5500 = vdwg.mxu0
  %5501 = vmatprep.subr.bf16.mxu0 %v3564
  %5502 = vmatpush1.bf16.msra.mxu0 %v3563
  %5503 = vmatprep.subr.bf16.mxu0 %v3560
  %5504 = vmatpush1.bf16.msra.mxu0 %v3559
  %5505 = vmatprep.subr.bf16.mxu0 %v3556
  %5506 = vmatpush1.bf16.msra.mxu0 %v3555
  %5507 = vmatprep.subr.bf16.mxu0 %v3552
  %5508 = vmatpush1.bf16.msra.mxu0 %v3551
  %5509 = vmatprep.subr.bf16.mxu0 %v3548
  %5510 = vmatpush1.bf16.msra.mxu0 %v3547
  %5511 = vmatprep.subr.bf16.mxu0 %v3544
  %5512 = vmatpush1.bf16.msra.mxu0 %v3543
  %5513 = vmatprep.subr.bf16.mxu0 %v3540
  %5514 = vmatpush1.bf16.msra.mxu0 %v3539
  %5515 = vmatprep.subr.bf16.mxu0 %v3536
  %5516 = vmatpush1.bf16.msra.mxu0 %v3535
  %5517 = vmatprep.subr.bf16.mxu0 %v3596
  %5518 = vmatpush2.bf16.msra.mxu0 %v3595
  %5519 = vmatprep.subr.bf16.mxu0 %v3592
  %5520 = vmatpush2.bf16.msra.mxu0 %v3591
  %5521 = vmatprep.subr.bf16.mxu0 %v3588
  %5522 = vmatpush2.bf16.msra.mxu0 %v3587
  %5523 = vmatprep.subr.bf16.mxu0 %v3584
  %5524 = vmatpush2.bf16.msra.mxu0 %v3583
  %5525 = vmatprep.subr.bf16.mxu0 %v3580
  %5526 = vmatpush2.bf16.msra.mxu0 %v3579
  %5527 = vmatprep.subr.bf16.mxu0 %v3576
  %5528 = vmatpush2.bf16.msra.mxu0 %v3575
  %5529 = vmatprep.subr.bf16.mxu0 %v3572
  %5530 = vmatpush2.bf16.msra.mxu0 %v3571
  %5531 = vmatprep.subr.bf16.mxu0 %v3568
  %5532 = vmatpush2.bf16.msra.mxu0 %v3567
  %5533 = vmatprep.mubr.bf16.mxu0 %v934
  %5534 = vmatmul.mubr.bf16.gmra.mxu0 %v933
  %v5535 = vpop.f32.mrf.mxu0
  %v5536 = vadd.f32 %v5493, %v5535
  %v5537 = vpop.f32.mrf.mxu0
  %v5538 = vadd.f32 %v5495, %v5537
  %v5539 = vpop.f32.mrf.mxu0
  %v5540 = vadd.f32 %v5497, %v5539
  %v5541 = vpop.f32.mrf.mxu0
  %v5542 = vadd.f32 %v5499, %v5541
  %5543 = vdwg.mxu0
  %5544 = vmatprep.subr.bf16.mxu0 %v3628
  %5545 = vmatpush1.bf16.msra.mxu0 %v3627
  %5546 = vmatprep.subr.bf16.mxu0 %v3624
  %5547 = vmatpush1.bf16.msra.mxu0 %v3623
  %5548 = vmatprep.subr.bf16.mxu0 %v3620
  %5549 = vmatpush1.bf16.msra.mxu0 %v3619
  %5550 = vmatprep.subr.bf16.mxu0 %v3616
  %5551 = vmatpush1.bf16.msra.mxu0 %v3615
  %5552 = vmatprep.subr.bf16.mxu0 %v3612
  %5553 = vmatpush1.bf16.msra.mxu0 %v3611
  %5554 = vmatprep.subr.bf16.mxu0 %v3608
  %5555 = vmatpush1.bf16.msra.mxu0 %v3607
  %5556 = vmatprep.subr.bf16.mxu0 %v3604
  %5557 = vmatpush1.bf16.msra.mxu0 %v3603
  %5558 = vmatprep.subr.bf16.mxu0 %v3600
  %5559 = vmatpush1.bf16.msra.mxu0 %v3599
  %5560 = vmatprep.subr.bf16.mxu0 %v3660
  %5561 = vmatpush2.bf16.msra.mxu0 %v3659
  %5562 = vmatprep.subr.bf16.mxu0 %v3656
  %5563 = vmatpush2.bf16.msra.mxu0 %v3655
  %5564 = vmatprep.subr.bf16.mxu0 %v3652
  %5565 = vmatpush2.bf16.msra.mxu0 %v3651
  %5566 = vmatprep.subr.bf16.mxu0 %v3648
  %5567 = vmatpush2.bf16.msra.mxu0 %v3647
  %5568 = vmatprep.subr.bf16.mxu0 %v3644
  %5569 = vmatpush2.bf16.msra.mxu0 %v3643
  %5570 = vmatprep.subr.bf16.mxu0 %v3640
  %5571 = vmatpush2.bf16.msra.mxu0 %v3639
  %5572 = vmatprep.subr.bf16.mxu0 %v3636
  %5573 = vmatpush2.bf16.msra.mxu0 %v3635
  %5574 = vmatprep.subr.bf16.mxu0 %v3632
  %5575 = vmatpush2.bf16.msra.mxu0 %v3631
  %5576 = vmatprep.mubr.bf16.mxu0 %v936
  %5577 = vmatmul.mubr.bf16.gmra.mxu0 %v935
  %v5578 = vpop.f32.mrf.mxu0
  %v5579 = vadd.f32 %v5536, %v5578
  %v5580 = vpop.f32.mrf.mxu0
  %v5581 = vadd.f32 %v5538, %v5580
  %v5582 = vpop.f32.mrf.mxu0
  %v5583 = vadd.f32 %v5540, %v5582
  %v5584 = vpop.f32.mrf.mxu0
  %v5585 = vadd.f32 %v5542, %v5584
  %5586 = vdwg.mxu0
  %5587 = vmatprep.subr.bf16.mxu0 %v3692
  %5588 = vmatpush1.bf16.msra.mxu0 %v3691
  %5589 = vmatprep.subr.bf16.mxu0 %v3688
  %5590 = vmatpush1.bf16.msra.mxu0 %v3687
  %5591 = vmatprep.subr.bf16.mxu0 %v3684
  %5592 = vmatpush1.bf16.msra.mxu0 %v3683
  %5593 = vmatprep.subr.bf16.mxu0 %v3680
  %5594 = vmatpush1.bf16.msra.mxu0 %v3679
  %5595 = vmatprep.subr.bf16.mxu0 %v3676
  %5596 = vmatpush1.bf16.msra.mxu0 %v3675
  %5597 = vmatprep.subr.bf16.mxu0 %v3672
  %5598 = vmatpush1.bf16.msra.mxu0 %v3671
  %5599 = vmatprep.subr.bf16.mxu0 %v3668
  %5600 = vmatpush1.bf16.msra.mxu0 %v3667
  %5601 = vmatprep.subr.bf16.mxu0 %v3664
  %5602 = vmatpush1.bf16.msra.mxu0 %v3663
  %5603 = vmatprep.subr.bf16.mxu0 %v3724
  %5604 = vmatpush2.bf16.msra.mxu0 %v3723
  %5605 = vmatprep.subr.bf16.mxu0 %v3720
  %5606 = vmatpush2.bf16.msra.mxu0 %v3719
  %5607 = vmatprep.subr.bf16.mxu0 %v3716
  %5608 = vmatpush2.bf16.msra.mxu0 %v3715
  %5609 = vmatprep.subr.bf16.mxu0 %v3712
  %5610 = vmatpush2.bf16.msra.mxu0 %v3711
  %5611 = vmatprep.subr.bf16.mxu0 %v3708
  %5612 = vmatpush2.bf16.msra.mxu0 %v3707
  %5613 = vmatprep.subr.bf16.mxu0 %v3704
  %5614 = vmatpush2.bf16.msra.mxu0 %v3703
  %5615 = vmatprep.subr.bf16.mxu0 %v3700
  %5616 = vmatpush2.bf16.msra.mxu0 %v3699
  %5617 = vmatprep.subr.bf16.mxu0 %v3696
  %5618 = vmatpush2.bf16.msra.mxu0 %v3695
  %5619 = vmatprep.mubr.bf16.mxu0 %v938
  %5620 = vmatmul.mubr.bf16.gmra.mxu0 %v937
  %v5621 = vpop.f32.mrf.mxu0
  %v5622 = vadd.f32 %v5579, %v5621
  %v5623 = vpop.f32.mrf.mxu0
  %v5624 = vadd.f32 %v5581, %v5623
  %v5625 = vpop.f32.mrf.mxu0
  %v5626 = vadd.f32 %v5583, %v5625
  %v5627 = vpop.f32.mrf.mxu0
  %v5628 = vadd.f32 %v5585, %v5627
  %5629 = vdwg.mxu0
  %5630 = vmatprep.subr.bf16.mxu0 %v3756
  %5631 = vmatpush1.bf16.msra.mxu0 %v3755
  %5632 = vmatprep.subr.bf16.mxu0 %v3752
  %5633 = vmatpush1.bf16.msra.mxu0 %v3751
  %5634 = vmatprep.subr.bf16.mxu0 %v3748
  %5635 = vmatpush1.bf16.msra.mxu0 %v3747
  %5636 = vmatprep.subr.bf16.mxu0 %v3744
  %5637 = vmatpush1.bf16.msra.mxu0 %v3743
  %5638 = vmatprep.subr.bf16.mxu0 %v3740
  %5639 = vmatpush1.bf16.msra.mxu0 %v3739
  %5640 = vmatprep.subr.bf16.mxu0 %v3736
  %5641 = vmatpush1.bf16.msra.mxu0 %v3735
  %5642 = vmatprep.subr.bf16.mxu0 %v3732
  %5643 = vmatpush1.bf16.msra.mxu0 %v3731
  %5644 = vmatprep.subr.bf16.mxu0 %v3728
  %5645 = vmatpush1.bf16.msra.mxu0 %v3727
  %5646 = vmatprep.subr.bf16.mxu0 %v3788
  %5647 = vmatpush2.bf16.msra.mxu0 %v3787
  %5648 = vmatprep.subr.bf16.mxu0 %v3784
  %5649 = vmatpush2.bf16.msra.mxu0 %v3783
  %5650 = vmatprep.subr.bf16.mxu0 %v3780
  %5651 = vmatpush2.bf16.msra.mxu0 %v3779
  %5652 = vmatprep.subr.bf16.mxu0 %v3776
  %5653 = vmatpush2.bf16.msra.mxu0 %v3775
  %5654 = vmatprep.subr.bf16.mxu0 %v3772
  %5655 = vmatpush2.bf16.msra.mxu0 %v3771
  %5656 = vmatprep.subr.bf16.mxu0 %v3768
  %5657 = vmatpush2.bf16.msra.mxu0 %v3767
  %5658 = vmatprep.subr.bf16.mxu0 %v3764
  %5659 = vmatpush2.bf16.msra.mxu0 %v3763
  %5660 = vmatprep.subr.bf16.mxu0 %v3760
  %5661 = vmatpush2.bf16.msra.mxu0 %v3759
  %5662 = vmatprep.mubr.bf16.mxu0 %v940
  %5663 = vmatmul.mubr.bf16.gmra.mxu0 %v939
  %v5664 = vpop.f32.mrf.mxu0
  %v5665 = vadd.f32 %v5622, %v5664
  %v5666 = vpop.f32.mrf.mxu0
  %v5667 = vadd.f32 %v5624, %v5666
  %v5668 = vpop.f32.mrf.mxu0
  %v5669 = vadd.f32 %v5626, %v5668
  %v5670 = vpop.f32.mrf.mxu0
  %v5671 = vadd.f32 %v5628, %v5670
  %5672 = vdwg.mxu0
  %5673 = vmatprep.subr.bf16.mxu0 %v3820
  %5674 = vmatpush1.bf16.msra.mxu0 %v3819
  %5675 = vmatprep.subr.bf16.mxu0 %v3816
  %5676 = vmatpush1.bf16.msra.mxu0 %v3815
  %5677 = vmatprep.subr.bf16.mxu0 %v3812
  %5678 = vmatpush1.bf16.msra.mxu0 %v3811
  %5679 = vmatprep.subr.bf16.mxu0 %v3808
  %5680 = vmatpush1.bf16.msra.mxu0 %v3807
  %5681 = vmatprep.subr.bf16.mxu0 %v3804
  %5682 = vmatpush1.bf16.msra.mxu0 %v3803
  %5683 = vmatprep.subr.bf16.mxu0 %v3800
  %5684 = vmatpush1.bf16.msra.mxu0 %v3799
  %5685 = vmatprep.subr.bf16.mxu0 %v3796
  %5686 = vmatpush1.bf16.msra.mxu0 %v3795
  %5687 = vmatprep.subr.bf16.mxu0 %v3792
  %5688 = vmatpush1.bf16.msra.mxu0 %v3791
  %5689 = vmatprep.subr.bf16.mxu0 %v3852
  %5690 = vmatpush2.bf16.msra.mxu0 %v3851
  %5691 = vmatprep.subr.bf16.mxu0 %v3848
  %5692 = vmatpush2.bf16.msra.mxu0 %v3847
  %5693 = vmatprep.subr.bf16.mxu0 %v3844
  %5694 = vmatpush2.bf16.msra.mxu0 %v3843
  %5695 = vmatprep.subr.bf16.mxu0 %v3840
  %5696 = vmatpush2.bf16.msra.mxu0 %v3839
  %5697 = vmatprep.subr.bf16.mxu0 %v3836
  %5698 = vmatpush2.bf16.msra.mxu0 %v3835
  %5699 = vmatprep.subr.bf16.mxu0 %v3832
  %5700 = vmatpush2.bf16.msra.mxu0 %v3831
  %5701 = vmatprep.subr.bf16.mxu0 %v3828
  %5702 = vmatpush2.bf16.msra.mxu0 %v3827
  %5703 = vmatprep.subr.bf16.mxu0 %v3824
  %5704 = vmatpush2.bf16.msra.mxu0 %v3823
  %5705 = vmatprep.mubr.bf16.mxu0 %v942
  %5706 = vmatmul.mubr.bf16.gmra.mxu0 %v941
  %v5707 = vpop.f32.mrf.mxu0
  %v5708 = vadd.f32 %v5665, %v5707
  %v5709 = vpop.f32.mrf.mxu0
  %v5710 = vadd.f32 %v5667, %v5709
  %v5711 = vpop.f32.mrf.mxu0
  %v5712 = vadd.f32 %v5669, %v5711
  %v5713 = vpop.f32.mrf.mxu0
  %v5714 = vadd.f32 %v5671, %v5713
  %5715 = vdwg.mxu0
  %5716 = vmatprep.subr.bf16.mxu0 %v3884
  %5717 = vmatpush1.bf16.msra.mxu0 %v3883
  %5718 = vmatprep.subr.bf16.mxu0 %v3880
  %5719 = vmatpush1.bf16.msra.mxu0 %v3879
  %5720 = vmatprep.subr.bf16.mxu0 %v3876
  %5721 = vmatpush1.bf16.msra.mxu0 %v3875
  %5722 = vmatprep.subr.bf16.mxu0 %v3872
  %5723 = vmatpush1.bf16.msra.mxu0 %v3871
  %5724 = vmatprep.subr.bf16.mxu0 %v3868
  %5725 = vmatpush1.bf16.msra.mxu0 %v3867
  %5726 = vmatprep.subr.bf16.mxu0 %v3864
  %5727 = vmatpush1.bf16.msra.mxu0 %v3863
  %5728 = vmatprep.subr.bf16.mxu0 %v3860
  %5729 = vmatpush1.bf16.msra.mxu0 %v3859
  %5730 = vmatprep.subr.bf16.mxu0 %v3856
  %5731 = vmatpush1.bf16.msra.mxu0 %v3855
  %5732 = vmatprep.subr.bf16.mxu0 %v3916
  %5733 = vmatpush2.bf16.msra.mxu0 %v3915
  %5734 = vmatprep.subr.bf16.mxu0 %v3912
  %5735 = vmatpush2.bf16.msra.mxu0 %v3911
  %5736 = vmatprep.subr.bf16.mxu0 %v3908
  %5737 = vmatpush2.bf16.msra.mxu0 %v3907
  %5738 = vmatprep.subr.bf16.mxu0 %v3904
  %5739 = vmatpush2.bf16.msra.mxu0 %v3903
  %5740 = vmatprep.subr.bf16.mxu0 %v3900
  %5741 = vmatpush2.bf16.msra.mxu0 %v3899
  %5742 = vmatprep.subr.bf16.mxu0 %v3896
  %5743 = vmatpush2.bf16.msra.mxu0 %v3895
  %5744 = vmatprep.subr.bf16.mxu0 %v3892
  %5745 = vmatpush2.bf16.msra.mxu0 %v3891
  %5746 = vmatprep.subr.bf16.mxu0 %v3888
  %5747 = vmatpush2.bf16.msra.mxu0 %v3887
  %5748 = vmatprep.mubr.bf16.mxu0 %v944
  %5749 = vmatmul.mubr.bf16.gmra.mxu0 %v943
  %v5750 = vpop.f32.mrf.mxu0
  %v5751 = vadd.f32 %v5708, %v5750
  %v5752 = vpop.f32.mrf.mxu0
  %v5753 = vadd.f32 %v5710, %v5752
  %v5754 = vpop.f32.mrf.mxu0
  %v5755 = vadd.f32 %v5712, %v5754
  %v5756 = vpop.f32.mrf.mxu0
  %v5757 = vadd.f32 %v5714, %v5756
  %5758 = vdwg.mxu0
  %5759 = vmatprep.subr.bf16.mxu0 %v3948
  %5760 = vmatpush1.bf16.msra.mxu0 %v3947
  %5761 = vmatprep.subr.bf16.mxu0 %v3944
  %5762 = vmatpush1.bf16.msra.mxu0 %v3943
  %5763 = vmatprep.subr.bf16.mxu0 %v3940
  %5764 = vmatpush1.bf16.msra.mxu0 %v3939
  %5765 = vmatprep.subr.bf16.mxu0 %v3936
  %5766 = vmatpush1.bf16.msra.mxu0 %v3935
  %5767 = vmatprep.subr.bf16.mxu0 %v3932
  %5768 = vmatpush1.bf16.msra.mxu0 %v3931
  %5769 = vmatprep.subr.bf16.mxu0 %v3928
  %5770 = vmatpush1.bf16.msra.mxu0 %v3927
  %5771 = vmatprep.subr.bf16.mxu0 %v3924
  %5772 = vmatpush1.bf16.msra.mxu0 %v3923
  %5773 = vmatprep.subr.bf16.mxu0 %v3920
  %5774 = vmatpush1.bf16.msra.mxu0 %v3919
  %5775 = vmatprep.subr.bf16.mxu0 %v3980
  %5776 = vmatpush2.bf16.msra.mxu0 %v3979
  %5777 = vmatprep.subr.bf16.mxu0 %v3976
  %5778 = vmatpush2.bf16.msra.mxu0 %v3975
  %5779 = vmatprep.subr.bf16.mxu0 %v3972
  %5780 = vmatpush2.bf16.msra.mxu0 %v3971
  %5781 = vmatprep.subr.bf16.mxu0 %v3968
  %5782 = vmatpush2.bf16.msra.mxu0 %v3967
  %5783 = vmatprep.subr.bf16.mxu0 %v3964
  %5784 = vmatpush2.bf16.msra.mxu0 %v3963
  %5785 = vmatprep.subr.bf16.mxu0 %v3960
  %5786 = vmatpush2.bf16.msra.mxu0 %v3959
  %5787 = vmatprep.subr.bf16.mxu0 %v3956
  %5788 = vmatpush2.bf16.msra.mxu0 %v3955
  %5789 = vmatprep.subr.bf16.mxu0 %v3952
  %5790 = vmatpush2.bf16.msra.mxu0 %v3951
  %5791 = vmatprep.mubr.bf16.mxu0 %v946
  %5792 = vmatmul.mubr.bf16.gmra.mxu0 %v945
  %v5793 = vpop.f32.mrf.mxu0
  %v5794 = vadd.f32 %v5751, %v5793
  %v5795 = vpop.f32.mrf.mxu0
  %v5796 = vadd.f32 %v5753, %v5795
  %v5797 = vpop.f32.mrf.mxu0
  %v5798 = vadd.f32 %v5755, %v5797
  %v5799 = vpop.f32.mrf.mxu0
  %v5800 = vadd.f32 %v5757, %v5799
  %5801 = vdwg.mxu0
  %5802 = vmatprep.subr.bf16.mxu0 %v4012
  %5803 = vmatpush1.bf16.msra.mxu0 %v4011
  %5804 = vmatprep.subr.bf16.mxu0 %v4008
  %5805 = vmatpush1.bf16.msra.mxu0 %v4007
  %5806 = vmatprep.subr.bf16.mxu0 %v4004
  %5807 = vmatpush1.bf16.msra.mxu0 %v4003
  %5808 = vmatprep.subr.bf16.mxu0 %v4000
  %5809 = vmatpush1.bf16.msra.mxu0 %v3999
  %5810 = vmatprep.subr.bf16.mxu0 %v3996
  %5811 = vmatpush1.bf16.msra.mxu0 %v3995
  %5812 = vmatprep.subr.bf16.mxu0 %v3992
  %5813 = vmatpush1.bf16.msra.mxu0 %v3991
  %5814 = vmatprep.subr.bf16.mxu0 %v3988
  %5815 = vmatpush1.bf16.msra.mxu0 %v3987
  %5816 = vmatprep.subr.bf16.mxu0 %v3984
  %5817 = vmatpush1.bf16.msra.mxu0 %v3983
  %5818 = vmatprep.subr.bf16.mxu0 %v4044
  %5819 = vmatpush2.bf16.msra.mxu0 %v4043
  %5820 = vmatprep.subr.bf16.mxu0 %v4040
  %5821 = vmatpush2.bf16.msra.mxu0 %v4039
  %5822 = vmatprep.subr.bf16.mxu0 %v4036
  %5823 = vmatpush2.bf16.msra.mxu0 %v4035
  %5824 = vmatprep.subr.bf16.mxu0 %v4032
  %5825 = vmatpush2.bf16.msra.mxu0 %v4031
  %5826 = vmatprep.subr.bf16.mxu0 %v4028
  %5827 = vmatpush2.bf16.msra.mxu0 %v4027
  %5828 = vmatprep.subr.bf16.mxu0 %v4024
  %5829 = vmatpush2.bf16.msra.mxu0 %v4023
  %5830 = vmatprep.subr.bf16.mxu0 %v4020
  %5831 = vmatpush2.bf16.msra.mxu0 %v4019
  %5832 = vmatprep.subr.bf16.mxu0 %v4016
  %5833 = vmatpush2.bf16.msra.mxu0 %v4015
  %5834 = vmatprep.mubr.bf16.mxu0 %v948
  %5835 = vmatmul.mubr.bf16.gmra.mxu0 %v947
  %v5836 = vpop.f32.mrf.mxu0
  %v5837 = vadd.f32 %v5794, %v5836
  %v5838 = vpop.f32.mrf.mxu0
  %v5839 = vadd.f32 %v5796, %v5838
  %v5840 = vpop.f32.mrf.mxu0
  %v5841 = vadd.f32 %v5798, %v5840
  %v5842 = vpop.f32.mrf.mxu0
  %v5843 = vadd.f32 %v5800, %v5842
  %5844 = vdwg.mxu0
  %v5845 = vmax.f32 %v5321, 0.0
  %v5846 = vmax.f32 %v5323, 0.0
  %v5847 = vmax.f32 %v5837, 0.0
  %v5848 = vmax.f32 %v5839, 0.0
  %v5849 = vmax.f32 %v5325, 0.0
  %v5850 = vmax.f32 %v5327, 0.0
  %v5851 = vmax.f32 %v5841, 0.0
  %v5852 = vmax.f32 %v5843, 0.0
  %v5853 = vld [vmem:[%s4] sm:$0xff]
  %v5854 = vld [vmem:[%s4 + $0x8] sm:$0xff]
  %v5855 = vld [vmem:[%s4 + $0x10] sm:$0xff]
  %v5856 = vld [vmem:[%s4 + $0x18] sm:$0xff]
  %v5857 = vld [vmem:[%s4 + $0x20] sm:$0xff]
  %v5858 = vld [vmem:[%s4 + $0x28] sm:$0xff]
  %v5859 = vld [vmem:[%s4 + $0x30] sm:$0xff]
  %v5860 = vld [vmem:[%s4 + $0x38] sm:$0xff]
  %v5861 = vld [vmem:[%s4 + $0x40] sm:$0xff]
  %v5862 = vld [vmem:[%s4 + $0x48] sm:$0xff]
  %v5863 = vld [vmem:[%s4 + $0x50] sm:$0xff]
  %v5864 = vld [vmem:[%s4 + $0x58] sm:$0xff]
  %v5865 = vld [vmem:[%s4 + $0x60] sm:$0xff]
  %v5866 = vld [vmem:[%s4 + $0x68] sm:$0xff]
  %v5867 = vld [vmem:[%s4 + $0x70] sm:$0xff]
  %v5868 = vld [vmem:[%s4 + $0x78] sm:$0xff]
  %v5869 = vld [vmem:[%s4 + $0x80] sm:$0xff]
  %v5870 = vld [vmem:[%s4 + $0x88] sm:$0xff]
  %v5871 = vld [vmem:[%s4 + $0x90] sm:$0xff]
  %v5872 = vld [vmem:[%s4 + $0x98] sm:$0xff]
  %v5873 = vld [vmem:[%s4 + $0xa0] sm:$0xff]
  %v5874 = vld [vmem:[%s4 + $0xa8] sm:$0xff]
  %v5875 = vld [vmem:[%s4 + $0xb0] sm:$0xff]
  %v5876 = vld [vmem:[%s4 + $0xb8] sm:$0xff]
  %v5877 = vld [vmem:[%s4 + $0xc0] sm:$0xff]
  %v5878 = vld [vmem:[%s4 + $0xc8] sm:$0xff]
  %v5879 = vld [vmem:[%s4 + $0xd0] sm:$0xff]
  %v5880 = vld [vmem:[%s4 + $0xd8] sm:$0xff]
  %v5881 = vld [vmem:[%s4 + $0xe0] sm:$0xff]
  %v5882 = vld [vmem:[%s4 + $0xe8] sm:$0xff]
  %v5883 = vld [vmem:[%s4 + $0xf0] sm:$0xff]
  %v5884 = vld [vmem:[%s4 + $0xf8] sm:$0xff]
  %v5885 = vld [vmem:[%s4 + $0x100] sm:$0xff]
  %v5886 = vld [vmem:[%s4 + $0x108] sm:$0xff]
  %v5887 = vld [vmem:[%s4 + $0x110] sm:$0xff]
  %v5888 = vld [vmem:[%s4 + $0x118] sm:$0xff]
  %v5889 = vld [vmem:[%s4 + $0x120] sm:$0xff]
  %v5890 = vld [vmem:[%s4 + $0x128] sm:$0xff]
  %v5891 = vld [vmem:[%s4 + $0x130] sm:$0xff]
  %v5892 = vld [vmem:[%s4 + $0x138] sm:$0xff]
  %v5893 = vld [vmem:[%s4 + $0x140] sm:$0xff]
  %v5894 = vld [vmem:[%s4 + $0x148] sm:$0xff]
  %v5895 = vld [vmem:[%s4 + $0x150] sm:$0xff]
  %v5896 = vld [vmem:[%s4 + $0x158] sm:$0xff]
  %v5897 = vld [vmem:[%s4 + $0x160] sm:$0xff]
  %v5898 = vld [vmem:[%s4 + $0x168] sm:$0xff]
  %v5899 = vld [vmem:[%s4 + $0x170] sm:$0xff]
  %v5900 = vld [vmem:[%s4 + $0x178] sm:$0xff]
  %v5901 = vld [vmem:[%s4 + $0x180] sm:$0xff]
  %v5902 = vld [vmem:[%s4 + $0x188] sm:$0xff]
  %v5903 = vld [vmem:[%s4 + $0x190] sm:$0xff]
  %v5904 = vld [vmem:[%s4 + $0x198] sm:$0xff]
  %v5905 = vld [vmem:[%s4 + $0x1a0] sm:$0xff]
  %v5906 = vld [vmem:[%s4 + $0x1a8] sm:$0xff]
  %v5907 = vld [vmem:[%s4 + $0x1b0] sm:$0xff]
  %v5908 = vld [vmem:[%s4 + $0x1b8] sm:$0xff]
  %v5909 = vld [vmem:[%s4 + $0x1c0] sm:$0xff]
  %v5910 = vld [vmem:[%s4 + $0x1c8] sm:$0xff]
  %v5911 = vld [vmem:[%s4 + $0x1d0] sm:$0xff]
  %v5912 = vld [vmem:[%s4 + $0x1d8] sm:$0xff]
  %v5913 = vld [vmem:[%s4 + $0x1e0] sm:$0xff]
  %v5914 = vld [vmem:[%s4 + $0x1e8] sm:$0xff]
  %v5915 = vld [vmem:[%s4 + $0x1f0] sm:$0xff]
  %v5916 = vld [vmem:[%s4 + $0x1f8] sm:$0xff]
  %v5917 = vld [vmem:[%s4 + $0x200] sm:$0xff]
  %v5918 = vld [vmem:[%s4 + $0x208] sm:$0xff]
  %v5919 = vld [vmem:[%s4 + $0x210] sm:$0xff]
  %v5920 = vld [vmem:[%s4 + $0x218] sm:$0xff]
  %v5921 = vld [vmem:[%s4 + $0x220] sm:$0xff]
  %v5922 = vld [vmem:[%s4 + $0x228] sm:$0xff]
  %v5923 = vld [vmem:[%s4 + $0x230] sm:$0xff]
  %v5924 = vld [vmem:[%s4 + $0x238] sm:$0xff]
  %v5925 = vld [vmem:[%s4 + $0x240] sm:$0xff]
  %v5926 = vld [vmem:[%s4 + $0x248] sm:$0xff]
  %v5927 = vld [vmem:[%s4 + $0x250] sm:$0xff]
  %v5928 = vld [vmem:[%s4 + $0x258] sm:$0xff]
  %v5929 = vld [vmem:[%s4 + $0x260] sm:$0xff]
  %v5930 = vld [vmem:[%s4 + $0x268] sm:$0xff]
  %v5931 = vld [vmem:[%s4 + $0x270] sm:$0xff]
  %v5932 = vld [vmem:[%s4 + $0x278] sm:$0xff]
  %v5933 = vld [vmem:[%s4 + $0x280] sm:$0xff]
  %v5934 = vld [vmem:[%s4 + $0x288] sm:$0xff]
  %v5935 = vld [vmem:[%s4 + $0x290] sm:$0xff]
  %v5936 = vld [vmem:[%s4 + $0x298] sm:$0xff]
  %v5937 = vld [vmem:[%s4 + $0x2a0] sm:$0xff]
  %v5938 = vld [vmem:[%s4 + $0x2a8] sm:$0xff]
  %v5939 = vld [vmem:[%s4 + $0x2b0] sm:$0xff]
  %v5940 = vld [vmem:[%s4 + $0x2b8] sm:$0xff]
  %v5941 = vld [vmem:[%s4 + $0x2c0] sm:$0xff]
  %v5942 = vld [vmem:[%s4 + $0x2c8] sm:$0xff]
  %v5943 = vld [vmem:[%s4 + $0x2d0] sm:$0xff]
  %v5944 = vld [vmem:[%s4 + $0x2d8] sm:$0xff]
  %v5945 = vld [vmem:[%s4 + $0x2e0] sm:$0xff]
  %v5946 = vld [vmem:[%s4 + $0x2e8] sm:$0xff]
  %v5947 = vld [vmem:[%s4 + $0x2f0] sm:$0xff]
  %v5948 = vld [vmem:[%s4 + $0x2f8] sm:$0xff]
  %v5949 = vld [vmem:[%s4 + $0x300] sm:$0xff]
  %v5950 = vld [vmem:[%s4 + $0x308] sm:$0xff]
  %v5951 = vld [vmem:[%s4 + $0x310] sm:$0xff]
  %v5952 = vld [vmem:[%s4 + $0x318] sm:$0xff]
  %v5953 = vld [vmem:[%s5] sm:$0x3]
  %v5955 = vlaneseq
  %v5956 = vshrl.u32 %v5955, 7
  %v5957 = vsub.s32 0, %v5956
  %v5958 = vrot.slane %v5953, %v5957
  %v5959 = vlaneseq
  %v5960 = vshrl.u32 %v5959, 7
  %v5961 = vsub.s32 1, %v5960
  %v5962 = vrot.slane %v5953, %v5961
  %vm5965 = vcmask 130048
  %v5967 = vsel %vm5965, %v5848, 0
  %v5970 = vsel %vm5965, %v5852, 0
  %5972 = vmatprep.subr.mxu0 %v5884
  %5973 = vmatpush1.msra.mxu0 %v5883
  %5974 = vmatprep.subr.mxu0 %v5882
  %5975 = vmatpush1.msra.mxu0 %v5881
  %5976 = vmatprep.subr.mxu0 %v5880
  %5977 = vmatpush1.msra.mxu0 %v5879
  %5978 = vmatprep.subr.mxu0 %v5878
  %5979 = vmatpush1.msra.mxu0 %v5877
  %5980 = vmatprep.subr.mxu0 %v5876
  %5981 = vmatpush1.msra.mxu0 %v5875
  %5982 = vmatprep.subr.mxu0 %v5874
  %5983 = vmatpush1.msra.mxu0 %v5873
  %5984 = vmatprep.subr.mxu0 %v5872
  %5985 = vmatpush1.msra.mxu0 %v5871
  %5986 = vmatprep.subr.mxu0 %v5870
  %5987 = vmatpush1.msra.mxu0 %v5869
  %5988 = vmatprep.subr.mxu0 %v5868
  %5989 = vmatpush1.msra.mxu0 %v5867
  %5990 = vmatprep.subr.mxu0 %v5866
  %5991 = vmatpush1.msra.mxu0 %v5865
  %5992 = vmatprep.subr.mxu0 %v5864
  %5993 = vmatpush1.msra.mxu0 %v5863
  %5994 = vmatprep.subr.mxu0 %v5862
  %5995 = vmatpush1.msra.mxu0 %v5861
  %5996 = vmatprep.subr.mxu0 %v5860
  %5997 = vmatpush1.msra.mxu0 %v5859
  %5998 = vmatprep.subr.mxu0 %v5858
  %5999 = vmatpush1.msra.mxu0 %v5857
  %6000 = vmatprep.subr.mxu0 %v5856
  %6001 = vmatpush1.msra.mxu0 %v5855
  %6002 = vmatprep.subr.mxu0 %v5854
  %6003 = vmatpush1.msra.mxu0 %v5853
  %6004 = vmatprep.subr.mxu0 %v5916
  %6005 = vmatpush2.msra.mxu0 %v5915
  %6006 = vmatprep.subr.mxu0 %v5914
  %6007 = vmatpush2.msra.mxu0 %v5913
  %6008 = vmatprep.subr.mxu0 %v5912
  %6009 = vmatpush2.msra.mxu0 %v5911
  %6010 = vmatprep.subr.mxu0 %v5910
  %6011 = vmatpush2.msra.mxu0 %v5909
  %6012 = vmatprep.subr.mxu0 %v5908
  %6013 = vmatpush2.msra.mxu0 %v5907
  %6014 = vmatprep.subr.mxu0 %v5906
  %6015 = vmatpush2.msra.mxu0 %v5905
  %6016 = vmatprep.subr.mxu0 %v5904
  %6017 = vmatpush2.msra.mxu0 %v5903
  %6018 = vmatprep.subr.mxu0 %v5902
  %6019 = vmatpush2.msra.mxu0 %v5901
  %6020 = vmatprep.subr.mxu0 %v5900
  %6021 = vmatpush2.msra.mxu0 %v5899
  %6022 = vmatprep.subr.mxu0 %v5898
  %6023 = vmatpush2.msra.mxu0 %v5897
  %6024 = vmatprep.subr.mxu0 %v5896
  %6025 = vmatpush2.msra.mxu0 %v5895
  %6026 = vmatprep.subr.mxu0 %v5894
  %6027 = vmatpush2.msra.mxu0 %v5893
  %6028 = vmatprep.subr.mxu0 %v5892
  %6029 = vmatpush2.msra.mxu0 %v5891
  %6030 = vmatprep.subr.mxu0 %v5890
  %6031 = vmatpush2.msra.mxu0 %v5889
  %6032 = vmatprep.subr.mxu0 %v5888
  %6033 = vmatpush2.msra.mxu0 %v5887
  %6034 = vmatprep.subr.mxu0 %v5886
  %6035 = vmatpush2.msra.mxu0 %v5885
  %6036 = vmatprep.mubr.f32.mxu0 %v5846
  %6037 = vmatmul.mubr.f32.gmra.mxu0 %v5845
  %v6038 = vpop.f32.mrf.mxu0
  %v6039 = vadd.f32 %v5958, %v6038
  %v6040 = vpop.f32.mrf.mxu0
  %v6041 = vadd.f32 %v5962, %v6040
  %6042 = vmatprep.mubr.f32.mxu0 %v5850
  %6043 = vmatmul.mubr.f32.gmra.mxu0 %v5849
  %v6044 = vpop.f32.mrf.mxu0
  %v6045 = vadd.f32 %v5958, %v6044
  %v6046 = vpop.f32.mrf.mxu0
  %v6047 = vadd.f32 %v5962, %v6046
  %6048 = vdwg.mxu0
  %6049 = vmatprep.subr.mxu0 %v5948
  %6050 = vmatpush1.msra.mxu0 %v5947
  %6051 = vmatprep.subr.mxu0 %v5946
  %6052 = vmatpush1.msra.mxu0 %v5945
  %6053 = vmatprep.subr.mxu0 %v5944
  %6054 = vmatpush1.msra.mxu0 %v5943
  %6055 = vmatprep.subr.mxu0 %v5942
  %6056 = vmatpush1.msra.mxu0 %v5941
  %6057 = vmatprep.subr.mxu0 %v5940
  %6058 = vmatpush1.msra.mxu0 %v5939
  %6059 = vmatprep.subr.mxu0 %v5938
  %6060 = vmatpush1.msra.mxu0 %v5937
  %6061 = vmatprep.subr.mxu0 %v5936
  %6062 = vmatpush1.msra.mxu0 %v5935
  %6063 = vmatprep.subr.mxu0 %v5934
  %6064 = vmatpush1.msra.mxu0 %v5933
  %6065 = vmatprep.subr.mxu0 %v5932
  %6066 = vmatpush1.msra.mxu0 %v5931
  %6067 = vmatprep.subr.mxu0 %v5930
  %6068 = vmatpush1.msra.mxu0 %v5929
  %6069 = vmatprep.subr.mxu0 %v5928
  %6070 = vmatpush1.msra.mxu0 %v5927
  %6071 = vmatprep.subr.mxu0 %v5926
  %6072 = vmatpush1.msra.mxu0 %v5925
  %6073 = vmatprep.subr.mxu0 %v5924
  %6074 = vmatpush1.msra.mxu0 %v5923
  %6075 = vmatprep.subr.mxu0 %v5922
  %6076 = vmatpush1.msra.mxu0 %v5921
  %6077 = vmatprep.subr.mxu0 %v5920
  %6078 = vmatpush1.msra.mxu0 %v5919
  %6079 = vmatprep.subr.mxu0 %v5918
  %6080 = vmatpush1.msra.mxu0 %v5917
  %6081 = vmatprep.subr.mxu0 0.0
  %6082 = vmatpush2.msra.mxu0 0.0
  %6083 = vmatprep.subr.mxu0 0.0
  %6084 = vmatpush2.msra.mxu0 0.0
  %6085 = vmatprep.subr.mxu0 0.0
  %6086 = vmatpush2.msra.mxu0 0.0
  %6087 = vmatprep.subr.mxu0 0.0
  %6088 = vmatpush2.msra.mxu0 0.0
  %6089 = vmatprep.subr.mxu0 0.0
  %6090 = vmatpush2.msra.mxu0 0.0
  %6091 = vmatprep.subr.mxu0 0.0
  %6092 = vmatpush2.msra.mxu0 0.0
  %6093 = vmatprep.subr.mxu0 0.0
  %6094 = vmatpush2.msra.mxu0 0.0
  %6095 = vmatprep.subr.mxu0 0.0
  %6096 = vmatpush2.msra.mxu0 0.0
  %6097 = vmatprep.subr.mxu0 0.0
  %6098 = vmatpush2.msra.mxu0 0.0
  %6099 = vmatprep.subr.mxu0 0.0
  %6100 = vmatpush2.msra.mxu0 0.0
  %6101 = vmatprep.subr.mxu0 0.0
  %6102 = vmatpush2.msra.mxu0 0.0
  %6103 = vmatprep.subr.mxu0 0.0
  %6104 = vmatpush2.msra.mxu0 0.0
  %6105 = vmatprep.subr.mxu0 0.0
  %6106 = vmatpush2.msra.mxu0 0.0
  %6107 = vmatprep.subr.mxu0 0.0
  %6108 = vmatpush2.msra.mxu0 0.0
  %6109 = vmatprep.subr.mxu0 %v5952
  %6110 = vmatpush2.msra.mxu0 %v5951
  %6111 = vmatprep.subr.mxu0 %v5950
  %6112 = vmatpush2.msra.mxu0 %v5949
  %6113 = vmatprep.mubr.f32.mxu0 %v5967
  %6114 = vmatmul.mubr.f32.gmra.mxu0 %v5847
  %v6115 = vpop.f32.mrf.mxu0
  %v6116 = vadd.f32 %v6039, %v6115
  %v6117 = vpop.f32.mrf.mxu0
  %v6118 = vadd.f32 %v6041, %v6117
  %6119 = vmatprep.mubr.f32.mxu0 %v5970
  %6120 = vmatmul.mubr.f32.gmra.mxu0 %v5851
  %v6121 = vpop.f32.mrf.mxu0
  %v6122 = vadd.f32 %v6045, %v6121
  %v6123 = vpop.f32.mrf.mxu0
  %v6124 = vadd.f32 %v6047, %v6123
  %6125 = vdwg.mxu0
  %6126 = vst [vmem:[%s11] sm:$0xff] %v6116
  %6127 = vst [vmem:[%s11 + $0x8] sm:$0xff] %v6122
  %6128 = vst [vmem:[%s12] sm:$0xff] %v6118
  %6129 = vst [vmem:[%s12 + $0x8] sm:$0xff] %v6124
  %v6130 = vld [vmem:[%s1] sm:$0xff]
  %v6131 = vld [vmem:[%s1 + $0x8] sm:$0xff]
  %v6132 = vmul.f32 %v6118, 0.5
  %v6133 = vmul.f32 %v6124, 0.5
  %v6134 = vmul.f32 %v6132, 1.442695
  %v6135 = vpow.pop %v6134
  %v6136 = vmul.f32 %v6133, 1.442695
  %v6137 = vpow.pop %v6136
  %v6138 = vmul.f32 %v6130, %v6135
  %v6139 = vmul.f32 %v6131, %v6137
  %v6140 = vadd.f32 %v6116, %v6138
  %v6141 = vadd.f32 %v6122, %v6139
  %v6142 = vld [vmem:[%s6] sm:$0xff]
  %v6143 = vld [vmem:[%s6 + $0x8] sm:$0xff]
  %v6144 = vld [vmem:[%s6 + $0x10] sm:$0xff]
  %v6145 = vld [vmem:[%s6 + $0x18] sm:$0xff]
  %v6146 = vld [vmem:[%s6 + $0x20] sm:$0xff]
  %v6147 = vld [vmem:[%s6 + $0x28] sm:$0xff]
  %v6148 = vld [vmem:[%s6 + $0x30] sm:$0xff]
  %v6149 = vld [vmem:[%s6 + $0x38] sm:$0xff]
  %v6150 = vld [vmem:[%s6 + $0x40] sm:$0xff]
  %v6151 = vld [vmem:[%s6 + $0x48] sm:$0xff]
  %v6152 = vld [vmem:[%s6 + $0x50] sm:$0xff]
  %v6153 = vld [vmem:[%s6 + $0x58] sm:$0xff]
  %v6154 = vld [vmem:[%s6 + $0x60] sm:$0xff]
  %v6155 = vld [vmem:[%s6 + $0x68] sm:$0xff]
  %v6156 = vld [vmem:[%s6 + $0x70] sm:$0xff]
  %v6157 = vld [vmem:[%s6 + $0x78] sm:$0xff]
  %v6158 = vld [vmem:[%s6 + $0x80] sm:$0xff]
  %v6159 = vld [vmem:[%s6 + $0x88] sm:$0xff]
  %v6160 = vld [vmem:[%s6 + $0x90] sm:$0xff]
  %v6161 = vld [vmem:[%s6 + $0x98] sm:$0xff]
  %v6162 = vld [vmem:[%s6 + $0xa0] sm:$0xff]
  %v6163 = vld [vmem:[%s6 + $0xa8] sm:$0xff]
  %v6164 = vld [vmem:[%s6 + $0xb0] sm:$0xff]
  %v6165 = vld [vmem:[%s6 + $0xb8] sm:$0xff]
  %v6166 = vld [vmem:[%s6 + $0xc0] sm:$0xff]
  %v6167 = vld [vmem:[%s6 + $0xc8] sm:$0xff]
  %v6168 = vld [vmem:[%s6 + $0xd0] sm:$0xff]
  %v6169 = vld [vmem:[%s6 + $0xd8] sm:$0xff]
  %v6170 = vld [vmem:[%s6 + $0xe0] sm:$0xff]
  %v6171 = vld [vmem:[%s6 + $0xe8] sm:$0xff]
  %v6172 = vld [vmem:[%s6 + $0xf0] sm:$0xff]
  %v6173 = vld [vmem:[%s6 + $0xf8] sm:$0xff]
  %v6174 = vld [vmem:[%s6 + $0x100] sm:$0xff]
  %v6175 = vld [vmem:[%s6 + $0x108] sm:$0xff]
  %v6176 = vld [vmem:[%s6 + $0x110] sm:$0xff]
  %v6177 = vld [vmem:[%s6 + $0x118] sm:$0xff]
  %v6178 = vld [vmem:[%s6 + $0x120] sm:$0xff]
  %v6179 = vld [vmem:[%s6 + $0x128] sm:$0xff]
  %v6180 = vld [vmem:[%s6 + $0x130] sm:$0xff]
  %v6181 = vld [vmem:[%s6 + $0x138] sm:$0xff]
  %v6182 = vld [vmem:[%s6 + $0x140] sm:$0xff]
  %v6183 = vld [vmem:[%s6 + $0x148] sm:$0xff]
  %v6184 = vld [vmem:[%s6 + $0x150] sm:$0xff]
  %v6185 = vld [vmem:[%s6 + $0x158] sm:$0xff]
  %v6186 = vld [vmem:[%s6 + $0x160] sm:$0xff]
  %v6187 = vld [vmem:[%s6 + $0x168] sm:$0xff]
  %v6188 = vld [vmem:[%s6 + $0x170] sm:$0xff]
  %v6189 = vld [vmem:[%s6 + $0x178] sm:$0xff]
  %v6190 = vld [vmem:[%s6 + $0x180] sm:$0xff]
  %v6191 = vld [vmem:[%s6 + $0x188] sm:$0xff]
  %v6192 = vld [vmem:[%s6 + $0x190] sm:$0xff]
  %v6193 = vld [vmem:[%s6 + $0x198] sm:$0xff]
  %v6194 = vld [vmem:[%s6 + $0x1a0] sm:$0xff]
  %v6195 = vld [vmem:[%s6 + $0x1a8] sm:$0xff]
  %v6196 = vld [vmem:[%s6 + $0x1b0] sm:$0xff]
  %v6197 = vld [vmem:[%s6 + $0x1b8] sm:$0xff]
  %v6198 = vld [vmem:[%s6 + $0x1c0] sm:$0xff]
  %v6199 = vld [vmem:[%s6 + $0x1c8] sm:$0xff]
  %v6200 = vld [vmem:[%s6 + $0x1d0] sm:$0xff]
  %v6201 = vld [vmem:[%s6 + $0x1d8] sm:$0xff]
  %v6202 = vld [vmem:[%s6 + $0x1e0] sm:$0xff]
  %v6203 = vld [vmem:[%s6 + $0x1e8] sm:$0xff]
  %v6204 = vld [vmem:[%s6 + $0x1f0] sm:$0xff]
  %v6205 = vld [vmem:[%s6 + $0x1f8] sm:$0xff]
  %v6206 = vld [vmem:[%s7] sm:$0xf]
  %v6208 = vlaneseq
  %v6209 = vshrl.u32 %v6208, 7
  %v6210 = vsub.s32 0, %v6209
  %v6211 = vrot.slane %v6206, %v6210
  %v6212 = vlaneseq
  %v6213 = vshrl.u32 %v6212, 7
  %v6214 = vsub.s32 1, %v6213
  %v6215 = vrot.slane %v6206, %v6214
  %v6216 = vlaneseq
  %v6217 = vshrl.u32 %v6216, 7
  %v6218 = vsub.s32 2, %v6217
  %v6219 = vrot.slane %v6206, %v6218
  %v6220 = vlaneseq
  %v6221 = vshrl.u32 %v6220, 7
  %v6222 = vsub.s32 3, %v6221
  %v6223 = vrot.slane %v6206, %v6222
  %6228 = vmatprep.subr.mxu0 %v6203
  %6229 = vmatpush1.msra.mxu0 %v6202
  %6230 = vmatprep.subr.mxu0 %v6199
  %6231 = vmatpush1.msra.mxu0 %v6198
  %6232 = vmatprep.subr.mxu0 %v6195
  %6233 = vmatpush1.msra.mxu0 %v6194
  %6234 = vmatprep.subr.mxu0 %v6191
  %6235 = vmatpush1.msra.mxu0 %v6190
  %6236 = vmatprep.subr.mxu0 %v6187
  %6237 = vmatpush1.msra.mxu0 %v6186
  %6238 = vmatprep.subr.mxu0 %v6183
  %6239 = vmatpush1.msra.mxu0 %v6182
  %6240 = vmatprep.subr.mxu0 %v6179
  %6241 = vmatpush1.msra.mxu0 %v6178
  %6242 = vmatprep.subr.mxu0 %v6175
  %6243 = vmatpush1.msra.mxu0 %v6174
  %6244 = vmatprep.subr.mxu0 %v6171
  %6245 = vmatpush1.msra.mxu0 %v6170
  %6246 = vmatprep.subr.mxu0 %v6167
  %6247 = vmatpush1.msra.mxu0 %v6166
  %6248 = vmatprep.subr.mxu0 %v6163
  %6249 = vmatpush1.msra.mxu0 %v6162
  %6250 = vmatprep.subr.mxu0 %v6159
  %6251 = vmatpush1.msra.mxu0 %v6158
  %6252 = vmatprep.subr.mxu0 %v6155
  %6253 = vmatpush1.msra.mxu0 %v6154
  %6254 = vmatprep.subr.mxu0 %v6151
  %6255 = vmatpush1.msra.mxu0 %v6150
  %6256 = vmatprep.subr.mxu0 %v6147
  %6257 = vmatpush1.msra.mxu0 %v6146
  %6258 = vmatprep.subr.mxu0 %v6143
  %6259 = vmatpush1.msra.mxu0 %v6142
  %6260 = vmatprep.subr.mxu0 0.0
  %6261 = vmatpush2.msra.mxu0 0.0
  %6262 = vmatprep.subr.mxu0 0.0
  %6263 = vmatpush2.msra.mxu0 0.0
  %6264 = vmatprep.subr.mxu0 0.0
  %6265 = vmatpush2.msra.mxu0 0.0
  %6266 = vmatprep.subr.mxu0 0.0
  %6267 = vmatpush2.msra.mxu0 0.0
  %6268 = vmatprep.subr.mxu0 0.0
  %6269 = vmatpush2.msra.mxu0 0.0
  %6270 = vmatprep.subr.mxu0 0.0
  %6271 = vmatpush2.msra.mxu0 0.0
  %6272 = vmatprep.subr.mxu0 0.0
  %6273 = vmatpush2.msra.mxu0 0.0
  %6274 = vmatprep.subr.mxu0 0.0
  %6275 = vmatpush2.msra.mxu0 0.0
  %6276 = vmatprep.subr.mxu0 0.0
  %6277 = vmatpush2.msra.mxu0 0.0
  %6278 = vmatprep.subr.mxu0 0.0
  %6279 = vmatpush2.msra.mxu0 0.0
  %6280 = vmatprep.subr.mxu0 0.0
  %6281 = vmatpush2.msra.mxu0 0.0
  %6282 = vmatprep.subr.mxu0 0.0
  %6283 = vmatpush2.msra.mxu0 0.0
  %6284 = vmatprep.subr.mxu0 0.0
  %6285 = vmatpush2.msra.mxu0 0.0
  %6286 = vmatprep.subr.mxu0 0.0
  %6287 = vmatpush2.msra.mxu0 0.0
  %6288 = vmatprep.subr.mxu0 0.0
  %6289 = vmatpush2.msra.mxu0 0.0
  %6290 = vmatprep.subr.mxu0 0.0
  %6291 = vmatpush2.msra.mxu0 0.0
  %6292 = vmatprep.mubr.f32.mxu0 0.0
  %6293 = vmatmul.mubr.f32.gmra.mxu0 %v6140
  %v6294 = vpop.f32.mrf.mxu0
  %v6295 = vadd.f32 %v6211, %v6294
  %v6296 = vpop.f32.mrf.mxu0
  %v6297 = vadd.f32 %v6215, %v6296
  %6298 = vmatprep.mubr.f32.mxu0 0.0
  %6299 = vmatmul.mubr.f32.gmra.mxu0 %v6141
  %v6300 = vpop.f32.mrf.mxu0
  %v6301 = vadd.f32 %v6211, %v6300
  %v6302 = vpop.f32.mrf.mxu0
  %v6303 = vadd.f32 %v6215, %v6302
  %6304 = vdwg.mxu0
  %6305 = vmatprep.subr.mxu0 %v6205
  %6306 = vmatpush1.msra.mxu0 %v6204
  %6307 = vmatprep.subr.mxu0 %v6201
  %6308 = vmatpush1.msra.mxu0 %v6200
  %6309 = vmatprep.subr.mxu0 %v6197
  %6310 = vmatpush1.msra.mxu0 %v6196
  %6311 = vmatprep.subr.mxu0 %v6193
  %6312 = vmatpush1.msra.mxu0 %v6192
  %6313 = vmatprep.subr.mxu0 %v6189
  %6314 = vmatpush1.msra.mxu0 %v6188
  %6315 = vmatprep.subr.mxu0 %v6185
  %6316 = vmatpush1.msra.mxu0 %v6184
  %6317 = vmatprep.subr.mxu0 %v6181
  %6318 = vmatpush1.msra.mxu0 %v6180
  %6319 = vmatprep.subr.mxu0 %v6177
  %6320 = vmatpush1.msra.mxu0 %v6176
  %6321 = vmatprep.subr.mxu0 %v6173
  %6322 = vmatpush1.msra.mxu0 %v6172
  %6323 = vmatprep.subr.mxu0 %v6169
  %6324 = vmatpush1.msra.mxu0 %v6168
  %6325 = vmatprep.subr.mxu0 %v6165
  %6326 = vmatpush1.msra.mxu0 %v6164
  %6327 = vmatprep.subr.mxu0 %v6161
  %6328 = vmatpush1.msra.mxu0 %v6160
  %6329 = vmatprep.subr.mxu0 %v6157
  %6330 = vmatpush1.msra.mxu0 %v6156
  %6331 = vmatprep.subr.mxu0 %v6153
  %6332 = vmatpush1.msra.mxu0 %v6152
  %6333 = vmatprep.subr.mxu0 %v6149
  %6334 = vmatpush1.msra.mxu0 %v6148
  %6335 = vmatprep.subr.mxu0 %v6145
  %6336 = vmatpush1.msra.mxu0 %v6144
  %6337 = vmatprep.subr.mxu0 0.0
  %6338 = vmatpush2.msra.mxu0 0.0
  %6339 = vmatprep.subr.mxu0 0.0
  %6340 = vmatpush2.msra.mxu0 0.0
  %6341 = vmatprep.subr.mxu0 0.0
  %6342 = vmatpush2.msra.mxu0 0.0
  %6343 = vmatprep.subr.mxu0 0.0
  %6344 = vmatpush2.msra.mxu0 0.0
  %6345 = vmatprep.subr.mxu0 0.0
  %6346 = vmatpush2.msra.mxu0 0.0
  %6347 = vmatprep.subr.mxu0 0.0
  %6348 = vmatpush2.msra.mxu0 0.0
  %6349 = vmatprep.subr.mxu0 0.0
  %6350 = vmatpush2.msra.mxu0 0.0
  %6351 = vmatprep.subr.mxu0 0.0
  %6352 = vmatpush2.msra.mxu0 0.0
  %6353 = vmatprep.subr.mxu0 0.0
  %6354 = vmatpush2.msra.mxu0 0.0
  %6355 = vmatprep.subr.mxu0 0.0
  %6356 = vmatpush2.msra.mxu0 0.0
  %6357 = vmatprep.subr.mxu0 0.0
  %6358 = vmatpush2.msra.mxu0 0.0
  %6359 = vmatprep.subr.mxu0 0.0
  %6360 = vmatpush2.msra.mxu0 0.0
  %6361 = vmatprep.subr.mxu0 0.0
  %6362 = vmatpush2.msra.mxu0 0.0
  %6363 = vmatprep.subr.mxu0 0.0
  %6364 = vmatpush2.msra.mxu0 0.0
  %6365 = vmatprep.subr.mxu0 0.0
  %6366 = vmatpush2.msra.mxu0 0.0
  %6367 = vmatprep.subr.mxu0 0.0
  %6368 = vmatpush2.msra.mxu0 0.0
  %6369 = vmatprep.mubr.f32.mxu0 0.0
  %6370 = vmatmul.mubr.f32.gmra.mxu0 %v6140
  %v6371 = vpop.f32.mrf.mxu0
  %v6372 = vadd.f32 %v6219, %v6371
  %v6373 = vpop.f32.mrf.mxu0
  %v6374 = vadd.f32 %v6223, %v6373
  %6375 = vmatprep.mubr.f32.mxu0 0.0
  %6376 = vmatmul.mubr.f32.gmra.mxu0 %v6141
  %v6377 = vpop.f32.mrf.mxu0
  %v6378 = vadd.f32 %v6219, %v6377
  %v6379 = vpop.f32.mrf.mxu0
  %v6380 = vadd.f32 %v6223, %v6379
  %6381 = vdwg.mxu0
  %v6382 = vmax.f32 %v6295, 0.0
  %v6383 = vmax.f32 %v6297, 0.0
  %v6384 = vmax.f32 %v6372, 0.0
  %v6385 = vmax.f32 %v6374, 0.0
  %v6386 = vmax.f32 %v6301, 0.0
  %v6387 = vmax.f32 %v6303, 0.0
  %v6388 = vmax.f32 %v6378, 0.0
  %v6389 = vmax.f32 %v6380, 0.0
  %v6390 = vpack.c.bf16 %v6386, %v6382
  %v6391 = vpack.c.bf16 %v6387, %v6383
  %v6392 = vpack.c.bf16 %v6388, %v6384
  %v6393 = vpack.c.bf16 %v6389, %v6385
  %v6394 = vld [vmem:[%s8] sm:$0xff]
  %v6395 = vld [vmem:[%s8 + $0x8] sm:$0xff]
  %v6396 = vld [vmem:[%s8 + $0x10] sm:$0xff]
  %v6397 = vld [vmem:[%s8 + $0x18] sm:$0xff]
  %v6398 = vld [vmem:[%s8 + $0x20] sm:$0xff]
  %v6399 = vld [vmem:[%s8 + $0x28] sm:$0xff]
  %v6400 = vld [vmem:[%s8 + $0x30] sm:$0xff]
  %v6401 = vld [vmem:[%s8 + $0x38] sm:$0xff]
  %v6402 = vld [vmem:[%s8 + $0x40] sm:$0xff]
  %v6403 = vld [vmem:[%s8 + $0x48] sm:$0xff]
  %v6404 = vld [vmem:[%s8 + $0x50] sm:$0xff]
  %v6405 = vld [vmem:[%s8 + $0x58] sm:$0xff]
  %v6406 = vld [vmem:[%s8 + $0x60] sm:$0xff]
  %v6407 = vld [vmem:[%s8 + $0x68] sm:$0xff]
  %v6408 = vld [vmem:[%s8 + $0x70] sm:$0xff]
  %v6409 = vld [vmem:[%s8 + $0x78] sm:$0xff]
  %v6410 = vld [vmem:[%s8 + $0x80] sm:$0xff]
  %v6411 = vld [vmem:[%s8 + $0x88] sm:$0xff]
  %v6412 = vld [vmem:[%s8 + $0x90] sm:$0xff]
  %v6413 = vld [vmem:[%s8 + $0x98] sm:$0xff]
  %v6414 = vld [vmem:[%s8 + $0xa0] sm:$0xff]
  %v6415 = vld [vmem:[%s8 + $0xa8] sm:$0xff]
  %v6416 = vld [vmem:[%s8 + $0xb0] sm:$0xff]
  %v6417 = vld [vmem:[%s8 + $0xb8] sm:$0xff]
  %v6418 = vld [vmem:[%s8 + $0xc0] sm:$0xff]
  %v6419 = vld [vmem:[%s8 + $0xc8] sm:$0xff]
  %v6420 = vld [vmem:[%s8 + $0xd0] sm:$0xff]
  %v6421 = vld [vmem:[%s8 + $0xd8] sm:$0xff]
  %v6422 = vld [vmem:[%s8 + $0xe0] sm:$0xff]
  %v6423 = vld [vmem:[%s8 + $0xe8] sm:$0xff]
  %v6424 = vld [vmem:[%s8 + $0xf0] sm:$0xff]
  %v6425 = vld [vmem:[%s8 + $0xf8] sm:$0xff]
  %v6426 = vld [vmem:[%s8 + $0x100] sm:$0xff]
  %v6427 = vld [vmem:[%s8 + $0x108] sm:$0xff]
  %v6428 = vld [vmem:[%s8 + $0x110] sm:$0xff]
  %v6429 = vld [vmem:[%s8 + $0x118] sm:$0xff]
  %v6430 = vld [vmem:[%s8 + $0x120] sm:$0xff]
  %v6431 = vld [vmem:[%s8 + $0x128] sm:$0xff]
  %v6432 = vld [vmem:[%s8 + $0x130] sm:$0xff]
  %v6433 = vld [vmem:[%s8 + $0x138] sm:$0xff]
  %v6434 = vld [vmem:[%s8 + $0x140] sm:$0xff]
  %v6435 = vld [vmem:[%s8 + $0x148] sm:$0xff]
  %v6436 = vld [vmem:[%s8 + $0x150] sm:$0xff]
  %v6437 = vld [vmem:[%s8 + $0x158] sm:$0xff]
  %v6438 = vld [vmem:[%s8 + $0x160] sm:$0xff]
  %v6439 = vld [vmem:[%s8 + $0x168] sm:$0xff]
  %v6440 = vld [vmem:[%s8 + $0x170] sm:$0xff]
  %v6441 = vld [vmem:[%s8 + $0x178] sm:$0xff]
  %v6442 = vld [vmem:[%s8 + $0x180] sm:$0xff]
  %v6443 = vld [vmem:[%s8 + $0x188] sm:$0xff]
  %v6444 = vld [vmem:[%s8 + $0x190] sm:$0xff]
  %v6445 = vld [vmem:[%s8 + $0x198] sm:$0xff]
  %v6446 = vld [vmem:[%s8 + $0x1a0] sm:$0xff]
  %v6447 = vld [vmem:[%s8 + $0x1a8] sm:$0xff]
  %v6448 = vld [vmem:[%s8 + $0x1b0] sm:$0xff]
  %v6449 = vld [vmem:[%s8 + $0x1b8] sm:$0xff]
  %v6450 = vld [vmem:[%s8 + $0x1c0] sm:$0xff]
  %v6451 = vld [vmem:[%s8 + $0x1c8] sm:$0xff]
  %v6452 = vld [vmem:[%s8 + $0x1d0] sm:$0xff]
  %v6453 = vld [vmem:[%s8 + $0x1d8] sm:$0xff]
  %v6454 = vld [vmem:[%s8 + $0x1e0] sm:$0xff]
  %v6455 = vld [vmem:[%s8 + $0x1e8] sm:$0xff]
  %v6456 = vld [vmem:[%s8 + $0x1f0] sm:$0xff]
  %v6457 = vld [vmem:[%s8 + $0x1f8] sm:$0xff]
  %v6458 = vld [vmem:[%s8 + $0x200] sm:$0xff]
  %v6459 = vld [vmem:[%s8 + $0x208] sm:$0xff]
  %v6460 = vld [vmem:[%s8 + $0x210] sm:$0xff]
  %v6461 = vld [vmem:[%s8 + $0x218] sm:$0xff]
  %v6462 = vld [vmem:[%s8 + $0x220] sm:$0xff]
  %v6463 = vld [vmem:[%s8 + $0x228] sm:$0xff]
  %v6464 = vld [vmem:[%s8 + $0x230] sm:$0xff]
  %v6465 = vld [vmem:[%s8 + $0x238] sm:$0xff]
  %v6466 = vld [vmem:[%s8 + $0x240] sm:$0xff]
  %v6467 = vld [vmem:[%s8 + $0x248] sm:$0xff]
  %v6468 = vld [vmem:[%s8 + $0x250] sm:$0xff]
  %v6469 = vld [vmem:[%s8 + $0x258] sm:$0xff]
  %v6470 = vld [vmem:[%s8 + $0x260] sm:$0xff]
  %v6471 = vld [vmem:[%s8 + $0x268] sm:$0xff]
  %v6472 = vld [vmem:[%s8 + $0x270] sm:$0xff]
  %v6473 = vld [vmem:[%s8 + $0x278] sm:$0xff]
  %v6474 = vld [vmem:[%s8 + $0x280] sm:$0xff]
  %v6475 = vld [vmem:[%s8 + $0x288] sm:$0xff]
  %v6476 = vld [vmem:[%s8 + $0x290] sm:$0xff]
  %v6477 = vld [vmem:[%s8 + $0x298] sm:$0xff]
  %v6478 = vld [vmem:[%s8 + $0x2a0] sm:$0xff]
  %v6479 = vld [vmem:[%s8 + $0x2a8] sm:$0xff]
  %v6480 = vld [vmem:[%s8 + $0x2b0] sm:$0xff]
  %v6481 = vld [vmem:[%s8 + $0x2b8] sm:$0xff]
  %v6482 = vld [vmem:[%s8 + $0x2c0] sm:$0xff]
  %v6483 = vld [vmem:[%s8 + $0x2c8] sm:$0xff]
  %v6484 = vld [vmem:[%s8 + $0x2d0] sm:$0xff]
  %v6485 = vld [vmem:[%s8 + $0x2d8] sm:$0xff]
  %v6486 = vld [vmem:[%s8 + $0x2e0] sm:$0xff]
  %v6487 = vld [vmem:[%s8 + $0x2e8] sm:$0xff]
  %v6488 = vld [vmem:[%s8 + $0x2f0] sm:$0xff]
  %v6489 = vld [vmem:[%s8 + $0x2f8] sm:$0xff]
  %v6490 = vld [vmem:[%s8 + $0x300] sm:$0xff]
  %v6491 = vld [vmem:[%s8 + $0x308] sm:$0xff]
  %v6492 = vld [vmem:[%s8 + $0x310] sm:$0xff]
  %v6493 = vld [vmem:[%s8 + $0x318] sm:$0xff]
  %v6494 = vld [vmem:[%s8 + $0x320] sm:$0xff]
  %v6495 = vld [vmem:[%s8 + $0x328] sm:$0xff]
  %v6496 = vld [vmem:[%s8 + $0x330] sm:$0xff]
  %v6497 = vld [vmem:[%s8 + $0x338] sm:$0xff]
  %v6498 = vld [vmem:[%s8 + $0x340] sm:$0xff]
  %v6499 = vld [vmem:[%s8 + $0x348] sm:$0xff]
  %v6500 = vld [vmem:[%s8 + $0x350] sm:$0xff]
  %v6501 = vld [vmem:[%s8 + $0x358] sm:$0xff]
  %v6502 = vld [vmem:[%s8 + $0x360] sm:$0xff]
  %v6503 = vld [vmem:[%s8 + $0x368] sm:$0xff]
  %v6504 = vld [vmem:[%s8 + $0x370] sm:$0xff]
  %v6505 = vld [vmem:[%s8 + $0x378] sm:$0xff]
  %v6506 = vld [vmem:[%s8 + $0x380] sm:$0xff]
  %v6507 = vld [vmem:[%s8 + $0x388] sm:$0xff]
  %v6508 = vld [vmem:[%s8 + $0x390] sm:$0xff]
  %v6509 = vld [vmem:[%s8 + $0x398] sm:$0xff]
  %v6510 = vld [vmem:[%s8 + $0x3a0] sm:$0xff]
  %v6511 = vld [vmem:[%s8 + $0x3a8] sm:$0xff]
  %v6512 = vld [vmem:[%s8 + $0x3b0] sm:$0xff]
  %v6513 = vld [vmem:[%s8 + $0x3b8] sm:$0xff]
  %v6514 = vld [vmem:[%s8 + $0x3c0] sm:$0xff]
  %v6515 = vld [vmem:[%s8 + $0x3c8] sm:$0xff]
  %v6516 = vld [vmem:[%s8 + $0x3d0] sm:$0xff]
  %v6517 = vld [vmem:[%s8 + $0x3d8] sm:$0xff]
  %v6518 = vld [vmem:[%s8 + $0x3e0] sm:$0xff]
  %v6519 = vld [vmem:[%s8 + $0x3e8] sm:$0xff]
  %v6520 = vld [vmem:[%s8 + $0x3f0] sm:$0xff]
  %v6521 = vld [vmem:[%s8 + $0x3f8] sm:$0xff]
  %v6522 = vld [vmem:[%s8 + $0x400] sm:$0xff]
  %v6523 = vld [vmem:[%s8 + $0x408] sm:$0xff]
  %v6524 = vld [vmem:[%s8 + $0x410] sm:$0xff]
  %v6525 = vld [vmem:[%s8 + $0x418] sm:$0xff]
  %v6526 = vld [vmem:[%s8 + $0x420] sm:$0xff]
  %v6527 = vld [vmem:[%s8 + $0x428] sm:$0xff]
  %v6528 = vld [vmem:[%s8 + $0x430] sm:$0xff]
  %v6529 = vld [vmem:[%s8 + $0x438] sm:$0xff]
  %v6530 = vld [vmem:[%s8 + $0x440] sm:$0xff]
  %v6531 = vld [vmem:[%s8 + $0x448] sm:$0xff]
  %v6532 = vld [vmem:[%s8 + $0x450] sm:$0xff]
  %v6533 = vld [vmem:[%s8 + $0x458] sm:$0xff]
  %v6534 = vld [vmem:[%s8 + $0x460] sm:$0xff]
  %v6535 = vld [vmem:[%s8 + $0x468] sm:$0xff]
  %v6536 = vld [vmem:[%s8 + $0x470] sm:$0xff]
  %v6537 = vld [vmem:[%s8 + $0x478] sm:$0xff]
  %v6538 = vld [vmem:[%s8 + $0x480] sm:$0xff]
  %v6539 = vld [vmem:[%s8 + $0x488] sm:$0xff]
  %v6540 = vld [vmem:[%s8 + $0x490] sm:$0xff]
  %v6541 = vld [vmem:[%s8 + $0x498] sm:$0xff]
  %v6542 = vld [vmem:[%s8 + $0x4a0] sm:$0xff]
  %v6543 = vld [vmem:[%s8 + $0x4a8] sm:$0xff]
  %v6544 = vld [vmem:[%s8 + $0x4b0] sm:$0xff]
  %v6545 = vld [vmem:[%s8 + $0x4b8] sm:$0xff]
  %v6546 = vld [vmem:[%s8 + $0x4c0] sm:$0xff]
  %v6547 = vld [vmem:[%s8 + $0x4c8] sm:$0xff]
  %v6548 = vld [vmem:[%s8 + $0x4d0] sm:$0xff]
  %v6549 = vld [vmem:[%s8 + $0x4d8] sm:$0xff]
  %v6550 = vld [vmem:[%s8 + $0x4e0] sm:$0xff]
  %v6551 = vld [vmem:[%s8 + $0x4e8] sm:$0xff]
  %v6552 = vld [vmem:[%s8 + $0x4f0] sm:$0xff]
  %v6553 = vld [vmem:[%s8 + $0x4f8] sm:$0xff]
  %v6554 = vld [vmem:[%s8 + $0x500] sm:$0xff]
  %v6555 = vld [vmem:[%s8 + $0x508] sm:$0xff]
  %v6556 = vld [vmem:[%s8 + $0x510] sm:$0xff]
  %v6557 = vld [vmem:[%s8 + $0x518] sm:$0xff]
  %v6558 = vld [vmem:[%s8 + $0x520] sm:$0xff]
  %v6559 = vld [vmem:[%s8 + $0x528] sm:$0xff]
  %v6560 = vld [vmem:[%s8 + $0x530] sm:$0xff]
  %v6561 = vld [vmem:[%s8 + $0x538] sm:$0xff]
  %v6562 = vld [vmem:[%s8 + $0x540] sm:$0xff]
  %v6563 = vld [vmem:[%s8 + $0x548] sm:$0xff]
  %v6564 = vld [vmem:[%s8 + $0x550] sm:$0xff]
  %v6565 = vld [vmem:[%s8 + $0x558] sm:$0xff]
  %v6566 = vld [vmem:[%s8 + $0x560] sm:$0xff]
  %v6567 = vld [vmem:[%s8 + $0x568] sm:$0xff]
  %v6568 = vld [vmem:[%s8 + $0x570] sm:$0xff]
  %v6569 = vld [vmem:[%s8 + $0x578] sm:$0xff]
  %v6570 = vld [vmem:[%s8 + $0x580] sm:$0xff]
  %v6571 = vld [vmem:[%s8 + $0x588] sm:$0xff]
  %v6572 = vld [vmem:[%s8 + $0x590] sm:$0xff]
  %v6573 = vld [vmem:[%s8 + $0x598] sm:$0xff]
  %v6574 = vld [vmem:[%s8 + $0x5a0] sm:$0xff]
  %v6575 = vld [vmem:[%s8 + $0x5a8] sm:$0xff]
  %v6576 = vld [vmem:[%s8 + $0x5b0] sm:$0xff]
  %v6577 = vld [vmem:[%s8 + $0x5b8] sm:$0xff]
  %v6578 = vld [vmem:[%s8 + $0x5c0] sm:$0xff]
  %v6579 = vld [vmem:[%s8 + $0x5c8] sm:$0xff]
  %v6580 = vld [vmem:[%s8 + $0x5d0] sm:$0xff]
  %v6581 = vld [vmem:[%s8 + $0x5d8] sm:$0xff]
  %v6582 = vld [vmem:[%s8 + $0x5e0] sm:$0xff]
  %v6583 = vld [vmem:[%s8 + $0x5e8] sm:$0xff]
  %v6584 = vld [vmem:[%s8 + $0x5f0] sm:$0xff]
  %v6585 = vld [vmem:[%s8 + $0x5f8] sm:$0xff]
  %v6586 = vld [vmem:[%s8 + $0x600] sm:$0xff]
  %v6587 = vld [vmem:[%s8 + $0x608] sm:$0xff]
  %v6588 = vld [vmem:[%s8 + $0x610] sm:$0xff]
  %v6589 = vld [vmem:[%s8 + $0x618] sm:$0xff]
  %v6590 = vld [vmem:[%s8 + $0x620] sm:$0xff]
  %v6591 = vld [vmem:[%s8 + $0x628] sm:$0xff]
  %v6592 = vld [vmem:[%s8 + $0x630] sm:$0xff]
  %v6593 = vld [vmem:[%s8 + $0x638] sm:$0xff]
  %v6594 = vld [vmem:[%s8 + $0x640] sm:$0xff]
  %v6595 = vld [vmem:[%s8 + $0x648] sm:$0xff]
  %v6596 = vld [vmem:[%s8 + $0x650] sm:$0xff]
  %v6597 = vld [vmem:[%s8 + $0x658] sm:$0xff]
  %v6598 = vld [vmem:[%s8 + $0x660] sm:$0xff]
  %v6599 = vld [vmem:[%s8 + $0x668] sm:$0xff]
  %v6600 = vld [vmem:[%s8 + $0x670] sm:$0xff]
  %v6601 = vld [vmem:[%s8 + $0x678] sm:$0xff]
  %v6602 = vld [vmem:[%s8 + $0x680] sm:$0xff]
  %v6603 = vld [vmem:[%s8 + $0x688] sm:$0xff]
  %v6604 = vld [vmem:[%s8 + $0x690] sm:$0xff]
  %v6605 = vld [vmem:[%s8 + $0x698] sm:$0xff]
  %v6606 = vld [vmem:[%s8 + $0x6a0] sm:$0xff]
  %v6607 = vld [vmem:[%s8 + $0x6a8] sm:$0xff]
  %v6608 = vld [vmem:[%s8 + $0x6b0] sm:$0xff]
  %v6609 = vld [vmem:[%s8 + $0x6b8] sm:$0xff]
  %v6610 = vld [vmem:[%s8 + $0x6c0] sm:$0xff]
  %v6611 = vld [vmem:[%s8 + $0x6c8] sm:$0xff]
  %v6612 = vld [vmem:[%s8 + $0x6d0] sm:$0xff]
  %v6613 = vld [vmem:[%s8 + $0x6d8] sm:$0xff]
  %v6614 = vld [vmem:[%s8 + $0x6e0] sm:$0xff]
  %v6615 = vld [vmem:[%s8 + $0x6e8] sm:$0xff]
  %v6616 = vld [vmem:[%s8 + $0x6f0] sm:$0xff]
  %v6617 = vld [vmem:[%s8 + $0x6f8] sm:$0xff]
  %v6618 = vld [vmem:[%s8 + $0x700] sm:$0xff]
  %v6619 = vld [vmem:[%s8 + $0x708] sm:$0xff]
  %v6620 = vld [vmem:[%s8 + $0x710] sm:$0xff]
  %v6621 = vld [vmem:[%s8 + $0x718] sm:$0xff]
  %v6622 = vld [vmem:[%s8 + $0x720] sm:$0xff]
  %v6623 = vld [vmem:[%s8 + $0x728] sm:$0xff]
  %v6624 = vld [vmem:[%s8 + $0x730] sm:$0xff]
  %v6625 = vld [vmem:[%s8 + $0x738] sm:$0xff]
  %v6626 = vld [vmem:[%s8 + $0x740] sm:$0xff]
  %v6627 = vld [vmem:[%s8 + $0x748] sm:$0xff]
  %v6628 = vld [vmem:[%s8 + $0x750] sm:$0xff]
  %v6629 = vld [vmem:[%s8 + $0x758] sm:$0xff]
  %v6630 = vld [vmem:[%s8 + $0x760] sm:$0xff]
  %v6631 = vld [vmem:[%s8 + $0x768] sm:$0xff]
  %v6632 = vld [vmem:[%s8 + $0x770] sm:$0xff]
  %v6633 = vld [vmem:[%s8 + $0x778] sm:$0xff]
  %v6634 = vld [vmem:[%s8 + $0x780] sm:$0xff]
  %v6635 = vld [vmem:[%s8 + $0x788] sm:$0xff]
  %v6636 = vld [vmem:[%s8 + $0x790] sm:$0xff]
  %v6637 = vld [vmem:[%s8 + $0x798] sm:$0xff]
  %v6638 = vld [vmem:[%s8 + $0x7a0] sm:$0xff]
  %v6639 = vld [vmem:[%s8 + $0x7a8] sm:$0xff]
  %v6640 = vld [vmem:[%s8 + $0x7b0] sm:$0xff]
  %v6641 = vld [vmem:[%s8 + $0x7b8] sm:$0xff]
  %v6642 = vld [vmem:[%s8 + $0x7c0] sm:$0xff]
  %v6643 = vld [vmem:[%s8 + $0x7c8] sm:$0xff]
  %v6644 = vld [vmem:[%s8 + $0x7d0] sm:$0xff]
  %v6645 = vld [vmem:[%s8 + $0x7d8] sm:$0xff]
  %v6646 = vld [vmem:[%s8 + $0x7e0] sm:$0xff]
  %v6647 = vld [vmem:[%s8 + $0x7e8] sm:$0xff]
  %v6648 = vld [vmem:[%s8 + $0x7f0] sm:$0xff]
  %v6649 = vld [vmem:[%s8 + $0x7f8] sm:$0xff]
  %v6650 = vld [vmem:[%s8 + $0x800] sm:$0xff]
  %v6651 = vld [vmem:[%s8 + $0x808] sm:$0xff]
  %v6652 = vld [vmem:[%s8 + $0x810] sm:$0xff]
  %v6653 = vld [vmem:[%s8 + $0x818] sm:$0xff]
  %v6654 = vld [vmem:[%s8 + $0x820] sm:$0xff]
  %v6655 = vld [vmem:[%s8 + $0x828] sm:$0xff]
  %v6656 = vld [vmem:[%s8 + $0x830] sm:$0xff]
  %v6657 = vld [vmem:[%s8 + $0x838] sm:$0xff]
  %v6658 = vld [vmem:[%s8 + $0x840] sm:$0xff]
  %v6659 = vld [vmem:[%s8 + $0x848] sm:$0xff]
  %v6660 = vld [vmem:[%s8 + $0x850] sm:$0xff]
  %v6661 = vld [vmem:[%s8 + $0x858] sm:$0xff]
  %v6662 = vld [vmem:[%s8 + $0x860] sm:$0xff]
  %v6663 = vld [vmem:[%s8 + $0x868] sm:$0xff]
  %v6664 = vld [vmem:[%s8 + $0x870] sm:$0xff]
  %v6665 = vld [vmem:[%s8 + $0x878] sm:$0xff]
  %v6666 = vld [vmem:[%s8 + $0x880] sm:$0xff]
  %v6667 = vld [vmem:[%s8 + $0x888] sm:$0xff]
  %v6668 = vld [vmem:[%s8 + $0x890] sm:$0xff]
  %v6669 = vld [vmem:[%s8 + $0x898] sm:$0xff]
  %v6670 = vld [vmem:[%s8 + $0x8a0] sm:$0xff]
  %v6671 = vld [vmem:[%s8 + $0x8a8] sm:$0xff]
  %v6672 = vld [vmem:[%s8 + $0x8b0] sm:$0xff]
  %v6673 = vld [vmem:[%s8 + $0x8b8] sm:$0xff]
  %v6674 = vld [vmem:[%s8 + $0x8c0] sm:$0xff]
  %v6675 = vld [vmem:[%s8 + $0x8c8] sm:$0xff]
  %v6676 = vld [vmem:[%s8 + $0x8d0] sm:$0xff]
  %v6677 = vld [vmem:[%s8 + $0x8d8] sm:$0xff]
  %v6678 = vld [vmem:[%s8 + $0x8e0] sm:$0xff]
  %v6679 = vld [vmem:[%s8 + $0x8e8] sm:$0xff]
  %v6680 = vld [vmem:[%s8 + $0x8f0] sm:$0xff]
  %v6681 = vld [vmem:[%s8 + $0x8f8] sm:$0xff]
  %v6682 = vld [vmem:[%s8 + $0x900] sm:$0xff]
  %v6683 = vld [vmem:[%s8 + $0x908] sm:$0xff]
  %v6684 = vld [vmem:[%s8 + $0x910] sm:$0xff]
  %v6685 = vld [vmem:[%s8 + $0x918] sm:$0xff]
  %v6686 = vld [vmem:[%s8 + $0x920] sm:$0xff]
  %v6687 = vld [vmem:[%s8 + $0x928] sm:$0xff]
  %v6688 = vld [vmem:[%s8 + $0x930] sm:$0xff]
  %v6689 = vld [vmem:[%s8 + $0x938] sm:$0xff]
  %v6690 = vld [vmem:[%s8 + $0x940] sm:$0xff]
  %v6691 = vld [vmem:[%s8 + $0x948] sm:$0xff]
  %v6692 = vld [vmem:[%s8 + $0x950] sm:$0xff]
  %v6693 = vld [vmem:[%s8 + $0x958] sm:$0xff]
  %v6694 = vld [vmem:[%s8 + $0x960] sm:$0xff]
  %v6695 = vld [vmem:[%s8 + $0x968] sm:$0xff]
  %v6696 = vld [vmem:[%s8 + $0x970] sm:$0xff]
  %v6697 = vld [vmem:[%s8 + $0x978] sm:$0xff]
  %v6698 = vld [vmem:[%s8 + $0x980] sm:$0xff]
  %v6699 = vld [vmem:[%s8 + $0x988] sm:$0xff]
  %v6700 = vld [vmem:[%s8 + $0x990] sm:$0xff]
  %v6701 = vld [vmem:[%s8 + $0x998] sm:$0xff]
  %v6702 = vld [vmem:[%s8 + $0x9a0] sm:$0xff]
  %v6703 = vld [vmem:[%s8 + $0x9a8] sm:$0xff]
  %v6704 = vld [vmem:[%s8 + $0x9b0] sm:$0xff]
  %v6705 = vld [vmem:[%s8 + $0x9b8] sm:$0xff]
  %v6706 = vld [vmem:[%s8 + $0x9c0] sm:$0xff]
  %v6707 = vld [vmem:[%s8 + $0x9c8] sm:$0xff]
  %v6708 = vld [vmem:[%s8 + $0x9d0] sm:$0xff]
  %v6709 = vld [vmem:[%s8 + $0x9d8] sm:$0xff]
  %v6710 = vld [vmem:[%s8 + $0x9e0] sm:$0xff]
  %v6711 = vld [vmem:[%s8 + $0x9e8] sm:$0xff]
  %v6712 = vld [vmem:[%s8 + $0x9f0] sm:$0xff]
  %v6713 = vld [vmem:[%s8 + $0x9f8] sm:$0xff]
  %v6714 = vld [vmem:[%s8 + $0xa00] sm:$0xff]
  %v6715 = vld [vmem:[%s8 + $0xa08] sm:$0xff]
  %v6716 = vld [vmem:[%s8 + $0xa10] sm:$0xff]
  %v6717 = vld [vmem:[%s8 + $0xa18] sm:$0xff]
  %v6718 = vld [vmem:[%s8 + $0xa20] sm:$0xff]
  %v6719 = vld [vmem:[%s8 + $0xa28] sm:$0xff]
  %v6720 = vld [vmem:[%s8 + $0xa30] sm:$0xff]
  %v6721 = vld [vmem:[%s8 + $0xa38] sm:$0xff]
  %v6722 = vld [vmem:[%s8 + $0xa40] sm:$0xff]
  %v6723 = vld [vmem:[%s8 + $0xa48] sm:$0xff]
  %v6724 = vld [vmem:[%s8 + $0xa50] sm:$0xff]
  %v6725 = vld [vmem:[%s8 + $0xa58] sm:$0xff]
  %v6726 = vld [vmem:[%s8 + $0xa60] sm:$0xff]
  %v6727 = vld [vmem:[%s8 + $0xa68] sm:$0xff]
  %v6728 = vld [vmem:[%s8 + $0xa70] sm:$0xff]
  %v6729 = vld [vmem:[%s8 + $0xa78] sm:$0xff]
  %v6730 = vld [vmem:[%s8 + $0xa80] sm:$0xff]
  %v6731 = vld [vmem:[%s8 + $0xa88] sm:$0xff]
  %v6732 = vld [vmem:[%s8 + $0xa90] sm:$0xff]
  %v6733 = vld [vmem:[%s8 + $0xa98] sm:$0xff]
  %v6734 = vld [vmem:[%s8 + $0xaa0] sm:$0xff]
  %v6735 = vld [vmem:[%s8 + $0xaa8] sm:$0xff]
  %v6736 = vld [vmem:[%s8 + $0xab0] sm:$0xff]
  %v6737 = vld [vmem:[%s8 + $0xab8] sm:$0xff]
  %v6738 = vld [vmem:[%s8 + $0xac0] sm:$0xff]
  %v6739 = vld [vmem:[%s8 + $0xac8] sm:$0xff]
  %v6740 = vld [vmem:[%s8 + $0xad0] sm:$0xff]
  %v6741 = vld [vmem:[%s8 + $0xad8] sm:$0xff]
  %v6742 = vld [vmem:[%s8 + $0xae0] sm:$0xff]
  %v6743 = vld [vmem:[%s8 + $0xae8] sm:$0xff]
  %v6744 = vld [vmem:[%s8 + $0xaf0] sm:$0xff]
  %v6745 = vld [vmem:[%s8 + $0xaf8] sm:$0xff]
  %v6746 = vld [vmem:[%s8 + $0xb00] sm:$0xff]
  %v6747 = vld [vmem:[%s8 + $0xb08] sm:$0xff]
  %v6748 = vld [vmem:[%s8 + $0xb10] sm:$0xff]
  %v6749 = vld [vmem:[%s8 + $0xb18] sm:$0xff]
  %v6750 = vld [vmem:[%s8 + $0xb20] sm:$0xff]
  %v6751 = vld [vmem:[%s8 + $0xb28] sm:$0xff]
  %v6752 = vld [vmem:[%s8 + $0xb30] sm:$0xff]
  %v6753 = vld [vmem:[%s8 + $0xb38] sm:$0xff]
  %v6754 = vld [vmem:[%s8 + $0xb40] sm:$0xff]
  %v6755 = vld [vmem:[%s8 + $0xb48] sm:$0xff]
  %v6756 = vld [vmem:[%s8 + $0xb50] sm:$0xff]
  %v6757 = vld [vmem:[%s8 + $0xb58] sm:$0xff]
  %v6758 = vld [vmem:[%s8 + $0xb60] sm:$0xff]
  %v6759 = vld [vmem:[%s8 + $0xb68] sm:$0xff]
  %v6760 = vld [vmem:[%s8 + $0xb70] sm:$0xff]
  %v6761 = vld [vmem:[%s8 + $0xb78] sm:$0xff]
  %v6762 = vld [vmem:[%s8 + $0xb80] sm:$0xff]
  %v6763 = vld [vmem:[%s8 + $0xb88] sm:$0xff]
  %v6764 = vld [vmem:[%s8 + $0xb90] sm:$0xff]
  %v6765 = vld [vmem:[%s8 + $0xb98] sm:$0xff]
  %v6766 = vld [vmem:[%s8 + $0xba0] sm:$0xff]
  %v6767 = vld [vmem:[%s8 + $0xba8] sm:$0xff]
  %v6768 = vld [vmem:[%s8 + $0xbb0] sm:$0xff]
  %v6769 = vld [vmem:[%s8 + $0xbb8] sm:$0xff]
  %v6770 = vld [vmem:[%s8 + $0xbc0] sm:$0xff]
  %v6771 = vld [vmem:[%s8 + $0xbc8] sm:$0xff]
  %v6772 = vld [vmem:[%s8 + $0xbd0] sm:$0xff]
  %v6773 = vld [vmem:[%s8 + $0xbd8] sm:$0xff]
  %v6774 = vld [vmem:[%s8 + $0xbe0] sm:$0xff]
  %v6775 = vld [vmem:[%s8 + $0xbe8] sm:$0xff]
  %v6776 = vld [vmem:[%s8 + $0xbf0] sm:$0xff]
  %v6777 = vld [vmem:[%s8 + $0xbf8] sm:$0xff]
  %v6778 = vld [vmem:[%s8 + $0xc00] sm:$0xff]
  %v6779 = vld [vmem:[%s8 + $0xc08] sm:$0xff]
  %v6780 = vld [vmem:[%s8 + $0xc10] sm:$0xff]
  %v6781 = vld [vmem:[%s8 + $0xc18] sm:$0xff]
  %v6782 = vld [vmem:[%s8 + $0xc20] sm:$0xff]
  %v6783 = vld [vmem:[%s8 + $0xc28] sm:$0xff]
  %v6784 = vld [vmem:[%s8 + $0xc30] sm:$0xff]
  %v6785 = vld [vmem:[%s8 + $0xc38] sm:$0xff]
  %v6786 = vld [vmem:[%s8 + $0xc40] sm:$0xff]
  %v6787 = vld [vmem:[%s8 + $0xc48] sm:$0xff]
  %v6788 = vld [vmem:[%s8 + $0xc50] sm:$0xff]
  %v6789 = vld [vmem:[%s8 + $0xc58] sm:$0xff]
  %v6790 = vld [vmem:[%s8 + $0xc60] sm:$0xff]
  %v6791 = vld [vmem:[%s8 + $0xc68] sm:$0xff]
  %v6792 = vld [vmem:[%s8 + $0xc70] sm:$0xff]
  %v6793 = vld [vmem:[%s8 + $0xc78] sm:$0xff]
  %v6794 = vld [vmem:[%s8 + $0xc80] sm:$0xff]
  %v6795 = vld [vmem:[%s8 + $0xc88] sm:$0xff]
  %v6796 = vld [vmem:[%s8 + $0xc90] sm:$0xff]
  %v6797 = vld [vmem:[%s8 + $0xc98] sm:$0xff]
  %v6798 = vld [vmem:[%s8 + $0xca0] sm:$0xff]
  %v6799 = vld [vmem:[%s8 + $0xca8] sm:$0xff]
  %v6800 = vld [vmem:[%s8 + $0xcb0] sm:$0xff]
  %v6801 = vld [vmem:[%s8 + $0xcb8] sm:$0xff]
  %v6802 = vld [vmem:[%s8 + $0xcc0] sm:$0xff]
  %v6803 = vld [vmem:[%s8 + $0xcc8] sm:$0xff]
  %v6804 = vld [vmem:[%s8 + $0xcd0] sm:$0xff]
  %v6805 = vld [vmem:[%s8 + $0xcd8] sm:$0xff]
  %v6806 = vld [vmem:[%s8 + $0xce0] sm:$0xff]
  %v6807 = vld [vmem:[%s8 + $0xce8] sm:$0xff]
  %v6808 = vld [vmem:[%s8 + $0xcf0] sm:$0xff]
  %v6809 = vld [vmem:[%s8 + $0xcf8] sm:$0xff]
  %v6810 = vld [vmem:[%s8 + $0xd00] sm:$0xff]
  %v6811 = vld [vmem:[%s8 + $0xd08] sm:$0xff]
  %v6812 = vld [vmem:[%s8 + $0xd10] sm:$0xff]
  %v6813 = vld [vmem:[%s8 + $0xd18] sm:$0xff]
  %v6814 = vld [vmem:[%s8 + $0xd20] sm:$0xff]
  %v6815 = vld [vmem:[%s8 + $0xd28] sm:$0xff]
  %v6816 = vld [vmem:[%s8 + $0xd30] sm:$0xff]
  %v6817 = vld [vmem:[%s8 + $0xd38] sm:$0xff]
  %v6818 = vld [vmem:[%s8 + $0xd40] sm:$0xff]
  %v6819 = vld [vmem:[%s8 + $0xd48] sm:$0xff]
  %v6820 = vld [vmem:[%s8 + $0xd50] sm:$0xff]
  %v6821 = vld [vmem:[%s8 + $0xd58] sm:$0xff]
  %v6822 = vld [vmem:[%s8 + $0xd60] sm:$0xff]
  %v6823 = vld [vmem:[%s8 + $0xd68] sm:$0xff]
  %v6824 = vld [vmem:[%s8 + $0xd70] sm:$0xff]
  %v6825 = vld [vmem:[%s8 + $0xd78] sm:$0xff]
  %v6826 = vld [vmem:[%s8 + $0xd80] sm:$0xff]
  %v6827 = vld [vmem:[%s8 + $0xd88] sm:$0xff]
  %v6828 = vld [vmem:[%s8 + $0xd90] sm:$0xff]
  %v6829 = vld [vmem:[%s8 + $0xd98] sm:$0xff]
  %v6830 = vld [vmem:[%s8 + $0xda0] sm:$0xff]
  %v6831 = vld [vmem:[%s8 + $0xda8] sm:$0xff]
  %v6832 = vld [vmem:[%s8 + $0xdb0] sm:$0xff]
  %v6833 = vld [vmem:[%s8 + $0xdb8] sm:$0xff]
  %v6834 = vld [vmem:[%s8 + $0xdc0] sm:$0xff]
  %v6835 = vld [vmem:[%s8 + $0xdc8] sm:$0xff]
  %v6836 = vld [vmem:[%s8 + $0xdd0] sm:$0xff]
  %v6837 = vld [vmem:[%s8 + $0xdd8] sm:$0xff]
  %v6838 = vld [vmem:[%s8 + $0xde0] sm:$0xff]
  %v6839 = vld [vmem:[%s8 + $0xde8] sm:$0xff]
  %v6840 = vld [vmem:[%s8 + $0xdf0] sm:$0xff]
  %v6841 = vld [vmem:[%s8 + $0xdf8] sm:$0xff]
  %v6842 = vld [vmem:[%s8 + $0xe00] sm:$0xff]
  %v6843 = vld [vmem:[%s8 + $0xe08] sm:$0xff]
  %v6844 = vld [vmem:[%s8 + $0xe10] sm:$0xff]
  %v6845 = vld [vmem:[%s8 + $0xe18] sm:$0xff]
  %v6846 = vld [vmem:[%s8 + $0xe20] sm:$0xff]
  %v6847 = vld [vmem:[%s8 + $0xe28] sm:$0xff]
  %v6848 = vld [vmem:[%s8 + $0xe30] sm:$0xff]
  %v6849 = vld [vmem:[%s8 + $0xe38] sm:$0xff]
  %v6850 = vld [vmem:[%s8 + $0xe40] sm:$0xff]
  %v6851 = vld [vmem:[%s8 + $0xe48] sm:$0xff]
  %v6852 = vld [vmem:[%s8 + $0xe50] sm:$0xff]
  %v6853 = vld [vmem:[%s8 + $0xe58] sm:$0xff]
  %v6854 = vld [vmem:[%s8 + $0xe60] sm:$0xff]
  %v6855 = vld [vmem:[%s8 + $0xe68] sm:$0xff]
  %v6856 = vld [vmem:[%s8 + $0xe70] sm:$0xff]
  %v6857 = vld [vmem:[%s8 + $0xe78] sm:$0xff]
  %v6858 = vld [vmem:[%s8 + $0xe80] sm:$0xff]
  %v6859 = vld [vmem:[%s8 + $0xe88] sm:$0xff]
  %v6860 = vld [vmem:[%s8 + $0xe90] sm:$0xff]
  %v6861 = vld [vmem:[%s8 + $0xe98] sm:$0xff]
  %v6862 = vld [vmem:[%s8 + $0xea0] sm:$0xff]
  %v6863 = vld [vmem:[%s8 + $0xea8] sm:$0xff]
  %v6864 = vld [vmem:[%s8 + $0xeb0] sm:$0xff]
  %v6865 = vld [vmem:[%s8 + $0xeb8] sm:$0xff]
  %v6866 = vld [vmem:[%s8 + $0xec0] sm:$0xff]
  %v6867 = vld [vmem:[%s8 + $0xec8] sm:$0xff]
  %v6868 = vld [vmem:[%s8 + $0xed0] sm:$0xff]
  %v6869 = vld [vmem:[%s8 + $0xed8] sm:$0xff]
  %v6870 = vld [vmem:[%s8 + $0xee0] sm:$0xff]
  %v6871 = vld [vmem:[%s8 + $0xee8] sm:$0xff]
  %v6872 = vld [vmem:[%s8 + $0xef0] sm:$0xff]
  %v6873 = vld [vmem:[%s8 + $0xef8] sm:$0xff]
  %v6874 = vld [vmem:[%s8 + $0xf00] sm:$0xff]
  %v6875 = vld [vmem:[%s8 + $0xf08] sm:$0xff]
  %v6876 = vld [vmem:[%s8 + $0xf10] sm:$0xff]
  %v6877 = vld [vmem:[%s8 + $0xf18] sm:$0xff]
  %v6878 = vld [vmem:[%s8 + $0xf20] sm:$0xff]
  %v6879 = vld [vmem:[%s8 + $0xf28] sm:$0xff]
  %v6880 = vld [vmem:[%s8 + $0xf30] sm:$0xff]
  %v6881 = vld [vmem:[%s8 + $0xf38] sm:$0xff]
  %v6882 = vld [vmem:[%s8 + $0xf40] sm:$0xff]
  %v6883 = vld [vmem:[%s8 + $0xf48] sm:$0xff]
  %v6884 = vld [vmem:[%s8 + $0xf50] sm:$0xff]
  %v6885 = vld [vmem:[%s8 + $0xf58] sm:$0xff]
  %v6886 = vld [vmem:[%s8 + $0xf60] sm:$0xff]
  %v6887 = vld [vmem:[%s8 + $0xf68] sm:$0xff]
  %v6888 = vld [vmem:[%s8 + $0xf70] sm:$0xff]
  %v6889 = vld [vmem:[%s8 + $0xf78] sm:$0xff]
  %v6890 = vld [vmem:[%s8 + $0xf80] sm:$0xff]
  %v6891 = vld [vmem:[%s8 + $0xf88] sm:$0xff]
  %v6892 = vld [vmem:[%s8 + $0xf90] sm:$0xff]
  %v6893 = vld [vmem:[%s8 + $0xf98] sm:$0xff]
  %v6894 = vld [vmem:[%s8 + $0xfa0] sm:$0xff]
  %v6895 = vld [vmem:[%s8 + $0xfa8] sm:$0xff]
  %v6896 = vld [vmem:[%s8 + $0xfb0] sm:$0xff]
  %v6897 = vld [vmem:[%s8 + $0xfb8] sm:$0xff]
  %v6898 = vld [vmem:[%s8 + $0xfc0] sm:$0xff]
  %v6899 = vld [vmem:[%s8 + $0xfc8] sm:$0xff]
  %v6900 = vld [vmem:[%s8 + $0xfd0] sm:$0xff]
  %v6901 = vld [vmem:[%s8 + $0xfd8] sm:$0xff]
  %v6902 = vld [vmem:[%s8 + $0xfe0] sm:$0xff]
  %v6903 = vld [vmem:[%s8 + $0xfe8] sm:$0xff]
  %v6904 = vld [vmem:[%s8 + $0xff0] sm:$0xff]
  %v6905 = vld [vmem:[%s8 + $0xff8] sm:$0xff]
  %v6906 = vld [vmem:[%s8 + $0x1000] sm:$0xff]
  %v6907 = vld [vmem:[%s8 + $0x1008] sm:$0xff]
  %v6908 = vld [vmem:[%s8 + $0x1010] sm:$0xff]
  %v6909 = vld [vmem:[%s8 + $0x1018] sm:$0xff]
  %v6910 = vld [vmem:[%s8 + $0x1020] sm:$0xff]
  %v6911 = vld [vmem:[%s8 + $0x1028] sm:$0xff]
  %v6912 = vld [vmem:[%s8 + $0x1030] sm:$0xff]
  %v6913 = vld [vmem:[%s8 + $0x1038] sm:$0xff]
  %v6914 = vld [vmem:[%s8 + $0x1040] sm:$0xff]
  %v6915 = vld [vmem:[%s8 + $0x1048] sm:$0xff]
  %v6916 = vld [vmem:[%s8 + $0x1050] sm:$0xff]
  %v6917 = vld [vmem:[%s8 + $0x1058] sm:$0xff]
  %v6918 = vld [vmem:[%s8 + $0x1060] sm:$0xff]
  %v6919 = vld [vmem:[%s8 + $0x1068] sm:$0xff]
  %v6920 = vld [vmem:[%s8 + $0x1070] sm:$0xff]
  %v6921 = vld [vmem:[%s8 + $0x1078] sm:$0xff]
  %v6922 = vld [vmem:[%s8 + $0x1080] sm:$0xff]
  %v6923 = vld [vmem:[%s8 + $0x1088] sm:$0xff]
  %v6924 = vld [vmem:[%s8 + $0x1090] sm:$0xff]
  %v6925 = vld [vmem:[%s8 + $0x1098] sm:$0xff]
  %v6926 = vld [vmem:[%s8 + $0x10a0] sm:$0xff]
  %v6927 = vld [vmem:[%s8 + $0x10a8] sm:$0xff]
  %v6928 = vld [vmem:[%s8 + $0x10b0] sm:$0xff]
  %v6929 = vld [vmem:[%s8 + $0x10b8] sm:$0xff]
  %v6930 = vld [vmem:[%s8 + $0x10c0] sm:$0xff]
  %v6931 = vld [vmem:[%s8 + $0x10c8] sm:$0xff]
  %v6932 = vld [vmem:[%s8 + $0x10d0] sm:$0xff]
  %v6933 = vld [vmem:[%s8 + $0x10d8] sm:$0xff]
  %v6934 = vld [vmem:[%s8 + $0x10e0] sm:$0xff]
  %v6935 = vld [vmem:[%s8 + $0x10e8] sm:$0xff]
  %v6936 = vld [vmem:[%s8 + $0x10f0] sm:$0xff]
  %v6937 = vld [vmem:[%s8 + $0x10f8] sm:$0xff]
  %v6938 = vld [vmem:[%s8 + $0x1100] sm:$0xff]
  %v6939 = vld [vmem:[%s8 + $0x1108] sm:$0xff]
  %v6940 = vld [vmem:[%s8 + $0x1110] sm:$0xff]
  %v6941 = vld [vmem:[%s8 + $0x1118] sm:$0xff]
  %v6942 = vld [vmem:[%s8 + $0x1120] sm:$0xff]
  %v6943 = vld [vmem:[%s8 + $0x1128] sm:$0xff]
  %v6944 = vld [vmem:[%s8 + $0x1130] sm:$0xff]
  %v6945 = vld [vmem:[%s8 + $0x1138] sm:$0xff]
  %v6946 = vld [vmem:[%s8 + $0x1140] sm:$0xff]
  %v6947 = vld [vmem:[%s8 + $0x1148] sm:$0xff]
  %v6948 = vld [vmem:[%s8 + $0x1150] sm:$0xff]
  %v6949 = vld [vmem:[%s8 + $0x1158] sm:$0xff]
  %v6950 = vld [vmem:[%s8 + $0x1160] sm:$0xff]
  %v6951 = vld [vmem:[%s8 + $0x1168] sm:$0xff]
  %v6952 = vld [vmem:[%s8 + $0x1170] sm:$0xff]
  %v6953 = vld [vmem:[%s8 + $0x1178] sm:$0xff]
  %v6954 = vld [vmem:[%s8 + $0x1180] sm:$0xff]
  %v6955 = vld [vmem:[%s8 + $0x1188] sm:$0xff]
  %v6956 = vld [vmem:[%s8 + $0x1190] sm:$0xff]
  %v6957 = vld [vmem:[%s8 + $0x1198] sm:$0xff]
  %v6958 = vld [vmem:[%s8 + $0x11a0] sm:$0xff]
  %v6959 = vld [vmem:[%s8 + $0x11a8] sm:$0xff]
  %v6960 = vld [vmem:[%s8 + $0x11b0] sm:$0xff]
  %v6961 = vld [vmem:[%s8 + $0x11b8] sm:$0xff]
  %v6962 = vld [vmem:[%s8 + $0x11c0] sm:$0xff]
  %v6963 = vld [vmem:[%s8 + $0x11c8] sm:$0xff]
  %v6964 = vld [vmem:[%s8 + $0x11d0] sm:$0xff]
  %v6965 = vld [vmem:[%s8 + $0x11d8] sm:$0xff]
  %v6966 = vld [vmem:[%s8 + $0x11e0] sm:$0xff]
  %v6967 = vld [vmem:[%s8 + $0x11e8] sm:$0xff]
  %v6968 = vld [vmem:[%s8 + $0x11f0] sm:$0xff]
  %v6969 = vld [vmem:[%s8 + $0x11f8] sm:$0xff]
  %v6970 = vld [vmem:[%s8 + $0x1200] sm:$0xff]
  %v6971 = vld [vmem:[%s8 + $0x1208] sm:$0xff]
  %v6972 = vld [vmem:[%s8 + $0x1210] sm:$0xff]
  %v6973 = vld [vmem:[%s8 + $0x1218] sm:$0xff]
  %v6974 = vld [vmem:[%s8 + $0x1220] sm:$0xff]
  %v6975 = vld [vmem:[%s8 + $0x1228] sm:$0xff]
  %v6976 = vld [vmem:[%s8 + $0x1230] sm:$0xff]
  %v6977 = vld [vmem:[%s8 + $0x1238] sm:$0xff]
  %v6978 = vld [vmem:[%s8 + $0x1240] sm:$0xff]
  %v6979 = vld [vmem:[%s8 + $0x1248] sm:$0xff]
  %v6980 = vld [vmem:[%s8 + $0x1250] sm:$0xff]
  %v6981 = vld [vmem:[%s8 + $0x1258] sm:$0xff]
  %v6982 = vld [vmem:[%s8 + $0x1260] sm:$0xff]
  %v6983 = vld [vmem:[%s8 + $0x1268] sm:$0xff]
  %v6984 = vld [vmem:[%s8 + $0x1270] sm:$0xff]
  %v6985 = vld [vmem:[%s8 + $0x1278] sm:$0xff]
  %v6986 = vld [vmem:[%s8 + $0x1280] sm:$0xff]
  %v6987 = vld [vmem:[%s8 + $0x1288] sm:$0xff]
  %v6988 = vld [vmem:[%s8 + $0x1290] sm:$0xff]
  %v6989 = vld [vmem:[%s8 + $0x1298] sm:$0xff]
  %v6990 = vld [vmem:[%s8 + $0x12a0] sm:$0xff]
  %v6991 = vld [vmem:[%s8 + $0x12a8] sm:$0xff]
  %v6992 = vld [vmem:[%s8 + $0x12b0] sm:$0xff]
  %v6993 = vld [vmem:[%s8 + $0x12b8] sm:$0xff]
  %v6994 = vld [vmem:[%s9] sm:$0xff]
  %v6995 = vld [vmem:[%s9 + $0x8] sm:$0xff]
  %v6996 = vld [vmem:[%s9 + $0x10] sm:$0xff]
  %v7000 = vlaneseq
  %v7001 = vshrl.u32 %v7000, 7
  %v7002 = vsub.s32 0, %v7001
  %v7003 = vrot.slane %v6994, %v7002
  %v7004 = vlaneseq
  %v7005 = vshrl.u32 %v7004, 7
  %v7006 = vsub.s32 1, %v7005
  %v7007 = vrot.slane %v6994, %v7006
  %v7008 = vlaneseq
  %v7009 = vshrl.u32 %v7008, 7
  %v7010 = vsub.s32 2, %v7009
  %v7011 = vrot.slane %v6994, %v7010
  %v7012 = vlaneseq
  %v7013 = vshrl.u32 %v7012, 7
  %v7014 = vsub.s32 3, %v7013
  %v7015 = vrot.slane %v6994, %v7014
  %v7016 = vlaneseq
  %v7017 = vshrl.u32 %v7016, 7
  %v7018 = vsub.s32 4, %v7017
  %v7019 = vrot.slane %v6994, %v7018
  %v7020 = vlaneseq
  %v7021 = vshrl.u32 %v7020, 7
  %v7022 = vsub.s32 5, %v7021
  %v7023 = vrot.slane %v6994, %v7022
  %v7024 = vlaneseq
  %v7025 = vshrl.u32 %v7024, 7
  %v7026 = vsub.s32 6, %v7025
  %v7027 = vrot.slane %v6994, %v7026
  %v7028 = vlaneseq
  %v7029 = vshrl.u32 %v7028, 7
  %v7030 = vsub.s32 7, %v7029
  %v7031 = vrot.slane %v6994, %v7030
  %v7032 = vlaneseq
  %v7033 = vshrl.u32 %v7032, 7
  %v7034 = vsub.s32 0, %v7033
  %v7035 = vrot.slane %v6995, %v7034
  %v7036 = vlaneseq
  %v7037 = vshrl.u32 %v7036, 7
  %v7038 = vsub.s32 1, %v7037
  %v7039 = vrot.slane %v6995, %v7038
  %v7040 = vlaneseq
  %v7041 = vshrl.u32 %v7040, 7
  %v7042 = vsub.s32 2, %v7041
  %v7043 = vrot.slane %v6995, %v7042
  %v7044 = vlaneseq
  %v7045 = vshrl.u32 %v7044, 7
  %v7046 = vsub.s32 3, %v7045
  %v7047 = vrot.slane %v6995, %v7046
  %v7048 = vlaneseq
  %v7049 = vshrl.u32 %v7048, 7
  %v7050 = vsub.s32 4, %v7049
  %v7051 = vrot.slane %v6995, %v7050
  %v7052 = vlaneseq
  %v7053 = vshrl.u32 %v7052, 7
  %v7054 = vsub.s32 5, %v7053
  %v7055 = vrot.slane %v6995, %v7054
  %v7056 = vlaneseq
  %v7057 = vshrl.u32 %v7056, 7
  %v7058 = vsub.s32 6, %v7057
  %v7059 = vrot.slane %v6995, %v7058
  %v7060 = vlaneseq
  %v7061 = vshrl.u32 %v7060, 7
  %v7062 = vsub.s32 7, %v7061
  %v7063 = vrot.slane %v6995, %v7062
  %v7064 = vlaneseq
  %v7065 = vshrl.u32 %v7064, 7
  %v7066 = vsub.s32 0, %v7065
  %v7067 = vrot.slane %v6996, %v7066
  %v7068 = vlaneseq
  %v7069 = vshrl.u32 %v7068, 7
  %v7070 = vsub.s32 1, %v7069
  %v7071 = vrot.slane %v6996, %v7070
  %v7072 = vlaneseq
  %v7073 = vshrl.u32 %v7072, 7
  %v7074 = vsub.s32 2, %v7073
  %v7075 = vrot.slane %v6996, %v7074
  %v7076 = vlaneseq
  %v7077 = vshrl.u32 %v7076, 7
  %v7078 = vsub.s32 3, %v7077
  %v7079 = vrot.slane %v6996, %v7078
  %v7080 = vlaneseq
  %v7081 = vshrl.u32 %v7080, 7
  %v7082 = vsub.s32 4, %v7081
  %v7083 = vrot.slane %v6996, %v7082
  %v7084 = vlaneseq
  %v7085 = vshrl.u32 %v7084, 7
  %v7086 = vsub.s32 5, %v7085
  %v7087 = vrot.slane %v6996, %v7086
  %v7088 = vlaneseq
  %v7089 = vshrl.u32 %v7088, 7
  %v7090 = vsub.s32 6, %v7089
  %v7091 = vrot.slane %v6996, %v7090
  %v7092 = vlaneseq
  %v7093 = vshrl.u32 %v7092, 7
  %v7094 = vsub.s32 7, %v7093
  %v7095 = vrot.slane %v6996, %v7094
  %v7720 = vunpack.c.l.b16 %v6394
  %v7721 = vunpack.c.h.b16 %v6394
  %v7722 = vunpack.c.l.b16 %v6395
  %v7723 = vunpack.c.h.b16 %v6395
  %v7724 = vunpack.c.l.b16 %v6396
  %v7725 = vunpack.c.h.b16 %v6396
  %v7726 = vunpack.c.l.b16 %v6397
  %v7727 = vunpack.c.h.b16 %v6397
  %v7728 = vunpack.c.l.b16 %v6398
  %v7729 = vunpack.c.h.b16 %v6398
  %v7730 = vunpack.c.l.b16 %v6399
  %v7731 = vunpack.c.h.b16 %v6399
  %v7732 = vunpack.c.l.b16 %v6400
  %v7733 = vunpack.c.h.b16 %v6400
  %v7734 = vunpack.c.l.b16 %v6401
  %v7735 = vunpack.c.h.b16 %v6401
  %v7736 = vunpack.c.l.b16 %v6402
  %v7737 = vunpack.c.h.b16 %v6402
  %v7738 = vunpack.c.l.b16 %v6403
  %v7739 = vunpack.c.h.b16 %v6403
  %v7740 = vunpack.c.l.b16 %v6404
  %v7741 = vunpack.c.h.b16 %v6404
  %v7742 = vunpack.c.l.b16 %v6405
  %v7743 = vunpack.c.h.b16 %v6405
  %v7744 = vunpack.c.l.b16 %v6406
  %v7745 = vunpack.c.h.b16 %v6406
  %v7746 = vunpack.c.l.b16 %v6407
  %v7747 = vunpack.c.h.b16 %v6407
  %v7748 = vunpack.c.l.b16 %v6408
  %v7749 = vunpack.c.h.b16 %v6408
  %v7750 = vunpack.c.l.b16 %v6409
  %v7751 = vunpack.c.h.b16 %v6409
  %v7752 = vunpack.c.l.b16 %v6410
  %v7753 = vunpack.c.h.b16 %v6410
  %v7754 = vunpack.c.l.b16 %v6411
  %v7755 = vunpack.c.h.b16 %v6411
  %v7756 = vunpack.c.l.b16 %v6412
  %v7757 = vunpack.c.h.b16 %v6412
  %v7758 = vunpack.c.l.b16 %v6413
  %v7759 = vunpack.c.h.b16 %v6413
  %v7760 = vunpack.c.l.b16 %v6414
  %v7761 = vunpack.c.h.b16 %v6414
  %v7762 = vunpack.c.l.b16 %v6415
  %v7763 = vunpack.c.h.b16 %v6415
  %v7764 = vunpack.c.l.b16 %v6416
  %v7765 = vunpack.c.h.b16 %v6416
  %v7766 = vunpack.c.l.b16 %v6417
  %v7767 = vunpack.c.h.b16 %v6417
  %v7768 = vunpack.c.l.b16 %v6418
  %v7769 = vunpack.c.h.b16 %v6418
  %v7770 = vunpack.c.l.b16 %v6419
  %v7771 = vunpack.c.h.b16 %v6419
  %v7772 = vunpack.c.l.b16 %v6420
  %v7773 = vunpack.c.h.b16 %v6420
  %v7774 = vunpack.c.l.b16 %v6421
  %v7775 = vunpack.c.h.b16 %v6421
  %v7776 = vunpack.c.l.b16 %v6422
  %v7777 = vunpack.c.h.b16 %v6422
  %v7778 = vunpack.c.l.b16 %v6423
  %v7779 = vunpack.c.h.b16 %v6423
  %v7780 = vunpack.c.l.b16 %v6424
  %v7781 = vunpack.c.h.b16 %v6424
  %v7782 = vunpack.c.l.b16 %v6425
  %v7783 = vunpack.c.h.b16 %v6425
  %v7784 = vunpack.c.l.b16 %v6426
  %v7785 = vunpack.c.h.b16 %v6426
  %v7786 = vunpack.c.l.b16 %v6427
  %v7787 = vunpack.c.h.b16 %v6427
  %v7788 = vunpack.c.l.b16 %v6428
  %v7789 = vunpack.c.h.b16 %v6428
  %v7790 = vunpack.c.l.b16 %v6429
  %v7791 = vunpack.c.h.b16 %v6429
  %v7792 = vunpack.c.l.b16 %v6430
  %v7793 = vunpack.c.h.b16 %v6430
  %v7794 = vunpack.c.l.b16 %v6431
  %v7795 = vunpack.c.h.b16 %v6431
  %v7796 = vunpack.c.l.b16 %v6432
  %v7797 = vunpack.c.h.b16 %v6432
  %v7798 = vunpack.c.l.b16 %v6433
  %v7799 = vunpack.c.h.b16 %v6433
  %v7800 = vunpack.c.l.b16 %v6434
  %v7801 = vunpack.c.h.b16 %v6434
  %v7802 = vunpack.c.l.b16 %v6435
  %v7803 = vunpack.c.h.b16 %v6435
  %v7804 = vunpack.c.l.b16 %v6436
  %v7805 = vunpack.c.h.b16 %v6436
  %v7806 = vunpack.c.l.b16 %v6437
  %v7807 = vunpack.c.h.b16 %v6437
  %v7808 = vunpack.c.l.b16 %v6438
  %v7809 = vunpack.c.h.b16 %v6438
  %v7810 = vunpack.c.l.b16 %v6439
  %v7811 = vunpack.c.h.b16 %v6439
  %v7812 = vunpack.c.l.b16 %v6440
  %v7813 = vunpack.c.h.b16 %v6440
  %v7814 = vunpack.c.l.b16 %v6441
  %v7815 = vunpack.c.h.b16 %v6441
  %v7816 = vunpack.c.l.b16 %v6442
  %v7817 = vunpack.c.h.b16 %v6442
  %v7818 = vunpack.c.l.b16 %v6443
  %v7819 = vunpack.c.h.b16 %v6443
  %v7820 = vunpack.c.l.b16 %v6444
  %v7821 = vunpack.c.h.b16 %v6444
  %v7822 = vunpack.c.l.b16 %v6445
  %v7823 = vunpack.c.h.b16 %v6445
  %v7824 = vunpack.c.l.b16 %v6446
  %v7825 = vunpack.c.h.b16 %v6446
  %v7826 = vunpack.c.l.b16 %v6447
  %v7827 = vunpack.c.h.b16 %v6447
  %v7828 = vunpack.c.l.b16 %v6448
  %v7829 = vunpack.c.h.b16 %v6448
  %v7830 = vunpack.c.l.b16 %v6449
  %v7831 = vunpack.c.h.b16 %v6449
  %v7832 = vunpack.c.l.b16 %v6450
  %v7833 = vunpack.c.h.b16 %v6450
  %v7834 = vunpack.c.l.b16 %v6451
  %v7835 = vunpack.c.h.b16 %v6451
  %v7836 = vunpack.c.l.b16 %v6452
  %v7837 = vunpack.c.h.b16 %v6452
  %v7838 = vunpack.c.l.b16 %v6453
  %v7839 = vunpack.c.h.b16 %v6453
  %v7840 = vunpack.c.l.b16 %v6454
  %v7841 = vunpack.c.h.b16 %v6454
  %v7842 = vunpack.c.l.b16 %v6455
  %v7843 = vunpack.c.h.b16 %v6455
  %v7844 = vunpack.c.l.b16 %v6456
  %v7845 = vunpack.c.h.b16 %v6456
  %v7846 = vunpack.c.l.b16 %v6457
  %v7847 = vunpack.c.h.b16 %v6457
  %v7848 = vunpack.c.l.b16 %v6458
  %v7849 = vunpack.c.h.b16 %v6458
  %v7850 = vunpack.c.l.b16 %v6459
  %v7851 = vunpack.c.h.b16 %v6459
  %v7852 = vunpack.c.l.b16 %v6460
  %v7853 = vunpack.c.h.b16 %v6460
  %v7854 = vunpack.c.l.b16 %v6461
  %v7855 = vunpack.c.h.b16 %v6461
  %v7856 = vunpack.c.l.b16 %v6462
  %v7857 = vunpack.c.h.b16 %v6462
  %v7858 = vunpack.c.l.b16 %v6463
  %v7859 = vunpack.c.h.b16 %v6463
  %v7860 = vunpack.c.l.b16 %v6464
  %v7861 = vunpack.c.h.b16 %v6464
  %v7862 = vunpack.c.l.b16 %v6465
  %v7863 = vunpack.c.h.b16 %v6465
  %v7864 = vunpack.c.l.b16 %v6466
  %v7865 = vunpack.c.h.b16 %v6466
  %v7866 = vunpack.c.l.b16 %v6467
  %v7867 = vunpack.c.h.b16 %v6467
  %v7868 = vunpack.c.l.b16 %v6468
  %v7869 = vunpack.c.h.b16 %v6468
  %v7870 = vunpack.c.l.b16 %v6469
  %v7871 = vunpack.c.h.b16 %v6469
  %v7872 = vunpack.c.l.b16 %v6470
  %v7873 = vunpack.c.h.b16 %v6470
  %v7874 = vunpack.c.l.b16 %v6471
  %v7875 = vunpack.c.h.b16 %v6471
  %v7876 = vunpack.c.l.b16 %v6472
  %v7877 = vunpack.c.h.b16 %v6472
  %v7878 = vunpack.c.l.b16 %v6473
  %v7879 = vunpack.c.h.b16 %v6473
  %v7880 = vunpack.c.l.b16 %v6474
  %v7881 = vunpack.c.h.b16 %v6474
  %v7882 = vunpack.c.l.b16 %v6475
  %v7883 = vunpack.c.h.b16 %v6475
  %v7884 = vunpack.c.l.b16 %v6476
  %v7885 = vunpack.c.h.b16 %v6476
  %v7886 = vunpack.c.l.b16 %v6477
  %v7887 = vunpack.c.h.b16 %v6477
  %v7888 = vunpack.c.l.b16 %v6478
  %v7889 = vunpack.c.h.b16 %v6478
  %v7890 = vunpack.c.l.b16 %v6479
  %v7891 = vunpack.c.h.b16 %v6479
  %v7892 = vunpack.c.l.b16 %v6480
  %v7893 = vunpack.c.h.b16 %v6480
  %v7894 = vunpack.c.l.b16 %v6481
  %v7895 = vunpack.c.h.b16 %v6481
  %v7896 = vunpack.c.l.b16 %v6482
  %v7897 = vunpack.c.h.b16 %v6482
  %v7898 = vunpack.c.l.b16 %v6483
  %v7899 = vunpack.c.h.b16 %v6483
  %v7900 = vunpack.c.l.b16 %v6484
  %v7901 = vunpack.c.h.b16 %v6484
  %v7902 = vunpack.c.l.b16 %v6485
  %v7903 = vunpack.c.h.b16 %v6485
  %v7904 = vunpack.c.l.b16 %v6486
  %v7905 = vunpack.c.h.b16 %v6486
  %v7906 = vunpack.c.l.b16 %v6487
  %v7907 = vunpack.c.h.b16 %v6487
  %v7908 = vunpack.c.l.b16 %v6488
  %v7909 = vunpack.c.h.b16 %v6488
  %v7910 = vunpack.c.l.b16 %v6489
  %v7911 = vunpack.c.h.b16 %v6489
  %v7912 = vunpack.c.l.b16 %v6490
  %v7913 = vunpack.c.h.b16 %v6490
  %v7914 = vunpack.c.l.b16 %v6491
  %v7915 = vunpack.c.h.b16 %v6491
  %v7916 = vunpack.c.l.b16 %v6492
  %v7917 = vunpack.c.h.b16 %v6492
  %v7918 = vunpack.c.l.b16 %v6493
  %v7919 = vunpack.c.h.b16 %v6493
  %v7920 = vunpack.c.l.b16 %v6494
  %v7921 = vunpack.c.h.b16 %v6494
  %v7922 = vunpack.c.l.b16 %v6495
  %v7923 = vunpack.c.h.b16 %v6495
  %v7924 = vunpack.c.l.b16 %v6496
  %v7925 = vunpack.c.h.b16 %v6496
  %v7926 = vunpack.c.l.b16 %v6497
  %v7927 = vunpack.c.h.b16 %v6497
  %v7928 = vunpack.c.l.b16 %v6498
  %v7929 = vunpack.c.h.b16 %v6498
  %v7930 = vunpack.c.l.b16 %v6499
  %v7931 = vunpack.c.h.b16 %v6499
  %v7932 = vunpack.c.l.b16 %v6500
  %v7933 = vunpack.c.h.b16 %v6500
  %v7934 = vunpack.c.l.b16 %v6501
  %v7935 = vunpack.c.h.b16 %v6501
  %v7936 = vunpack.c.l.b16 %v6502
  %v7937 = vunpack.c.h.b16 %v6502
  %v7938 = vunpack.c.l.b16 %v6503
  %v7939 = vunpack.c.h.b16 %v6503
  %v7940 = vunpack.c.l.b16 %v6504
  %v7941 = vunpack.c.h.b16 %v6504
  %v7942 = vunpack.c.l.b16 %v6505
  %v7943 = vunpack.c.h.b16 %v6505
  %v7944 = vunpack.c.l.b16 %v6506
  %v7945 = vunpack.c.h.b16 %v6506
  %v7946 = vunpack.c.l.b16 %v6507
  %v7947 = vunpack.c.h.b16 %v6507
  %v7948 = vunpack.c.l.b16 %v6508
  %v7949 = vunpack.c.h.b16 %v6508
  %v7950 = vunpack.c.l.b16 %v6509
  %v7951 = vunpack.c.h.b16 %v6509
  %v7952 = vunpack.c.l.b16 %v6510
  %v7953 = vunpack.c.h.b16 %v6510
  %v7954 = vunpack.c.l.b16 %v6511
  %v7955 = vunpack.c.h.b16 %v6511
  %v7956 = vunpack.c.l.b16 %v6512
  %v7957 = vunpack.c.h.b16 %v6512
  %v7958 = vunpack.c.l.b16 %v6513
  %v7959 = vunpack.c.h.b16 %v6513
  %v7960 = vunpack.c.l.b16 %v6514
  %v7961 = vunpack.c.h.b16 %v6514
  %v7962 = vunpack.c.l.b16 %v6515
  %v7963 = vunpack.c.h.b16 %v6515
  %v7964 = vunpack.c.l.b16 %v6516
  %v7965 = vunpack.c.h.b16 %v6516
  %v7966 = vunpack.c.l.b16 %v6517
  %v7967 = vunpack.c.h.b16 %v6517
  %v7968 = vunpack.c.l.b16 %v6518
  %v7969 = vunpack.c.h.b16 %v6518
  %v7970 = vunpack.c.l.b16 %v6519
  %v7971 = vunpack.c.h.b16 %v6519
  %v7972 = vunpack.c.l.b16 %v6520
  %v7973 = vunpack.c.h.b16 %v6520
  %v7974 = vunpack.c.l.b16 %v6521
  %v7975 = vunpack.c.h.b16 %v6521
  %v7976 = vunpack.c.l.b16 %v6522
  %v7977 = vunpack.c.h.b16 %v6522
  %v7978 = vunpack.c.l.b16 %v6523
  %v7979 = vunpack.c.h.b16 %v6523
  %v7980 = vunpack.c.l.b16 %v6524
  %v7981 = vunpack.c.h.b16 %v6524
  %v7982 = vunpack.c.l.b16 %v6525
  %v7983 = vunpack.c.h.b16 %v6525
  %v7984 = vunpack.c.l.b16 %v6526
  %v7985 = vunpack.c.h.b16 %v6526
  %v7986 = vunpack.c.l.b16 %v6527
  %v7987 = vunpack.c.h.b16 %v6527
  %v7988 = vunpack.c.l.b16 %v6528
  %v7989 = vunpack.c.h.b16 %v6528
  %v7990 = vunpack.c.l.b16 %v6529
  %v7991 = vunpack.c.h.b16 %v6529
  %v7992 = vunpack.c.l.b16 %v6530
  %v7993 = vunpack.c.h.b16 %v6530
  %v7994 = vunpack.c.l.b16 %v6531
  %v7995 = vunpack.c.h.b16 %v6531
  %v7996 = vunpack.c.l.b16 %v6532
  %v7997 = vunpack.c.h.b16 %v6532
  %v7998 = vunpack.c.l.b16 %v6533
  %v7999 = vunpack.c.h.b16 %v6533
  %v8000 = vunpack.c.l.b16 %v6534
  %v8001 = vunpack.c.h.b16 %v6534
  %v8002 = vunpack.c.l.b16 %v6535
  %v8003 = vunpack.c.h.b16 %v6535
  %v8004 = vunpack.c.l.b16 %v6536
  %v8005 = vunpack.c.h.b16 %v6536
  %v8006 = vunpack.c.l.b16 %v6537
  %v8007 = vunpack.c.h.b16 %v6537
  %v8008 = vunpack.c.l.b16 %v6538
  %v8009 = vunpack.c.h.b16 %v6538
  %v8010 = vunpack.c.l.b16 %v6539
  %v8011 = vunpack.c.h.b16 %v6539
  %v8012 = vunpack.c.l.b16 %v6540
  %v8013 = vunpack.c.h.b16 %v6540
  %v8014 = vunpack.c.l.b16 %v6541
  %v8015 = vunpack.c.h.b16 %v6541
  %v8016 = vunpack.c.l.b16 %v6542
  %v8017 = vunpack.c.h.b16 %v6542
  %v8018 = vunpack.c.l.b16 %v6543
  %v8019 = vunpack.c.h.b16 %v6543
  %v8020 = vunpack.c.l.b16 %v6544
  %v8021 = vunpack.c.h.b16 %v6544
  %v8022 = vunpack.c.l.b16 %v6545
  %v8023 = vunpack.c.h.b16 %v6545
  %v8024 = vunpack.c.l.b16 %v6546
  %v8025 = vunpack.c.h.b16 %v6546
  %v8026 = vunpack.c.l.b16 %v6547
  %v8027 = vunpack.c.h.b16 %v6547
  %v8028 = vunpack.c.l.b16 %v6548
  %v8029 = vunpack.c.h.b16 %v6548
  %v8030 = vunpack.c.l.b16 %v6549
  %v8031 = vunpack.c.h.b16 %v6549
  %v8032 = vunpack.c.l.b16 %v6550
  %v8033 = vunpack.c.h.b16 %v6550
  %v8034 = vunpack.c.l.b16 %v6551
  %v8035 = vunpack.c.h.b16 %v6551
  %v8036 = vunpack.c.l.b16 %v6552
  %v8037 = vunpack.c.h.b16 %v6552
  %v8038 = vunpack.c.l.b16 %v6553
  %v8039 = vunpack.c.h.b16 %v6553
  %v8040 = vunpack.c.l.b16 %v6554
  %v8041 = vunpack.c.h.b16 %v6554
  %v8042 = vunpack.c.l.b16 %v6555
  %v8043 = vunpack.c.h.b16 %v6555
  %v8044 = vunpack.c.l.b16 %v6556
  %v8045 = vunpack.c.h.b16 %v6556
  %v8046 = vunpack.c.l.b16 %v6557
  %v8047 = vunpack.c.h.b16 %v6557
  %v8048 = vunpack.c.l.b16 %v6558
  %v8049 = vunpack.c.h.b16 %v6558
  %v8050 = vunpack.c.l.b16 %v6559
  %v8051 = vunpack.c.h.b16 %v6559
  %v8052 = vunpack.c.l.b16 %v6560
  %v8053 = vunpack.c.h.b16 %v6560
  %v8054 = vunpack.c.l.b16 %v6561
  %v8055 = vunpack.c.h.b16 %v6561
  %v8056 = vunpack.c.l.b16 %v6562
  %v8057 = vunpack.c.h.b16 %v6562
  %v8058 = vunpack.c.l.b16 %v6563
  %v8059 = vunpack.c.h.b16 %v6563
  %v8060 = vunpack.c.l.b16 %v6564
  %v8061 = vunpack.c.h.b16 %v6564
  %v8062 = vunpack.c.l.b16 %v6565
  %v8063 = vunpack.c.h.b16 %v6565
  %v8064 = vunpack.c.l.b16 %v6566
  %v8065 = vunpack.c.h.b16 %v6566
  %v8066 = vunpack.c.l.b16 %v6567
  %v8067 = vunpack.c.h.b16 %v6567
  %v8068 = vunpack.c.l.b16 %v6568
  %v8069 = vunpack.c.h.b16 %v6568
  %v8070 = vunpack.c.l.b16 %v6569
  %v8071 = vunpack.c.h.b16 %v6569
  %v8072 = vunpack.c.l.b16 %v6570
  %v8073 = vunpack.c.h.b16 %v6570
  %v8074 = vunpack.c.l.b16 %v6571
  %v8075 = vunpack.c.h.b16 %v6571
  %v8076 = vunpack.c.l.b16 %v6572
  %v8077 = vunpack.c.h.b16 %v6572
  %v8078 = vunpack.c.l.b16 %v6573
  %v8079 = vunpack.c.h.b16 %v6573
  %v8080 = vunpack.c.l.b16 %v6574
  %v8081 = vunpack.c.h.b16 %v6574
  %v8082 = vunpack.c.l.b16 %v6575
  %v8083 = vunpack.c.h.b16 %v6575
  %v8084 = vunpack.c.l.b16 %v6576
  %v8085 = vunpack.c.h.b16 %v6576
  %v8086 = vunpack.c.l.b16 %v6577
  %v8087 = vunpack.c.h.b16 %v6577
  %v8088 = vunpack.c.l.b16 %v6578
  %v8089 = vunpack.c.h.b16 %v6578
  %v8090 = vunpack.c.l.b16 %v6579
  %v8091 = vunpack.c.h.b16 %v6579
  %v8092 = vunpack.c.l.b16 %v6580
  %v8093 = vunpack.c.h.b16 %v6580
  %v8094 = vunpack.c.l.b16 %v6581
  %v8095 = vunpack.c.h.b16 %v6581
  %v8096 = vunpack.c.l.b16 %v6582
  %v8097 = vunpack.c.h.b16 %v6582
  %v8098 = vunpack.c.l.b16 %v6583
  %v8099 = vunpack.c.h.b16 %v6583
  %v8100 = vunpack.c.l.b16 %v6584
  %v8101 = vunpack.c.h.b16 %v6584
  %v8102 = vunpack.c.l.b16 %v6585
  %v8103 = vunpack.c.h.b16 %v6585
  %v8104 = vunpack.c.l.b16 %v6586
  %v8105 = vunpack.c.h.b16 %v6586
  %v8106 = vunpack.c.l.b16 %v6587
  %v8107 = vunpack.c.h.b16 %v6587
  %v8108 = vunpack.c.l.b16 %v6588
  %v8109 = vunpack.c.h.b16 %v6588
  %v8110 = vunpack.c.l.b16 %v6589
  %v8111 = vunpack.c.h.b16 %v6589
  %v8112 = vunpack.c.l.b16 %v6590
  %v8113 = vunpack.c.h.b16 %v6590
  %v8114 = vunpack.c.l.b16 %v6591
  %v8115 = vunpack.c.h.b16 %v6591
  %v8116 = vunpack.c.l.b16 %v6592
  %v8117 = vunpack.c.h.b16 %v6592
  %v8118 = vunpack.c.l.b16 %v6593
  %v8119 = vunpack.c.h.b16 %v6593
  %v8120 = vunpack.c.l.b16 %v6594
  %v8121 = vunpack.c.h.b16 %v6594
  %v8122 = vunpack.c.l.b16 %v6595
  %v8123 = vunpack.c.h.b16 %v6595
  %v8124 = vunpack.c.l.b16 %v6596
  %v8125 = vunpack.c.h.b16 %v6596
  %v8126 = vunpack.c.l.b16 %v6597
  %v8127 = vunpack.c.h.b16 %v6597
  %v8128 = vunpack.c.l.b16 %v6598
  %v8129 = vunpack.c.h.b16 %v6598
  %v8130 = vunpack.c.l.b16 %v6599
  %v8131 = vunpack.c.h.b16 %v6599
  %v8132 = vunpack.c.l.b16 %v6600
  %v8133 = vunpack.c.h.b16 %v6600
  %v8134 = vunpack.c.l.b16 %v6601
  %v8135 = vunpack.c.h.b16 %v6601
  %v8136 = vunpack.c.l.b16 %v6602
  %v8137 = vunpack.c.h.b16 %v6602
  %v8138 = vunpack.c.l.b16 %v6603
  %v8139 = vunpack.c.h.b16 %v6603
  %v8140 = vunpack.c.l.b16 %v6604
  %v8141 = vunpack.c.h.b16 %v6604
  %v8142 = vunpack.c.l.b16 %v6605
  %v8143 = vunpack.c.h.b16 %v6605
  %v8144 = vunpack.c.l.b16 %v6606
  %v8145 = vunpack.c.h.b16 %v6606
  %v8146 = vunpack.c.l.b16 %v6607
  %v8147 = vunpack.c.h.b16 %v6607
  %v8148 = vunpack.c.l.b16 %v6608
  %v8149 = vunpack.c.h.b16 %v6608
  %v8150 = vunpack.c.l.b16 %v6609
  %v8151 = vunpack.c.h.b16 %v6609
  %v8152 = vunpack.c.l.b16 %v6610
  %v8153 = vunpack.c.h.b16 %v6610
  %v8154 = vunpack.c.l.b16 %v6611
  %v8155 = vunpack.c.h.b16 %v6611
  %v8156 = vunpack.c.l.b16 %v6612
  %v8157 = vunpack.c.h.b16 %v6612
  %v8158 = vunpack.c.l.b16 %v6613
  %v8159 = vunpack.c.h.b16 %v6613
  %v8160 = vunpack.c.l.b16 %v6614
  %v8161 = vunpack.c.h.b16 %v6614
  %v8162 = vunpack.c.l.b16 %v6615
  %v8163 = vunpack.c.h.b16 %v6615
  %v8164 = vunpack.c.l.b16 %v6616
  %v8165 = vunpack.c.h.b16 %v6616
  %v8166 = vunpack.c.l.b16 %v6617
  %v8167 = vunpack.c.h.b16 %v6617
  %v8168 = vunpack.c.l.b16 %v6618
  %v8169 = vunpack.c.h.b16 %v6618
  %v8170 = vunpack.c.l.b16 %v6619
  %v8171 = vunpack.c.h.b16 %v6619
  %v8172 = vunpack.c.l.b16 %v6620
  %v8173 = vunpack.c.h.b16 %v6620
  %v8174 = vunpack.c.l.b16 %v6621
  %v8175 = vunpack.c.h.b16 %v6621
  %v8176 = vunpack.c.l.b16 %v6622
  %v8177 = vunpack.c.h.b16 %v6622
  %v8178 = vunpack.c.l.b16 %v6623
  %v8179 = vunpack.c.h.b16 %v6623
  %v8180 = vunpack.c.l.b16 %v6624
  %v8181 = vunpack.c.h.b16 %v6624
  %v8182 = vunpack.c.l.b16 %v6625
  %v8183 = vunpack.c.h.b16 %v6625
  %v8184 = vunpack.c.l.b16 %v6626
  %v8185 = vunpack.c.h.b16 %v6626
  %v8186 = vunpack.c.l.b16 %v6627
  %v8187 = vunpack.c.h.b16 %v6627
  %v8188 = vunpack.c.l.b16 %v6628
  %v8189 = vunpack.c.h.b16 %v6628
  %v8190 = vunpack.c.l.b16 %v6629
  %v8191 = vunpack.c.h.b16 %v6629
  %v8192 = vunpack.c.l.b16 %v6630
  %v8193 = vunpack.c.h.b16 %v6630
  %v8194 = vunpack.c.l.b16 %v6631
  %v8195 = vunpack.c.h.b16 %v6631
  %v8196 = vunpack.c.l.b16 %v6632
  %v8197 = vunpack.c.h.b16 %v6632
  %v8198 = vunpack.c.l.b16 %v6633
  %v8199 = vunpack.c.h.b16 %v6633
  %v8200 = vunpack.c.l.b16 %v6634
  %v8201 = vunpack.c.h.b16 %v6634
  %v8202 = vunpack.c.l.b16 %v6635
  %v8203 = vunpack.c.h.b16 %v6635
  %v8204 = vunpack.c.l.b16 %v6636
  %v8205 = vunpack.c.h.b16 %v6636
  %v8206 = vunpack.c.l.b16 %v6637
  %v8207 = vunpack.c.h.b16 %v6637
  %v8208 = vunpack.c.l.b16 %v6638
  %v8209 = vunpack.c.h.b16 %v6638
  %v8210 = vunpack.c.l.b16 %v6639
  %v8211 = vunpack.c.h.b16 %v6639
  %v8212 = vunpack.c.l.b16 %v6640
  %v8213 = vunpack.c.h.b16 %v6640
  %v8214 = vunpack.c.l.b16 %v6641
  %v8215 = vunpack.c.h.b16 %v6641
  %v8216 = vunpack.c.l.b16 %v6642
  %v8217 = vunpack.c.h.b16 %v6642
  %v8218 = vunpack.c.l.b16 %v6643
  %v8219 = vunpack.c.h.b16 %v6643
  %v8220 = vunpack.c.l.b16 %v6644
  %v8221 = vunpack.c.h.b16 %v6644
  %v8222 = vunpack.c.l.b16 %v6645
  %v8223 = vunpack.c.h.b16 %v6645
  %v8224 = vunpack.c.l.b16 %v6646
  %v8225 = vunpack.c.h.b16 %v6646
  %v8226 = vunpack.c.l.b16 %v6647
  %v8227 = vunpack.c.h.b16 %v6647
  %v8228 = vunpack.c.l.b16 %v6648
  %v8229 = vunpack.c.h.b16 %v6648
  %v8230 = vunpack.c.l.b16 %v6649
  %v8231 = vunpack.c.h.b16 %v6649
  %v8232 = vunpack.c.l.b16 %v6650
  %v8233 = vunpack.c.h.b16 %v6650
  %v8234 = vunpack.c.l.b16 %v6651
  %v8235 = vunpack.c.h.b16 %v6651
  %v8236 = vunpack.c.l.b16 %v6652
  %v8237 = vunpack.c.h.b16 %v6652
  %v8238 = vunpack.c.l.b16 %v6653
  %v8239 = vunpack.c.h.b16 %v6653
  %v8240 = vunpack.c.l.b16 %v6654
  %v8241 = vunpack.c.h.b16 %v6654
  %v8242 = vunpack.c.l.b16 %v6655
  %v8243 = vunpack.c.h.b16 %v6655
  %v8244 = vunpack.c.l.b16 %v6656
  %v8245 = vunpack.c.h.b16 %v6656
  %v8246 = vunpack.c.l.b16 %v6657
  %v8247 = vunpack.c.h.b16 %v6657
  %v8248 = vunpack.c.l.b16 %v6658
  %v8249 = vunpack.c.h.b16 %v6658
  %v8250 = vunpack.c.l.b16 %v6659
  %v8251 = vunpack.c.h.b16 %v6659
  %v8252 = vunpack.c.l.b16 %v6660
  %v8253 = vunpack.c.h.b16 %v6660
  %v8254 = vunpack.c.l.b16 %v6661
  %v8255 = vunpack.c.h.b16 %v6661
  %v8256 = vunpack.c.l.b16 %v6662
  %v8257 = vunpack.c.h.b16 %v6662
  %v8258 = vunpack.c.l.b16 %v6663
  %v8259 = vunpack.c.h.b16 %v6663
  %v8260 = vunpack.c.l.b16 %v6664
  %v8261 = vunpack.c.h.b16 %v6664
  %v8262 = vunpack.c.l.b16 %v6665
  %v8263 = vunpack.c.h.b16 %v6665
  %v8264 = vunpack.c.l.b16 %v6666
  %v8265 = vunpack.c.h.b16 %v6666
  %v8266 = vunpack.c.l.b16 %v6667
  %v8267 = vunpack.c.h.b16 %v6667
  %v8268 = vunpack.c.l.b16 %v6668
  %v8269 = vunpack.c.h.b16 %v6668
  %v8270 = vunpack.c.l.b16 %v6669
  %v8271 = vunpack.c.h.b16 %v6669
  %v8272 = vunpack.c.l.b16 %v6670
  %v8273 = vunpack.c.h.b16 %v6670
  %v8274 = vunpack.c.l.b16 %v6671
  %v8275 = vunpack.c.h.b16 %v6671
  %v8276 = vunpack.c.l.b16 %v6672
  %v8277 = vunpack.c.h.b16 %v6672
  %v8278 = vunpack.c.l.b16 %v6673
  %v8279 = vunpack.c.h.b16 %v6673
  %v8280 = vunpack.c.l.b16 %v6674
  %v8281 = vunpack.c.h.b16 %v6674
  %v8282 = vunpack.c.l.b16 %v6675
  %v8283 = vunpack.c.h.b16 %v6675
  %v8284 = vunpack.c.l.b16 %v6676
  %v8285 = vunpack.c.h.b16 %v6676
  %v8286 = vunpack.c.l.b16 %v6677
  %v8287 = vunpack.c.h.b16 %v6677
  %v8288 = vunpack.c.l.b16 %v6678
  %v8289 = vunpack.c.h.b16 %v6678
  %v8290 = vunpack.c.l.b16 %v6679
  %v8291 = vunpack.c.h.b16 %v6679
  %v8292 = vunpack.c.l.b16 %v6680
  %v8293 = vunpack.c.h.b16 %v6680
  %v8294 = vunpack.c.l.b16 %v6681
  %v8295 = vunpack.c.h.b16 %v6681
  %v8296 = vunpack.c.l.b16 %v6682
  %v8297 = vunpack.c.h.b16 %v6682
  %v8298 = vunpack.c.l.b16 %v6683
  %v8299 = vunpack.c.h.b16 %v6683
  %v8300 = vunpack.c.l.b16 %v6684
  %v8301 = vunpack.c.h.b16 %v6684
  %v8302 = vunpack.c.l.b16 %v6685
  %v8303 = vunpack.c.h.b16 %v6685
  %v8304 = vunpack.c.l.b16 %v6686
  %v8305 = vunpack.c.h.b16 %v6686
  %v8306 = vunpack.c.l.b16 %v6687
  %v8307 = vunpack.c.h.b16 %v6687
  %v8308 = vunpack.c.l.b16 %v6688
  %v8309 = vunpack.c.h.b16 %v6688
  %v8310 = vunpack.c.l.b16 %v6689
  %v8311 = vunpack.c.h.b16 %v6689
  %v8312 = vunpack.c.l.b16 %v6690
  %v8313 = vunpack.c.h.b16 %v6690
  %v8314 = vunpack.c.l.b16 %v6691
  %v8315 = vunpack.c.h.b16 %v6691
  %v8316 = vunpack.c.l.b16 %v6692
  %v8317 = vunpack.c.h.b16 %v6692
  %v8318 = vunpack.c.l.b16 %v6693
  %v8319 = vunpack.c.h.b16 %v6693
  %v8320 = vunpack.c.l.b16 %v6694
  %v8321 = vunpack.c.h.b16 %v6694
  %v8322 = vunpack.c.l.b16 %v6695
  %v8323 = vunpack.c.h.b16 %v6695
  %v8324 = vunpack.c.l.b16 %v6696
  %v8325 = vunpack.c.h.b16 %v6696
  %v8326 = vunpack.c.l.b16 %v6697
  %v8327 = vunpack.c.h.b16 %v6697
  %v8328 = vunpack.c.l.b16 %v6698
  %v8329 = vunpack.c.h.b16 %v6698
  %v8330 = vunpack.c.l.b16 %v6699
  %v8331 = vunpack.c.h.b16 %v6699
  %v8332 = vunpack.c.l.b16 %v6700
  %v8333 = vunpack.c.h.b16 %v6700
  %v8334 = vunpack.c.l.b16 %v6701
  %v8335 = vunpack.c.h.b16 %v6701
  %v8336 = vunpack.c.l.b16 %v6702
  %v8337 = vunpack.c.h.b16 %v6702
  %v8338 = vunpack.c.l.b16 %v6703
  %v8339 = vunpack.c.h.b16 %v6703
  %v8340 = vunpack.c.l.b16 %v6704
  %v8341 = vunpack.c.h.b16 %v6704
  %v8342 = vunpack.c.l.b16 %v6705
  %v8343 = vunpack.c.h.b16 %v6705
  %v8344 = vunpack.c.l.b16 %v6706
  %v8345 = vunpack.c.h.b16 %v6706
  %v8346 = vunpack.c.l.b16 %v6707
  %v8347 = vunpack.c.h.b16 %v6707
  %v8348 = vunpack.c.l.b16 %v6708
  %v8349 = vunpack.c.h.b16 %v6708
  %v8350 = vunpack.c.l.b16 %v6709
  %v8351 = vunpack.c.h.b16 %v6709
  %v8352 = vunpack.c.l.b16 %v6710
  %v8353 = vunpack.c.h.b16 %v6710
  %v8354 = vunpack.c.l.b16 %v6711
  %v8355 = vunpack.c.h.b16 %v6711
  %v8356 = vunpack.c.l.b16 %v6712
  %v8357 = vunpack.c.h.b16 %v6712
  %v8358 = vunpack.c.l.b16 %v6713
  %v8359 = vunpack.c.h.b16 %v6713
  %v8360 = vunpack.c.l.b16 %v6714
  %v8361 = vunpack.c.h.b16 %v6714
  %v8362 = vunpack.c.l.b16 %v6715
  %v8363 = vunpack.c.h.b16 %v6715
  %v8364 = vunpack.c.l.b16 %v6716
  %v8365 = vunpack.c.h.b16 %v6716
  %v8366 = vunpack.c.l.b16 %v6717
  %v8367 = vunpack.c.h.b16 %v6717
  %v8368 = vunpack.c.l.b16 %v6718
  %v8369 = vunpack.c.h.b16 %v6718
  %v8370 = vunpack.c.l.b16 %v6719
  %v8371 = vunpack.c.h.b16 %v6719
  %v8372 = vunpack.c.l.b16 %v6720
  %v8373 = vunpack.c.h.b16 %v6720
  %v8374 = vunpack.c.l.b16 %v6721
  %v8375 = vunpack.c.h.b16 %v6721
  %v8376 = vunpack.c.l.b16 %v6722
  %v8377 = vunpack.c.h.b16 %v6722
  %v8378 = vunpack.c.l.b16 %v6723
  %v8379 = vunpack.c.h.b16 %v6723
  %v8380 = vunpack.c.l.b16 %v6724
  %v8381 = vunpack.c.h.b16 %v6724
  %v8382 = vunpack.c.l.b16 %v6725
  %v8383 = vunpack.c.h.b16 %v6725
  %v8384 = vunpack.c.l.b16 %v6726
  %v8385 = vunpack.c.h.b16 %v6726
  %v8386 = vunpack.c.l.b16 %v6727
  %v8387 = vunpack.c.h.b16 %v6727
  %v8388 = vunpack.c.l.b16 %v6728
  %v8389 = vunpack.c.h.b16 %v6728
  %v8390 = vunpack.c.l.b16 %v6729
  %v8391 = vunpack.c.h.b16 %v6729
  %v8392 = vunpack.c.l.b16 %v6730
  %v8393 = vunpack.c.h.b16 %v6730
  %v8394 = vunpack.c.l.b16 %v6731
  %v8395 = vunpack.c.h.b16 %v6731
  %v8396 = vunpack.c.l.b16 %v6732
  %v8397 = vunpack.c.h.b16 %v6732
  %v8398 = vunpack.c.l.b16 %v6733
  %v8399 = vunpack.c.h.b16 %v6733
  %v8400 = vunpack.c.l.b16 %v6734
  %v8401 = vunpack.c.h.b16 %v6734
  %v8402 = vunpack.c.l.b16 %v6735
  %v8403 = vunpack.c.h.b16 %v6735
  %v8404 = vunpack.c.l.b16 %v6736
  %v8405 = vunpack.c.h.b16 %v6736
  %v8406 = vunpack.c.l.b16 %v6737
  %v8407 = vunpack.c.h.b16 %v6737
  %v8408 = vunpack.c.l.b16 %v6738
  %v8409 = vunpack.c.h.b16 %v6738
  %v8410 = vunpack.c.l.b16 %v6739
  %v8411 = vunpack.c.h.b16 %v6739
  %v8412 = vunpack.c.l.b16 %v6740
  %v8413 = vunpack.c.h.b16 %v6740
  %v8414 = vunpack.c.l.b16 %v6741
  %v8415 = vunpack.c.h.b16 %v6741
  %v8416 = vunpack.c.l.b16 %v6742
  %v8417 = vunpack.c.h.b16 %v6742
  %v8418 = vunpack.c.l.b16 %v6743
  %v8419 = vunpack.c.h.b16 %v6743
  %v8420 = vunpack.c.l.b16 %v6744
  %v8421 = vunpack.c.h.b16 %v6744
  %v8422 = vunpack.c.l.b16 %v6745
  %v8423 = vunpack.c.h.b16 %v6745
  %v8424 = vunpack.c.l.b16 %v6746
  %v8425 = vunpack.c.h.b16 %v6746
  %v8426 = vunpack.c.l.b16 %v6747
  %v8427 = vunpack.c.h.b16 %v6747
  %v8428 = vunpack.c.l.b16 %v6748
  %v8429 = vunpack.c.h.b16 %v6748
  %v8430 = vunpack.c.l.b16 %v6749
  %v8431 = vunpack.c.h.b16 %v6749
  %v8432 = vunpack.c.l.b16 %v6750
  %v8433 = vunpack.c.h.b16 %v6750
  %v8434 = vunpack.c.l.b16 %v6751
  %v8435 = vunpack.c.h.b16 %v6751
  %v8436 = vunpack.c.l.b16 %v6752
  %v8437 = vunpack.c.h.b16 %v6752
  %v8438 = vunpack.c.l.b16 %v6753
  %v8439 = vunpack.c.h.b16 %v6753
  %v8440 = vunpack.c.l.b16 %v6754
  %v8441 = vunpack.c.h.b16 %v6754
  %v8442 = vunpack.c.l.b16 %v6755
  %v8443 = vunpack.c.h.b16 %v6755
  %v8444 = vunpack.c.l.b16 %v6756
  %v8445 = vunpack.c.h.b16 %v6756
  %v8446 = vunpack.c.l.b16 %v6757
  %v8447 = vunpack.c.h.b16 %v6757
  %v8448 = vunpack.c.l.b16 %v6758
  %v8449 = vunpack.c.h.b16 %v6758
  %v8450 = vunpack.c.l.b16 %v6759
  %v8451 = vunpack.c.h.b16 %v6759
  %v8452 = vunpack.c.l.b16 %v6760
  %v8453 = vunpack.c.h.b16 %v6760
  %v8454 = vunpack.c.l.b16 %v6761
  %v8455 = vunpack.c.h.b16 %v6761
  %v8456 = vunpack.c.l.b16 %v6762
  %v8457 = vunpack.c.h.b16 %v6762
  %v8458 = vunpack.c.l.b16 %v6763
  %v8459 = vunpack.c.h.b16 %v6763
  %v8460 = vunpack.c.l.b16 %v6764
  %v8461 = vunpack.c.h.b16 %v6764
  %v8462 = vunpack.c.l.b16 %v6765
  %v8463 = vunpack.c.h.b16 %v6765
  %v8464 = vunpack.c.l.b16 %v6766
  %v8465 = vunpack.c.h.b16 %v6766
  %v8466 = vunpack.c.l.b16 %v6767
  %v8467 = vunpack.c.h.b16 %v6767
  %v8468 = vunpack.c.l.b16 %v6768
  %v8469 = vunpack.c.h.b16 %v6768
  %v8470 = vunpack.c.l.b16 %v6769
  %v8471 = vunpack.c.h.b16 %v6769
  %v8472 = vunpack.c.l.b16 %v6770
  %v8473 = vunpack.c.h.b16 %v6770
  %v8474 = vunpack.c.l.b16 %v6771
  %v8475 = vunpack.c.h.b16 %v6771
  %v8476 = vunpack.c.l.b16 %v6772
  %v8477 = vunpack.c.h.b16 %v6772
  %v8478 = vunpack.c.l.b16 %v6773
  %v8479 = vunpack.c.h.b16 %v6773
  %v8480 = vunpack.c.l.b16 %v6774
  %v8481 = vunpack.c.h.b16 %v6774
  %v8482 = vunpack.c.l.b16 %v6775
  %v8483 = vunpack.c.h.b16 %v6775
  %v8484 = vunpack.c.l.b16 %v6776
  %v8485 = vunpack.c.h.b16 %v6776
  %v8486 = vunpack.c.l.b16 %v6777
  %v8487 = vunpack.c.h.b16 %v6777
  %v8488 = vunpack.c.l.b16 %v6778
  %v8489 = vunpack.c.h.b16 %v6778
  %v8490 = vunpack.c.l.b16 %v6779
  %v8491 = vunpack.c.h.b16 %v6779
  %v8492 = vunpack.c.l.b16 %v6780
  %v8493 = vunpack.c.h.b16 %v6780
  %v8494 = vunpack.c.l.b16 %v6781
  %v8495 = vunpack.c.h.b16 %v6781
  %v8496 = vunpack.c.l.b16 %v6782
  %v8497 = vunpack.c.h.b16 %v6782
  %v8498 = vunpack.c.l.b16 %v6783
  %v8499 = vunpack.c.h.b16 %v6783
  %v8500 = vunpack.c.l.b16 %v6784
  %v8501 = vunpack.c.h.b16 %v6784
  %v8502 = vunpack.c.l.b16 %v6785
  %v8503 = vunpack.c.h.b16 %v6785
  %v8504 = vunpack.c.l.b16 %v6786
  %v8505 = vunpack.c.h.b16 %v6786
  %v8506 = vunpack.c.l.b16 %v6787
  %v8507 = vunpack.c.h.b16 %v6787
  %v8508 = vunpack.c.l.b16 %v6788
  %v8509 = vunpack.c.h.b16 %v6788
  %v8510 = vunpack.c.l.b16 %v6789
  %v8511 = vunpack.c.h.b16 %v6789
  %v8512 = vunpack.c.l.b16 %v6790
  %v8513 = vunpack.c.h.b16 %v6790
  %v8514 = vunpack.c.l.b16 %v6791
  %v8515 = vunpack.c.h.b16 %v6791
  %v8516 = vunpack.c.l.b16 %v6792
  %v8517 = vunpack.c.h.b16 %v6792
  %v8518 = vunpack.c.l.b16 %v6793
  %v8519 = vunpack.c.h.b16 %v6793
  %v8520 = vunpack.c.l.b16 %v6794
  %v8521 = vunpack.c.h.b16 %v6794
  %v8522 = vunpack.c.l.b16 %v6795
  %v8523 = vunpack.c.h.b16 %v6795
  %v8524 = vunpack.c.l.b16 %v6796
  %v8525 = vunpack.c.h.b16 %v6796
  %v8526 = vunpack.c.l.b16 %v6797
  %v8527 = vunpack.c.h.b16 %v6797
  %v8528 = vunpack.c.l.b16 %v6798
  %v8529 = vunpack.c.h.b16 %v6798
  %v8530 = vunpack.c.l.b16 %v6799
  %v8531 = vunpack.c.h.b16 %v6799
  %v8532 = vunpack.c.l.b16 %v6800
  %v8533 = vunpack.c.h.b16 %v6800
  %v8534 = vunpack.c.l.b16 %v6801
  %v8535 = vunpack.c.h.b16 %v6801
  %v8536 = vunpack.c.l.b16 %v6802
  %v8537 = vunpack.c.h.b16 %v6802
  %v8538 = vunpack.c.l.b16 %v6803
  %v8539 = vunpack.c.h.b16 %v6803
  %v8540 = vunpack.c.l.b16 %v6804
  %v8541 = vunpack.c.h.b16 %v6804
  %v8542 = vunpack.c.l.b16 %v6805
  %v8543 = vunpack.c.h.b16 %v6805
  %v8544 = vunpack.c.l.b16 %v6806
  %v8545 = vunpack.c.h.b16 %v6806
  %v8546 = vunpack.c.l.b16 %v6807
  %v8547 = vunpack.c.h.b16 %v6807
  %v8548 = vunpack.c.l.b16 %v6808
  %v8549 = vunpack.c.h.b16 %v6808
  %v8550 = vunpack.c.l.b16 %v6809
  %v8551 = vunpack.c.h.b16 %v6809
  %v8552 = vunpack.c.l.b16 %v6810
  %v8553 = vunpack.c.h.b16 %v6810
  %v8554 = vunpack.c.l.b16 %v6811
  %v8555 = vunpack.c.h.b16 %v6811
  %v8556 = vunpack.c.l.b16 %v6812
  %v8557 = vunpack.c.h.b16 %v6812
  %v8558 = vunpack.c.l.b16 %v6813
  %v8559 = vunpack.c.h.b16 %v6813
  %v8560 = vunpack.c.l.b16 %v6814
  %v8561 = vunpack.c.h.b16 %v6814
  %v8562 = vunpack.c.l.b16 %v6815
  %v8563 = vunpack.c.h.b16 %v6815
  %v8564 = vunpack.c.l.b16 %v6816
  %v8565 = vunpack.c.h.b16 %v6816
  %v8566 = vunpack.c.l.b16 %v6817
  %v8567 = vunpack.c.h.b16 %v6817
  %v8568 = vunpack.c.l.b16 %v6818
  %v8569 = vunpack.c.h.b16 %v6818
  %v8570 = vunpack.c.l.b16 %v6819
  %v8571 = vunpack.c.h.b16 %v6819
  %v8572 = vunpack.c.l.b16 %v6820
  %v8573 = vunpack.c.h.b16 %v6820
  %v8574 = vunpack.c.l.b16 %v6821
  %v8575 = vunpack.c.h.b16 %v6821
  %v8576 = vunpack.c.l.b16 %v6822
  %v8577 = vunpack.c.h.b16 %v6822
  %v8578 = vunpack.c.l.b16 %v6823
  %v8579 = vunpack.c.h.b16 %v6823
  %v8580 = vunpack.c.l.b16 %v6824
  %v8581 = vunpack.c.h.b16 %v6824
  %v8582 = vunpack.c.l.b16 %v6825
  %v8583 = vunpack.c.h.b16 %v6825
  %v8584 = vunpack.c.l.b16 %v6826
  %v8585 = vunpack.c.h.b16 %v6826
  %v8586 = vunpack.c.l.b16 %v6827
  %v8587 = vunpack.c.h.b16 %v6827
  %v8588 = vunpack.c.l.b16 %v6828
  %v8589 = vunpack.c.h.b16 %v6828
  %v8590 = vunpack.c.l.b16 %v6829
  %v8591 = vunpack.c.h.b16 %v6829
  %v8592 = vunpack.c.l.b16 %v6830
  %v8593 = vunpack.c.h.b16 %v6830
  %v8594 = vunpack.c.l.b16 %v6831
  %v8595 = vunpack.c.h.b16 %v6831
  %v8596 = vunpack.c.l.b16 %v6832
  %v8597 = vunpack.c.h.b16 %v6832
  %v8598 = vunpack.c.l.b16 %v6833
  %v8599 = vunpack.c.h.b16 %v6833
  %v8600 = vunpack.c.l.b16 %v6834
  %v8601 = vunpack.c.h.b16 %v6834
  %v8602 = vunpack.c.l.b16 %v6835
  %v8603 = vunpack.c.h.b16 %v6835
  %v8604 = vunpack.c.l.b16 %v6836
  %v8605 = vunpack.c.h.b16 %v6836
  %v8606 = vunpack.c.l.b16 %v6837
  %v8607 = vunpack.c.h.b16 %v6837
  %v8608 = vunpack.c.l.b16 %v6838
  %v8609 = vunpack.c.h.b16 %v6838
  %v8610 = vunpack.c.l.b16 %v6839
  %v8611 = vunpack.c.h.b16 %v6839
  %v8612 = vunpack.c.l.b16 %v6840
  %v8613 = vunpack.c.h.b16 %v6840
  %v8614 = vunpack.c.l.b16 %v6841
  %v8615 = vunpack.c.h.b16 %v6841
  %v8616 = vunpack.c.l.b16 %v6842
  %v8617 = vunpack.c.h.b16 %v6842
  %v8618 = vunpack.c.l.b16 %v6843
  %v8619 = vunpack.c.h.b16 %v6843
  %v8620 = vunpack.c.l.b16 %v6844
  %v8621 = vunpack.c.h.b16 %v6844
  %v8622 = vunpack.c.l.b16 %v6845
  %v8623 = vunpack.c.h.b16 %v6845
  %v8624 = vunpack.c.l.b16 %v6846
  %v8625 = vunpack.c.h.b16 %v6846
  %v8626 = vunpack.c.l.b16 %v6847
  %v8627 = vunpack.c.h.b16 %v6847
  %v8628 = vunpack.c.l.b16 %v6848
  %v8629 = vunpack.c.h.b16 %v6848
  %v8630 = vunpack.c.l.b16 %v6849
  %v8631 = vunpack.c.h.b16 %v6849
  %v8632 = vunpack.c.l.b16 %v6850
  %v8633 = vunpack.c.h.b16 %v6850
  %v8634 = vunpack.c.l.b16 %v6851
  %v8635 = vunpack.c.h.b16 %v6851
  %v8636 = vunpack.c.l.b16 %v6852
  %v8637 = vunpack.c.h.b16 %v6852
  %v8638 = vunpack.c.l.b16 %v6853
  %v8639 = vunpack.c.h.b16 %v6853
  %v8640 = vunpack.c.l.b16 %v6854
  %v8641 = vunpack.c.h.b16 %v6854
  %v8642 = vunpack.c.l.b16 %v6855
  %v8643 = vunpack.c.h.b16 %v6855
  %v8644 = vunpack.c.l.b16 %v6856
  %v8645 = vunpack.c.h.b16 %v6856
  %v8646 = vunpack.c.l.b16 %v6857
  %v8647 = vunpack.c.h.b16 %v6857
  %v8648 = vunpack.c.l.b16 %v6858
  %v8649 = vunpack.c.h.b16 %v6858
  %v8650 = vunpack.c.l.b16 %v6859
  %v8651 = vunpack.c.h.b16 %v6859
  %v8652 = vunpack.c.l.b16 %v6860
  %v8653 = vunpack.c.h.b16 %v6860
  %v8654 = vunpack.c.l.b16 %v6861
  %v8655 = vunpack.c.h.b16 %v6861
  %v8656 = vunpack.c.l.b16 %v6862
  %v8657 = vunpack.c.h.b16 %v6862
  %v8658 = vunpack.c.l.b16 %v6863
  %v8659 = vunpack.c.h.b16 %v6863
  %v8660 = vunpack.c.l.b16 %v6864
  %v8661 = vunpack.c.h.b16 %v6864
  %v8662 = vunpack.c.l.b16 %v6865
  %v8663 = vunpack.c.h.b16 %v6865
  %v8664 = vunpack.c.l.b16 %v6866
  %v8665 = vunpack.c.h.b16 %v6866
  %v8666 = vunpack.c.l.b16 %v6867
  %v8667 = vunpack.c.h.b16 %v6867
  %v8668 = vunpack.c.l.b16 %v6868
  %v8669 = vunpack.c.h.b16 %v6868
  %v8670 = vunpack.c.l.b16 %v6869
  %v8671 = vunpack.c.h.b16 %v6869
  %v8672 = vunpack.c.l.b16 %v6870
  %v8673 = vunpack.c.h.b16 %v6870
  %v8674 = vunpack.c.l.b16 %v6871
  %v8675 = vunpack.c.h.b16 %v6871
  %v8676 = vunpack.c.l.b16 %v6872
  %v8677 = vunpack.c.h.b16 %v6872
  %v8678 = vunpack.c.l.b16 %v6873
  %v8679 = vunpack.c.h.b16 %v6873
  %v8680 = vunpack.c.l.b16 %v6874
  %v8681 = vunpack.c.h.b16 %v6874
  %v8682 = vunpack.c.l.b16 %v6875
  %v8683 = vunpack.c.h.b16 %v6875
  %v8684 = vunpack.c.l.b16 %v6876
  %v8685 = vunpack.c.h.b16 %v6876
  %v8686 = vunpack.c.l.b16 %v6877
  %v8687 = vunpack.c.h.b16 %v6877
  %v8688 = vunpack.c.l.b16 %v6878
  %v8689 = vunpack.c.h.b16 %v6878
  %v8690 = vunpack.c.l.b16 %v6879
  %v8691 = vunpack.c.h.b16 %v6879
  %v8692 = vunpack.c.l.b16 %v6880
  %v8693 = vunpack.c.h.b16 %v6880
  %v8694 = vunpack.c.l.b16 %v6881
  %v8695 = vunpack.c.h.b16 %v6881
  %v8696 = vunpack.c.l.b16 %v6882
  %v8697 = vunpack.c.h.b16 %v6882
  %v8698 = vunpack.c.l.b16 %v6883
  %v8699 = vunpack.c.h.b16 %v6883
  %v8700 = vunpack.c.l.b16 %v6884
  %v8701 = vunpack.c.h.b16 %v6884
  %v8702 = vunpack.c.l.b16 %v6885
  %v8703 = vunpack.c.h.b16 %v6885
  %v8704 = vunpack.c.l.b16 %v6886
  %v8705 = vunpack.c.h.b16 %v6886
  %v8706 = vunpack.c.l.b16 %v6887
  %v8707 = vunpack.c.h.b16 %v6887
  %v8708 = vunpack.c.l.b16 %v6888
  %v8709 = vunpack.c.h.b16 %v6888
  %v8710 = vunpack.c.l.b16 %v6889
  %v8711 = vunpack.c.h.b16 %v6889
  %v8712 = vunpack.c.l.b16 %v6890
  %v8713 = vunpack.c.h.b16 %v6890
  %v8714 = vunpack.c.l.b16 %v6891
  %v8715 = vunpack.c.h.b16 %v6891
  %v8716 = vunpack.c.l.b16 %v6892
  %v8717 = vunpack.c.h.b16 %v6892
  %v8718 = vunpack.c.l.b16 %v6893
  %v8719 = vunpack.c.h.b16 %v6893
  %v8720 = vunpack.c.l.b16 %v6894
  %v8721 = vunpack.c.h.b16 %v6894
  %v8722 = vunpack.c.l.b16 %v6895
  %v8723 = vunpack.c.h.b16 %v6895
  %v8724 = vunpack.c.l.b16 %v6896
  %v8725 = vunpack.c.h.b16 %v6896
  %v8726 = vunpack.c.l.b16 %v6897
  %v8727 = vunpack.c.h.b16 %v6897
  %v8728 = vunpack.c.l.b16 %v6898
  %v8729 = vunpack.c.h.b16 %v6898
  %v8730 = vunpack.c.l.b16 %v6899
  %v8731 = vunpack.c.h.b16 %v6899
  %v8732 = vunpack.c.l.b16 %v6900
  %v8733 = vunpack.c.h.b16 %v6900
  %v8734 = vunpack.c.l.b16 %v6901
  %v8735 = vunpack.c.h.b16 %v6901
  %v8736 = vunpack.c.l.b16 %v6902
  %v8737 = vunpack.c.h.b16 %v6902
  %v8738 = vunpack.c.l.b16 %v6903
  %v8739 = vunpack.c.h.b16 %v6903
  %v8740 = vunpack.c.l.b16 %v6904
  %v8741 = vunpack.c.h.b16 %v6904
  %v8742 = vunpack.c.l.b16 %v6905
  %v8743 = vunpack.c.h.b16 %v6905
  %v8744 = vunpack.c.l.b16 %v6906
  %v8745 = vunpack.c.h.b16 %v6906
  %v8746 = vunpack.c.l.b16 %v6907
  %v8747 = vunpack.c.h.b16 %v6907
  %v8748 = vunpack.c.l.b16 %v6908
  %v8749 = vunpack.c.h.b16 %v6908
  %v8750 = vunpack.c.l.b16 %v6909
  %v8751 = vunpack.c.h.b16 %v6909
  %v8752 = vunpack.c.l.b16 %v6910
  %v8753 = vunpack.c.h.b16 %v6910
  %v8754 = vunpack.c.l.b16 %v6911
  %v8755 = vunpack.c.h.b16 %v6911
  %v8756 = vunpack.c.l.b16 %v6912
  %v8757 = vunpack.c.h.b16 %v6912
  %v8758 = vunpack.c.l.b16 %v6913
  %v8759 = vunpack.c.h.b16 %v6913
  %v8760 = vunpack.c.l.b16 %v6914
  %v8761 = vunpack.c.h.b16 %v6914
  %v8762 = vunpack.c.l.b16 %v6915
  %v8763 = vunpack.c.h.b16 %v6915
  %v8764 = vunpack.c.l.b16 %v6916
  %v8765 = vunpack.c.h.b16 %v6916
  %v8766 = vunpack.c.l.b16 %v6917
  %v8767 = vunpack.c.h.b16 %v6917
  %v8768 = vunpack.c.l.b16 %v6918
  %v8769 = vunpack.c.h.b16 %v6918
  %v8770 = vunpack.c.l.b16 %v6919
  %v8771 = vunpack.c.h.b16 %v6919
  %v8772 = vunpack.c.l.b16 %v6920
  %v8773 = vunpack.c.h.b16 %v6920
  %v8774 = vunpack.c.l.b16 %v6921
  %v8775 = vunpack.c.h.b16 %v6921
  %v8776 = vunpack.c.l.b16 %v6922
  %v8777 = vunpack.c.h.b16 %v6922
  %v8778 = vunpack.c.l.b16 %v6923
  %v8779 = vunpack.c.h.b16 %v6923
  %v8780 = vunpack.c.l.b16 %v6924
  %v8781 = vunpack.c.h.b16 %v6924
  %v8782 = vunpack.c.l.b16 %v6925
  %v8783 = vunpack.c.h.b16 %v6925
  %v8784 = vunpack.c.l.b16 %v6926
  %v8785 = vunpack.c.h.b16 %v6926
  %v8786 = vunpack.c.l.b16 %v6927
  %v8787 = vunpack.c.h.b16 %v6927
  %v8788 = vunpack.c.l.b16 %v6928
  %v8789 = vunpack.c.h.b16 %v6928
  %v8790 = vunpack.c.l.b16 %v6929
  %v8791 = vunpack.c.h.b16 %v6929
  %v8792 = vunpack.c.l.b16 %v6930
  %v8793 = vunpack.c.h.b16 %v6930
  %v8794 = vunpack.c.l.b16 %v6931
  %v8795 = vunpack.c.h.b16 %v6931
  %v8796 = vunpack.c.l.b16 %v6932
  %v8797 = vunpack.c.h.b16 %v6932
  %v8798 = vunpack.c.l.b16 %v6933
  %v8799 = vunpack.c.h.b16 %v6933
  %v8800 = vunpack.c.l.b16 %v6934
  %v8801 = vunpack.c.h.b16 %v6934
  %v8802 = vunpack.c.l.b16 %v6935
  %v8803 = vunpack.c.h.b16 %v6935
  %v8804 = vunpack.c.l.b16 %v6936
  %v8805 = vunpack.c.h.b16 %v6936
  %v8806 = vunpack.c.l.b16 %v6937
  %v8807 = vunpack.c.h.b16 %v6937
  %v8808 = vunpack.c.l.b16 %v6938
  %v8809 = vunpack.c.h.b16 %v6938
  %v8810 = vunpack.c.l.b16 %v6939
  %v8811 = vunpack.c.h.b16 %v6939
  %v8812 = vunpack.c.l.b16 %v6940
  %v8813 = vunpack.c.h.b16 %v6940
  %v8814 = vunpack.c.l.b16 %v6941
  %v8815 = vunpack.c.h.b16 %v6941
  %v8816 = vunpack.c.l.b16 %v6942
  %v8817 = vunpack.c.h.b16 %v6942
  %v8818 = vunpack.c.l.b16 %v6943
  %v8819 = vunpack.c.h.b16 %v6943
  %v8820 = vunpack.c.l.b16 %v6944
  %v8821 = vunpack.c.h.b16 %v6944
  %v8822 = vunpack.c.l.b16 %v6945
  %v8823 = vunpack.c.h.b16 %v6945
  %v8824 = vunpack.c.l.b16 %v6946
  %v8825 = vunpack.c.h.b16 %v6946
  %v8826 = vunpack.c.l.b16 %v6947
  %v8827 = vunpack.c.h.b16 %v6947
  %v8828 = vunpack.c.l.b16 %v6948
  %v8829 = vunpack.c.h.b16 %v6948
  %v8830 = vunpack.c.l.b16 %v6949
  %v8831 = vunpack.c.h.b16 %v6949
  %v8832 = vunpack.c.l.b16 %v6950
  %v8833 = vunpack.c.h.b16 %v6950
  %v8834 = vunpack.c.l.b16 %v6951
  %v8835 = vunpack.c.h.b16 %v6951
  %v8836 = vunpack.c.l.b16 %v6952
  %v8837 = vunpack.c.h.b16 %v6952
  %v8838 = vunpack.c.l.b16 %v6953
  %v8839 = vunpack.c.h.b16 %v6953
  %v8840 = vunpack.c.l.b16 %v6954
  %v8841 = vunpack.c.h.b16 %v6954
  %v8842 = vunpack.c.l.b16 %v6955
  %v8843 = vunpack.c.h.b16 %v6955
  %v8844 = vunpack.c.l.b16 %v6956
  %v8845 = vunpack.c.h.b16 %v6956
  %v8846 = vunpack.c.l.b16 %v6957
  %v8847 = vunpack.c.h.b16 %v6957
  %v8848 = vunpack.c.l.b16 %v6958
  %v8849 = vunpack.c.h.b16 %v6958
  %v8850 = vunpack.c.l.b16 %v6959
  %v8851 = vunpack.c.h.b16 %v6959
  %v8852 = vunpack.c.l.b16 %v6960
  %v8853 = vunpack.c.h.b16 %v6960
  %v8854 = vunpack.c.l.b16 %v6961
  %v8855 = vunpack.c.h.b16 %v6961
  %v8856 = vunpack.c.l.b16 %v6962
  %v8857 = vunpack.c.h.b16 %v6962
  %v8858 = vunpack.c.l.b16 %v6963
  %v8859 = vunpack.c.h.b16 %v6963
  %v8860 = vunpack.c.l.b16 %v6964
  %v8861 = vunpack.c.h.b16 %v6964
  %v8862 = vunpack.c.l.b16 %v6965
  %v8863 = vunpack.c.h.b16 %v6965
  %v8864 = vunpack.c.l.b16 %v6966
  %v8865 = vunpack.c.h.b16 %v6966
  %v8866 = vunpack.c.l.b16 %v6967
  %v8867 = vunpack.c.h.b16 %v6967
  %v8868 = vunpack.c.l.b16 %v6968
  %v8869 = vunpack.c.h.b16 %v6968
  %v8870 = vunpack.c.l.b16 %v6969
  %v8871 = vunpack.c.h.b16 %v6969
  %v8872 = vunpack.c.l.b16 %v6970
  %v8873 = vunpack.c.h.b16 %v6970
  %v8874 = vunpack.c.l.b16 %v6971
  %v8875 = vunpack.c.h.b16 %v6971
  %v8876 = vunpack.c.l.b16 %v6972
  %v8877 = vunpack.c.h.b16 %v6972
  %v8878 = vunpack.c.l.b16 %v6973
  %v8879 = vunpack.c.h.b16 %v6973
  %v8880 = vunpack.c.l.b16 %v6974
  %v8881 = vunpack.c.h.b16 %v6974
  %v8882 = vunpack.c.l.b16 %v6975
  %v8883 = vunpack.c.h.b16 %v6975
  %v8884 = vunpack.c.l.b16 %v6976
  %v8885 = vunpack.c.h.b16 %v6976
  %v8886 = vunpack.c.l.b16 %v6977
  %v8887 = vunpack.c.h.b16 %v6977
  %v8888 = vunpack.c.l.b16 %v6978
  %v8889 = vunpack.c.h.b16 %v6978
  %v8890 = vunpack.c.l.b16 %v6979
  %v8891 = vunpack.c.h.b16 %v6979
  %v8892 = vunpack.c.l.b16 %v6980
  %v8893 = vunpack.c.h.b16 %v6980
  %v8894 = vunpack.c.l.b16 %v6981
  %v8895 = vunpack.c.h.b16 %v6981
  %v8896 = vunpack.c.l.b16 %v6982
  %v8897 = vunpack.c.h.b16 %v6982
  %v8898 = vunpack.c.l.b16 %v6983
  %v8899 = vunpack.c.h.b16 %v6983
  %v8900 = vunpack.c.l.b16 %v6984
  %v8901 = vunpack.c.h.b16 %v6984
  %v8902 = vunpack.c.l.b16 %v6985
  %v8903 = vunpack.c.h.b16 %v6985
  %v8904 = vunpack.c.l.b16 %v6986
  %v8905 = vunpack.c.h.b16 %v6986
  %v8906 = vunpack.c.l.b16 %v6987
  %v8907 = vunpack.c.h.b16 %v6987
  %v8908 = vunpack.c.l.b16 %v6988
  %v8909 = vunpack.c.h.b16 %v6988
  %v8910 = vunpack.c.l.b16 %v6989
  %v8911 = vunpack.c.h.b16 %v6989
  %v8912 = vunpack.c.l.b16 %v6990
  %v8913 = vunpack.c.h.b16 %v6990
  %v8914 = vunpack.c.l.b16 %v6991
  %v8915 = vunpack.c.h.b16 %v6991
  %v8916 = vunpack.c.l.b16 %v6992
  %v8917 = vunpack.c.h.b16 %v6992
  %v8918 = vunpack.c.l.b16 %v6993
  %v8919 = vunpack.c.h.b16 %v6993
  %v8920 = vpack.c.b16 %v7744, %v7720
  %v8921 = vpack.c.b16 %v7745, %v7721
  %v8922 = vpack.c.b16 %v7746, %v7722
  %v8923 = vpack.c.b16 %v7747, %v7723
  %v8924 = vpack.c.b16 %v7748, %v7724
  %v8925 = vpack.c.b16 %v7749, %v7725
  %v8926 = vpack.c.b16 %v7750, %v7726
  %v8927 = vpack.c.b16 %v7751, %v7727
  %v8928 = vpack.c.b16 %v7752, %v7728
  %v8929 = vpack.c.b16 %v7753, %v7729
  %v8930 = vpack.c.b16 %v7754, %v7730
  %v8931 = vpack.c.b16 %v7755, %v7731
  %v8932 = vpack.c.b16 %v7756, %v7732
  %v8933 = vpack.c.b16 %v7757, %v7733
  %v8934 = vpack.c.b16 %v7758, %v7734
  %v8935 = vpack.c.b16 %v7759, %v7735
  %v8936 = vpack.c.b16 %v7760, %v7736
  %v8937 = vpack.c.b16 %v7761, %v7737
  %v8938 = vpack.c.b16 %v7762, %v7738
  %v8939 = vpack.c.b16 %v7763, %v7739
  %v8940 = vpack.c.b16 %v7764, %v7740
  %v8941 = vpack.c.b16 %v7765, %v7741
  %v8942 = vpack.c.b16 %v7766, %v7742
  %v8943 = vpack.c.b16 %v7767, %v7743
  %v8944 = vpack.c.b16 %v7792, %v7768
  %v8945 = vpack.c.b16 %v7793, %v7769
  %v8946 = vpack.c.b16 %v7794, %v7770
  %v8947 = vpack.c.b16 %v7795, %v7771
  %v8948 = vpack.c.b16 %v7796, %v7772
  %v8949 = vpack.c.b16 %v7797, %v7773
  %v8950 = vpack.c.b16 %v7798, %v7774
  %v8951 = vpack.c.b16 %v7799, %v7775
  %v8952 = vpack.c.b16 %v7800, %v7776
  %v8953 = vpack.c.b16 %v7801, %v7777
  %v8954 = vpack.c.b16 %v7802, %v7778
  %v8955 = vpack.c.b16 %v7803, %v7779
  %v8956 = vpack.c.b16 %v7804, %v7780
  %v8957 = vpack.c.b16 %v7805, %v7781
  %v8958 = vpack.c.b16 %v7806, %v7782
  %v8959 = vpack.c.b16 %v7807, %v7783
  %v8960 = vpack.c.b16 %v7808, %v7784
  %v8961 = vpack.c.b16 %v7809, %v7785
  %v8962 = vpack.c.b16 %v7810, %v7786
  %v8963 = vpack.c.b16 %v7811, %v7787
  %v8964 = vpack.c.b16 %v7812, %v7788
  %v8965 = vpack.c.b16 %v7813, %v7789
  %v8966 = vpack.c.b16 %v7814, %v7790
  %v8967 = vpack.c.b16 %v7815, %v7791
  %v8968 = vpack.c.b16 %v7840, %v7816
  %v8969 = vpack.c.b16 %v7841, %v7817
  %v8970 = vpack.c.b16 %v7842, %v7818
  %v8971 = vpack.c.b16 %v7843, %v7819
  %v8972 = vpack.c.b16 %v7844, %v7820
  %v8973 = vpack.c.b16 %v7845, %v7821
  %v8974 = vpack.c.b16 %v7846, %v7822
  %v8975 = vpack.c.b16 %v7847, %v7823
  %v8976 = vpack.c.b16 %v7848, %v7824
  %v8977 = vpack.c.b16 %v7849, %v7825
  %v8978 = vpack.c.b16 %v7850, %v7826
  %v8979 = vpack.c.b16 %v7851, %v7827
  %v8980 = vpack.c.b16 %v7852, %v7828
  %v8981 = vpack.c.b16 %v7853, %v7829
  %v8982 = vpack.c.b16 %v7854, %v7830
  %v8983 = vpack.c.b16 %v7855, %v7831
  %v8984 = vpack.c.b16 %v7856, %v7832
  %v8985 = vpack.c.b16 %v7857, %v7833
  %v8986 = vpack.c.b16 %v7858, %v7834
  %v8987 = vpack.c.b16 %v7859, %v7835
  %v8988 = vpack.c.b16 %v7860, %v7836
  %v8989 = vpack.c.b16 %v7861, %v7837
  %v8990 = vpack.c.b16 %v7862, %v7838
  %v8991 = vpack.c.b16 %v7863, %v7839
  %v8992 = vpack.c.b16 %v7888, %v7864
  %v8993 = vpack.c.b16 %v7889, %v7865
  %v8994 = vpack.c.b16 %v7890, %v7866
  %v8995 = vpack.c.b16 %v7891, %v7867
  %v8996 = vpack.c.b16 %v7892, %v7868
  %v8997 = vpack.c.b16 %v7893, %v7869
  %v8998 = vpack.c.b16 %v7894, %v7870
  %v8999 = vpack.c.b16 %v7895, %v7871
  %v9000 = vpack.c.b16 %v7896, %v7872
  %v9001 = vpack.c.b16 %v7897, %v7873
  %v9002 = vpack.c.b16 %v7898, %v7874
  %v9003 = vpack.c.b16 %v7899, %v7875
  %v9004 = vpack.c.b16 %v7900, %v7876
  %v9005 = vpack.c.b16 %v7901, %v7877
  %v9006 = vpack.c.b16 %v7902, %v7878
  %v9007 = vpack.c.b16 %v7903, %v7879
  %v9008 = vpack.c.b16 %v7904, %v7880
  %v9009 = vpack.c.b16 %v7905, %v7881
  %v9010 = vpack.c.b16 %v7906, %v7882
  %v9011 = vpack.c.b16 %v7907, %v7883
  %v9012 = vpack.c.b16 %v7908, %v7884
  %v9013 = vpack.c.b16 %v7909, %v7885
  %v9014 = vpack.c.b16 %v7910, %v7886
  %v9015 = vpack.c.b16 %v7911, %v7887
  %v9016 = vpack.c.b16 %v7936, %v7912
  %v9017 = vpack.c.b16 %v7937, %v7913
  %v9018 = vpack.c.b16 %v7938, %v7914
  %v9019 = vpack.c.b16 %v7939, %v7915
  %v9020 = vpack.c.b16 %v7940, %v7916
  %v9021 = vpack.c.b16 %v7941, %v7917
  %v9022 = vpack.c.b16 %v7942, %v7918
  %v9023 = vpack.c.b16 %v7943, %v7919
  %v9024 = vpack.c.b16 %v7944, %v7920
  %v9025 = vpack.c.b16 %v7945, %v7921
  %v9026 = vpack.c.b16 %v7946, %v7922
  %v9027 = vpack.c.b16 %v7947, %v7923
  %v9028 = vpack.c.b16 %v7948, %v7924
  %v9029 = vpack.c.b16 %v7949, %v7925
  %v9030 = vpack.c.b16 %v7950, %v7926
  %v9031 = vpack.c.b16 %v7951, %v7927
  %v9032 = vpack.c.b16 %v7952, %v7928
  %v9033 = vpack.c.b16 %v7953, %v7929
  %v9034 = vpack.c.b16 %v7954, %v7930
  %v9035 = vpack.c.b16 %v7955, %v7931
  %v9036 = vpack.c.b16 %v7956, %v7932
  %v9037 = vpack.c.b16 %v7957, %v7933
  %v9038 = vpack.c.b16 %v7958, %v7934
  %v9039 = vpack.c.b16 %v7959, %v7935
  %v9040 = vpack.c.b16 %v7984, %v7960
  %v9041 = vpack.c.b16 %v7985, %v7961
  %v9042 = vpack.c.b16 %v7986, %v7962
  %v9043 = vpack.c.b16 %v7987, %v7963
  %v9044 = vpack.c.b16 %v7988, %v7964
  %v9045 = vpack.c.b16 %v7989, %v7965
  %v9046 = vpack.c.b16 %v7990, %v7966
  %v9047 = vpack.c.b16 %v7991, %v7967
  %v9048 = vpack.c.b16 %v7992, %v7968
  %v9049 = vpack.c.b16 %v7993, %v7969
  %v9050 = vpack.c.b16 %v7994, %v7970
  %v9051 = vpack.c.b16 %v7995, %v7971
  %v9052 = vpack.c.b16 %v7996, %v7972
  %v9053 = vpack.c.b16 %v7997, %v7973
  %v9054 = vpack.c.b16 %v7998, %v7974
  %v9055 = vpack.c.b16 %v7999, %v7975
  %v9056 = vpack.c.b16 %v8000, %v7976
  %v9057 = vpack.c.b16 %v8001, %v7977
  %v9058 = vpack.c.b16 %v8002, %v7978
  %v9059 = vpack.c.b16 %v8003, %v7979
  %v9060 = vpack.c.b16 %v8004, %v7980
  %v9061 = vpack.c.b16 %v8005, %v7981
  %v9062 = vpack.c.b16 %v8006, %v7982
  %v9063 = vpack.c.b16 %v8007, %v7983
  %v9064 = vpack.c.b16 %v8032, %v8008
  %v9065 = vpack.c.b16 %v8033, %v8009
  %v9066 = vpack.c.b16 %v8034, %v8010
  %v9067 = vpack.c.b16 %v8035, %v8011
  %v9068 = vpack.c.b16 %v8036, %v8012
  %v9069 = vpack.c.b16 %v8037, %v8013
  %v9070 = vpack.c.b16 %v8038, %v8014
  %v9071 = vpack.c.b16 %v8039, %v8015
  %v9072 = vpack.c.b16 %v8040, %v8016
  %v9073 = vpack.c.b16 %v8041, %v8017
  %v9074 = vpack.c.b16 %v8042, %v8018
  %v9075 = vpack.c.b16 %v8043, %v8019
  %v9076 = vpack.c.b16 %v8044, %v8020
  %v9077 = vpack.c.b16 %v8045, %v8021
  %v9078 = vpack.c.b16 %v8046, %v8022
  %v9079 = vpack.c.b16 %v8047, %v8023
  %v9080 = vpack.c.b16 %v8048, %v8024
  %v9081 = vpack.c.b16 %v8049, %v8025
  %v9082 = vpack.c.b16 %v8050, %v8026
  %v9083 = vpack.c.b16 %v8051, %v8027
  %v9084 = vpack.c.b16 %v8052, %v8028
  %v9085 = vpack.c.b16 %v8053, %v8029
  %v9086 = vpack.c.b16 %v8054, %v8030
  %v9087 = vpack.c.b16 %v8055, %v8031
  %v9088 = vpack.c.b16 %v8080, %v8056
  %v9089 = vpack.c.b16 %v8081, %v8057
  %v9090 = vpack.c.b16 %v8082, %v8058
  %v9091 = vpack.c.b16 %v8083, %v8059
  %v9092 = vpack.c.b16 %v8084, %v8060
  %v9093 = vpack.c.b16 %v8085, %v8061
  %v9094 = vpack.c.b16 %v8086, %v8062
  %v9095 = vpack.c.b16 %v8087, %v8063
  %v9096 = vpack.c.b16 %v8088, %v8064
  %v9097 = vpack.c.b16 %v8089, %v8065
  %v9098 = vpack.c.b16 %v8090, %v8066
  %v9099 = vpack.c.b16 %v8091, %v8067
  %v9100 = vpack.c.b16 %v8092, %v8068
  %v9101 = vpack.c.b16 %v8093, %v8069
  %v9102 = vpack.c.b16 %v8094, %v8070
  %v9103 = vpack.c.b16 %v8095, %v8071
  %v9104 = vpack.c.b16 %v8096, %v8072
  %v9105 = vpack.c.b16 %v8097, %v8073
  %v9106 = vpack.c.b16 %v8098, %v8074
  %v9107 = vpack.c.b16 %v8099, %v8075
  %v9108 = vpack.c.b16 %v8100, %v8076
  %v9109 = vpack.c.b16 %v8101, %v8077
  %v9110 = vpack.c.b16 %v8102, %v8078
  %v9111 = vpack.c.b16 %v8103, %v8079
  %v9112 = vpack.c.b16 %v8128, %v8104
  %v9113 = vpack.c.b16 %v8129, %v8105
  %v9114 = vpack.c.b16 %v8130, %v8106
  %v9115 = vpack.c.b16 %v8131, %v8107
  %v9116 = vpack.c.b16 %v8132, %v8108
  %v9117 = vpack.c.b16 %v8133, %v8109
  %v9118 = vpack.c.b16 %v8134, %v8110
  %v9119 = vpack.c.b16 %v8135, %v8111
  %v9120 = vpack.c.b16 %v8136, %v8112
  %v9121 = vpack.c.b16 %v8137, %v8113
  %v9122 = vpack.c.b16 %v8138, %v8114
  %v9123 = vpack.c.b16 %v8139, %v8115
  %v9124 = vpack.c.b16 %v8140, %v8116
  %v9125 = vpack.c.b16 %v8141, %v8117
  %v9126 = vpack.c.b16 %v8142, %v8118
  %v9127 = vpack.c.b16 %v8143, %v8119
  %v9128 = vpack.c.b16 %v8144, %v8120
  %v9129 = vpack.c.b16 %v8145, %v8121
  %v9130 = vpack.c.b16 %v8146, %v8122
  %v9131 = vpack.c.b16 %v8147, %v8123
  %v9132 = vpack.c.b16 %v8148, %v8124
  %v9133 = vpack.c.b16 %v8149, %v8125
  %v9134 = vpack.c.b16 %v8150, %v8126
  %v9135 = vpack.c.b16 %v8151, %v8127
  %v9136 = vpack.c.b16 %v8176, %v8152
  %v9137 = vpack.c.b16 %v8177, %v8153
  %v9138 = vpack.c.b16 %v8178, %v8154
  %v9139 = vpack.c.b16 %v8179, %v8155
  %v9140 = vpack.c.b16 %v8180, %v8156
  %v9141 = vpack.c.b16 %v8181, %v8157
  %v9142 = vpack.c.b16 %v8182, %v8158
  %v9143 = vpack.c.b16 %v8183, %v8159
  %v9144 = vpack.c.b16 %v8184, %v8160
  %v9145 = vpack.c.b16 %v8185, %v8161
  %v9146 = vpack.c.b16 %v8186, %v8162
  %v9147 = vpack.c.b16 %v8187, %v8163
  %v9148 = vpack.c.b16 %v8188, %v8164
  %v9149 = vpack.c.b16 %v8189, %v8165
  %v9150 = vpack.c.b16 %v8190, %v8166
  %v9151 = vpack.c.b16 %v8191, %v8167
  %v9152 = vpack.c.b16 %v8192, %v8168
  %v9153 = vpack.c.b16 %v8193, %v8169
  %v9154 = vpack.c.b16 %v8194, %v8170
  %v9155 = vpack.c.b16 %v8195, %v8171
  %v9156 = vpack.c.b16 %v8196, %v8172
  %v9157 = vpack.c.b16 %v8197, %v8173
  %v9158 = vpack.c.b16 %v8198, %v8174
  %v9159 = vpack.c.b16 %v8199, %v8175
  %v9160 = vpack.c.b16 %v8224, %v8200
  %v9161 = vpack.c.b16 %v8225, %v8201
  %v9162 = vpack.c.b16 %v8226, %v8202
  %v9163 = vpack.c.b16 %v8227, %v8203
  %v9164 = vpack.c.b16 %v8228, %v8204
  %v9165 = vpack.c.b16 %v8229, %v8205
  %v9166 = vpack.c.b16 %v8230, %v8206
  %v9167 = vpack.c.b16 %v8231, %v8207
  %v9168 = vpack.c.b16 %v8232, %v8208
  %v9169 = vpack.c.b16 %v8233, %v8209
  %v9170 = vpack.c.b16 %v8234, %v8210
  %v9171 = vpack.c.b16 %v8235, %v8211
  %v9172 = vpack.c.b16 %v8236, %v8212
  %v9173 = vpack.c.b16 %v8237, %v8213
  %v9174 = vpack.c.b16 %v8238, %v8214
  %v9175 = vpack.c.b16 %v8239, %v8215
  %v9176 = vpack.c.b16 %v8240, %v8216
  %v9177 = vpack.c.b16 %v8241, %v8217
  %v9178 = vpack.c.b16 %v8242, %v8218
  %v9179 = vpack.c.b16 %v8243, %v8219
  %v9180 = vpack.c.b16 %v8244, %v8220
  %v9181 = vpack.c.b16 %v8245, %v8221
  %v9182 = vpack.c.b16 %v8246, %v8222
  %v9183 = vpack.c.b16 %v8247, %v8223
  %v9184 = vpack.c.b16 %v8272, %v8248
  %v9185 = vpack.c.b16 %v8273, %v8249
  %v9186 = vpack.c.b16 %v8274, %v8250
  %v9187 = vpack.c.b16 %v8275, %v8251
  %v9188 = vpack.c.b16 %v8276, %v8252
  %v9189 = vpack.c.b16 %v8277, %v8253
  %v9190 = vpack.c.b16 %v8278, %v8254
  %v9191 = vpack.c.b16 %v8279, %v8255
  %v9192 = vpack.c.b16 %v8280, %v8256
  %v9193 = vpack.c.b16 %v8281, %v8257
  %v9194 = vpack.c.b16 %v8282, %v8258
  %v9195 = vpack.c.b16 %v8283, %v8259
  %v9196 = vpack.c.b16 %v8284, %v8260
  %v9197 = vpack.c.b16 %v8285, %v8261
  %v9198 = vpack.c.b16 %v8286, %v8262
  %v9199 = vpack.c.b16 %v8287, %v8263
  %v9200 = vpack.c.b16 %v8288, %v8264
  %v9201 = vpack.c.b16 %v8289, %v8265
  %v9202 = vpack.c.b16 %v8290, %v8266
  %v9203 = vpack.c.b16 %v8291, %v8267
  %v9204 = vpack.c.b16 %v8292, %v8268
  %v9205 = vpack.c.b16 %v8293, %v8269
  %v9206 = vpack.c.b16 %v8294, %v8270
  %v9207 = vpack.c.b16 %v8295, %v8271
  %v9208 = vpack.c.b16 %v8320, %v8296
  %v9209 = vpack.c.b16 %v8321, %v8297
  %v9210 = vpack.c.b16 %v8322, %v8298
  %v9211 = vpack.c.b16 %v8323, %v8299
  %v9212 = vpack.c.b16 %v8324, %v8300
  %v9213 = vpack.c.b16 %v8325, %v8301
  %v9214 = vpack.c.b16 %v8326, %v8302
  %v9215 = vpack.c.b16 %v8327, %v8303
  %v9216 = vpack.c.b16 %v8328, %v8304
  %v9217 = vpack.c.b16 %v8329, %v8305
  %v9218 = vpack.c.b16 %v8330, %v8306
  %v9219 = vpack.c.b16 %v8331, %v8307
  %v9220 = vpack.c.b16 %v8332, %v8308
  %v9221 = vpack.c.b16 %v8333, %v8309
  %v9222 = vpack.c.b16 %v8334, %v8310
  %v9223 = vpack.c.b16 %v8335, %v8311
  %v9224 = vpack.c.b16 %v8336, %v8312
  %v9225 = vpack.c.b16 %v8337, %v8313
  %v9226 = vpack.c.b16 %v8338, %v8314
  %v9227 = vpack.c.b16 %v8339, %v8315
  %v9228 = vpack.c.b16 %v8340, %v8316
  %v9229 = vpack.c.b16 %v8341, %v8317
  %v9230 = vpack.c.b16 %v8342, %v8318
  %v9231 = vpack.c.b16 %v8343, %v8319
  %v9232 = vpack.c.b16 %v8368, %v8344
  %v9233 = vpack.c.b16 %v8369, %v8345
  %v9234 = vpack.c.b16 %v8370, %v8346
  %v9235 = vpack.c.b16 %v8371, %v8347
  %v9236 = vpack.c.b16 %v8372, %v8348
  %v9237 = vpack.c.b16 %v8373, %v8349
  %v9238 = vpack.c.b16 %v8374, %v8350
  %v9239 = vpack.c.b16 %v8375, %v8351
  %v9240 = vpack.c.b16 %v8376, %v8352
  %v9241 = vpack.c.b16 %v8377, %v8353
  %v9242 = vpack.c.b16 %v8378, %v8354
  %v9243 = vpack.c.b16 %v8379, %v8355
  %v9244 = vpack.c.b16 %v8380, %v8356
  %v9245 = vpack.c.b16 %v8381, %v8357
  %v9246 = vpack.c.b16 %v8382, %v8358
  %v9247 = vpack.c.b16 %v8383, %v8359
  %v9248 = vpack.c.b16 %v8384, %v8360
  %v9249 = vpack.c.b16 %v8385, %v8361
  %v9250 = vpack.c.b16 %v8386, %v8362
  %v9251 = vpack.c.b16 %v8387, %v8363
  %v9252 = vpack.c.b16 %v8388, %v8364
  %v9253 = vpack.c.b16 %v8389, %v8365
  %v9254 = vpack.c.b16 %v8390, %v8366
  %v9255 = vpack.c.b16 %v8391, %v8367
  %v9256 = vpack.c.b16 %v8416, %v8392
  %v9257 = vpack.c.b16 %v8417, %v8393
  %v9258 = vpack.c.b16 %v8418, %v8394
  %v9259 = vpack.c.b16 %v8419, %v8395
  %v9260 = vpack.c.b16 %v8420, %v8396
  %v9261 = vpack.c.b16 %v8421, %v8397
  %v9262 = vpack.c.b16 %v8422, %v8398
  %v9263 = vpack.c.b16 %v8423, %v8399
  %v9264 = vpack.c.b16 %v8424, %v8400
  %v9265 = vpack.c.b16 %v8425, %v8401
  %v9266 = vpack.c.b16 %v8426, %v8402
  %v9267 = vpack.c.b16 %v8427, %v8403
  %v9268 = vpack.c.b16 %v8428, %v8404
  %v9269 = vpack.c.b16 %v8429, %v8405
  %v9270 = vpack.c.b16 %v8430, %v8406
  %v9271 = vpack.c.b16 %v8431, %v8407
  %v9272 = vpack.c.b16 %v8432, %v8408
  %v9273 = vpack.c.b16 %v8433, %v8409
  %v9274 = vpack.c.b16 %v8434, %v8410
  %v9275 = vpack.c.b16 %v8435, %v8411
  %v9276 = vpack.c.b16 %v8436, %v8412
  %v9277 = vpack.c.b16 %v8437, %v8413
  %v9278 = vpack.c.b16 %v8438, %v8414
  %v9279 = vpack.c.b16 %v8439, %v8415
  %v9280 = vpack.c.b16 %v8464, %v8440
  %v9281 = vpack.c.b16 %v8465, %v8441
  %v9282 = vpack.c.b16 %v8466, %v8442
  %v9283 = vpack.c.b16 %v8467, %v8443
  %v9284 = vpack.c.b16 %v8468, %v8444
  %v9285 = vpack.c.b16 %v8469, %v8445
  %v9286 = vpack.c.b16 %v8470, %v8446
  %v9287 = vpack.c.b16 %v8471, %v8447
  %v9288 = vpack.c.b16 %v8472, %v8448
  %v9289 = vpack.c.b16 %v8473, %v8449
  %v9290 = vpack.c.b16 %v8474, %v8450
  %v9291 = vpack.c.b16 %v8475, %v8451
  %v9292 = vpack.c.b16 %v8476, %v8452
  %v9293 = vpack.c.b16 %v8477, %v8453
  %v9294 = vpack.c.b16 %v8478, %v8454
  %v9295 = vpack.c.b16 %v8479, %v8455
  %v9296 = vpack.c.b16 %v8480, %v8456
  %v9297 = vpack.c.b16 %v8481, %v8457
  %v9298 = vpack.c.b16 %v8482, %v8458
  %v9299 = vpack.c.b16 %v8483, %v8459
  %v9300 = vpack.c.b16 %v8484, %v8460
  %v9301 = vpack.c.b16 %v8485, %v8461
  %v9302 = vpack.c.b16 %v8486, %v8462
  %v9303 = vpack.c.b16 %v8487, %v8463
  %v9304 = vpack.c.b16 %v8512, %v8488
  %v9305 = vpack.c.b16 %v8513, %v8489
  %v9306 = vpack.c.b16 %v8514, %v8490
  %v9307 = vpack.c.b16 %v8515, %v8491
  %v9308 = vpack.c.b16 %v8516, %v8492
  %v9309 = vpack.c.b16 %v8517, %v8493
  %v9310 = vpack.c.b16 %v8518, %v8494
  %v9311 = vpack.c.b16 %v8519, %v8495
  %v9312 = vpack.c.b16 %v8520, %v8496
  %v9313 = vpack.c.b16 %v8521, %v8497
  %v9314 = vpack.c.b16 %v8522, %v8498
  %v9315 = vpack.c.b16 %v8523, %v8499
  %v9316 = vpack.c.b16 %v8524, %v8500
  %v9317 = vpack.c.b16 %v8525, %v8501
  %v9318 = vpack.c.b16 %v8526, %v8502
  %v9319 = vpack.c.b16 %v8527, %v8503
  %v9320 = vpack.c.b16 %v8528, %v8504
  %v9321 = vpack.c.b16 %v8529, %v8505
  %v9322 = vpack.c.b16 %v8530, %v8506
  %v9323 = vpack.c.b16 %v8531, %v8507
  %v9324 = vpack.c.b16 %v8532, %v8508
  %v9325 = vpack.c.b16 %v8533, %v8509
  %v9326 = vpack.c.b16 %v8534, %v8510
  %v9327 = vpack.c.b16 %v8535, %v8511
  %v9328 = vpack.c.b16 %v8560, %v8536
  %v9329 = vpack.c.b16 %v8561, %v8537
  %v9330 = vpack.c.b16 %v8562, %v8538
  %v9331 = vpack.c.b16 %v8563, %v8539
  %v9332 = vpack.c.b16 %v8564, %v8540
  %v9333 = vpack.c.b16 %v8565, %v8541
  %v9334 = vpack.c.b16 %v8566, %v8542
  %v9335 = vpack.c.b16 %v8567, %v8543
  %v9336 = vpack.c.b16 %v8568, %v8544
  %v9337 = vpack.c.b16 %v8569, %v8545
  %v9338 = vpack.c.b16 %v8570, %v8546
  %v9339 = vpack.c.b16 %v8571, %v8547
  %v9340 = vpack.c.b16 %v8572, %v8548
  %v9341 = vpack.c.b16 %v8573, %v8549
  %v9342 = vpack.c.b16 %v8574, %v8550
  %v9343 = vpack.c.b16 %v8575, %v8551
  %v9344 = vpack.c.b16 %v8576, %v8552
  %v9345 = vpack.c.b16 %v8577, %v8553
  %v9346 = vpack.c.b16 %v8578, %v8554
  %v9347 = vpack.c.b16 %v8579, %v8555
  %v9348 = vpack.c.b16 %v8580, %v8556
  %v9349 = vpack.c.b16 %v8581, %v8557
  %v9350 = vpack.c.b16 %v8582, %v8558
  %v9351 = vpack.c.b16 %v8583, %v8559
  %v9352 = vpack.c.b16 %v8608, %v8584
  %v9353 = vpack.c.b16 %v8609, %v8585
  %v9354 = vpack.c.b16 %v8610, %v8586
  %v9355 = vpack.c.b16 %v8611, %v8587
  %v9356 = vpack.c.b16 %v8612, %v8588
  %v9357 = vpack.c.b16 %v8613, %v8589
  %v9358 = vpack.c.b16 %v8614, %v8590
  %v9359 = vpack.c.b16 %v8615, %v8591
  %v9360 = vpack.c.b16 %v8616, %v8592
  %v9361 = vpack.c.b16 %v8617, %v8593
  %v9362 = vpack.c.b16 %v8618, %v8594
  %v9363 = vpack.c.b16 %v8619, %v8595
  %v9364 = vpack.c.b16 %v8620, %v8596
  %v9365 = vpack.c.b16 %v8621, %v8597
  %v9366 = vpack.c.b16 %v8622, %v8598
  %v9367 = vpack.c.b16 %v8623, %v8599
  %v9368 = vpack.c.b16 %v8624, %v8600
  %v9369 = vpack.c.b16 %v8625, %v8601
  %v9370 = vpack.c.b16 %v8626, %v8602
  %v9371 = vpack.c.b16 %v8627, %v8603
  %v9372 = vpack.c.b16 %v8628, %v8604
  %v9373 = vpack.c.b16 %v8629, %v8605
  %v9374 = vpack.c.b16 %v8630, %v8606
  %v9375 = vpack.c.b16 %v8631, %v8607
  %v9376 = vpack.c.b16 %v8656, %v8632
  %v9377 = vpack.c.b16 %v8657, %v8633
  %v9378 = vpack.c.b16 %v8658, %v8634
  %v9379 = vpack.c.b16 %v8659, %v8635
  %v9380 = vpack.c.b16 %v8660, %v8636
  %v9381 = vpack.c.b16 %v8661, %v8637
  %v9382 = vpack.c.b16 %v8662, %v8638
  %v9383 = vpack.c.b16 %v8663, %v8639
  %v9384 = vpack.c.b16 %v8664, %v8640
  %v9385 = vpack.c.b16 %v8665, %v8641
  %v9386 = vpack.c.b16 %v8666, %v8642
  %v9387 = vpack.c.b16 %v8667, %v8643
  %v9388 = vpack.c.b16 %v8668, %v8644
  %v9389 = vpack.c.b16 %v8669, %v8645
  %v9390 = vpack.c.b16 %v8670, %v8646
  %v9391 = vpack.c.b16 %v8671, %v8647
  %v9392 = vpack.c.b16 %v8672, %v8648
  %v9393 = vpack.c.b16 %v8673, %v8649
  %v9394 = vpack.c.b16 %v8674, %v8650
  %v9395 = vpack.c.b16 %v8675, %v8651
  %v9396 = vpack.c.b16 %v8676, %v8652
  %v9397 = vpack.c.b16 %v8677, %v8653
  %v9398 = vpack.c.b16 %v8678, %v8654
  %v9399 = vpack.c.b16 %v8679, %v8655
  %v9400 = vpack.c.b16 %v8704, %v8680
  %v9401 = vpack.c.b16 %v8705, %v8681
  %v9402 = vpack.c.b16 %v8706, %v8682
  %v9403 = vpack.c.b16 %v8707, %v8683
  %v9404 = vpack.c.b16 %v8708, %v8684
  %v9405 = vpack.c.b16 %v8709, %v8685
  %v9406 = vpack.c.b16 %v8710, %v8686
  %v9407 = vpack.c.b16 %v8711, %v8687
  %v9408 = vpack.c.b16 %v8712, %v8688
  %v9409 = vpack.c.b16 %v8713, %v8689
  %v9410 = vpack.c.b16 %v8714, %v8690
  %v9411 = vpack.c.b16 %v8715, %v8691
  %v9412 = vpack.c.b16 %v8716, %v8692
  %v9413 = vpack.c.b16 %v8717, %v8693
  %v9414 = vpack.c.b16 %v8718, %v8694
  %v9415 = vpack.c.b16 %v8719, %v8695
  %v9416 = vpack.c.b16 %v8720, %v8696
  %v9417 = vpack.c.b16 %v8721, %v8697
  %v9418 = vpack.c.b16 %v8722, %v8698
  %v9419 = vpack.c.b16 %v8723, %v8699
  %v9420 = vpack.c.b16 %v8724, %v8700
  %v9421 = vpack.c.b16 %v8725, %v8701
  %v9422 = vpack.c.b16 %v8726, %v8702
  %v9423 = vpack.c.b16 %v8727, %v8703
  %v9424 = vpack.c.b16 %v8752, %v8728
  %v9425 = vpack.c.b16 %v8753, %v8729
  %v9426 = vpack.c.b16 %v8754, %v8730
  %v9427 = vpack.c.b16 %v8755, %v8731
  %v9428 = vpack.c.b16 %v8756, %v8732
  %v9429 = vpack.c.b16 %v8757, %v8733
  %v9430 = vpack.c.b16 %v8758, %v8734
  %v9431 = vpack.c.b16 %v8759, %v8735
  %v9432 = vpack.c.b16 %v8760, %v8736
  %v9433 = vpack.c.b16 %v8761, %v8737
  %v9434 = vpack.c.b16 %v8762, %v8738
  %v9435 = vpack.c.b16 %v8763, %v8739
  %v9436 = vpack.c.b16 %v8764, %v8740
  %v9437 = vpack.c.b16 %v8765, %v8741
  %v9438 = vpack.c.b16 %v8766, %v8742
  %v9439 = vpack.c.b16 %v8767, %v8743
  %v9440 = vpack.c.b16 %v8768, %v8744
  %v9441 = vpack.c.b16 %v8769, %v8745
  %v9442 = vpack.c.b16 %v8770, %v8746
  %v9443 = vpack.c.b16 %v8771, %v8747
  %v9444 = vpack.c.b16 %v8772, %v8748
  %v9445 = vpack.c.b16 %v8773, %v8749
  %v9446 = vpack.c.b16 %v8774, %v8750
  %v9447 = vpack.c.b16 %v8775, %v8751
  %v9448 = vpack.c.b16 %v8800, %v8776
  %v9449 = vpack.c.b16 %v8801, %v8777
  %v9450 = vpack.c.b16 %v8802, %v8778
  %v9451 = vpack.c.b16 %v8803, %v8779
  %v9452 = vpack.c.b16 %v8804, %v8780
  %v9453 = vpack.c.b16 %v8805, %v8781
  %v9454 = vpack.c.b16 %v8806, %v8782
  %v9455 = vpack.c.b16 %v8807, %v8783
  %v9456 = vpack.c.b16 %v8808, %v8784
  %v9457 = vpack.c.b16 %v8809, %v8785
  %v9458 = vpack.c.b16 %v8810, %v8786
  %v9459 = vpack.c.b16 %v8811, %v8787
  %v9460 = vpack.c.b16 %v8812, %v8788
  %v9461 = vpack.c.b16 %v8813, %v8789
  %v9462 = vpack.c.b16 %v8814, %v8790
  %v9463 = vpack.c.b16 %v8815, %v8791
  %v9464 = vpack.c.b16 %v8816, %v8792
  %v9465 = vpack.c.b16 %v8817, %v8793
  %v9466 = vpack.c.b16 %v8818, %v8794
  %v9467 = vpack.c.b16 %v8819, %v8795
  %v9468 = vpack.c.b16 %v8820, %v8796
  %v9469 = vpack.c.b16 %v8821, %v8797
  %v9470 = vpack.c.b16 %v8822, %v8798
  %v9471 = vpack.c.b16 %v8823, %v8799
  %v9472 = vpack.c.b16 %v8848, %v8824
  %v9473 = vpack.c.b16 %v8849, %v8825
  %v9474 = vpack.c.b16 %v8850, %v8826
  %v9475 = vpack.c.b16 %v8851, %v8827
  %v9476 = vpack.c.b16 %v8852, %v8828
  %v9477 = vpack.c.b16 %v8853, %v8829
  %v9478 = vpack.c.b16 %v8854, %v8830
  %v9479 = vpack.c.b16 %v8855, %v8831
  %v9480 = vpack.c.b16 %v8856, %v8832
  %v9481 = vpack.c.b16 %v8857, %v8833
  %v9482 = vpack.c.b16 %v8858, %v8834
  %v9483 = vpack.c.b16 %v8859, %v8835
  %v9484 = vpack.c.b16 %v8860, %v8836
  %v9485 = vpack.c.b16 %v8861, %v8837
  %v9486 = vpack.c.b16 %v8862, %v8838
  %v9487 = vpack.c.b16 %v8863, %v8839
  %v9488 = vpack.c.b16 %v8864, %v8840
  %v9489 = vpack.c.b16 %v8865, %v8841
  %v9490 = vpack.c.b16 %v8866, %v8842
  %v9491 = vpack.c.b16 %v8867, %v8843
  %v9492 = vpack.c.b16 %v8868, %v8844
  %v9493 = vpack.c.b16 %v8869, %v8845
  %v9494 = vpack.c.b16 %v8870, %v8846
  %v9495 = vpack.c.b16 %v8871, %v8847
  %v9496 = vpack.c.b16 %v8896, %v8872
  %v9497 = vpack.c.b16 %v8897, %v8873
  %v9498 = vpack.c.b16 %v8898, %v8874
  %v9499 = vpack.c.b16 %v8899, %v8875
  %v9500 = vpack.c.b16 %v8900, %v8876
  %v9501 = vpack.c.b16 %v8901, %v8877
  %v9502 = vpack.c.b16 %v8902, %v8878
  %v9503 = vpack.c.b16 %v8903, %v8879
  %v9504 = vpack.c.b16 %v8904, %v8880
  %v9505 = vpack.c.b16 %v8905, %v8881
  %v9506 = vpack.c.b16 %v8906, %v8882
  %v9507 = vpack.c.b16 %v8907, %v8883
  %v9508 = vpack.c.b16 %v8908, %v8884
  %v9509 = vpack.c.b16 %v8909, %v8885
  %v9510 = vpack.c.b16 %v8910, %v8886
  %v9511 = vpack.c.b16 %v8911, %v8887
  %v9512 = vpack.c.b16 %v8912, %v8888
  %v9513 = vpack.c.b16 %v8913, %v8889
  %v9514 = vpack.c.b16 %v8914, %v8890
  %v9515 = vpack.c.b16 %v8915, %v8891
  %v9516 = vpack.c.b16 %v8916, %v8892
  %v9517 = vpack.c.b16 %v8917, %v8893
  %v9518 = vpack.c.b16 %v8918, %v8894
  %v9519 = vpack.c.b16 %v8919, %v8895
  %v10121 = vsel %vm5965, %v6393, 0
  %10123 = vmatprep.subr.bf16.mxu0 %v9089
  %10124 = vmatpush1.bf16.msra.mxu0 %v9088
  %10125 = vmatprep.subr.bf16.mxu0 %v9065
  %10126 = vmatpush1.bf16.msra.mxu0 %v9064
  %10127 = vmatprep.subr.bf16.mxu0 %v9041
  %10128 = vmatpush1.bf16.msra.mxu0 %v9040
  %10129 = vmatprep.subr.bf16.mxu0 %v9017
  %10130 = vmatpush1.bf16.msra.mxu0 %v9016
  %10131 = vmatprep.subr.bf16.mxu0 %v8993
  %10132 = vmatpush1.bf16.msra.mxu0 %v8992
  %10133 = vmatprep.subr.bf16.mxu0 %v8969
  %10134 = vmatpush1.bf16.msra.mxu0 %v8968
  %10135 = vmatprep.subr.bf16.mxu0 %v8945
  %10136 = vmatpush1.bf16.msra.mxu0 %v8944
  %10137 = vmatprep.subr.bf16.mxu0 %v8921
  %10138 = vmatpush1.bf16.msra.mxu0 %v8920
  %10139 = vmatprep.subr.bf16.mxu0 %v9281
  %10140 = vmatpush2.bf16.msra.mxu0 %v9280
  %10141 = vmatprep.subr.bf16.mxu0 %v9257
  %10142 = vmatpush2.bf16.msra.mxu0 %v9256
  %10143 = vmatprep.subr.bf16.mxu0 %v9233
  %10144 = vmatpush2.bf16.msra.mxu0 %v9232
  %10145 = vmatprep.subr.bf16.mxu0 %v9209
  %10146 = vmatpush2.bf16.msra.mxu0 %v9208
  %10147 = vmatprep.subr.bf16.mxu0 %v9185
  %10148 = vmatpush2.bf16.msra.mxu0 %v9184
  %10149 = vmatprep.subr.bf16.mxu0 %v9161
  %10150 = vmatpush2.bf16.msra.mxu0 %v9160
  %10151 = vmatprep.subr.bf16.mxu0 %v9137
  %10152 = vmatpush2.bf16.msra.mxu0 %v9136
  %10153 = vmatprep.subr.bf16.mxu0 %v9113
  %10154 = vmatpush2.bf16.msra.mxu0 %v9112
  %10155 = vmatprep.mubr.bf16.mxu0 %v6391
  %10156 = vmatmul.mubr.bf16.gmra.mxu0 %v6390
  %v10157 = vpop.f32.mrf.mxu0
  %v10158 = vadd.f32 %v7003, %v10157
  %v10159 = vpop.f32.mrf.mxu0
  %v10160 = vadd.f32 %v7007, %v10159
  %v10161 = vpop.f32.mrf.mxu0
  %v10162 = vadd.f32 %v7003, %v10161
  %v10163 = vpop.f32.mrf.mxu0
  %v10164 = vadd.f32 %v7007, %v10163
  %10165 = vdwg.mxu0
  %10166 = vmatprep.subr.bf16.mxu0 %v9473
  %10167 = vmatpush1.bf16.msra.mxu0 %v9472
  %10168 = vmatprep.subr.bf16.mxu0 %v9449
  %10169 = vmatpush1.bf16.msra.mxu0 %v9448
  %10170 = vmatprep.subr.bf16.mxu0 %v9425
  %10171 = vmatpush1.bf16.msra.mxu0 %v9424
  %10172 = vmatprep.subr.bf16.mxu0 %v9401
  %10173 = vmatpush1.bf16.msra.mxu0 %v9400
  %10174 = vmatprep.subr.bf16.mxu0 %v9377
  %10175 = vmatpush1.bf16.msra.mxu0 %v9376
  %10176 = vmatprep.subr.bf16.mxu0 %v9353
  %10177 = vmatpush1.bf16.msra.mxu0 %v9352
  %10178 = vmatprep.subr.bf16.mxu0 %v9329
  %10179 = vmatpush1.bf16.msra.mxu0 %v9328
  %10180 = vmatprep.subr.bf16.mxu0 %v9305
  %10181 = vmatpush1.bf16.msra.mxu0 %v9304
  %10182 = vmatprep.subr.bf16.mxu0 0
  %10183 = vmatpush2.bf16.msra.mxu0 0
  %10184 = vmatprep.subr.bf16.mxu0 0
  %10185 = vmatpush2.bf16.msra.mxu0 0
  %10186 = vmatprep.subr.bf16.mxu0 0
  %10187 = vmatpush2.bf16.msra.mxu0 0
  %10188 = vmatprep.subr.bf16.mxu0 0
  %10189 = vmatpush2.bf16.msra.mxu0 0
  %10190 = vmatprep.subr.bf16.mxu0 0
  %10191 = vmatpush2.bf16.msra.mxu0 0
  %10192 = vmatprep.subr.bf16.mxu0 0
  %10193 = vmatpush2.bf16.msra.mxu0 0
  %10194 = vmatprep.subr.bf16.mxu0 0
  %10195 = vmatpush2.bf16.msra.mxu0 0
  %10196 = vmatprep.subr.bf16.mxu0 %v9497
  %10197 = vmatpush2.bf16.msra.mxu0 %v9496
  %10198 = vmatprep.mubr.bf16.mxu0 %v10121
  %10199 = vmatmul.mubr.bf16.gmra.mxu0 %v6392
  %v10200 = vpop.f32.mrf.mxu0
  %v10201 = vadd.f32 %v10158, %v10200
  %v10202 = vpop.f32.mrf.mxu0
  %v10203 = vadd.f32 %v10160, %v10202
  %v10204 = vpop.f32.mrf.mxu0
  %v10205 = vadd.f32 %v10162, %v10204
  %v10206 = vpop.f32.mrf.mxu0
  %v10207 = vadd.f32 %v10164, %v10206
  %10208 = vdwg.mxu0
  %10209 = vmatprep.subr.bf16.mxu0 %v9091
  %10210 = vmatpush1.bf16.msra.mxu0 %v9090
  %10211 = vmatprep.subr.bf16.mxu0 %v9067
  %10212 = vmatpush1.bf16.msra.mxu0 %v9066
  %10213 = vmatprep.subr.bf16.mxu0 %v9043
  %10214 = vmatpush1.bf16.msra.mxu0 %v9042
  %10215 = vmatprep.subr.bf16.mxu0 %v9019
  %10216 = vmatpush1.bf16.msra.mxu0 %v9018
  %10217 = vmatprep.subr.bf16.mxu0 %v8995
  %10218 = vmatpush1.bf16.msra.mxu0 %v8994
  %10219 = vmatprep.subr.bf16.mxu0 %v8971
  %10220 = vmatpush1.bf16.msra.mxu0 %v8970
  %10221 = vmatprep.subr.bf16.mxu0 %v8947
  %10222 = vmatpush1.bf16.msra.mxu0 %v8946
  %10223 = vmatprep.subr.bf16.mxu0 %v8923
  %10224 = vmatpush1.bf16.msra.mxu0 %v8922
  %10225 = vmatprep.subr.bf16.mxu0 %v9283
  %10226 = vmatpush2.bf16.msra.mxu0 %v9282
  %10227 = vmatprep.subr.bf16.mxu0 %v9259
  %10228 = vmatpush2.bf16.msra.mxu0 %v9258
  %10229 = vmatprep.subr.bf16.mxu0 %v9235
  %10230 = vmatpush2.bf16.msra.mxu0 %v9234
  %10231 = vmatprep.subr.bf16.mxu0 %v9211
  %10232 = vmatpush2.bf16.msra.mxu0 %v9210
  %10233 = vmatprep.subr.bf16.mxu0 %v9187
  %10234 = vmatpush2.bf16.msra.mxu0 %v9186
  %10235 = vmatprep.subr.bf16.mxu0 %v9163
  %10236 = vmatpush2.bf16.msra.mxu0 %v9162
  %10237 = vmatprep.subr.bf16.mxu0 %v9139
  %10238 = vmatpush2.bf16.msra.mxu0 %v9138
  %10239 = vmatprep.subr.bf16.mxu0 %v9115
  %10240 = vmatpush2.bf16.msra.mxu0 %v9114
  %10241 = vmatprep.mubr.bf16.mxu0 %v6391
  %10242 = vmatmul.mubr.bf16.gmra.mxu0 %v6390
  %v10243 = vpop.f32.mrf.mxu0
  %v10244 = vadd.f32 %v7011, %v10243
  %v10245 = vpop.f32.mrf.mxu0
  %v10246 = vadd.f32 %v7015, %v10245
  %v10247 = vpop.f32.mrf.mxu0
  %v10248 = vadd.f32 %v7011, %v10247
  %v10249 = vpop.f32.mrf.mxu0
  %v10250 = vadd.f32 %v7015, %v10249
  %10251 = vdwg.mxu0
  %10252 = vmatprep.subr.bf16.mxu0 %v9475
  %10253 = vmatpush1.bf16.msra.mxu0 %v9474
  %10254 = vmatprep.subr.bf16.mxu0 %v9451
  %10255 = vmatpush1.bf16.msra.mxu0 %v9450
  %10256 = vmatprep.subr.bf16.mxu0 %v9427
  %10257 = vmatpush1.bf16.msra.mxu0 %v9426
  %10258 = vmatprep.subr.bf16.mxu0 %v9403
  %10259 = vmatpush1.bf16.msra.mxu0 %v9402
  %10260 = vmatprep.subr.bf16.mxu0 %v9379
  %10261 = vmatpush1.bf16.msra.mxu0 %v9378
  %10262 = vmatprep.subr.bf16.mxu0 %v9355
  %10263 = vmatpush1.bf16.msra.mxu0 %v9354
  %10264 = vmatprep.subr.bf16.mxu0 %v9331
  %10265 = vmatpush1.bf16.msra.mxu0 %v9330
  %10266 = vmatprep.subr.bf16.mxu0 %v9307
  %10267 = vmatpush1.bf16.msra.mxu0 %v9306
  %10268 = vmatprep.subr.bf16.mxu0 0
  %10269 = vmatpush2.bf16.msra.mxu0 0
  %10270 = vmatprep.subr.bf16.mxu0 0
  %10271 = vmatpush2.bf16.msra.mxu0 0
  %10272 = vmatprep.subr.bf16.mxu0 0
  %10273 = vmatpush2.bf16.msra.mxu0 0
  %10274 = vmatprep.subr.bf16.mxu0 0
  %10275 = vmatpush2.bf16.msra.mxu0 0
  %10276 = vmatprep.subr.bf16.mxu0 0
  %10277 = vmatpush2.bf16.msra.mxu0 0
  %10278 = vmatprep.subr.bf16.mxu0 0
  %10279 = vmatpush2.bf16.msra.mxu0 0
  %10280 = vmatprep.subr.bf16.mxu0 0
  %10281 = vmatpush2.bf16.msra.mxu0 0
  %10282 = vmatprep.subr.bf16.mxu0 %v9499
  %10283 = vmatpush2.bf16.msra.mxu0 %v9498
  %10284 = vmatprep.mubr.bf16.mxu0 %v10121
  %10285 = vmatmul.mubr.bf16.gmra.mxu0 %v6392
  %v10286 = vpop.f32.mrf.mxu0
  %v10287 = vadd.f32 %v10244, %v10286
  %v10288 = vpop.f32.mrf.mxu0
  %v10289 = vadd.f32 %v10246, %v10288
  %v10290 = vpop.f32.mrf.mxu0
  %v10291 = vadd.f32 %v10248, %v10290
  %v10292 = vpop.f32.mrf.mxu0
  %v10293 = vadd.f32 %v10250, %v10292
  %10294 = vdwg.mxu0
  %10295 = vmatprep.subr.bf16.mxu0 %v9093
  %10296 = vmatpush1.bf16.msra.mxu0 %v9092
  %10297 = vmatprep.subr.bf16.mxu0 %v9069
  %10298 = vmatpush1.bf16.msra.mxu0 %v9068
  %10299 = vmatprep.subr.bf16.mxu0 %v9045
  %10300 = vmatpush1.bf16.msra.mxu0 %v9044
  %10301 = vmatprep.subr.bf16.mxu0 %v9021
  %10302 = vmatpush1.bf16.msra.mxu0 %v9020
  %10303 = vmatprep.subr.bf16.mxu0 %v8997
  %10304 = vmatpush1.bf16.msra.mxu0 %v8996
  %10305 = vmatprep.subr.bf16.mxu0 %v8973
  %10306 = vmatpush1.bf16.msra.mxu0 %v8972
  %10307 = vmatprep.subr.bf16.mxu0 %v8949
  %10308 = vmatpush1.bf16.msra.mxu0 %v8948
  %10309 = vmatprep.subr.bf16.mxu0 %v8925
  %10310 = vmatpush1.bf16.msra.mxu0 %v8924
  %10311 = vmatprep.subr.bf16.mxu0 %v9285
  %10312 = vmatpush2.bf16.msra.mxu0 %v9284
  %10313 = vmatprep.subr.bf16.mxu0 %v9261
  %10314 = vmatpush2.bf16.msra.mxu0 %v9260
  %10315 = vmatprep.subr.bf16.mxu0 %v9237
  %10316 = vmatpush2.bf16.msra.mxu0 %v9236
  %10317 = vmatprep.subr.bf16.mxu0 %v9213
  %10318 = vmatpush2.bf16.msra.mxu0 %v9212
  %10319 = vmatprep.subr.bf16.mxu0 %v9189
  %10320 = vmatpush2.bf16.msra.mxu0 %v9188
  %10321 = vmatprep.subr.bf16.mxu0 %v9165
  %10322 = vmatpush2.bf16.msra.mxu0 %v9164
  %10323 = vmatprep.subr.bf16.mxu0 %v9141
  %10324 = vmatpush2.bf16.msra.mxu0 %v9140
  %10325 = vmatprep.subr.bf16.mxu0 %v9117
  %10326 = vmatpush2.bf16.msra.mxu0 %v9116
  %10327 = vmatprep.mubr.bf16.mxu0 %v6391
  %10328 = vmatmul.mubr.bf16.gmra.mxu0 %v6390
  %v10329 = vpop.f32.mrf.mxu0
  %v10330 = vadd.f32 %v7019, %v10329
  %v10331 = vpop.f32.mrf.mxu0
  %v10332 = vadd.f32 %v7023, %v10331
  %v10333 = vpop.f32.mrf.mxu0
  %v10334 = vadd.f32 %v7019, %v10333
  %v10335 = vpop.f32.mrf.mxu0
  %v10336 = vadd.f32 %v7023, %v10335
  %10337 = vdwg.mxu0
  %10338 = vmatprep.subr.bf16.mxu0 %v9477
  %10339 = vmatpush1.bf16.msra.mxu0 %v9476
  %10340 = vmatprep.subr.bf16.mxu0 %v9453
  %10341 = vmatpush1.bf16.msra.mxu0 %v9452
  %10342 = vmatprep.subr.bf16.mxu0 %v9429
  %10343 = vmatpush1.bf16.msra.mxu0 %v9428
  %10344 = vmatprep.subr.bf16.mxu0 %v9405
  %10345 = vmatpush1.bf16.msra.mxu0 %v9404
  %10346 = vmatprep.subr.bf16.mxu0 %v9381
  %10347 = vmatpush1.bf16.msra.mxu0 %v9380
  %10348 = vmatprep.subr.bf16.mxu0 %v9357
  %10349 = vmatpush1.bf16.msra.mxu0 %v9356
  %10350 = vmatprep.subr.bf16.mxu0 %v9333
  %10351 = vmatpush1.bf16.msra.mxu0 %v9332
  %10352 = vmatprep.subr.bf16.mxu0 %v9309
  %10353 = vmatpush1.bf16.msra.mxu0 %v9308
  %10354 = vmatprep.subr.bf16.mxu0 0
  %10355 = vmatpush2.bf16.msra.mxu0 0
  %10356 = vmatprep.subr.bf16.mxu0 0
  %10357 = vmatpush2.bf16.msra.mxu0 0
  %10358 = vmatprep.subr.bf16.mxu0 0
  %10359 = vmatpush2.bf16.msra.mxu0 0
  %10360 = vmatprep.subr.bf16.mxu0 0
  %10361 = vmatpush2.bf16.msra.mxu0 0
  %10362 = vmatprep.subr.bf16.mxu0 0
  %10363 = vmatpush2.bf16.msra.mxu0 0
  %10364 = vmatprep.subr.bf16.mxu0 0
  %10365 = vmatpush2.bf16.msra.mxu0 0
  %10366 = vmatprep.subr.bf16.mxu0 0
  %10367 = vmatpush2.bf16.msra.mxu0 0
  %10368 = vmatprep.subr.bf16.mxu0 %v9501
  %10369 = vmatpush2.bf16.msra.mxu0 %v9500
  %10370 = vmatprep.mubr.bf16.mxu0 %v10121
  %10371 = vmatmul.mubr.bf16.gmra.mxu0 %v6392
  %v10372 = vpop.f32.mrf.mxu0
  %v10373 = vadd.f32 %v10330, %v10372
  %v10374 = vpop.f32.mrf.mxu0
  %v10375 = vadd.f32 %v10332, %v10374
  %v10376 = vpop.f32.mrf.mxu0
  %v10377 = vadd.f32 %v10334, %v10376
  %v10378 = vpop.f32.mrf.mxu0
  %v10379 = vadd.f32 %v10336, %v10378
  %10380 = vdwg.mxu0
  %10381 = vmatprep.subr.bf16.mxu0 %v9095
  %10382 = vmatpush1.bf16.msra.mxu0 %v9094
  %10383 = vmatprep.subr.bf16.mxu0 %v9071
  %10384 = vmatpush1.bf16.msra.mxu0 %v9070
  %10385 = vmatprep.subr.bf16.mxu0 %v9047
  %10386 = vmatpush1.bf16.msra.mxu0 %v9046
  %10387 = vmatprep.subr.bf16.mxu0 %v9023
  %10388 = vmatpush1.bf16.msra.mxu0 %v9022
  %10389 = vmatprep.subr.bf16.mxu0 %v8999
  %10390 = vmatpush1.bf16.msra.mxu0 %v8998
  %10391 = vmatprep.subr.bf16.mxu0 %v8975
  %10392 = vmatpush1.bf16.msra.mxu0 %v8974
  %10393 = vmatprep.subr.bf16.mxu0 %v8951
  %10394 = vmatpush1.bf16.msra.mxu0 %v8950
  %10395 = vmatprep.subr.bf16.mxu0 %v8927
  %10396 = vmatpush1.bf16.msra.mxu0 %v8926
  %10397 = vmatprep.subr.bf16.mxu0 %v9287
  %10398 = vmatpush2.bf16.msra.mxu0 %v9286
  %10399 = vmatprep.subr.bf16.mxu0 %v9263
  %10400 = vmatpush2.bf16.msra.mxu0 %v9262
  %10401 = vmatprep.subr.bf16.mxu0 %v9239
  %10402 = vmatpush2.bf16.msra.mxu0 %v9238
  %10403 = vmatprep.subr.bf16.mxu0 %v9215
  %10404 = vmatpush2.bf16.msra.mxu0 %v9214
  %10405 = vmatprep.subr.bf16.mxu0 %v9191
  %10406 = vmatpush2.bf16.msra.mxu0 %v9190
  %10407 = vmatprep.subr.bf16.mxu0 %v9167
  %10408 = vmatpush2.bf16.msra.mxu0 %v9166
  %10409 = vmatprep.subr.bf16.mxu0 %v9143
  %10410 = vmatpush2.bf16.msra.mxu0 %v9142
  %10411 = vmatprep.subr.bf16.mxu0 %v9119
  %10412 = vmatpush2.bf16.msra.mxu0 %v9118
  %10413 = vmatprep.mubr.bf16.mxu0 %v6391
  %10414 = vmatmul.mubr.bf16.gmra.mxu0 %v6390
  %v10415 = vpop.f32.mrf.mxu0
  %v10416 = vadd.f32 %v7027, %v10415
  %v10417 = vpop.f32.mrf.mxu0
  %v10418 = vadd.f32 %v7031, %v10417
  %v10419 = vpop.f32.mrf.mxu0
  %v10420 = vadd.f32 %v7027, %v10419
  %v10421 = vpop.f32.mrf.mxu0
  %v10422 = vadd.f32 %v7031, %v10421
  %10423 = vdwg.mxu0
  %10424 = vmatprep.subr.bf16.mxu0 %v9479
  %10425 = vmatpush1.bf16.msra.mxu0 %v9478
  %10426 = vmatprep.subr.bf16.mxu0 %v9455
  %10427 = vmatpush1.bf16.msra.mxu0 %v9454
  %10428 = vmatprep.subr.bf16.mxu0 %v9431
  %10429 = vmatpush1.bf16.msra.mxu0 %v9430
  %10430 = vmatprep.subr.bf16.mxu0 %v9407
  %10431 = vmatpush1.bf16.msra.mxu0 %v9406
  %10432 = vmatprep.subr.bf16.mxu0 %v9383
  %10433 = vmatpush1.bf16.msra.mxu0 %v9382
  %10434 = vmatprep.subr.bf16.mxu0 %v9359
  %10435 = vmatpush1.bf16.msra.mxu0 %v9358
  %10436 = vmatprep.subr.bf16.mxu0 %v9335
  %10437 = vmatpush1.bf16.msra.mxu0 %v9334
  %10438 = vmatprep.subr.bf16.mxu0 %v9311
  %10439 = vmatpush1.bf16.msra.mxu0 %v9310
  %10440 = vmatprep.subr.bf16.mxu0 0
  %10441 = vmatpush2.bf16.msra.mxu0 0
  %10442 = vmatprep.subr.bf16.mxu0 0
  %10443 = vmatpush2.bf16.msra.mxu0 0
  %10444 = vmatprep.subr.bf16.mxu0 0
  %10445 = vmatpush2.bf16.msra.mxu0 0
  %10446 = vmatprep.subr.bf16.mxu0 0
  %10447 = vmatpush2.bf16.msra.mxu0 0
  %10448 = vmatprep.subr.bf16.mxu0 0
  %10449 = vmatpush2.bf16.msra.mxu0 0
  %10450 = vmatprep.subr.bf16.mxu0 0
  %10451 = vmatpush2.bf16.msra.mxu0 0
  %10452 = vmatprep.subr.bf16.mxu0 0
  %10453 = vmatpush2.bf16.msra.mxu0 0
  %10454 = vmatprep.subr.bf16.mxu0 %v9503
  %10455 = vmatpush2.bf16.msra.mxu0 %v9502
  %10456 = vmatprep.mubr.bf16.mxu0 %v10121
  %10457 = vmatmul.mubr.bf16.gmra.mxu0 %v6392
  %v10458 = vpop.f32.mrf.mxu0
  %v10459 = vadd.f32 %v10416, %v10458
  %v10460 = vpop.f32.mrf.mxu0
  %v10461 = vadd.f32 %v10418, %v10460
  %v10462 = vpop.f32.mrf.mxu0
  %v10463 = vadd.f32 %v10420, %v10462
  %v10464 = vpop.f32.mrf.mxu0
  %v10465 = vadd.f32 %v10422, %v10464
  %10466 = vdwg.mxu0
  %10467 = vmatprep.subr.bf16.mxu0 %v9097
  %10468 = vmatpush1.bf16.msra.mxu0 %v9096
  %10469 = vmatprep.subr.bf16.mxu0 %v9073
  %10470 = vmatpush1.bf16.msra.mxu0 %v9072
  %10471 = vmatprep.subr.bf16.mxu0 %v9049
  %10472 = vmatpush1.bf16.msra.mxu0 %v9048
  %10473 = vmatprep.subr.bf16.mxu0 %v9025
  %10474 = vmatpush1.bf16.msra.mxu0 %v9024
  %10475 = vmatprep.subr.bf16.mxu0 %v9001
  %10476 = vmatpush1.bf16.msra.mxu0 %v9000
  %10477 = vmatprep.subr.bf16.mxu0 %v8977
  %10478 = vmatpush1.bf16.msra.mxu0 %v8976
  %10479 = vmatprep.subr.bf16.mxu0 %v8953
  %10480 = vmatpush1.bf16.msra.mxu0 %v8952
  %10481 = vmatprep.subr.bf16.mxu0 %v8929
  %10482 = vmatpush1.bf16.msra.mxu0 %v8928
  %10483 = vmatprep.subr.bf16.mxu0 %v9289
  %10484 = vmatpush2.bf16.msra.mxu0 %v9288
  %10485 = vmatprep.subr.bf16.mxu0 %v9265
  %10486 = vmatpush2.bf16.msra.mxu0 %v9264
  %10487 = vmatprep.subr.bf16.mxu0 %v9241
  %10488 = vmatpush2.bf16.msra.mxu0 %v9240
  %10489 = vmatprep.subr.bf16.mxu0 %v9217
  %10490 = vmatpush2.bf16.msra.mxu0 %v9216
  %10491 = vmatprep.subr.bf16.mxu0 %v9193
  %10492 = vmatpush2.bf16.msra.mxu0 %v9192
  %10493 = vmatprep.subr.bf16.mxu0 %v9169
  %10494 = vmatpush2.bf16.msra.mxu0 %v9168
  %10495 = vmatprep.subr.bf16.mxu0 %v9145
  %10496 = vmatpush2.bf16.msra.mxu0 %v9144
  %10497 = vmatprep.subr.bf16.mxu0 %v9121
  %10498 = vmatpush2.bf16.msra.mxu0 %v9120
  %10499 = vmatprep.mubr.bf16.mxu0 %v6391
  %10500 = vmatmul.mubr.bf16.gmra.mxu0 %v6390
  %v10501 = vpop.f32.mrf.mxu0
  %v10502 = vadd.f32 %v7035, %v10501
  %v10503 = vpop.f32.mrf.mxu0
  %v10504 = vadd.f32 %v7039, %v10503
  %v10505 = vpop.f32.mrf.mxu0
  %v10506 = vadd.f32 %v7035, %v10505
  %v10507 = vpop.f32.mrf.mxu0
  %v10508 = vadd.f32 %v7039, %v10507
  %10509 = vdwg.mxu0
  %10510 = vmatprep.subr.bf16.mxu0 %v9481
  %10511 = vmatpush1.bf16.msra.mxu0 %v9480
  %10512 = vmatprep.subr.bf16.mxu0 %v9457
  %10513 = vmatpush1.bf16.msra.mxu0 %v9456
  %10514 = vmatprep.subr.bf16.mxu0 %v9433
  %10515 = vmatpush1.bf16.msra.mxu0 %v9432
  %10516 = vmatprep.subr.bf16.mxu0 %v9409
  %10517 = vmatpush1.bf16.msra.mxu0 %v9408
  %10518 = vmatprep.subr.bf16.mxu0 %v9385
  %10519 = vmatpush1.bf16.msra.mxu0 %v9384
  %10520 = vmatprep.subr.bf16.mxu0 %v9361
  %10521 = vmatpush1.bf16.msra.mxu0 %v9360
  %10522 = vmatprep.subr.bf16.mxu0 %v9337
  %10523 = vmatpush1.bf16.msra.mxu0 %v9336
  %10524 = vmatprep.subr.bf16.mxu0 %v9313
  %10525 = vmatpush1.bf16.msra.mxu0 %v9312
  %10526 = vmatprep.subr.bf16.mxu0 0
  %10527 = vmatpush2.bf16.msra.mxu0 0
  %10528 = vmatprep.subr.bf16.mxu0 0
  %10529 = vmatpush2.bf16.msra.mxu0 0
  %10530 = vmatprep.subr.bf16.mxu0 0
  %10531 = vmatpush2.bf16.msra.mxu0 0
  %10532 = vmatprep.subr.bf16.mxu0 0
  %10533 = vmatpush2.bf16.msra.mxu0 0
  %10534 = vmatprep.subr.bf16.mxu0 0
  %10535 = vmatpush2.bf16.msra.mxu0 0
  %10536 = vmatprep.subr.bf16.mxu0 0
  %10537 = vmatpush2.bf16.msra.mxu0 0
  %10538 = vmatprep.subr.bf16.mxu0 0
  %10539 = vmatpush2.bf16.msra.mxu0 0
  %10540 = vmatprep.subr.bf16.mxu0 %v9505
  %10541 = vmatpush2.bf16.msra.mxu0 %v9504
  %10542 = vmatprep.mubr.bf16.mxu0 %v10121
  %10543 = vmatmul.mubr.bf16.gmra.mxu0 %v6392
  %v10544 = vpop.f32.mrf.mxu0
  %v10545 = vadd.f32 %v10502, %v10544
  %v10546 = vpop.f32.mrf.mxu0
  %v10547 = vadd.f32 %v10504, %v10546
  %v10548 = vpop.f32.mrf.mxu0
  %v10549 = vadd.f32 %v10506, %v10548
  %v10550 = vpop.f32.mrf.mxu0
  %v10551 = vadd.f32 %v10508, %v10550
  %10552 = vdwg.mxu0
  %10553 = vmatprep.subr.bf16.mxu0 %v9099
  %10554 = vmatpush1.bf16.msra.mxu0 %v9098
  %10555 = vmatprep.subr.bf16.mxu0 %v9075
  %10556 = vmatpush1.bf16.msra.mxu0 %v9074
  %10557 = vmatprep.subr.bf16.mxu0 %v9051
  %10558 = vmatpush1.bf16.msra.mxu0 %v9050
  %10559 = vmatprep.subr.bf16.mxu0 %v9027
  %10560 = vmatpush1.bf16.msra.mxu0 %v9026
  %10561 = vmatprep.subr.bf16.mxu0 %v9003
  %10562 = vmatpush1.bf16.msra.mxu0 %v9002
  %10563 = vmatprep.subr.bf16.mxu0 %v8979
  %10564 = vmatpush1.bf16.msra.mxu0 %v8978
  %10565 = vmatprep.subr.bf16.mxu0 %v8955
  %10566 = vmatpush1.bf16.msra.mxu0 %v8954
  %10567 = vmatprep.subr.bf16.mxu0 %v8931
  %10568 = vmatpush1.bf16.msra.mxu0 %v8930
  %10569 = vmatprep.subr.bf16.mxu0 %v9291
  %10570 = vmatpush2.bf16.msra.mxu0 %v9290
  %10571 = vmatprep.subr.bf16.mxu0 %v9267
  %10572 = vmatpush2.bf16.msra.mxu0 %v9266
  %10573 = vmatprep.subr.bf16.mxu0 %v9243
  %10574 = vmatpush2.bf16.msra.mxu0 %v9242
  %10575 = vmatprep.subr.bf16.mxu0 %v9219
  %10576 = vmatpush2.bf16.msra.mxu0 %v9218
  %10577 = vmatprep.subr.bf16.mxu0 %v9195
  %10578 = vmatpush2.bf16.msra.mxu0 %v9194
  %10579 = vmatprep.subr.bf16.mxu0 %v9171
  %10580 = vmatpush2.bf16.msra.mxu0 %v9170
  %10581 = vmatprep.subr.bf16.mxu0 %v9147
  %10582 = vmatpush2.bf16.msra.mxu0 %v9146
  %10583 = vmatprep.subr.bf16.mxu0 %v9123
  %10584 = vmatpush2.bf16.msra.mxu0 %v9122
  %10585 = vmatprep.mubr.bf16.mxu0 %v6391
  %10586 = vmatmul.mubr.bf16.gmra.mxu0 %v6390
  %v10587 = vpop.f32.mrf.mxu0
  %v10588 = vadd.f32 %v7043, %v10587
  %v10589 = vpop.f32.mrf.mxu0
  %v10590 = vadd.f32 %v7047, %v10589
  %v10591 = vpop.f32.mrf.mxu0
  %v10592 = vadd.f32 %v7043, %v10591
  %v10593 = vpop.f32.mrf.mxu0
  %v10594 = vadd.f32 %v7047, %v10593
  %10595 = vdwg.mxu0
  %10596 = vmatprep.subr.bf16.mxu0 %v9483
  %10597 = vmatpush1.bf16.msra.mxu0 %v9482
  %10598 = vmatprep.subr.bf16.mxu0 %v9459
  %10599 = vmatpush1.bf16.msra.mxu0 %v9458
  %10600 = vmatprep.subr.bf16.mxu0 %v9435
  %10601 = vmatpush1.bf16.msra.mxu0 %v9434
  %10602 = vmatprep.subr.bf16.mxu0 %v9411
  %10603 = vmatpush1.bf16.msra.mxu0 %v9410
  %10604 = vmatprep.subr.bf16.mxu0 %v9387
  %10605 = vmatpush1.bf16.msra.mxu0 %v9386
  %10606 = vmatprep.subr.bf16.mxu0 %v9363
  %10607 = vmatpush1.bf16.msra.mxu0 %v9362
  %10608 = vmatprep.subr.bf16.mxu0 %v9339
  %10609 = vmatpush1.bf16.msra.mxu0 %v9338
  %10610 = vmatprep.subr.bf16.mxu0 %v9315
  %10611 = vmatpush1.bf16.msra.mxu0 %v9314
  %10612 = vmatprep.subr.bf16.mxu0 0
  %10613 = vmatpush2.bf16.msra.mxu0 0
  %10614 = vmatprep.subr.bf16.mxu0 0
  %10615 = vmatpush2.bf16.msra.mxu0 0
  %10616 = vmatprep.subr.bf16.mxu0 0
  %10617 = vmatpush2.bf16.msra.mxu0 0
  %10618 = vmatprep.subr.bf16.mxu0 0
  %10619 = vmatpush2.bf16.msra.mxu0 0
  %10620 = vmatprep.subr.bf16.mxu0 0
  %10621 = vmatpush2.bf16.msra.mxu0 0
  %10622 = vmatprep.subr.bf16.mxu0 0
  %10623 = vmatpush2.bf16.msra.mxu0 0
  %10624 = vmatprep.subr.bf16.mxu0 0
  %10625 = vmatpush2.bf16.msra.mxu0 0
  %10626 = vmatprep.subr.bf16.mxu0 %v9507
  %10627 = vmatpush2.bf16.msra.mxu0 %v9506
  %10628 = vmatprep.mubr.bf16.mxu0 %v10121
  %10629 = vmatmul.mubr.bf16.gmra.mxu0 %v6392
  %v10630 = vpop.f32.mrf.mxu0
  %v10631 = vadd.f32 %v10588, %v10630
  %v10632 = vpop.f32.mrf.mxu0
  %v10633 = vadd.f32 %v10590, %v10632
  %v10634 = vpop.f32.mrf.mxu0
  %v10635 = vadd.f32 %v10592, %v10634
  %v10636 = vpop.f32.mrf.mxu0
  %v10637 = vadd.f32 %v10594, %v10636
  %10638 = vdwg.mxu0
  %10639 = vmatprep.subr.bf16.mxu0 %v9101
  %10640 = vmatpush1.bf16.msra.mxu0 %v9100
  %10641 = vmatprep.subr.bf16.mxu0 %v9077
  %10642 = vmatpush1.bf16.msra.mxu0 %v9076
  %10643 = vmatprep.subr.bf16.mxu0 %v9053
  %10644 = vmatpush1.bf16.msra.mxu0 %v9052
  %10645 = vmatprep.subr.bf16.mxu0 %v9029
  %10646 = vmatpush1.bf16.msra.mxu0 %v9028
  %10647 = vmatprep.subr.bf16.mxu0 %v9005
  %10648 = vmatpush1.bf16.msra.mxu0 %v9004
  %10649 = vmatprep.subr.bf16.mxu0 %v8981
  %10650 = vmatpush1.bf16.msra.mxu0 %v8980
  %10651 = vmatprep.subr.bf16.mxu0 %v8957
  %10652 = vmatpush1.bf16.msra.mxu0 %v8956
  %10653 = vmatprep.subr.bf16.mxu0 %v8933
  %10654 = vmatpush1.bf16.msra.mxu0 %v8932
  %10655 = vmatprep.subr.bf16.mxu0 %v9293
  %10656 = vmatpush2.bf16.msra.mxu0 %v9292
  %10657 = vmatprep.subr.bf16.mxu0 %v9269
  %10658 = vmatpush2.bf16.msra.mxu0 %v9268
  %10659 = vmatprep.subr.bf16.mxu0 %v9245
  %10660 = vmatpush2.bf16.msra.mxu0 %v9244
  %10661 = vmatprep.subr.bf16.mxu0 %v9221
  %10662 = vmatpush2.bf16.msra.mxu0 %v9220
  %10663 = vmatprep.subr.bf16.mxu0 %v9197
  %10664 = vmatpush2.bf16.msra.mxu0 %v9196
  %10665 = vmatprep.subr.bf16.mxu0 %v9173
  %10666 = vmatpush2.bf16.msra.mxu0 %v9172
  %10667 = vmatprep.subr.bf16.mxu0 %v9149
  %10668 = vmatpush2.bf16.msra.mxu0 %v9148
  %10669 = vmatprep.subr.bf16.mxu0 %v9125
  %10670 = vmatpush2.bf16.msra.mxu0 %v9124
  %10671 = vmatprep.mubr.bf16.mxu0 %v6391
  %10672 = vmatmul.mubr.bf16.gmra.mxu0 %v6390
  %v10673 = vpop.f32.mrf.mxu0
  %v10674 = vadd.f32 %v7051, %v10673
  %v10675 = vpop.f32.mrf.mxu0
  %v10676 = vadd.f32 %v7055, %v10675
  %v10677 = vpop.f32.mrf.mxu0
  %v10678 = vadd.f32 %v7051, %v10677
  %v10679 = vpop.f32.mrf.mxu0
  %v10680 = vadd.f32 %v7055, %v10679
  %10681 = vdwg.mxu0
  %10682 = vmatprep.subr.bf16.mxu0 %v9485
  %10683 = vmatpush1.bf16.msra.mxu0 %v9484
  %10684 = vmatprep.subr.bf16.mxu0 %v9461
  %10685 = vmatpush1.bf16.msra.mxu0 %v9460
  %10686 = vmatprep.subr.bf16.mxu0 %v9437
  %10687 = vmatpush1.bf16.msra.mxu0 %v9436
  %10688 = vmatprep.subr.bf16.mxu0 %v9413
  %10689 = vmatpush1.bf16.msra.mxu0 %v9412
  %10690 = vmatprep.subr.bf16.mxu0 %v9389
  %10691 = vmatpush1.bf16.msra.mxu0 %v9388
  %10692 = vmatprep.subr.bf16.mxu0 %v9365
  %10693 = vmatpush1.bf16.msra.mxu0 %v9364
  %10694 = vmatprep.subr.bf16.mxu0 %v9341
  %10695 = vmatpush1.bf16.msra.mxu0 %v9340
  %10696 = vmatprep.subr.bf16.mxu0 %v9317
  %10697 = vmatpush1.bf16.msra.mxu0 %v9316
  %10698 = vmatprep.subr.bf16.mxu0 0
  %10699 = vmatpush2.bf16.msra.mxu0 0
  %10700 = vmatprep.subr.bf16.mxu0 0
  %10701 = vmatpush2.bf16.msra.mxu0 0
  %10702 = vmatprep.subr.bf16.mxu0 0
  %10703 = vmatpush2.bf16.msra.mxu0 0
  %10704 = vmatprep.subr.bf16.mxu0 0
  %10705 = vmatpush2.bf16.msra.mxu0 0
  %10706 = vmatprep.subr.bf16.mxu0 0
  %10707 = vmatpush2.bf16.msra.mxu0 0
  %10708 = vmatprep.subr.bf16.mxu0 0
  %10709 = vmatpush2.bf16.msra.mxu0 0
  %10710 = vmatprep.subr.bf16.mxu0 0
  %10711 = vmatpush2.bf16.msra.mxu0 0
  %10712 = vmatprep.subr.bf16.mxu0 %v9509
  %10713 = vmatpush2.bf16.msra.mxu0 %v9508
  %10714 = vmatprep.mubr.bf16.mxu0 %v10121
  %10715 = vmatmul.mubr.bf16.gmra.mxu0 %v6392
  %v10716 = vpop.f32.mrf.mxu0
  %v10717 = vadd.f32 %v10674, %v10716
  %v10718 = vpop.f32.mrf.mxu0
  %v10719 = vadd.f32 %v10676, %v10718
  %v10720 = vpop.f32.mrf.mxu0
  %v10721 = vadd.f32 %v10678, %v10720
  %v10722 = vpop.f32.mrf.mxu0
  %v10723 = vadd.f32 %v10680, %v10722
  %10724 = vdwg.mxu0
  %10725 = vmatprep.subr.bf16.mxu0 %v9103
  %10726 = vmatpush1.bf16.msra.mxu0 %v9102
  %10727 = vmatprep.subr.bf16.mxu0 %v9079
  %10728 = vmatpush1.bf16.msra.mxu0 %v9078
  %10729 = vmatprep.subr.bf16.mxu0 %v9055
  %10730 = vmatpush1.bf16.msra.mxu0 %v9054
  %10731 = vmatprep.subr.bf16.mxu0 %v9031
  %10732 = vmatpush1.bf16.msra.mxu0 %v9030
  %10733 = vmatprep.subr.bf16.mxu0 %v9007
  %10734 = vmatpush1.bf16.msra.mxu0 %v9006
  %10735 = vmatprep.subr.bf16.mxu0 %v8983
  %10736 = vmatpush1.bf16.msra.mxu0 %v8982
  %10737 = vmatprep.subr.bf16.mxu0 %v8959
  %10738 = vmatpush1.bf16.msra.mxu0 %v8958
  %10739 = vmatprep.subr.bf16.mxu0 %v8935
  %10740 = vmatpush1.bf16.msra.mxu0 %v8934
  %10741 = vmatprep.subr.bf16.mxu0 %v9295
  %10742 = vmatpush2.bf16.msra.mxu0 %v9294
  %10743 = vmatprep.subr.bf16.mxu0 %v9271
  %10744 = vmatpush2.bf16.msra.mxu0 %v9270
  %10745 = vmatprep.subr.bf16.mxu0 %v9247
  %10746 = vmatpush2.bf16.msra.mxu0 %v9246
  %10747 = vmatprep.subr.bf16.mxu0 %v9223
  %10748 = vmatpush2.bf16.msra.mxu0 %v9222
  %10749 = vmatprep.subr.bf16.mxu0 %v9199
  %10750 = vmatpush2.bf16.msra.mxu0 %v9198
  %10751 = vmatprep.subr.bf16.mxu0 %v9175
  %10752 = vmatpush2.bf16.msra.mxu0 %v9174
  %10753 = vmatprep.subr.bf16.mxu0 %v9151
  %10754 = vmatpush2.bf16.msra.mxu0 %v9150
  %10755 = vmatprep.subr.bf16.mxu0 %v9127
  %10756 = vmatpush2.bf16.msra.mxu0 %v9126
  %10757 = vmatprep.mubr.bf16.mxu0 %v6391
  %10758 = vmatmul.mubr.bf16.gmra.mxu0 %v6390
  %v10759 = vpop.f32.mrf.mxu0
  %v10760 = vadd.f32 %v7059, %v10759
  %v10761 = vpop.f32.mrf.mxu0
  %v10762 = vadd.f32 %v7063, %v10761
  %v10763 = vpop.f32.mrf.mxu0
  %v10764 = vadd.f32 %v7059, %v10763
  %v10765 = vpop.f32.mrf.mxu0
  %v10766 = vadd.f32 %v7063, %v10765
  %10767 = vdwg.mxu0
  %10768 = vmatprep.subr.bf16.mxu0 %v9487
  %10769 = vmatpush1.bf16.msra.mxu0 %v9486
  %10770 = vmatprep.subr.bf16.mxu0 %v9463
  %10771 = vmatpush1.bf16.msra.mxu0 %v9462
  %10772 = vmatprep.subr.bf16.mxu0 %v9439
  %10773 = vmatpush1.bf16.msra.mxu0 %v9438
  %10774 = vmatprep.subr.bf16.mxu0 %v9415
  %10775 = vmatpush1.bf16.msra.mxu0 %v9414
  %10776 = vmatprep.subr.bf16.mxu0 %v9391
  %10777 = vmatpush1.bf16.msra.mxu0 %v9390
  %10778 = vmatprep.subr.bf16.mxu0 %v9367
  %10779 = vmatpush1.bf16.msra.mxu0 %v9366
  %10780 = vmatprep.subr.bf16.mxu0 %v9343
  %10781 = vmatpush1.bf16.msra.mxu0 %v9342
  %10782 = vmatprep.subr.bf16.mxu0 %v9319
  %10783 = vmatpush1.bf16.msra.mxu0 %v9318
  %10784 = vmatprep.subr.bf16.mxu0 0
  %10785 = vmatpush2.bf16.msra.mxu0 0
  %10786 = vmatprep.subr.bf16.mxu0 0
  %10787 = vmatpush2.bf16.msra.mxu0 0
  %10788 = vmatprep.subr.bf16.mxu0 0
  %10789 = vmatpush2.bf16.msra.mxu0 0
  %10790 = vmatprep.subr.bf16.mxu0 0
  %10791 = vmatpush2.bf16.msra.mxu0 0
  %10792 = vmatprep.subr.bf16.mxu0 0
  %10793 = vmatpush2.bf16.msra.mxu0 0
  %10794 = vmatprep.subr.bf16.mxu0 0
  %10795 = vmatpush2.bf16.msra.mxu0 0
  %10796 = vmatprep.subr.bf16.mxu0 0
  %10797 = vmatpush2.bf16.msra.mxu0 0
  %10798 = vmatprep.subr.bf16.mxu0 %v9511
  %10799 = vmatpush2.bf16.msra.mxu0 %v9510
  %10800 = vmatprep.mubr.bf16.mxu0 %v10121
  %10801 = vmatmul.mubr.bf16.gmra.mxu0 %v6392
  %v10802 = vpop.f32.mrf.mxu0
  %v10803 = vadd.f32 %v10760, %v10802
  %v10804 = vpop.f32.mrf.mxu0
  %v10805 = vadd.f32 %v10762, %v10804
  %v10806 = vpop.f32.mrf.mxu0
  %v10807 = vadd.f32 %v10764, %v10806
  %v10808 = vpop.f32.mrf.mxu0
  %v10809 = vadd.f32 %v10766, %v10808
  %10810 = vdwg.mxu0
  %10811 = vmatprep.subr.bf16.mxu0 %v9105
  %10812 = vmatpush1.bf16.msra.mxu0 %v9104
  %10813 = vmatprep.subr.bf16.mxu0 %v9081
  %10814 = vmatpush1.bf16.msra.mxu0 %v9080
  %10815 = vmatprep.subr.bf16.mxu0 %v9057
  %10816 = vmatpush1.bf16.msra.mxu0 %v9056
  %10817 = vmatprep.subr.bf16.mxu0 %v9033
  %10818 = vmatpush1.bf16.msra.mxu0 %v9032
  %10819 = vmatprep.subr.bf16.mxu0 %v9009
  %10820 = vmatpush1.bf16.msra.mxu0 %v9008
  %10821 = vmatprep.subr.bf16.mxu0 %v8985
  %10822 = vmatpush1.bf16.msra.mxu0 %v8984
  %10823 = vmatprep.subr.bf16.mxu0 %v8961
  %10824 = vmatpush1.bf16.msra.mxu0 %v8960
  %10825 = vmatprep.subr.bf16.mxu0 %v8937
  %10826 = vmatpush1.bf16.msra.mxu0 %v8936
  %10827 = vmatprep.subr.bf16.mxu0 %v9297
  %10828 = vmatpush2.bf16.msra.mxu0 %v9296
  %10829 = vmatprep.subr.bf16.mxu0 %v9273
  %10830 = vmatpush2.bf16.msra.mxu0 %v9272
  %10831 = vmatprep.subr.bf16.mxu0 %v9249
  %10832 = vmatpush2.bf16.msra.mxu0 %v9248
  %10833 = vmatprep.subr.bf16.mxu0 %v9225
  %10834 = vmatpush2.bf16.msra.mxu0 %v9224
  %10835 = vmatprep.subr.bf16.mxu0 %v9201
  %10836 = vmatpush2.bf16.msra.mxu0 %v9200
  %10837 = vmatprep.subr.bf16.mxu0 %v9177
  %10838 = vmatpush2.bf16.msra.mxu0 %v9176
  %10839 = vmatprep.subr.bf16.mxu0 %v9153
  %10840 = vmatpush2.bf16.msra.mxu0 %v9152
  %10841 = vmatprep.subr.bf16.mxu0 %v9129
  %10842 = vmatpush2.bf16.msra.mxu0 %v9128
  %10843 = vmatprep.mubr.bf16.mxu0 %v6391
  %10844 = vmatmul.mubr.bf16.gmra.mxu0 %v6390
  %v10845 = vpop.f32.mrf.mxu0
  %v10846 = vadd.f32 %v7067, %v10845
  %v10847 = vpop.f32.mrf.mxu0
  %v10848 = vadd.f32 %v7071, %v10847
  %v10849 = vpop.f32.mrf.mxu0
  %v10850 = vadd.f32 %v7067, %v10849
  %v10851 = vpop.f32.mrf.mxu0
  %v10852 = vadd.f32 %v7071, %v10851
  %10853 = vdwg.mxu0
  %10854 = vmatprep.subr.bf16.mxu0 %v9489
  %10855 = vmatpush1.bf16.msra.mxu0 %v9488
  %10856 = vmatprep.subr.bf16.mxu0 %v9465
  %10857 = vmatpush1.bf16.msra.mxu0 %v9464
  %10858 = vmatprep.subr.bf16.mxu0 %v9441
  %10859 = vmatpush1.bf16.msra.mxu0 %v9440
  %10860 = vmatprep.subr.bf16.mxu0 %v9417
  %10861 = vmatpush1.bf16.msra.mxu0 %v9416
  %10862 = vmatprep.subr.bf16.mxu0 %v9393
  %10863 = vmatpush1.bf16.msra.mxu0 %v9392
  %10864 = vmatprep.subr.bf16.mxu0 %v9369
  %10865 = vmatpush1.bf16.msra.mxu0 %v9368
  %10866 = vmatprep.subr.bf16.mxu0 %v9345
  %10867 = vmatpush1.bf16.msra.mxu0 %v9344
  %10868 = vmatprep.subr.bf16.mxu0 %v9321
  %10869 = vmatpush1.bf16.msra.mxu0 %v9320
  %10870 = vmatprep.subr.bf16.mxu0 0
  %10871 = vmatpush2.bf16.msra.mxu0 0
  %10872 = vmatprep.subr.bf16.mxu0 0
  %10873 = vmatpush2.bf16.msra.mxu0 0
  %10874 = vmatprep.subr.bf16.mxu0 0
  %10875 = vmatpush2.bf16.msra.mxu0 0
  %10876 = vmatprep.subr.bf16.mxu0 0
  %10877 = vmatpush2.bf16.msra.mxu0 0
  %10878 = vmatprep.subr.bf16.mxu0 0
  %10879 = vmatpush2.bf16.msra.mxu0 0
  %10880 = vmatprep.subr.bf16.mxu0 0
  %10881 = vmatpush2.bf16.msra.mxu0 0
  %10882 = vmatprep.subr.bf16.mxu0 0
  %10883 = vmatpush2.bf16.msra.mxu0 0
  %10884 = vmatprep.subr.bf16.mxu0 %v9513
  %10885 = vmatpush2.bf16.msra.mxu0 %v9512
  %10886 = vmatprep.mubr.bf16.mxu0 %v10121
  %10887 = vmatmul.mubr.bf16.gmra.mxu0 %v6392
  %v10888 = vpop.f32.mrf.mxu0
  %v10889 = vadd.f32 %v10846, %v10888
  %v10890 = vpop.f32.mrf.mxu0
  %v10891 = vadd.f32 %v10848, %v10890
  %v10892 = vpop.f32.mrf.mxu0
  %v10893 = vadd.f32 %v10850, %v10892
  %v10894 = vpop.f32.mrf.mxu0
  %v10895 = vadd.f32 %v10852, %v10894
  %10896 = vdwg.mxu0
  %10897 = vmatprep.subr.bf16.mxu0 %v9107
  %10898 = vmatpush1.bf16.msra.mxu0 %v9106
  %10899 = vmatprep.subr.bf16.mxu0 %v9083
  %10900 = vmatpush1.bf16.msra.mxu0 %v9082
  %10901 = vmatprep.subr.bf16.mxu0 %v9059
  %10902 = vmatpush1.bf16.msra.mxu0 %v9058
  %10903 = vmatprep.subr.bf16.mxu0 %v9035
  %10904 = vmatpush1.bf16.msra.mxu0 %v9034
  %10905 = vmatprep.subr.bf16.mxu0 %v9011
  %10906 = vmatpush1.bf16.msra.mxu0 %v9010
  %10907 = vmatprep.subr.bf16.mxu0 %v8987
  %10908 = vmatpush1.bf16.msra.mxu0 %v8986
  %10909 = vmatprep.subr.bf16.mxu0 %v8963
  %10910 = vmatpush1.bf16.msra.mxu0 %v8962
  %10911 = vmatprep.subr.bf16.mxu0 %v8939
  %10912 = vmatpush1.bf16.msra.mxu0 %v8938
  %10913 = vmatprep.subr.bf16.mxu0 %v9299
  %10914 = vmatpush2.bf16.msra.mxu0 %v9298
  %10915 = vmatprep.subr.bf16.mxu0 %v9275
  %10916 = vmatpush2.bf16.msra.mxu0 %v9274
  %10917 = vmatprep.subr.bf16.mxu0 %v9251
  %10918 = vmatpush2.bf16.msra.mxu0 %v9250
  %10919 = vmatprep.subr.bf16.mxu0 %v9227
  %10920 = vmatpush2.bf16.msra.mxu0 %v9226
  %10921 = vmatprep.subr.bf16.mxu0 %v9203
  %10922 = vmatpush2.bf16.msra.mxu0 %v9202
  %10923 = vmatprep.subr.bf16.mxu0 %v9179
  %10924 = vmatpush2.bf16.msra.mxu0 %v9178
  %10925 = vmatprep.subr.bf16.mxu0 %v9155
  %10926 = vmatpush2.bf16.msra.mxu0 %v9154
  %10927 = vmatprep.subr.bf16.mxu0 %v9131
  %10928 = vmatpush2.bf16.msra.mxu0 %v9130
  %10929 = vmatprep.mubr.bf16.mxu0 %v6391
  %10930 = vmatmul.mubr.bf16.gmra.mxu0 %v6390
  %v10931 = vpop.f32.mrf.mxu0
  %v10932 = vadd.f32 %v7075, %v10931
  %v10933 = vpop.f32.mrf.mxu0
  %v10934 = vadd.f32 %v7079, %v10933
  %v10935 = vpop.f32.mrf.mxu0
  %v10936 = vadd.f32 %v7075, %v10935
  %v10937 = vpop.f32.mrf.mxu0
  %v10938 = vadd.f32 %v7079, %v10937
  %10939 = vdwg.mxu0
  %10940 = vmatprep.subr.bf16.mxu0 %v9491
  %10941 = vmatpush1.bf16.msra.mxu0 %v9490
  %10942 = vmatprep.subr.bf16.mxu0 %v9467
  %10943 = vmatpush1.bf16.msra.mxu0 %v9466
  %10944 = vmatprep.subr.bf16.mxu0 %v9443
  %10945 = vmatpush1.bf16.msra.mxu0 %v9442
  %10946 = vmatprep.subr.bf16.mxu0 %v9419
  %10947 = vmatpush1.bf16.msra.mxu0 %v9418
  %10948 = vmatprep.subr.bf16.mxu0 %v9395
  %10949 = vmatpush1.bf16.msra.mxu0 %v9394
  %10950 = vmatprep.subr.bf16.mxu0 %v9371
  %10951 = vmatpush1.bf16.msra.mxu0 %v9370
  %10952 = vmatprep.subr.bf16.mxu0 %v9347
  %10953 = vmatpush1.bf16.msra.mxu0 %v9346
  %10954 = vmatprep.subr.bf16.mxu0 %v9323
  %10955 = vmatpush1.bf16.msra.mxu0 %v9322
  %10956 = vmatprep.subr.bf16.mxu0 0
  %10957 = vmatpush2.bf16.msra.mxu0 0
  %10958 = vmatprep.subr.bf16.mxu0 0
  %10959 = vmatpush2.bf16.msra.mxu0 0
  %10960 = vmatprep.subr.bf16.mxu0 0
  %10961 = vmatpush2.bf16.msra.mxu0 0
  %10962 = vmatprep.subr.bf16.mxu0 0
  %10963 = vmatpush2.bf16.msra.mxu0 0
  %10964 = vmatprep.subr.bf16.mxu0 0
  %10965 = vmatpush2.bf16.msra.mxu0 0
  %10966 = vmatprep.subr.bf16.mxu0 0
  %10967 = vmatpush2.bf16.msra.mxu0 0
  %10968 = vmatprep.subr.bf16.mxu0 0
  %10969 = vmatpush2.bf16.msra.mxu0 0
  %10970 = vmatprep.subr.bf16.mxu0 %v9515
  %10971 = vmatpush2.bf16.msra.mxu0 %v9514
  %10972 = vmatprep.mubr.bf16.mxu0 %v10121
  %10973 = vmatmul.mubr.bf16.gmra.mxu0 %v6392
  %v10974 = vpop.f32.mrf.mxu0
  %v10975 = vadd.f32 %v10932, %v10974
  %v10976 = vpop.f32.mrf.mxu0
  %v10977 = vadd.f32 %v10934, %v10976
  %v10978 = vpop.f32.mrf.mxu0
  %v10979 = vadd.f32 %v10936, %v10978
  %v10980 = vpop.f32.mrf.mxu0
  %v10981 = vadd.f32 %v10938, %v10980
  %10982 = vdwg.mxu0
  %10983 = vmatprep.subr.bf16.mxu0 %v9109
  %10984 = vmatpush1.bf16.msra.mxu0 %v9108
  %10985 = vmatprep.subr.bf16.mxu0 %v9085
  %10986 = vmatpush1.bf16.msra.mxu0 %v9084
  %10987 = vmatprep.subr.bf16.mxu0 %v9061
  %10988 = vmatpush1.bf16.msra.mxu0 %v9060
  %10989 = vmatprep.subr.bf16.mxu0 %v9037
  %10990 = vmatpush1.bf16.msra.mxu0 %v9036
  %10991 = vmatprep.subr.bf16.mxu0 %v9013
  %10992 = vmatpush1.bf16.msra.mxu0 %v9012
  %10993 = vmatprep.subr.bf16.mxu0 %v8989
  %10994 = vmatpush1.bf16.msra.mxu0 %v8988
  %10995 = vmatprep.subr.bf16.mxu0 %v8965
  %10996 = vmatpush1.bf16.msra.mxu0 %v8964
  %10997 = vmatprep.subr.bf16.mxu0 %v8941
  %10998 = vmatpush1.bf16.msra.mxu0 %v8940
  %10999 = vmatprep.subr.bf16.mxu0 %v9301
  %11000 = vmatpush2.bf16.msra.mxu0 %v9300
  %11001 = vmatprep.subr.bf16.mxu0 %v9277
  %11002 = vmatpush2.bf16.msra.mxu0 %v9276
  %11003 = vmatprep.subr.bf16.mxu0 %v9253
  %11004 = vmatpush2.bf16.msra.mxu0 %v9252
  %11005 = vmatprep.subr.bf16.mxu0 %v9229
  %11006 = vmatpush2.bf16.msra.mxu0 %v9228
  %11007 = vmatprep.subr.bf16.mxu0 %v9205
  %11008 = vmatpush2.bf16.msra.mxu0 %v9204
  %11009 = vmatprep.subr.bf16.mxu0 %v9181
  %11010 = vmatpush2.bf16.msra.mxu0 %v9180
  %11011 = vmatprep.subr.bf16.mxu0 %v9157
  %11012 = vmatpush2.bf16.msra.mxu0 %v9156
  %11013 = vmatprep.subr.bf16.mxu0 %v9133
  %11014 = vmatpush2.bf16.msra.mxu0 %v9132
  %11015 = vmatprep.mubr.bf16.mxu0 %v6391
  %11016 = vmatmul.mubr.bf16.gmra.mxu0 %v6390
  %v11017 = vpop.f32.mrf.mxu0
  %v11018 = vadd.f32 %v7083, %v11017
  %v11019 = vpop.f32.mrf.mxu0
  %v11020 = vadd.f32 %v7087, %v11019
  %v11021 = vpop.f32.mrf.mxu0
  %v11022 = vadd.f32 %v7083, %v11021
  %v11023 = vpop.f32.mrf.mxu0
  %v11024 = vadd.f32 %v7087, %v11023
  %11025 = vdwg.mxu0
  %11026 = vmatprep.subr.bf16.mxu0 %v9493
  %11027 = vmatpush1.bf16.msra.mxu0 %v9492
  %11028 = vmatprep.subr.bf16.mxu0 %v9469
  %11029 = vmatpush1.bf16.msra.mxu0 %v9468
  %11030 = vmatprep.subr.bf16.mxu0 %v9445
  %11031 = vmatpush1.bf16.msra.mxu0 %v9444
  %11032 = vmatprep.subr.bf16.mxu0 %v9421
  %11033 = vmatpush1.bf16.msra.mxu0 %v9420
  %11034 = vmatprep.subr.bf16.mxu0 %v9397
  %11035 = vmatpush1.bf16.msra.mxu0 %v9396
  %11036 = vmatprep.subr.bf16.mxu0 %v9373
  %11037 = vmatpush1.bf16.msra.mxu0 %v9372
  %11038 = vmatprep.subr.bf16.mxu0 %v9349
  %11039 = vmatpush1.bf16.msra.mxu0 %v9348
  %11040 = vmatprep.subr.bf16.mxu0 %v9325
  %11041 = vmatpush1.bf16.msra.mxu0 %v9324
  %11042 = vmatprep.subr.bf16.mxu0 0
  %11043 = vmatpush2.bf16.msra.mxu0 0
  %11044 = vmatprep.subr.bf16.mxu0 0
  %11045 = vmatpush2.bf16.msra.mxu0 0
  %11046 = vmatprep.subr.bf16.mxu0 0
  %11047 = vmatpush2.bf16.msra.mxu0 0
  %11048 = vmatprep.subr.bf16.mxu0 0
  %11049 = vmatpush2.bf16.msra.mxu0 0
  %11050 = vmatprep.subr.bf16.mxu0 0
  %11051 = vmatpush2.bf16.msra.mxu0 0
  %11052 = vmatprep.subr.bf16.mxu0 0
  %11053 = vmatpush2.bf16.msra.mxu0 0
  %11054 = vmatprep.subr.bf16.mxu0 0
  %11055 = vmatpush2.bf16.msra.mxu0 0
  %11056 = vmatprep.subr.bf16.mxu0 %v9517
  %11057 = vmatpush2.bf16.msra.mxu0 %v9516
  %11058 = vmatprep.mubr.bf16.mxu0 %v10121
  %11059 = vmatmul.mubr.bf16.gmra.mxu0 %v6392
  %v11060 = vpop.f32.mrf.mxu0
  %v11061 = vadd.f32 %v11018, %v11060
  %v11062 = vpop.f32.mrf.mxu0
  %v11063 = vadd.f32 %v11020, %v11062
  %v11064 = vpop.f32.mrf.mxu0
  %v11065 = vadd.f32 %v11022, %v11064
  %v11066 = vpop.f32.mrf.mxu0
  %v11067 = vadd.f32 %v11024, %v11066
  %11068 = vdwg.mxu0
  %11069 = vmatprep.subr.bf16.mxu0 %v9111
  %11070 = vmatpush1.bf16.msra.mxu0 %v9110
  %11071 = vmatprep.subr.bf16.mxu0 %v9087
  %11072 = vmatpush1.bf16.msra.mxu0 %v9086
  %11073 = vmatprep.subr.bf16.mxu0 %v9063
  %11074 = vmatpush1.bf16.msra.mxu0 %v9062
  %11075 = vmatprep.subr.bf16.mxu0 %v9039
  %11076 = vmatpush1.bf16.msra.mxu0 %v9038
  %11077 = vmatprep.subr.bf16.mxu0 %v9015
  %11078 = vmatpush1.bf16.msra.mxu0 %v9014
  %11079 = vmatprep.subr.bf16.mxu0 %v8991
  %11080 = vmatpush1.bf16.msra.mxu0 %v8990
  %11081 = vmatprep.subr.bf16.mxu0 %v8967
  %11082 = vmatpush1.bf16.msra.mxu0 %v8966
  %11083 = vmatprep.subr.bf16.mxu0 %v8943
  %11084 = vmatpush1.bf16.msra.mxu0 %v8942
  %11085 = vmatprep.subr.bf16.mxu0 %v9303
  %11086 = vmatpush2.bf16.msra.mxu0 %v9302
  %11087 = vmatprep.subr.bf16.mxu0 %v9279
  %11088 = vmatpush2.bf16.msra.mxu0 %v9278
  %11089 = vmatprep.subr.bf16.mxu0 %v9255
  %11090 = vmatpush2.bf16.msra.mxu0 %v9254
  %11091 = vmatprep.subr.bf16.mxu0 %v9231
  %11092 = vmatpush2.bf16.msra.mxu0 %v9230
  %11093 = vmatprep.subr.bf16.mxu0 %v9207
  %11094 = vmatpush2.bf16.msra.mxu0 %v9206
  %11095 = vmatprep.subr.bf16.mxu0 %v9183
  %11096 = vmatpush2.bf16.msra.mxu0 %v9182
  %11097 = vmatprep.subr.bf16.mxu0 %v9159
  %11098 = vmatpush2.bf16.msra.mxu0 %v9158
  %11099 = vmatprep.subr.bf16.mxu0 %v9135
  %11100 = vmatpush2.bf16.msra.mxu0 %v9134
  %11101 = vmatprep.mubr.bf16.mxu0 %v6391
  %11102 = vmatmul.mubr.bf16.gmra.mxu0 %v6390
  %v11103 = vpop.f32.mrf.mxu0
  %v11104 = vadd.f32 %v7091, %v11103
  %v11105 = vpop.f32.mrf.mxu0
  %v11106 = vadd.f32 %v7095, %v11105
  %v11107 = vpop.f32.mrf.mxu0
  %v11108 = vadd.f32 %v7091, %v11107
  %v11109 = vpop.f32.mrf.mxu0
  %v11110 = vadd.f32 %v7095, %v11109
  %11111 = vdwg.mxu0
  %11112 = vmatprep.subr.bf16.mxu0 %v9495
  %11113 = vmatpush1.bf16.msra.mxu0 %v9494
  %11114 = vmatprep.subr.bf16.mxu0 %v9471
  %11115 = vmatpush1.bf16.msra.mxu0 %v9470
  %11116 = vmatprep.subr.bf16.mxu0 %v9447
  %11117 = vmatpush1.bf16.msra.mxu0 %v9446
  %11118 = vmatprep.subr.bf16.mxu0 %v9423
  %11119 = vmatpush1.bf16.msra.mxu0 %v9422
  %11120 = vmatprep.subr.bf16.mxu0 %v9399
  %11121 = vmatpush1.bf16.msra.mxu0 %v9398
  %11122 = vmatprep.subr.bf16.mxu0 %v9375
  %11123 = vmatpush1.bf16.msra.mxu0 %v9374
  %11124 = vmatprep.subr.bf16.mxu0 %v9351
  %11125 = vmatpush1.bf16.msra.mxu0 %v9350
  %11126 = vmatprep.subr.bf16.mxu0 %v9327
  %11127 = vmatpush1.bf16.msra.mxu0 %v9326
  %11128 = vmatprep.subr.bf16.mxu0 0
  %11129 = vmatpush2.bf16.msra.mxu0 0
  %11130 = vmatprep.subr.bf16.mxu0 0
  %11131 = vmatpush2.bf16.msra.mxu0 0
  %11132 = vmatprep.subr.bf16.mxu0 0
  %11133 = vmatpush2.bf16.msra.mxu0 0
  %11134 = vmatprep.subr.bf16.mxu0 0
  %11135 = vmatpush2.bf16.msra.mxu0 0
  %11136 = vmatprep.subr.bf16.mxu0 0
  %11137 = vmatpush2.bf16.msra.mxu0 0
  %11138 = vmatprep.subr.bf16.mxu0 0
  %11139 = vmatpush2.bf16.msra.mxu0 0
  %11140 = vmatprep.subr.bf16.mxu0 0
  %11141 = vmatpush2.bf16.msra.mxu0 0
  %11142 = vmatprep.subr.bf16.mxu0 %v9519
  %11143 = vmatpush2.bf16.msra.mxu0 %v9518
  %11144 = vmatprep.mubr.bf16.mxu0 %v10121
  %11145 = vmatmul.mubr.bf16.gmra.mxu0 %v6392
  %v11146 = vpop.f32.mrf.mxu0
  %v11147 = vadd.f32 %v11104, %v11146
  %v11148 = vpop.f32.mrf.mxu0
  %v11149 = vadd.f32 %v11106, %v11148
  %v11150 = vpop.f32.mrf.mxu0
  %v11151 = vadd.f32 %v11108, %v11150
  %v11152 = vpop.f32.mrf.mxu0
  %v11153 = vadd.f32 %v11110, %v11152
  %11154 = vdwg.mxu0
  %v11155 = vsub.f32 0.0, %v10201
  %v11156 = vsub.f32 0.0, %v10203
  %v11157 = vsub.f32 0.0, %v10287
  %v11158 = vsub.f32 0.0, %v10289
  %v11159 = vsub.f32 0.0, %v10373
  %v11160 = vsub.f32 0.0, %v10375
  %v11161 = vsub.f32 0.0, %v10459
  %v11162 = vsub.f32 0.0, %v10461
  %v11163 = vsub.f32 0.0, %v10545
  %v11164 = vsub.f32 0.0, %v10547
  %v11165 = vsub.f32 0.0, %v10631
  %v11166 = vsub.f32 0.0, %v10633
  %v11167 = vsub.f32 0.0, %v10717
  %v11168 = vsub.f32 0.0, %v10719
  %v11169 = vsub.f32 0.0, %v10803
  %v11170 = vsub.f32 0.0, %v10805
  %v11171 = vsub.f32 0.0, %v10889
  %v11172 = vsub.f32 0.0, %v10891
  %v11173 = vsub.f32 0.0, %v10975
  %v11174 = vsub.f32 0.0, %v10977
  %v11175 = vsub.f32 0.0, %v11061
  %v11176 = vsub.f32 0.0, %v11063
  %v11177 = vsub.f32 0.0, %v11147
  %v11178 = vsub.f32 0.0, %v11149
  %v11179 = vsub.f32 0.0, %v10205
  %v11180 = vsub.f32 0.0, %v10207
  %v11181 = vsub.f32 0.0, %v10291
  %v11182 = vsub.f32 0.0, %v10293
  %v11183 = vsub.f32 0.0, %v10377
  %v11184 = vsub.f32 0.0, %v10379
  %v11185 = vsub.f32 0.0, %v10463
  %v11186 = vsub.f32 0.0, %v10465
  %v11187 = vsub.f32 0.0, %v10549
  %v11188 = vsub.f32 0.0, %v10551
  %v11189 = vsub.f32 0.0, %v10635
  %v11190 = vsub.f32 0.0, %v10637
  %v11191 = vsub.f32 0.0, %v10721
  %v11192 = vsub.f32 0.0, %v10723
  %v11193 = vsub.f32 0.0, %v10807
  %v11194 = vsub.f32 0.0, %v10809
  %v11195 = vsub.f32 0.0, %v10893
  %v11196 = vsub.f32 0.0, %v10895
  %v11197 = vsub.f32 0.0, %v10979
  %v11198 = vsub.f32 0.0, %v10981
  %v11199 = vsub.f32 0.0, %v11065
  %v11200 = vsub.f32 0.0, %v11067
  %v11201 = vsub.f32 0.0, %v11151
  %v11202 = vsub.f32 0.0, %v11153
  %v11203 = vmul.f32 %v11155, 1.442695
  %v11204 = vpow.pop %v11203
  %v11205 = vmul.f32 %v11156, 1.442695
  %v11206 = vpow.pop %v11205
  %v11207 = vmul.f32 %v11157, 1.442695
  %v11208 = vpow.pop %v11207
  %v11209 = vmul.f32 %v11158, 1.442695
  %v11210 = vpow.pop %v11209
  %v11211 = vmul.f32 %v11159, 1.442695
  %v11212 = vpow.pop %v11211
  %v11213 = vmul.f32 %v11160, 1.442695
  %v11214 = vpow.pop %v11213
  %v11215 = vmul.f32 %v11161, 1.442695
  %v11216 = vpow.pop %v11215
  %v11217 = vmul.f32 %v11162, 1.442695
  %v11218 = vpow.pop %v11217
  %v11219 = vmul.f32 %v11163, 1.442695
  %v11220 = vpow.pop %v11219
  %v11221 = vmul.f32 %v11164, 1.442695
  %v11222 = vpow.pop %v11221
  %v11223 = vmul.f32 %v11165, 1.442695
  %v11224 = vpow.pop %v11223
  %v11225 = vmul.f32 %v11166, 1.442695
  %v11226 = vpow.pop %v11225
  %v11227 = vmul.f32 %v11167, 1.442695
  %v11228 = vpow.pop %v11227
  %v11229 = vmul.f32 %v11168, 1.442695
  %v11230 = vpow.pop %v11229
  %v11231 = vmul.f32 %v11169, 1.442695
  %v11232 = vpow.pop %v11231
  %v11233 = vmul.f32 %v11170, 1.442695
  %v11234 = vpow.pop %v11233
  %v11235 = vmul.f32 %v11171, 1.442695
  %v11236 = vpow.pop %v11235
  %v11237 = vmul.f32 %v11172, 1.442695
  %v11238 = vpow.pop %v11237
  %v11239 = vmul.f32 %v11173, 1.442695
  %v11240 = vpow.pop %v11239
  %v11241 = vmul.f32 %v11174, 1.442695
  %v11242 = vpow.pop %v11241
  %v11243 = vmul.f32 %v11175, 1.442695
  %v11244 = vpow.pop %v11243
  %v11245 = vmul.f32 %v11176, 1.442695
  %v11246 = vpow.pop %v11245
  %v11247 = vmul.f32 %v11177, 1.442695
  %v11248 = vpow.pop %v11247
  %v11249 = vmul.f32 %v11178, 1.442695
  %v11250 = vpow.pop %v11249
  %v11251 = vmul.f32 %v11179, 1.442695
  %v11252 = vpow.pop %v11251
  %v11253 = vmul.f32 %v11180, 1.442695
  %v11254 = vpow.pop %v11253
  %v11255 = vmul.f32 %v11181, 1.442695
  %v11256 = vpow.pop %v11255
  %v11257 = vmul.f32 %v11182, 1.442695
  %v11258 = vpow.pop %v11257
  %v11259 = vmul.f32 %v11183, 1.442695
  %v11260 = vpow.pop %v11259
  %v11261 = vmul.f32 %v11184, 1.442695
  %v11262 = vpow.pop %v11261
  %v11263 = vmul.f32 %v11185, 1.442695
  %v11264 = vpow.pop %v11263
  %v11265 = vmul.f32 %v11186, 1.442695
  %v11266 = vpow.pop %v11265
  %v11267 = vmul.f32 %v11187, 1.442695
  %v11268 = vpow.pop %v11267
  %v11269 = vmul.f32 %v11188, 1.442695
  %v11270 = vpow.pop %v11269
  %v11271 = vmul.f32 %v11189, 1.442695
  %v11272 = vpow.pop %v11271
  %v11273 = vmul.f32 %v11190, 1.442695
  %v11274 = vpow.pop %v11273
  %v11275 = vmul.f32 %v11191, 1.442695
  %v11276 = vpow.pop %v11275
  %v11277 = vmul.f32 %v11192, 1.442695
  %v11278 = vpow.pop %v11277
  %v11279 = vmul.f32 %v11193, 1.442695
  %v11280 = vpow.pop %v11279
  %v11281 = vmul.f32 %v11194, 1.442695
  %v11282 = vpow.pop %v11281
  %v11283 = vmul.f32 %v11195, 1.442695
  %v11284 = vpow.pop %v11283
  %v11285 = vmul.f32 %v11196, 1.442695
  %v11286 = vpow.pop %v11285
  %v11287 = vmul.f32 %v11197, 1.442695
  %v11288 = vpow.pop %v11287
  %v11289 = vmul.f32 %v11198, 1.442695
  %v11290 = vpow.pop %v11289
  %v11291 = vmul.f32 %v11199, 1.442695
  %v11292 = vpow.pop %v11291
  %v11293 = vmul.f32 %v11200, 1.442695
  %v11294 = vpow.pop %v11293
  %v11295 = vmul.f32 %v11201, 1.442695
  %v11296 = vpow.pop %v11295
  %v11297 = vmul.f32 %v11202, 1.442695
  %v11298 = vpow.pop %v11297
  %v11299 = vadd.f32 %v11204, 1.0
  %v11300 = vadd.f32 %v11206, 1.0
  %v11301 = vadd.f32 %v11208, 1.0
  %v11302 = vadd.f32 %v11210, 1.0
  %v11303 = vadd.f32 %v11212, 1.0
  %v11304 = vadd.f32 %v11214, 1.0
  %v11305 = vadd.f32 %v11216, 1.0
  %v11306 = vadd.f32 %v11218, 1.0
  %v11307 = vadd.f32 %v11220, 1.0
  %v11308 = vadd.f32 %v11222, 1.0
  %v11309 = vadd.f32 %v11224, 1.0
  %v11310 = vadd.f32 %v11226, 1.0
  %v11311 = vadd.f32 %v11228, 1.0
  %v11312 = vadd.f32 %v11230, 1.0
  %v11313 = vadd.f32 %v11232, 1.0
  %v11314 = vadd.f32 %v11234, 1.0
  %v11315 = vadd.f32 %v11236, 1.0
  %v11316 = vadd.f32 %v11238, 1.0
  %v11317 = vadd.f32 %v11240, 1.0
  %v11318 = vadd.f32 %v11242, 1.0
  %v11319 = vadd.f32 %v11244, 1.0
  %v11320 = vadd.f32 %v11246, 1.0
  %v11321 = vadd.f32 %v11248, 1.0
  %v11322 = vadd.f32 %v11250, 1.0
  %v11323 = vadd.f32 %v11252, 1.0
  %v11324 = vadd.f32 %v11254, 1.0
  %v11325 = vadd.f32 %v11256, 1.0
  %v11326 = vadd.f32 %v11258, 1.0
  %v11327 = vadd.f32 %v11260, 1.0
  %v11328 = vadd.f32 %v11262, 1.0
  %v11329 = vadd.f32 %v11264, 1.0
  %v11330 = vadd.f32 %v11266, 1.0
  %v11331 = vadd.f32 %v11268, 1.0
  %v11332 = vadd.f32 %v11270, 1.0
  %v11333 = vadd.f32 %v11272, 1.0
  %v11334 = vadd.f32 %v11274, 1.0
  %v11335 = vadd.f32 %v11276, 1.0
  %v11336 = vadd.f32 %v11278, 1.0
  %v11337 = vadd.f32 %v11280, 1.0
  %v11338 = vadd.f32 %v11282, 1.0
  %v11339 = vadd.f32 %v11284, 1.0
  %v11340 = vadd.f32 %v11286, 1.0
  %v11341 = vadd.f32 %v11288, 1.0
  %v11342 = vadd.f32 %v11290, 1.0
  %v11343 = vadd.f32 %v11292, 1.0
  %v11344 = vadd.f32 %v11294, 1.0
  %v11345 = vadd.f32 %v11296, 1.0
  %v11346 = vadd.f32 %v11298, 1.0
  %v11347 = vrcp.pop %v11299
  %v11348 = vrcp.pop %v11300
  %v11349 = vrcp.pop %v11301
  %v11350 = vrcp.pop %v11302
  %v11351 = vrcp.pop %v11303
  %v11352 = vrcp.pop %v11304
  %v11353 = vrcp.pop %v11305
  %v11354 = vrcp.pop %v11306
  %v11355 = vrcp.pop %v11307
  %v11356 = vrcp.pop %v11308
  %v11357 = vrcp.pop %v11309
  %v11358 = vrcp.pop %v11310
  %v11359 = vrcp.pop %v11311
  %v11360 = vrcp.pop %v11312
  %v11361 = vrcp.pop %v11313
  %v11362 = vrcp.pop %v11314
  %v11363 = vrcp.pop %v11315
  %v11364 = vrcp.pop %v11316
  %v11365 = vrcp.pop %v11317
  %v11366 = vrcp.pop %v11318
  %v11367 = vrcp.pop %v11319
  %v11368 = vrcp.pop %v11320
  %v11369 = vrcp.pop %v11321
  %v11370 = vrcp.pop %v11322
  %v11371 = vrcp.pop %v11323
  %v11372 = vrcp.pop %v11324
  %v11373 = vrcp.pop %v11325
  %v11374 = vrcp.pop %v11326
  %v11375 = vrcp.pop %v11327
  %v11376 = vrcp.pop %v11328
  %v11377 = vrcp.pop %v11329
  %v11378 = vrcp.pop %v11330
  %v11379 = vrcp.pop %v11331
  %v11380 = vrcp.pop %v11332
  %v11381 = vrcp.pop %v11333
  %v11382 = vrcp.pop %v11334
  %v11383 = vrcp.pop %v11335
  %v11384 = vrcp.pop %v11336
  %v11385 = vrcp.pop %v11337
  %v11386 = vrcp.pop %v11338
  %v11387 = vrcp.pop %v11339
  %v11388 = vrcp.pop %v11340
  %v11389 = vrcp.pop %v11341
  %v11390 = vrcp.pop %v11342
  %v11391 = vrcp.pop %v11343
  %v11392 = vrcp.pop %v11344
  %v11393 = vrcp.pop %v11345
  %v11394 = vrcp.pop %v11346
  %v11395 = vpack.c.bf16 %v11371, %v11347
  %v11396 = vpack.c.bf16 %v11372, %v11348
  %v11397 = vpack.c.bf16 %v11373, %v11349
  %v11398 = vpack.c.bf16 %v11374, %v11350
  %v11399 = vpack.c.bf16 %v11375, %v11351
  %v11400 = vpack.c.bf16 %v11376, %v11352
  %v11401 = vpack.c.bf16 %v11377, %v11353
  %v11402 = vpack.c.bf16 %v11378, %v11354
  %v11403 = vpack.c.bf16 %v11379, %v11355
  %v11404 = vpack.c.bf16 %v11380, %v11356
  %v11405 = vpack.c.bf16 %v11381, %v11357
  %v11406 = vpack.c.bf16 %v11382, %v11358
  %v11407 = vpack.c.bf16 %v11383, %v11359
  %v11408 = vpack.c.bf16 %v11384, %v11360
  %v11409 = vpack.c.bf16 %v11385, %v11361
  %v11410 = vpack.c.bf16 %v11386, %v11362
  %v11411 = vpack.c.bf16 %v11387, %v11363
  %v11412 = vpack.c.bf16 %v11388, %v11364
  %v11413 = vpack.c.bf16 %v11389, %v11365
  %v11414 = vpack.c.bf16 %v11390, %v11366
  %v11415 = vpack.c.bf16 %v11391, %v11367
  %v11416 = vpack.c.bf16 %v11392, %v11368
  %v11417 = vpack.c.bf16 %v11393, %v11369
  %v11418 = vpack.c.bf16 %v11394, %v11370
  %v11443 = vunpack.c.l.b16 %v11395
  %v11444 = vunpack.c.l.b16 %v11396
  %v11445 = vunpack.c.l.b16 %v11397
  %v11446 = vunpack.c.l.b16 %v11398
  %v11447 = vunpack.c.l.b16 %v11399
  %v11448 = vunpack.c.l.b16 %v11400
  %v11449 = vunpack.c.l.b16 %v11401
  %v11450 = vunpack.c.l.b16 %v11402
  %v11451 = vunpack.c.l.b16 %v11403
  %v11452 = vunpack.c.l.b16 %v11404
  %v11453 = vunpack.c.l.b16 %v11405
  %v11454 = vunpack.c.l.b16 %v11406
  %v11455 = vunpack.c.l.b16 %v11407
  %v11456 = vunpack.c.l.b16 %v11408
  %v11457 = vunpack.c.l.b16 %v11409
  %v11458 = vunpack.c.l.b16 %v11410
  %v11459 = vunpack.c.l.b16 %v11411
  %v11460 = vunpack.c.l.b16 %v11412
  %v11461 = vunpack.c.l.b16 %v11413
  %v11462 = vunpack.c.l.b16 %v11414
  %v11463 = vunpack.c.l.b16 %v11415
  %v11464 = vunpack.c.l.b16 %v11416
  %v11465 = vunpack.c.l.b16 %v11417
  %v11466 = vunpack.c.l.b16 %v11418
  %v11467 = vunpack.c.h.b16 %v11395
  %v11468 = vunpack.c.h.b16 %v11396
  %v11469 = vunpack.c.h.b16 %v11397
  %v11470 = vunpack.c.h.b16 %v11398
  %v11471 = vunpack.c.h.b16 %v11399
  %v11472 = vunpack.c.h.b16 %v11400
  %v11473 = vunpack.c.h.b16 %v11401
  %v11474 = vunpack.c.h.b16 %v11402
  %v11475 = vunpack.c.h.b16 %v11403
  %v11476 = vunpack.c.h.b16 %v11404
  %v11477 = vunpack.c.h.b16 %v11405
  %v11478 = vunpack.c.h.b16 %v11406
  %v11479 = vunpack.c.h.b16 %v11407
  %v11480 = vunpack.c.h.b16 %v11408
  %v11481 = vunpack.c.h.b16 %v11409
  %v11482 = vunpack.c.h.b16 %v11410
  %v11483 = vunpack.c.h.b16 %v11411
  %v11484 = vunpack.c.h.b16 %v11412
  %v11485 = vunpack.c.h.b16 %v11413
  %v11486 = vunpack.c.h.b16 %v11414
  %v11487 = vunpack.c.h.b16 %v11415
  %v11488 = vunpack.c.h.b16 %v11416
  %v11489 = vunpack.c.h.b16 %v11417
  %v11490 = vunpack.c.h.b16 %v11418
  %v11491 = vpack.c.b16 %v11444, %v11443
  %v11492 = vpack.c.b16 %v11446, %v11445
  %v11493 = vpack.c.b16 %v11448, %v11447
  %v11494 = vpack.c.b16 %v11450, %v11449
  %v11495 = vpack.c.b16 %v11452, %v11451
  %v11496 = vpack.c.b16 %v11454, %v11453
  %v11497 = vpack.c.b16 %v11456, %v11455
  %v11498 = vpack.c.b16 %v11458, %v11457
  %v11499 = vpack.c.b16 %v11460, %v11459
  %v11500 = vpack.c.b16 %v11462, %v11461
  %v11501 = vpack.c.b16 %v11464, %v11463
  %v11502 = vpack.c.b16 %v11466, %v11465
  %v11503 = vpack.c.b16 %v11468, %v11467
  %v11504 = vpack.c.b16 %v11470, %v11469
  %v11505 = vpack.c.b16 %v11472, %v11471
  %v11506 = vpack.c.b16 %v11474, %v11473
  %v11507 = vpack.c.b16 %v11476, %v11475
  %v11508 = vpack.c.b16 %v11478, %v11477
  %v11509 = vpack.c.b16 %v11480, %v11479
  %v11510 = vpack.c.b16 %v11482, %v11481
  %v11511 = vpack.c.b16 %v11484, %v11483
  %v11512 = vpack.c.b16 %v11486, %v11485
  %v11513 = vpack.c.b16 %v11488, %v11487
  %v11514 = vpack.c.b16 %v11490, %v11489
  %11539 = vst [vmem:[%s10] sm:$0xff] %v11491
  %11540 = vst [vmem:[%s10 + $0x8] sm:$0xff] %v11492
  %11541 = vst [vmem:[%s10 + $0x10] sm:$0xff] %v11493
  %11542 = vst [vmem:[%s10 + $0x18] sm:$0xff] %v11494
  %11543 = vst [vmem:[%s10 + $0x20] sm:$0xff] %v11495
  %11544 = vst [vmem:[%s10 + $0x28] sm:$0xff] %v11496
  %11545 = vst [vmem:[%s10 + $0x30] sm:$0xff] %v11497
  %11546 = vst [vmem:[%s10 + $0x38] sm:$0xff] %v11498
  %11547 = vst [vmem:[%s10 + $0x40] sm:$0xff] %v11499
  %11548 = vst [vmem:[%s10 + $0x48] sm:$0xff] %v11500
  %11549 = vst [vmem:[%s10 + $0x50] sm:$0xff] %v11501
  %11550 = vst [vmem:[%s10 + $0x58] sm:$0xff] %v11502
  %11551 = vst [vmem:[%s10 + $0x60] sm:$0xff] %v11503
  %11552 = vst [vmem:[%s10 + $0x68] sm:$0xff] %v11504
  %11553 = vst [vmem:[%s10 + $0x70] sm:$0xff] %v11505
  %11554 = vst [vmem:[%s10 + $0x78] sm:$0xff] %v11506
  %11555 = vst [vmem:[%s10 + $0x80] sm:$0xff] %v11507
  %11556 = vst [vmem:[%s10 + $0x88] sm:$0xff] %v11508
  %11557 = vst [vmem:[%s10 + $0x90] sm:$0xff] %v11509
  %11558 = vst [vmem:[%s10 + $0x98] sm:$0xff] %v11510
  %11559 = vst [vmem:[%s10 + $0xa0] sm:$0xff] %v11511
  %11560 = vst [vmem:[%s10 + $0xa8] sm:$0xff] %v11512
  %11561 = vst [vmem:[%s10 + $0xb0] sm:$0xff] %v11513
  %11562 = vst [vmem:[%s10 + $0xb8] sm:$0xff] %v11514
  // Predicated region
  $region42: #{vae_forward.1} parent=0 // pred_check
    _
  $region43: #{vae_forward.1} parent=0 // pred_check_branch
    %11564 = sbr.rel (0) target = $region45
  $region44: #{vae_forward.1} parent=0 // pred_region
    _
  $region45: #{vae_forward.1} parent=0 // pred_fallthru
    _
  // Predicated region
  $region46: #{vae_forward.1} parent=0 // pred_check
    _
  $region47: #{vae_forward.1} parent=0 // pred_check_branch
    %11566 = sbr.rel (0) target = $region49
  $region48: #{vae_forward.1} parent=0 // pred_region
    _
  $region49: #{vae_forward.1} parent=0 // pred_fallthru
    _
  // Predicated region
  $region50: #{vae_forward.1} parent=0 // pred_check
    _
  $region51: #{vae_forward.1} parent=0 // pred_check_branch
    %11568 = sbr.rel (0) target = $region53
  $region52: #{vae_forward.1} parent=0 // pred_region
    _
  $region53: #{vae_forward.1} parent=0 // pred_fallthru
    _
  // Predicated region
  $region54: #{vae_forward.1} parent=0 // pred_check
    _
  $region55: #{vae_forward.1} parent=0 // pred_check_branch
    %11570 = sbr.rel (0) target = $region57
  $region56: #{vae_forward.1} parent=0 // pred_region
    _
  $region57: #{vae_forward.1} parent=0 // pred_fallthru
    _
  // Predicated region
  $region58: #{vae_forward.1} parent=0 // pred_check
    _
  $region59: #{vae_forward.1} parent=0 // pred_check_branch
    %11572 = sbr.rel (0) target = $region61
  $region60: #{vae_forward.1} parent=0 // pred_region
    _
  $region61: #{vae_forward.1} parent=0 // pred_fallthru
    _
  // Predicated region
  $region62: #{vae_forward.1} parent=0 // pred_check
    _
  $region63: #{vae_forward.1} parent=0 // pred_check_branch
    %11574 = sbr.rel (0) target = $region65
  $region64: #{vae_forward.1} parent=0 // pred_region
    _
  $region65: #{vae_forward.1} parent=0 // pred_fallthru
    _

</llo_original>
